<compile_context>
chip_gen: v5e
topology: v5e:2x2
jax: 0.10.0
libtpu: 0.0.40
codegen_flags: <defaults>
</compile_context>

<pallas_src>
import jax
import jax.numpy as jnp
import numpy as np
from jax.experimental import pallas as pl
from jax.experimental.pallas import tpu as pltpu

K = 5     # conv kernel size
PAD = 2   # "same" padding for 5x5, stride 1


# ----------------------------------------------------------------------------
# In-kernel helpers
# ----------------------------------------------------------------------------
def _pool2x2(y, b, h, w, c):
    """2x2 max-pool.  y: (b*h, w*c) f32 whose columns are parity-major over width:
    col = parity*(w//2)*c + w2*c + ci  with spatial width = 2*w2 + parity.
    Both pooling halves are lane-slice maxima; returns (b, h//2, (w//2)*c) dense."""
    half = (w // 2) * c
    y = jnp.maximum(y[:, :half], y[:, half:])          # width pool: aligned lane slices
    y = y.reshape(b * (h // 2), 2 * half)              # rows (2h, 2h+1) packed into lanes
    y = jnp.maximum(y[:, :half], y[:, half:])          # height pool: aligned lane slices
    return y.reshape(b, h // 2, half)


def _tudui_kernel(x_ref, a1_ref, b1_ref, a2_ref, b2_ref, a3_ref, b3_ref,
                  wl1_ref, bl1_ref, wl2_ref, bl2_ref, o_ref,
                  pad2_ref, pad3_ref):
    b = x_ref.shape[0]   # batch tile

    # ---- conv1 (3 -> 32, 32x32) + bias + maxpool 2x2 -------------------------
    acc = jnp.zeros((b * 32, 32 * 32), jnp.float32)
    for kh in range(K):
        lhs = x_ref[:, kh:kh + 32, :].reshape(b * 32, 32 * 3)       # bf16
        acc += jnp.dot(lhs, a1_ref[kh], preferred_element_type=jnp.float32)
    acc += b1_ref[...]
    p1 = _pool2x2(acc, b, 32, 32, 32)                  # (b, 16, 16*32) f32

    # ---- conv2 (32 -> 32, 16x16) + bias + maxpool 2x2 ------------------------
    zero2 = jnp.zeros((b, PAD, 16 * 32), pad2_ref.dtype)
    pad2_ref[:, 0:PAD, :] = zero2                      # top border rows
    pad2_ref[:, PAD + 16:PAD + 16 + PAD, :] = zero2    # bottom border rows
    pad2_ref[:, PAD:PAD + 16, :] = p1.astype(pad2_ref.dtype)
    acc = jnp.zeros((b * 16, 16 * 32), jnp.float32)
    for kh in range(K):
        lhs = pad2_ref[:, kh:kh + 16, :].reshape(b * 16, 16 * 32)   # bf16
        acc += jnp.dot(lhs, a2_ref[kh], preferred_element_type=jnp.float32)
    acc += b2_ref[...]
    p2 = _pool2x2(acc, b, 16, 16, 32)                  # (b, 8, 8*32) f32

    # ---- conv3 (32 -> 64, 8x8) + bias + maxpool 2x2 --------------------------
    zero3 = jnp.zeros((b, PAD, 8 * 32), pad3_ref.dtype)
    pad3_ref[:, 0:PAD, :] = zero3
    pad3_ref[:, PAD + 8:PAD + 8 + PAD, :] = zero3
    pad3_ref[:, PAD:PAD + 8, :] = p2.astype(pad3_ref.dtype)
    acc = jnp.zeros((b * 8, 8 * 64), jnp.float32)
    for kh in range(K):
        lhs = pad3_ref[:, kh:kh + 8, :].reshape(b * 8, 8 * 32)      # bf16
        acc += jnp.dot(lhs, a3_ref[kh], preferred_element_type=jnp.float32)
    acc += b3_ref[...]
    p3 = _pool2x2(acc, b, 8, 8, 64)                    # (b, 4, 4*64) f32

    # ---- Flatten (h, w, c order; wl1 rows pre-permuted) + Linear head --------
    feat = p3.reshape(b, 1024).astype(jnp.bfloat16)
    h1 = jnp.dot(feat, wl1_ref[...], preferred_element_type=jnp.float32) + bl1_ref[...]
    o_ref[...] = (jnp.dot(h1.astype(jnp.bfloat16), wl2_ref[...],
                          preferred_element_type=jnp.float32) + bl2_ref[...])


# ----------------------------------------------------------------------------
# Wrapper
# ----------------------------------------------------------------------------
def _wspec(shape):
    """Full-array, constant-index, single-buffered block (weights / biases)."""
    nd = len(shape)
    return pl.BlockSpec(shape, lambda i, _nd=nd: (0,) * _nd,
                        pipeline_mode=pl.Buffered(1))


def tudui_forward(x_nchw, kp, *, batch_tile=32, interpret=False):
    """Forward pass matching Tudui.forward on an (N, 3, 32, 32) NCHW float32 input."""
    n = x_nchw.shape[0]
    bt = min(batch_tile, n)
    n_pad = -(-n // bt) * bt

    # One-time input prep: NCHW -> (N, H, W*C) lane-dense layout, bf16, pad H for the
    # first "same" conv (2+2 rows) plus 4 never-read rows so each image spans 40 rows.
    x = jnp.transpose(x_nchw, (0, 2, 3, 1)).reshape(n, 32, 32 * 3).astype(jnp.bfloat16)
    if n_pad != n:
        x = jnp.concatenate([x, jnp.zeros((n_pad - n, 32, 96), x.dtype)], axis=0)
    x = jnp.pad(x, ((0, 0), (PAD, PAD + 4), (0, 0)))                 # (n_pad, 40, 96)

    out = pl.pallas_call(
        _tudui_kernel,
        out_shape=jax.ShapeDtypeStruct((n_pad, 10), jnp.float32),
        grid=(n_pad // bt,),
        in_specs=[
            pl.BlockSpec((bt, 40, 96), lambda i: (i, 0, 0)),         # x (batch-tiled)
            _wspec((K, 96, 1024)),  _wspec((1, 1024)),               # conv1 A, bias
            _wspec((K, 512, 512)),  _wspec((1, 512)),                # conv2 A, bias
            _wspec((K, 256, 512)),  _wspec((1, 512)),                # conv3 A, bias
            _wspec((1024, 64)),     _wspec((1, 64)),                 # fc1 w, b
            _wspec((64, 10)),       _wspec((1, 10)),                 # fc2 w, b
        ],
        out_specs=pl.BlockSpec((bt, 10), lambda i: (i, 0)),
        scratch_shapes=[
            pltpu.VMEM((bt, 24, 16 * 32), jnp.bfloat16),   # H-padded conv2 input
            pltpu.VMEM((bt, 16, 8 * 32), jnp.bfloat16),    # H-padded conv3 input
        ],
        compiler_params=pltpu.CompilerParams(
            dimension_semantics=("parallel",),             # batch tiles -> both TCs on v7x
            vmem_limit_bytes=40 * 1024 * 1024,
        ),
        interpret=interpret,
    )(x, kp["a1"], kp["b1"], kp["a2"], kp["b2"], kp["a3"], kp["b3"],
      kp["wl1"], kp["bl1"], kp["wl2"], kp["bl2"])
    return out[:n]


# ----------------------------------------------------------------------------
# One-time parameter conversion (PyTorch layout -> fused-kernel layout)
# ----------------------------------------------------------------------------
def _expand_conv_weight(w_oihw, w_out):
    """Expand a (Cout, Cin, 5, 5) conv weight into 5 width-shift matrices A[kh] of
    shape (W*Cin, W*Cout) over the UNPADDED width (out-of-range taps give zero rows),
    so with activations laid out rows=(img,h), lanes=(w*Cin + ci):
        y = sum_kh  x_padH[rows h+kh, :] @ A[kh].
    Output columns are permuted parity-major over width so the in-kernel 2x1 width
    max-pool is a single aligned lane-slice maximum."""
    c_out, c_in, k, _ = w_oihw.shape
    w_t = jnp.transpose(w_oihw, (2, 3, 1, 0)).astype(jnp.float32)    # (KH, KW, Cin, Cout)
    tap = (jnp.arange(w_out)[None, :, None] + jnp.arange(k)[None, None, :] - PAD)
    shift = (jnp.arange(w_out)[:, None, None] == tap).astype(jnp.float32)  # (Win, Wout, KW)
    a = jnp.einsum("pwk,hkio->hpiwo", shift, w_t)                    # (KH, Win, Cin, Wout, Cout)
    perm = np.concatenate([np.arange(0, w_out, 2), np.arange(1, w_out, 2)])
    a = a[:, :, :, perm, :]                                          # parity-major out width
    return a.reshape(k, w_out * c_in, w_out * c_out).astype(jnp.bfloat16)


def prepare_params(p):
    """Convert PyTorch-layout params (Conv2d OIHW, Linear (out,in)) to kernel layout."""
    return {
        "a1": _expand_conv_weight(p["w1"], 32), "b1": jnp.tile(p["b1"], 32)[None, :],
        "a2": _expand_conv_weight(p["w2"], 16), "b2": jnp.tile(p["b2"], 16)[None, :],
        "a3": _expand_conv_weight(p["w3"], 8),  "b3": jnp.tile(p["b3"], 8)[None, :],
        # nn.Flatten on NCHW flattens (c, h, w); kernel features come out (h, w, c),
        # so permute wl1's input axis once here instead of transposing activations.
        "wl1": jnp.transpose(p["wl1"].reshape(64, 64, 4, 4), (2, 3, 1, 0))
                   .reshape(1024, 64).astype(jnp.bfloat16),
        "bl1": p["bl1"][None, :],
        "wl2": p["wl2"].T.astype(jnp.bfloat16),
        "bl2": p["bl2"][None, :],
    }


def init_params(key):
    """PyTorch-layout parameters with nn.Conv2d / nn.Linear style uniform init."""
    ks = jax.random.split(key, 10)

    def u(k, shape, fan_in):
        bound = 1.0 / (fan_in ** 0.5)
        return jax.random.uniform(k, shape, jnp.float32, -bound, bound)

    return {
        "w1": u(ks[0], (32, 3, 5, 5), 3 * 25),   "b1": u(ks[1], (32,), 3 * 25),
        "w2": u(ks[2], (32, 32, 5, 5), 32 * 25), "b2": u(ks[3], (32,), 32 * 25),
        "w3": u(ks[4], (64, 32, 5, 5), 32 * 25), "b3": u(ks[5], (64,), 32 * 25),
        "wl1": u(ks[6], (64, 1024), 1024),       "bl1": u(ks[7], (64,), 1024),
        "wl2": u(ks[8], (10, 64), 64),           "bl2": u(ks[9], (10,), 64),
    }


# ----------------------------------------------------------------------------
# Pure-JAX (XLA) reference, identical to the PyTorch module, for validation.
# ----------------------------------------------------------------------------
def tudui_reference(x_nchw, p):
    def conv(x, w, b):
        y = jax.lax.conv_general_dilated(
            x, w, window_strides=(1, 1), padding=((PAD, PAD), (PAD, PAD)),
            dimension_numbers=("NCHW", "OIHW", "NCHW"),
            precision=jax.lax.Precision.HIGHEST)
        return y + b[None, :, None, None]

    def pool(x):
        return jax.lax.reduce_window(x, -jnp.inf, jax.lax.max,
                                     (1, 1, 2, 2), (1, 1, 2, 2), "VALID")

    x = pool(conv(x_nchw, p["w1"], p["b1"]))
    x = pool(conv(x, p["w2"], p["b2"]))
    x = pool(conv(x, p["w3"], p["b3"]))
    x = x.reshape(x.shape[0], -1)
    x = jnp.dot(x, p["wl1"].T, precision=jax.lax.Precision.HIGHEST) + p["bl1"]
    return jnp.dot(x, p["wl2"].T, precision=jax.lax.Precision.HIGHEST) + p["bl2"]


if __name__ == "__main__":
    key = jax.random.PRNGKey(0)
    pkey, xkey = jax.random.split(key)
    torch_params = init_params(pkey)
    kernel_params = prepare_params(torch_params)

    # 32x32 spatial input is required so Flatten yields 64*4*4 = 1024 features.
    x = jax.random.normal(xkey, (2, 3, 32, 32), jnp.float32)

    out = jax.jit(tudui_forward)(x, kernel_params)
    out = jax.block_until_ready(out)
    assert out.shape == (2, 10) and out.dtype == jnp.float32

    ref = tudui_reference(x, torch_params)
    np.testing.assert_allclose(np.asarray(out), np.asarray(ref), rtol=2e-2, atol=2e-2)
    print("KERNEL_OK")
</pallas_src>

<mosaic_0001>
module attributes {stable_mosaic.version = 11 : i64} {
  func.func @_tudui_kernel(%arg0: i32, %arg1: memref<2x40x96xbf16, #tpu.memory_space<vmem>>, %arg2: memref<5x96x1024xbf16, #tpu.memory_space<vmem>>, %arg3: memref<1x1024xf32, #tpu.memory_space<vmem>>, %arg4: memref<5x512x512xbf16, #tpu.memory_space<vmem>>, %arg5: memref<1x512xf32, #tpu.memory_space<vmem>>, %arg6: memref<5x256x512xbf16, #tpu.memory_space<vmem>>, %arg7: memref<1x512xf32, #tpu.memory_space<vmem>>, %arg8: memref<1024x64xbf16, #tpu.memory_space<vmem>>, %arg9: memref<1x64xf32, #tpu.memory_space<vmem>>, %arg10: memref<64x10xbf16, #tpu.memory_space<vmem>>, %arg11: memref<1x10xf32, #tpu.memory_space<vmem>>, %arg12: memref<2x10xf32, #tpu.memory_space<vmem>>, %arg13: memref<2x24x512xbf16, #tpu.memory_space<vmem>>, %arg14: memref<2x16x256xbf16, #tpu.memory_space<vmem>>) attributes {dimension_semantics = [#tpu.dimension_semantics<parallel>], iteration_bounds = array<i64: 1>, scalar_prefetch = 0 : i64, scratch_operands = 2 : i64, tpu.core_type = #tpu.core_type<tc>, window_params = [{transform_indices = @transform_0, window_bounds = array<i64: 2, 40, 96>}, {pipeline_mode = #tpu.pipeline_mode<synchronous>, transform_indices = @transform_1, window_bounds = array<i64: 5, 96, 1024>}, {pipeline_mode = #tpu.pipeline_mode<synchronous>, transform_indices = @transform_2, window_bounds = array<i64: 1, 1024>}, {pipeline_mode = #tpu.pipeline_mode<synchronous>, transform_indices = @transform_3, window_bounds = array<i64: 5, 512, 512>}, {pipeline_mode = #tpu.pipeline_mode<synchronous>, transform_indices = @transform_4, window_bounds = array<i64: 1, 512>}, {pipeline_mode = #tpu.pipeline_mode<synchronous>, transform_indices = @transform_5, window_bounds = array<i64: 5, 256, 512>}, {pipeline_mode = #tpu.pipeline_mode<synchronous>, transform_indices = @transform_6, window_bounds = array<i64: 1, 512>}, {pipeline_mode = #tpu.pipeline_mode<synchronous>, transform_indices = @transform_7, window_bounds = array<i64: 1024, 64>}, {pipeline_mode = #tpu.pipeline_mode<synchronous>, transform_indices = @transform_8, window_bounds = array<i64: 1, 64>}, {pipeline_mode = #tpu.pipeline_mode<synchronous>, transform_indices = @transform_9, window_bounds = array<i64: 64, 10>}, {pipeline_mode = #tpu.pipeline_mode<synchronous>, transform_indices = @transform_10, window_bounds = array<i64: 1, 10>}, {transform_indices = @transform_11, window_bounds = array<i64: 2, 10>}]} {
    %cst = arith.constant 0.000000e+00 : f32
    %0 = vector.broadcast %cst : f32 to vector<64x1024xf32>
    %c0 = arith.constant 0 : index
    %c0_0 = arith.constant 0 : index
    %c0_1 = arith.constant 0 : index
    %1 = vector.load %arg1[%c0, %c0_0, %c0_1] : memref<2x40x96xbf16, #tpu.memory_space<vmem>>, vector<2x32x96xbf16>
    %2 = vector.shape_cast %1 : vector<2x32x96xbf16> to vector<64x96xbf16>
    %c0_2 = arith.constant 0 : index
    %c0_3 = arith.constant 0 : index
    %c0_4 = arith.constant 0 : index
    %3 = vector.load %arg2[%c0_2, %c0_3, %c0_4] : memref<5x96x1024xbf16, #tpu.memory_space<vmem>>, vector<1x96x1024xbf16>
    %4 = vector.shape_cast %3 : vector<1x96x1024xbf16> to vector<96x1024xbf16>
    %cst_5 = arith.constant dense<0.000000e+00> : vector<64x1024xf32>
    %5 = tpu.matmul %2, %4, %cst_5 {dimension_numbers = #tpu.dot_dimension_numbers<[1], [0], [0], [1], [0, 0, 1, 1], [], []>} : vector<64x96xbf16>, vector<96x1024xbf16>, vector<64x1024xf32> -> vector<64x1024xf32>
    %6 = arith.addf %0, %5 : vector<64x1024xf32>
    %c0_6 = arith.constant 0 : index
    %c1 = arith.constant 1 : index
    %c0_7 = arith.constant 0 : index
    %7 = vector.load %arg1[%c0_6, %c1, %c0_7] : memref<2x40x96xbf16, #tpu.memory_space<vmem>>, vector<2x32x96xbf16>
    %8 = vector.shape_cast %7 : vector<2x32x96xbf16> to vector<64x96xbf16>
    %c1_8 = arith.constant 1 : index
    %c0_9 = arith.constant 0 : index
    %c0_10 = arith.constant 0 : index
    %9 = vector.load %arg2[%c1_8, %c0_9, %c0_10] : memref<5x96x1024xbf16, #tpu.memory_space<vmem>>, vector<1x96x1024xbf16>
    %10 = vector.shape_cast %9 : vector<1x96x1024xbf16> to vector<96x1024xbf16>
    %cst_11 = arith.constant dense<0.000000e+00> : vector<64x1024xf32>
    %11 = tpu.matmul %8, %10, %cst_11 {dimension_numbers = #tpu.dot_dimension_numbers<[1], [0], [0], [1], [0, 0, 1, 1], [], []>} : vector<64x96xbf16>, vector<96x1024xbf16>, vector<64x1024xf32> -> vector<64x1024xf32>
    %12 = arith.addf %6, %11 : vector<64x1024xf32>
    %c0_12 = arith.constant 0 : index
    %c2 = arith.constant 2 : index
    %c0_13 = arith.constant 0 : index
    %13 = vector.load %arg1[%c0_12, %c2, %c0_13] : memref<2x40x96xbf16, #tpu.memory_space<vmem>>, vector<2x32x96xbf16>
    %14 = vector.shape_cast %13 : vector<2x32x96xbf16> to vector<64x96xbf16>
    %c2_14 = arith.constant 2 : index
    %c0_15 = arith.constant 0 : index
    %c0_16 = arith.constant 0 : index
    %15 = vector.load %arg2[%c2_14, %c0_15, %c0_16] : memref<5x96x1024xbf16, #tpu.memory_space<vmem>>, vector<1x96x1024xbf16>
    %16 = vector.shape_cast %15 : vector<1x96x1024xbf16> to vector<96x1024xbf16>
    %cst_17 = arith.constant dense<0.000000e+00> : vector<64x1024xf32>
    %17 = tpu.matmul %14, %16, %cst_17 {dimension_numbers = #tpu.dot_dimension_numbers<[1], [0], [0], [1], [0, 0, 1, 1], [], []>} : vector<64x96xbf16>, vector<96x1024xbf16>, vector<64x1024xf32> -> vector<64x1024xf32>
    %18 = arith.addf %12, %17 : vector<64x1024xf32>
    %c0_18 = arith.constant 0 : index
    %c3 = arith.constant 3 : index
    %c0_19 = arith.constant 0 : index
    %19 = vector.load %arg1[%c0_18, %c3, %c0_19] : memref<2x40x96xbf16, #tpu.memory_space<vmem>>, vector<2x32x96xbf16>
    %20 = vector.shape_cast %19 : vector<2x32x96xbf16> to vector<64x96xbf16>
    %c3_20 = arith.constant 3 : index
    %c0_21 = arith.constant 0 : index
    %c0_22 = arith.constant 0 : index
    %21 = vector.load %arg2[%c3_20, %c0_21, %c0_22] : memref<5x96x1024xbf16, #tpu.memory_space<vmem>>, vector<1x96x1024xbf16>
    %22 = vector.shape_cast %21 : vector<1x96x1024xbf16> to vector<96x1024xbf16>
    %cst_23 = arith.constant dense<0.000000e+00> : vector<64x1024xf32>
    %23 = tpu.matmul %20, %22, %cst_23 {dimension_numbers = #tpu.dot_dimension_numbers<[1], [0], [0], [1], [0, 0, 1, 1], [], []>} : vector<64x96xbf16>, vector<96x1024xbf16>, vector<64x1024xf32> -> vector<64x1024xf32>
    %24 = arith.addf %18, %23 : vector<64x1024xf32>
    %c0_24 = arith.constant 0 : index
    %c4 = arith.constant 4 : index
    %c0_25 = arith.constant 0 : index
    %25 = vector.load %arg1[%c0_24, %c4, %c0_25] : memref<2x40x96xbf16, #tpu.memory_space<vmem>>, vector<2x32x96xbf16>
    %26 = vector.shape_cast %25 : vector<2x32x96xbf16> to vector<64x96xbf16>
    %c4_26 = arith.constant 4 : index
    %c0_27 = arith.constant 0 : index
    %c0_28 = arith.constant 0 : index
    %27 = vector.load %arg2[%c4_26, %c0_27, %c0_28] : memref<5x96x1024xbf16, #tpu.memory_space<vmem>>, vector<1x96x1024xbf16>
    %28 = vector.shape_cast %27 : vector<1x96x1024xbf16> to vector<96x1024xbf16>
    %cst_29 = arith.constant dense<0.000000e+00> : vector<64x1024xf32>
    %29 = tpu.matmul %26, %28, %cst_29 {dimension_numbers = #tpu.dot_dimension_numbers<[1], [0], [0], [1], [0, 0, 1, 1], [], []>} : vector<64x96xbf16>, vector<96x1024xbf16>, vector<64x1024xf32> -> vector<64x1024xf32>
    %30 = arith.addf %24, %29 : vector<64x1024xf32>
    %c0_30 = arith.constant 0 : index
    %c0_31 = arith.constant 0 : index
    %31 = vector.load %arg3[%c0_30, %c0_31] : memref<1x1024xf32, #tpu.memory_space<vmem>>, vector<1x1024xf32>
    %32 = vector.broadcast %31 : vector<1x1024xf32> to vector<64x1024xf32>
    %33 = arith.addf %30, %32 : vector<64x1024xf32>
    %34 = vector.extract_strided_slice %33 {offsets = [0, 0], sizes = [64, 512], strides = [1, 1]} : vector<64x1024xf32> to vector<64x512xf32>
    %35 = vector.extract_strided_slice %33 {offsets = [0, 512], sizes = [64, 512], strides = [1, 1]} : vector<64x1024xf32> to vector<64x512xf32>
    %36 = arith.maximumf %34, %35 : vector<64x512xf32>
    %37 = vector.shape_cast %36 : vector<64x512xf32> to vector<32x1024xf32>
    %38 = vector.extract_strided_slice %37 {offsets = [0, 0], sizes = [32, 512], strides = [1, 1]} : vector<32x1024xf32> to vector<32x512xf32>
    %39 = vector.extract_strided_slice %37 {offsets = [0, 512], sizes = [32, 512], strides = [1, 1]} : vector<32x1024xf32> to vector<32x512xf32>
    %40 = arith.maximumf %38, %39 : vector<32x512xf32>
    %41 = vector.shape_cast %40 : vector<32x512xf32> to vector<2x16x512xf32>
    %cst_32 = arith.constant 0.000000e+00 : bf16
    %42 = vector.broadcast %cst_32 : bf16 to vector<2x2x512xbf16>
    %c0_33 = arith.constant 0 : index
    %c0_34 = arith.constant 0 : index
    %c0_35 = arith.constant 0 : index
    %43 = vector.load %arg13[%c0_33, %c0_34, %c0_35] : memref<2x24x512xbf16, #tpu.memory_space<vmem>>, vector<2x2x512xbf16>
    tpu.vector_store %arg13[%c0_33, %c0_34, %c0_35], %42 {strides = array<i32>} : memref<2x24x512xbf16, #tpu.memory_space<vmem>>, vector<2x2x512xbf16>,
    %c0_36 = arith.constant 0 : index
    %c18 = arith.constant 18 : index
    %c0_37 = arith.constant 0 : index
    %44 = vector.load %arg13[%c0_36, %c18, %c0_37] : memref<2x24x512xbf16, #tpu.memory_space<vmem>>, vector<2x2x512xbf16>
    tpu.vector_store %arg13[%c0_36, %c18, %c0_37], %42 {strides = array<i32>} : memref<2x24x512xbf16, #tpu.memory_space<vmem>>, vector<2x2x512xbf16>,
    %45 = arith.truncf %41 : vector<2x16x512xf32> to vector<2x16x512xbf16>
    %c0_38 = arith.constant 0 : index
    %c2_39 = arith.constant 2 : index
    %c0_40 = arith.constant 0 : index
    %46 = vector.load %arg13[%c0_38, %c2_39, %c0_40] : memref<2x24x512xbf16, #tpu.memory_space<vmem>>, vector<2x16x512xbf16>
    tpu.vector_store %arg13[%c0_38, %c2_39, %c0_40], %45 {strides = array<i32>} : memref<2x24x512xbf16, #tpu.memory_space<vmem>>, vector<2x16x512xbf16>,
    %cst_41 = arith.constant 0.000000e+00 : f32
    %47 = vector.broadcast %cst_41 : f32 to vector<32x512xf32>
    %c0_42 = arith.constant 0 : index
    %c0_43 = arith.constant 0 : index
    %c0_44 = arith.constant 0 : index
    %48 = vector.load %arg13[%c0_42, %c0_43, %c0_44] : memref<2x24x512xbf16, #tpu.memory_space<vmem>>, vector<2x16x512xbf16>
    %49 = vector.shape_cast %48 : vector<2x16x512xbf16> to vector<32x512xbf16>
    %c0_45 = arith.constant 0 : index
    %c0_46 = arith.constant 0 : index
    %c0_47 = arith.constant 0 : index
    %50 = vector.load %arg4[%c0_45, %c0_46, %c0_47] : memref<5x512x512xbf16, #tpu.memory_space<vmem>>, vector<1x512x512xbf16>
    %51 = vector.shape_cast %50 : vector<1x512x512xbf16> to vector<512x512xbf16>
    %cst_48 = arith.constant dense<0.000000e+00> : vector<32x512xf32>
    %52 = tpu.matmul %49, %51, %cst_48 {dimension_numbers = #tpu.dot_dimension_numbers<[1], [0], [0], [1], [0, 0, 1, 1], [], []>} : vector<32x512xbf16>, vector<512x512xbf16>, vector<32x512xf32> -> vector<32x512xf32>
    %53 = arith.addf %47, %52 : vector<32x512xf32>
    %c0_49 = arith.constant 0 : index
    %c1_50 = arith.constant 1 : index
    %c0_51 = arith.constant 0 : index
    %54 = vector.load %arg13[%c0_49, %c1_50, %c0_51] : memref<2x24x512xbf16, #tpu.memory_space<vmem>>, vector<2x16x512xbf16>
    %55 = vector.shape_cast %54 : vector<2x16x512xbf16> to vector<32x512xbf16>
    %c1_52 = arith.constant 1 : index
    %c0_53 = arith.constant 0 : index
    %c0_54 = arith.constant 0 : index
    %56 = vector.load %arg4[%c1_52, %c0_53, %c0_54] : memref<5x512x512xbf16, #tpu.memory_space<vmem>>, vector<1x512x512xbf16>
    %57 = vector.shape_cast %56 : vector<1x512x512xbf16> to vector<512x512xbf16>
    %cst_55 = arith.constant dense<0.000000e+00> : vector<32x512xf32>
    %58 = tpu.matmul %55, %57, %cst_55 {dimension_numbers = #tpu.dot_dimension_numbers<[1], [0], [0], [1], [0, 0, 1, 1], [], []>} : vector<32x512xbf16>, vector<512x512xbf16>, vector<32x512xf32> -> vector<32x512xf32>
    %59 = arith.addf %53, %58 : vector<32x512xf32>
    %c0_56 = arith.constant 0 : index
    %c2_57 = arith.constant 2 : index
    %c0_58 = arith.constant 0 : index
    %60 = vector.load %arg13[%c0_56, %c2_57, %c0_58] : memref<2x24x512xbf16, #tpu.memory_space<vmem>>, vector<2x16x512xbf16>
    %61 = vector.shape_cast %60 : vector<2x16x512xbf16> to vector<32x512xbf16>
    %c2_59 = arith.constant 2 : index
    %c0_60 = arith.constant 0 : index
    %c0_61 = arith.constant 0 : index
    %62 = vector.load %arg4[%c2_59, %c0_60, %c0_61] : memref<5x512x512xbf16, #tpu.memory_space<vmem>>, vector<1x512x512xbf16>
    %63 = vector.shape_cast %62 : vector<1x512x512xbf16> to vector<512x512xbf16>
    %cst_62 = arith.constant dense<0.000000e+00> : vector<32x512xf32>
    %64 = tpu.matmul %61, %63, %cst_62 {dimension_numbers = #tpu.dot_dimension_numbers<[1], [0], [0], [1], [0, 0, 1, 1], [], []>} : vector<32x512xbf16>, vector<512x512xbf16>, vector<32x512xf32> -> vector<32x512xf32>
    %65 = arith.addf %59, %64 : vector<32x512xf32>
    %c0_63 = arith.constant 0 : index
    %c3_64 = arith.constant 3 : index
    %c0_65 = arith.constant 0 : index
    %66 = vector.load %arg13[%c0_63, %c3_64, %c0_65] : memref<2x24x512xbf16, #tpu.memory_space<vmem>>, vector<2x16x512xbf16>
    %67 = vector.shape_cast %66 : vector<2x16x512xbf16> to vector<32x512xbf16>
    %c3_66 = arith.constant 3 : index
    %c0_67 = arith.constant 0 : index
    %c0_68 = arith.constant 0 : index
    %68 = vector.load %arg4[%c3_66, %c0_67, %c0_68] : memref<5x512x512xbf16, #tpu.memory_space<vmem>>, vector<1x512x512xbf16>
    %69 = vector.shape_cast %68 : vector<1x512x512xbf16> to vector<512x512xbf16>
    %cst_69 = arith.constant dense<0.000000e+00> : vector<32x512xf32>
    %70 = tpu.matmul %67, %69, %cst_69 {dimension_numbers = #tpu.dot_dimension_numbers<[1], [0], [0], [1], [0, 0, 1, 1], [], []>} : vector<32x512xbf16>, vector<512x512xbf16>, vector<32x512xf32> -> vector<32x512xf32>
    %71 = arith.addf %65, %70 : vector<32x512xf32>
    %c0_70 = arith.constant 0 : index
    %c4_71 = arith.constant 4 : index
    %c0_72 = arith.constant 0 : index
    %72 = vector.load %arg13[%c0_70, %c4_71, %c0_72] : memref<2x24x512xbf16, #tpu.memory_space<vmem>>, vector<2x16x512xbf16>
    %73 = vector.shape_cast %72 : vector<2x16x512xbf16> to vector<32x512xbf16>
    %c4_73 = arith.constant 4 : index
    %c0_74 = arith.constant 0 : index
    %c0_75 = arith.constant 0 : index
    %74 = vector.load %arg4[%c4_73, %c0_74, %c0_75] : memref<5x512x512xbf16, #tpu.memory_space<vmem>>, vector<1x512x512xbf16>
    %75 = vector.shape_cast %74 : vector<1x512x512xbf16> to vector<512x512xbf16>
    %cst_76 = arith.constant dense<0.000000e+00> : vector<32x512xf32>
    %76 = tpu.matmul %73, %75, %cst_76 {dimension_numbers = #tpu.dot_dimension_numbers<[1], [0], [0], [1], [0, 0, 1, 1], [], []>} : vector<32x512xbf16>, vector<512x512xbf16>, vector<32x512xf32> -> vector<32x512xf32>
    %77 = arith.addf %71, %76 : vector<32x512xf32>
    %c0_77 = arith.constant 0 : index
    %c0_78 = arith.constant 0 : index
    %78 = vector.load %arg5[%c0_77, %c0_78] : memref<1x512xf32, #tpu.memory_space<vmem>>, vector<1x512xf32>
    %79 = vector.broadcast %78 : vector<1x512xf32> to vector<32x512xf32>
    %80 = arith.addf %77, %79 : vector<32x512xf32>
    %81 = vector.extract_strided_slice %80 {offsets = [0, 0], sizes = [32, 256], strides = [1, 1]} : vector<32x512xf32> to vector<32x256xf32>
    %82 = vector.extract_strided_slice %80 {offsets = [0, 256], sizes = [32, 256], strides = [1, 1]} : vector<32x512xf32> to vector<32x256xf32>
    %83 = arith.maximumf %81, %82 : vector<32x256xf32>
    %84 = vector.shape_cast %83 : vector<32x256xf32> to vector<16x512xf32>
    %85 = vector.extract_strided_slice %84 {offsets = [0, 0], sizes = [16, 256], strides = [1, 1]} : vector<16x512xf32> to vector<16x256xf32>
    %86 = vector.extract_strided_slice %84 {offsets = [0, 256], sizes = [16, 256], strides = [1, 1]} : vector<16x512xf32> to vector<16x256xf32>
    %87 = arith.maximumf %85, %86 : vector<16x256xf32>
    %88 = vector.shape_cast %87 : vector<16x256xf32> to vector<2x8x256xf32>
    %cst_79 = arith.constant 0.000000e+00 : bf16
    %89 = vector.broadcast %cst_79 : bf16 to vector<2x2x256xbf16>
    %c0_80 = arith.constant 0 : index
    %c0_81 = arith.constant 0 : index
    %c0_82 = arith.constant 0 : index
    %90 = vector.load %arg14[%c0_80, %c0_81, %c0_82] : memref<2x16x256xbf16, #tpu.memory_space<vmem>>, vector<2x2x256xbf16>
    tpu.vector_store %arg14[%c0_80, %c0_81, %c0_82], %89 {strides = array<i32>} : memref<2x16x256xbf16, #tpu.memory_space<vmem>>, vector<2x2x256xbf16>,
    %c0_83 = arith.constant 0 : index
    %c10 = arith.constant 10 : index
    %c0_84 = arith.constant 0 : index
    %91 = vector.load %arg14[%c0_83, %c10, %c0_84] : memref<2x16x256xbf16, #tpu.memory_space<vmem>>, vector<2x2x256xbf16>
    tpu.vector_store %arg14[%c0_83, %c10, %c0_84], %89 {strides = array<i32>} : memref<2x16x256xbf16, #tpu.memory_space<vmem>>, vector<2x2x256xbf16>,
    %92 = arith.truncf %88 : vector<2x8x256xf32> to vector<2x8x256xbf16>
    %c0_85 = arith.constant 0 : index
    %c2_86 = arith.constant 2 : index
    %c0_87 = arith.constant 0 : index
    %93 = vector.load %arg14[%c0_85, %c2_86, %c0_87] : memref<2x16x256xbf16, #tpu.memory_space<vmem>>, vector<2x8x256xbf16>
    tpu.vector_store %arg14[%c0_85, %c2_86, %c0_87], %92 {strides = array<i32>} : memref<2x16x256xbf16, #tpu.memory_space<vmem>>, vector<2x8x256xbf16>,
    %cst_88 = arith.constant 0.000000e+00 : f32
    %94 = vector.broadcast %cst_88 : f32 to vector<16x512xf32>
    %c0_89 = arith.constant 0 : index
    %c0_90 = arith.constant 0 : index
    %c0_91 = arith.constant 0 : index
    %95 = vector.load %arg14[%c0_89, %c0_90, %c0_91] : memref<2x16x256xbf16, #tpu.memory_space<vmem>>, vector<2x8x256xbf16>
    %96 = vector.shape_cast %95 : vector<2x8x256xbf16> to vector<16x256xbf16>
    %c0_92 = arith.constant 0 : index
    %c0_93 = arith.constant 0 : index
    %c0_94 = arith.constant 0 : index
    %97 = vector.load %arg6[%c0_92, %c0_93, %c0_94] : memref<5x256x512xbf16, #tpu.memory_space<vmem>>, vector<1x256x512xbf16>
    %98 = vector.shape_cast %97 : vector<1x256x512xbf16> to vector<256x512xbf16>
    %cst_95 = arith.constant dense<0.000000e+00> : vector<16x512xf32>
    %99 = tpu.matmul %96, %98, %cst_95 {dimension_numbers = #tpu.dot_dimension_numbers<[1], [0], [0], [1], [0, 0, 1, 1], [], []>} : vector<16x256xbf16>, vector<256x512xbf16>, vector<16x512xf32> -> vector<16x512xf32>
    %100 = arith.addf %94, %99 : vector<16x512xf32>
    %c0_96 = arith.constant 0 : index
    %c1_97 = arith.constant 1 : index
    %c0_98 = arith.constant 0 : index
    %101 = vector.load %arg14[%c0_96, %c1_97, %c0_98] : memref<2x16x256xbf16, #tpu.memory_space<vmem>>, vector<2x8x256xbf16>
    %102 = vector.shape_cast %101 : vector<2x8x256xbf16> to vector<16x256xbf16>
    %c1_99 = arith.constant 1 : index
    %c0_100 = arith.constant 0 : index
    %c0_101 = arith.constant 0 : index
    %103 = vector.load %arg6[%c1_99, %c0_100, %c0_101] : memref<5x256x512xbf16, #tpu.memory_space<vmem>>, vector<1x256x512xbf16>
    %104 = vector.shape_cast %103 : vector<1x256x512xbf16> to vector<256x512xbf16>
    %cst_102 = arith.constant dense<0.000000e+00> : vector<16x512xf32>
    %105 = tpu.matmul %102, %104, %cst_102 {dimension_numbers = #tpu.dot_dimension_numbers<[1], [0], [0], [1], [0, 0, 1, 1], [], []>} : vector<16x256xbf16>, vector<256x512xbf16>, vector<16x512xf32> -> vector<16x512xf32>
    %106 = arith.addf %100, %105 : vector<16x512xf32>
    %c0_103 = arith.constant 0 : index
    %c2_104 = arith.constant 2 : index
    %c0_105 = arith.constant 0 : index
    %107 = vector.load %arg14[%c0_103, %c2_104, %c0_105] : memref<2x16x256xbf16, #tpu.memory_space<vmem>>, vector<2x8x256xbf16>
    %108 = vector.shape_cast %107 : vector<2x8x256xbf16> to vector<16x256xbf16>
    %c2_106 = arith.constant 2 : index
    %c0_107 = arith.constant 0 : index
    %c0_108 = arith.constant 0 : index
    %109 = vector.load %arg6[%c2_106, %c0_107, %c0_108] : memref<5x256x512xbf16, #tpu.memory_space<vmem>>, vector<1x256x512xbf16>
    %110 = vector.shape_cast %109 : vector<1x256x512xbf16> to vector<256x512xbf16>
    %cst_109 = arith.constant dense<0.000000e+00> : vector<16x512xf32>
    %111 = tpu.matmul %108, %110, %cst_109 {dimension_numbers = #tpu.dot_dimension_numbers<[1], [0], [0], [1], [0, 0, 1, 1], [], []>} : vector<16x256xbf16>, vector<256x512xbf16>, vector<16x512xf32> -> vector<16x512xf32>
    %112 = arith.addf %106, %111 : vector<16x512xf32>
    %c0_110 = arith.constant 0 : index
    %c3_111 = arith.constant 3 : index
    %c0_112 = arith.constant 0 : index
    %113 = vector.load %arg14[%c0_110, %c3_111, %c0_112] : memref<2x16x256xbf16, #tpu.memory_space<vmem>>, vector<2x8x256xbf16>
    %114 = vector.shape_cast %113 : vector<2x8x256xbf16> to vector<16x256xbf16>
    %c3_113 = arith.constant 3 : index
    %c0_114 = arith.constant 0 : index
    %c0_115 = arith.constant 0 : index
    %115 = vector.load %arg6[%c3_113, %c0_114, %c0_115] : memref<5x256x512xbf16, #tpu.memory_space<vmem>>, vector<1x256x512xbf16>
    %116 = vector.shape_cast %115 : vector<1x256x512xbf16> to vector<256x512xbf16>
    %cst_116 = arith.constant dense<0.000000e+00> : vector<16x512xf32>
    %117 = tpu.matmul %114, %116, %cst_116 {dimension_numbers = #tpu.dot_dimension_numbers<[1], [0], [0], [1], [0, 0, 1, 1], [], []>} : vector<16x256xbf16>, vector<256x512xbf16>, vector<16x512xf32> -> vector<16x512xf32>
    %118 = arith.addf %112, %117 : vector<16x512xf32>
    %c0_117 = arith.constant 0 : index
    %c4_118 = arith.constant 4 : index
    %c0_119 = arith.constant 0 : index
    %119 = vector.load %arg14[%c0_117, %c4_118, %c0_119] : memref<2x16x256xbf16, #tpu.memory_space<vmem>>, vector<2x8x256xbf16>
    %120 = vector.shape_cast %119 : vector<2x8x256xbf16> to vector<16x256xbf16>
    %c4_120 = arith.constant 4 : index
    %c0_121 = arith.constant 0 : index
    %c0_122 = arith.constant 0 : index
    %121 = vector.load %arg6[%c4_120, %c0_121, %c0_122] : memref<5x256x512xbf16, #tpu.memory_space<vmem>>, vector<1x256x512xbf16>
    %122 = vector.shape_cast %121 : vector<1x256x512xbf16> to vector<256x512xbf16>
    %cst_123 = arith.constant dense<0.000000e+00> : vector<16x512xf32>
    %123 = tpu.matmul %120, %122, %cst_123 {dimension_numbers = #tpu.dot_dimension_numbers<[1], [0], [0], [1], [0, 0, 1, 1], [], []>} : vector<16x256xbf16>, vector<256x512xbf16>, vector<16x512xf32> -> vector<16x512xf32>
    %124 = arith.addf %118, %123 : vector<16x512xf32>
    %c0_124 = arith.constant 0 : index
    %c0_125 = arith.constant 0 : index
    %125 = vector.load %arg7[%c0_124, %c0_125] : memref<1x512xf32, #tpu.memory_space<vmem>>, vector<1x512xf32>
    %126 = vector.broadcast %125 : vector<1x512xf32> to vector<16x512xf32>
    %127 = arith.addf %124, %126 : vector<16x512xf32>
    %128 = vector.extract_strided_slice %127 {offsets = [0, 0], sizes = [16, 256], strides = [1, 1]} : vector<16x512xf32> to vector<16x256xf32>
    %129 = vector.extract_strided_slice %127 {offsets = [0, 256], sizes = [16, 256], strides = [1, 1]} : vector<16x512xf32> to vector<16x256xf32>
    %130 = arith.maximumf %128, %129 : vector<16x256xf32>
    %131 = vector.shape_cast %130 : vector<16x256xf32> to vector<8x512xf32>
    %132 = vector.extract_strided_slice %131 {offsets = [0, 0], sizes = [8, 256], strides = [1, 1]} : vector<8x512xf32> to vector<8x256xf32>
    %133 = vector.extract_strided_slice %131 {offsets = [0, 256], sizes = [8, 256], strides = [1, 1]} : vector<8x512xf32> to vector<8x256xf32>
    %134 = arith.maximumf %132, %133 : vector<8x256xf32>
    %135 = vector.shape_cast %134 : vector<8x256xf32> to vector<2x4x256xf32>
    %136 = vector.shape_cast %135 : vector<2x4x256xf32> to vector<2x1024xf32>
    %137 = arith.truncf %136 : vector<2x1024xf32> to vector<2x1024xbf16>
    %c0_126 = arith.constant 0 : index
    %c0_127 = arith.constant 0 : index
    %138 = vector.load %arg8[%c0_126, %c0_127] : memref<1024x64xbf16, #tpu.memory_space<vmem>>, vector<1024x64xbf16>
    %cst_128 = arith.constant dense<0.000000e+00> : vector<2x64xf32>
    %139 = tpu.matmul %137, %138, %cst_128 {dimension_numbers = #tpu.dot_dimension_numbers<[1], [0], [0], [1], [0, 0, 1, 1], [], []>} : vector<2x1024xbf16>, vector<1024x64xbf16>, vector<2x64xf32> -> vector<2x64xf32>
    %c0_129 = arith.constant 0 : index
    %c0_130 = arith.constant 0 : index
    %140 = vector.load %arg9[%c0_129, %c0_130] : memref<1x64xf32, #tpu.memory_space<vmem>>, vector<1x64xf32>
    %141 = vector.broadcast %140 : vector<1x64xf32> to vector<2x64xf32>
    %142 = arith.addf %139, %141 : vector<2x64xf32>
    %143 = arith.truncf %142 : vector<2x64xf32> to vector<2x64xbf16>
    %c0_131 = arith.constant 0 : index
    %c0_132 = arith.constant 0 : index
    %144 = vector.load %arg10[%c0_131, %c0_132] : memref<64x10xbf16, #tpu.memory_space<vmem>>, vector<64x10xbf16>
    %cst_133 = arith.constant dense<0.000000e+00> : vector<2x10xf32>
    %145 = tpu.matmul %143, %144, %cst_133 {dimension_numbers = #tpu.dot_dimension_numbers<[1], [0], [0], [1], [0, 0, 1, 1], [], []>} : vector<2x64xbf16>, vector<64x10xbf16>, vector<2x10xf32> -> vector<2x10xf32>
    %c0_134 = arith.constant 0 : index
    %c0_135 = arith.constant 0 : index
    %146 = vector.load %arg11[%c0_134, %c0_135] : memref<1x10xf32, #tpu.memory_space<vmem>>, vector<1x10xf32>
    %147 = vector.broadcast %146 : vector<1x10xf32> to vector<2x10xf32>
    %148 = arith.addf %145, %147 : vector<2x10xf32>
    %c0_136 = arith.constant 0 : index
    %c0_137 = arith.constant 0 : index
    %149 = vector.load %arg12[%c0_136, %c0_137] : memref<2x10xf32, #tpu.memory_space<vmem>>, vector<2x10xf32>
    tpu.vector_store %arg12[%c0_136, %c0_137], %148 {strides = array<i32>} : memref<2x10xf32, #tpu.memory_space<vmem>>, vector<2x10xf32>,
    return
  }
  func.func @transform_0(%arg0: i32) -> (i32, i32, i32) {
    %c0_i32 = arith.constant 0 : i32
    %c0_i32_0 = arith.constant 0 : i32
    %c0_i32_1 = arith.constant 0 : i32
    return %arg0, %c0_i32, %c0_i32_0 : i32, i32, i32
  }
  func.func @transform_1(%arg0: i32) -> (i32, i32, i32) {
    %c0_i32 = arith.constant 0 : i32
    %c0_i32_0 = arith.constant 0 : i32
    %c0_i32_1 = arith.constant 0 : i32
    %c0_i32_2 = arith.constant 0 : i32
    return %c0_i32, %c0_i32_0, %c0_i32_1 : i32, i32, i32
  }
  func.func @transform_2(%arg0: i32) -> (i32, i32) {
    %c0_i32 = arith.constant 0 : i32
    %c0_i32_0 = arith.constant 0 : i32
    %c0_i32_1 = arith.constant 0 : i32
    return %c0_i32, %c0_i32_0 : i32, i32
  }
  func.func @transform_3(%arg0: i32) -> (i32, i32, i32) {
    %c0_i32 = arith.constant 0 : i32
    %c0_i32_0 = arith.constant 0 : i32
    %c0_i32_1 = arith.constant 0 : i32
    %c0_i32_2 = arith.constant 0 : i32
    return %c0_i32, %c0_i32_0, %c0_i32_1 : i32, i32, i32
  }
  func.func @transform_4(%arg0: i32) -> (i32, i32) {
    %c0_i32 = arith.constant 0 : i32
    %c0_i32_0 = arith.constant 0 : i32
    %c0_i32_1 = arith.constant 0 : i32
    return %c0_i32, %c0_i32_0 : i32, i32
  }
  func.func @transform_5(%arg0: i32) -> (i32, i32, i32) {
    %c0_i32 = arith.constant 0 : i32
    %c0_i32_0 = arith.constant 0 : i32
    %c0_i32_1 = arith.constant 0 : i32
    %c0_i32_2 = arith.constant 0 : i32
    return %c0_i32, %c0_i32_0, %c0_i32_1 : i32, i32, i32
  }
  func.func @transform_6(%arg0: i32) -> (i32, i32) {
    %c0_i32 = arith.constant 0 : i32
    %c0_i32_0 = arith.constant 0 : i32
    %c0_i32_1 = arith.constant 0 : i32
    return %c0_i32, %c0_i32_0 : i32, i32
  }
  func.func @transform_7(%arg0: i32) -> (i32, i32) {
    %c0_i32 = arith.constant 0 : i32
    %c0_i32_0 = arith.constant 0 : i32
    %c0_i32_1 = arith.constant 0 : i32
    return %c0_i32, %c0_i32_0 : i32, i32
  }
  func.func @transform_8(%arg0: i32) -> (i32, i32) {
    %c0_i32 = arith.constant 0 : i32
    %c0_i32_0 = arith.constant 0 : i32
    %c0_i32_1 = arith.constant 0 : i32
    return %c0_i32, %c0_i32_0 : i32, i32
  }
  func.func @transform_9(%arg0: i32) -> (i32, i32) {
    %c0_i32 = arith.constant 0 : i32
    %c0_i32_0 = arith.constant 0 : i32
    %c0_i32_1 = arith.constant 0 : i32
    return %c0_i32, %c0_i32_0 : i32, i32
  }
  func.func @transform_10(%arg0: i32) -> (i32, i32) {
    %c0_i32 = arith.constant 0 : i32
    %c0_i32_0 = arith.constant 0 : i32
    %c0_i32_1 = arith.constant 0 : i32
    return %c0_i32, %c0_i32_0 : i32, i32
  }
  func.func @transform_11(%arg0: i32) -> (i32, i32) {
    %c0_i32 = arith.constant 0 : i32
    %c0_i32_0 = arith.constant 0 : i32
    return %arg0, %c0_i32 : i32, i32
  }
}

</mosaic_0001>

<llo_original>
// kernel: tudui_forward.1
$region0: #{tudui_forward.1}
  #allocation0 [shape = 'u32[]', space=smem, size = 0x4, offset = 0x4, fixed_abs, tag = 'smem constant byte address 0x4 - core index']
  #allocation1 [shape = 'u32[72,128]{1,0:T(1,128)}', space=vmem, size = 0x9000, scoped, tag = 'internal scratch']
  #allocation2 [shape = 'bf16[2,24,512]{2,1,0:T(8,128)(2,1)}', space=vmem, size = 0xc000, scoped, tag = 'scratch operand']
  #allocation3 [shape = 'bf16[2,16,256]{2,1,0:T(8,128)(2,1)}', space=vmem, size = 0x4000, scoped, tag = 'scratch operand']
  %s0 = inlined_call_operand.vmem [shape: bf16[2,40,96], index: 0, kind: input, shape index: {}]
  %s1 = inlined_call_operand.hbm [shape: bf16[5,96,1024], index: 1, kind: input, shape index: {}]
  %s2 = inlined_call_operand.hbm [shape: f32[1,1024], index: 2, kind: input, shape index: {}]
  %s3 = inlined_call_operand.hbm [shape: bf16[5,512,512], index: 3, kind: input, shape index: {}]
  %s4 = inlined_call_operand.hbm [shape: f32[1,512], index: 4, kind: input, shape index: {}]
  %s5 = inlined_call_operand.hbm [shape: bf16[5,256,512], index: 5, kind: input, shape index: {}]
  %s6 = inlined_call_operand.hbm [shape: f32[1,512], index: 6, kind: input, shape index: {}]
  %s7 = inlined_call_operand.vmem [shape: bf16[1024,64], index: 7, kind: input, shape index: {}]
  %s8 = inlined_call_operand.hbm [shape: f32[1,64], index: 8, kind: input, shape index: {}]
  %s9 = inlined_call_operand.vmem [shape: bf16[64,10], index: 9, kind: input, shape index: {}]
  %s10 = inlined_call_operand.hbm [shape: f32[1,10], index: 10, kind: input, shape index: {}]
  %s11 = inlined_call_operand.hbm [shape: f32[2,10], index: 11, kind: output, shape index: {}]
  %s12 = sld [smem:[#allocation0]]
  $region86: #{tudui_forward.1} parent=0
    _
  %s14 = ssub.s32 1, %s12
  %s15 = scalar_select 0, %s14, %s12
  $region1: #{tudui_forward.1} parent=0
    #allocation4 [shape = 'u8[983040]{0}', space=vmem, size = 0xf0000, scoped, tag = 'input window, operand 1, single buffered']
    #allocation5 [shape = 's32[1]{0}', space=sflag, size = 0x4, scoped, tag = 'scoped memory for tudui_forward.1']
    #allocation6 [shape = 's32[1]{0}', space=sflag, size = 0x4, scoped, tag = 'scoped memory for tudui_forward.1']
    #allocation7 [shape = 'u8[4096]{0}', space=vmem, size = 0x1000, scoped, tag = 'input window, operand 2, single buffered']
    #allocation8 [shape = 's32[1]{0}', space=sflag, size = 0x4, scoped, tag = 'scoped memory for tudui_forward.1']
    #allocation9 [shape = 'u8[2621440]{0}', space=vmem, size = 0x280000, scoped, tag = 'input window, operand 3, single buffered']
    #allocation10 [shape = 'u8[2048]{0}', space=vmem, size = 0x800, scoped, tag = 'input window, operand 4, single buffered']
    #allocation11 [shape = 's32[1]{0}', space=sflag, size = 0x4, scoped, tag = 'scoped memory for tudui_forward.1']
    #allocation12 [shape = 'u8[1310720]{0}', space=vmem, size = 0x140000, scoped, tag = 'input window, operand 5, single buffered']
    #allocation13 [shape = 'u8[2048]{0}', space=vmem, size = 0x800, scoped, tag = 'input window, operand 6, single buffered']
    #allocation14 [shape = 's32[1]{0}', space=sflag, size = 0x4, scoped, tag = 'scoped memory for tudui_forward.1']
    #allocation15 [shape = 'u8[512]{0}', space=vmem, size = 0x400, scoped, tag = 'input window, operand 8, single buffered']
    #allocation16 [shape = 'u8[512]{0}', space=vmem, size = 0x400, scoped, tag = 'input window, operand 10, single buffered']
    #allocation17 [shape = 's32[1]{0}', space=sflag, size = 0x4, scoped, tag = 'scoped memory for tudui_forward.1']
    #allocation18 [shape = 'u8[1024]{0}', space=vmem, size = 0x400, scoped, tag = 'output window, operand 0, single buffered']
    %16 = vsyncpa [#allocation5], 0
    %17 = vsyncpa [#allocation8], 0
    %18 = vsyncpa [#allocation11], 0
    %19 = vsyncpa [#allocation14], 0
    %20 = vsyncpa [#allocation17], 0
    %21 = vsyncpa [#allocation6], 0
    // Predicated region
    $region2: #{tudui_forward.1} parent=1 // pred_check
      _
    $region3: #{tudui_forward.1} parent=1 // pred_check_branch
      %23 = sbr.rel (0) target = $region5
    $region4: #{tudui_forward.1} parent=1 // pred_region
      _
    $region5: #{tudui_forward.1} parent=1 // pred_fallthru
      _
    // Predicated region
    $region6: #{tudui_forward.1} parent=1 // pred_check
      _
    $region7: #{tudui_forward.1} parent=1 // pred_check_branch
      %25 = sbr.rel (0) target = $region9
    $region8: #{tudui_forward.1} parent=1 // pred_region
      %27 = vsyncadd [#allocation5], 0
      %s28 = sshll.u32 %s1, 4
      %s29 = int_to_ptr.hbm [resolvable:$true] %s28
      %s30 = sshll.u32 [#allocation4], 4
      %s31 = int_to_ptr.vmem [resolvable:$true] %s30
      %36 = dma.hbm_to_vmem [thread:$0]  %s29, 30720, %s31, [#allocation5], 512, 512, 32
    $region9: #{tudui_forward.1} parent=1 // pred_fallthru
      _
    // Predicated region
    $region10: #{tudui_forward.1} parent=1 // pred_check
      _
    $region11: #{tudui_forward.1} parent=1 // pred_check_branch
      %38 = sbr.rel (0) target = $region13
    $region12: #{tudui_forward.1} parent=1 // pred_region
      %40 = vsyncadd [#allocation8], 0
      %s42 = sshll.u32 %s2, 4
      %s43 = int_to_ptr.hbm [resolvable:$true] %s42
      %s44 = sshll.u32 [#allocation7], 4
      %s45 = int_to_ptr.vmem [resolvable:$true] %s44
      %47 = dma.hbm_to_vmem [thread:$0]  %s43, 128, %s45, [#allocation8]
    $region13: #{tudui_forward.1} parent=1 // pred_fallthru
      _
    // Predicated region
    $region14: #{tudui_forward.1} parent=1 // pred_check
      _
    $region15: #{tudui_forward.1} parent=1 // pred_check_branch
      %49 = sbr.rel (0) target = $region17
    $region16: #{tudui_forward.1} parent=1 // pred_region
      %51 = vsyncadd [#allocation8], 0
      %s52 = sshll.u32 %s3, 4
      %s53 = int_to_ptr.hbm [resolvable:$true] %s52
      %s54 = sshll.u32 [#allocation9], 4
      %s55 = int_to_ptr.vmem [resolvable:$true] %s54
      %60 = dma.hbm_to_vmem [thread:$0]  %s53, 81920, %s55, [#allocation8], 256, 256, 16
    $region17: #{tudui_forward.1} parent=1 // pred_fallthru
      _
    // Predicated region
    $region18: #{tudui_forward.1} parent=1 // pred_check
      _
    $region19: #{tudui_forward.1} parent=1 // pred_check_branch
      %62 = sbr.rel (0) target = $region21
    $region20: #{tudui_forward.1} parent=1 // pred_region
      %64 = vsyncadd [#allocation11], 0
      %s66 = sshll.u32 %s4, 4
      %s67 = int_to_ptr.hbm [resolvable:$true] %s66
      %s68 = sshll.u32 [#allocation10], 4
      %s69 = int_to_ptr.vmem [resolvable:$true] %s68
      %71 = dma.hbm_to_vmem [thread:$0]  %s67, 64, %s69, [#allocation11]
    $region21: #{tudui_forward.1} parent=1 // pred_fallthru
      _
    // Predicated region
    $region22: #{tudui_forward.1} parent=1 // pred_check
      _
    $region23: #{tudui_forward.1} parent=1 // pred_check_branch
      %73 = sbr.rel (0) target = $region25
    $region24: #{tudui_forward.1} parent=1 // pred_region
      %75 = vsyncadd [#allocation11], 0
      %s76 = sshll.u32 %s5, 4
      %s77 = int_to_ptr.hbm [resolvable:$true] %s76
      %s78 = sshll.u32 [#allocation12], 4
      %s79 = int_to_ptr.vmem [resolvable:$true] %s78
      %84 = dma.hbm_to_vmem [thread:$0]  %s77, 40960, %s79, [#allocation11], 256, 256, 16
    $region25: #{tudui_forward.1} parent=1 // pred_fallthru
      _
    // Predicated region
    $region26: #{tudui_forward.1} parent=1 // pred_check
      _
    $region27: #{tudui_forward.1} parent=1 // pred_check_branch
      %86 = sbr.rel (0) target = $region29
    $region28: #{tudui_forward.1} parent=1 // pred_region
      %88 = vsyncadd [#allocation14], 0
      %s90 = sshll.u32 %s6, 4
      %s91 = int_to_ptr.hbm [resolvable:$true] %s90
      %s92 = sshll.u32 [#allocation13], 4
      %s93 = int_to_ptr.vmem [resolvable:$true] %s92
      %95 = dma.hbm_to_vmem [thread:$0]  %s91, 64, %s93, [#allocation14]
    $region29: #{tudui_forward.1} parent=1 // pred_fallthru
      _
    // Predicated region
    $region30: #{tudui_forward.1} parent=1 // pred_check
      _
    $region31: #{tudui_forward.1} parent=1 // pred_check_branch
      %97 = sbr.rel (0) target = $region33
    $region32: #{tudui_forward.1} parent=1 // pred_region
      _
    $region33: #{tudui_forward.1} parent=1 // pred_fallthru
      _
    // Predicated region
    $region34: #{tudui_forward.1} parent=1 // pred_check
      _
    $region35: #{tudui_forward.1} parent=1 // pred_check_branch
      %99 = sbr.rel (0) target = $region37
    $region36: #{tudui_forward.1} parent=1 // pred_region
      %101 = vsyncadd [#allocation14], 0
      %s103 = sshll.u32 %s8, 4
      %s104 = int_to_ptr.hbm [resolvable:$true] %s103
      %s105 = sshll.u32 [#allocation15], 4
      %s106 = int_to_ptr.vmem [resolvable:$true] %s105
      %108 = dma.hbm_to_vmem [thread:$0]  %s104, 16, %s106, [#allocation14]
    $region37: #{tudui_forward.1} parent=1 // pred_fallthru
      _
    // Predicated region
    $region38: #{tudui_forward.1} parent=1 // pred_check
      _
    $region39: #{tudui_forward.1} parent=1 // pred_check_branch
      %110 = sbr.rel (0) target = $region41
    $region40: #{tudui_forward.1} parent=1 // pred_region
      _
    $region41: #{tudui_forward.1} parent=1 // pred_fallthru
      _
    // Predicated region
    $region42: #{tudui_forward.1} parent=1 // pred_check
      _
    $region43: #{tudui_forward.1} parent=1 // pred_check_branch
      %112 = sbr.rel (0) target = $region45
    $region44: #{tudui_forward.1} parent=1 // pred_region
      %114 = vsyncadd [#allocation17], 0
      %s116 = sshll.u32 %s10, 4
      %s117 = int_to_ptr.hbm [resolvable:$true] %s116
      %s118 = sshll.u32 [#allocation16], 4
      %s119 = int_to_ptr.vmem [resolvable:$true] %s118
      %121 = dma.hbm_to_vmem [thread:$0]  %s117, 16, %s119, [#allocation17]
    $region45: #{tudui_forward.1} parent=1 // pred_fallthru
      _
    // Predicated region
    $region46: #{tudui_forward.1} parent=1 // pred_check
      _
    $region47: #{tudui_forward.1} parent=1 // pred_check_branch
      %123 = sbr.rel (0) target = $region49
    $region48: #{tudui_forward.1} parent=1 // pred_region
      %125 = dma.done [#allocation5], 30720
    $region49: #{tudui_forward.1} parent=1 // pred_fallthru
      _
    // Predicated region
    $region50: #{tudui_forward.1} parent=1 // pred_check
      _
    $region51: #{tudui_forward.1} parent=1 // pred_check_branch
      %127 = sbr.rel (0) target = $region53
    $region52: #{tudui_forward.1} parent=1 // pred_region
      %129 = dma.done [#allocation8], 128
    $region53: #{tudui_forward.1} parent=1 // pred_fallthru
      _
    // Predicated region
    $region54: #{tudui_forward.1} parent=1 // pred_check
      _
    $region55: #{tudui_forward.1} parent=1 // pred_check_branch
      %131 = sbr.rel (0) target = $region57
    $region56: #{tudui_forward.1} parent=1 // pred_region
      %133 = dma.done [#allocation8], 81920
    $region57: #{tudui_forward.1} parent=1 // pred_fallthru
      _
    // Predicated region
    $region58: #{tudui_forward.1} parent=1 // pred_check
      _
    $region59: #{tudui_forward.1} parent=1 // pred_check_branch
      %135 = sbr.rel (0) target = $region61
    $region60: #{tudui_forward.1} parent=1 // pred_region
      %137 = dma.done [#allocation11], 64
    $region61: #{tudui_forward.1} parent=1 // pred_fallthru
      _
    // Predicated region
    $region62: #{tudui_forward.1} parent=1 // pred_check
      _
    $region63: #{tudui_forward.1} parent=1 // pred_check_branch
      %139 = sbr.rel (0) target = $region65
    $region64: #{tudui_forward.1} parent=1 // pred_region
      %141 = dma.done [#allocation11], 40960
    $region65: #{tudui_forward.1} parent=1 // pred_fallthru
      _
    // Predicated region
    $region66: #{tudui_forward.1} parent=1 // pred_check
      _
    $region67: #{tudui_forward.1} parent=1 // pred_check_branch
      %143 = sbr.rel (0) target = $region69
    $region68: #{tudui_forward.1} parent=1 // pred_region
      %145 = dma.done [#allocation14], 64
    $region69: #{tudui_forward.1} parent=1 // pred_fallthru
      _
    // Predicated region
    $region70: #{tudui_forward.1} parent=1 // pred_check
      _
    $region71: #{tudui_forward.1} parent=1 // pred_check_branch
      %147 = sbr.rel (0) target = $region73
    $region72: #{tudui_forward.1} parent=1 // pred_region
      %149 = dma.done [#allocation14], 16
    $region73: #{tudui_forward.1} parent=1 // pred_fallthru
      _
    // Predicated region
    $region74: #{tudui_forward.1} parent=1 // pred_check
      _
    $region75: #{tudui_forward.1} parent=1 // pred_check_branch
      %151 = sbr.rel (0) target = $region77
    $region76: #{tudui_forward.1} parent=1 // pred_region
      %153 = dma.done [#allocation17], 16
    $region77: #{tudui_forward.1} parent=1 // pred_fallthru
      _
    %v155 = vld [vmem:[%s0] sm:$0xf]
    %v156 = vld [vmem:[%s0 + $0x4] sm:$0xf]
    %v157 = vld [vmem:[%s0 + $0x8] sm:$0xf]
    %v158 = vld [vmem:[%s0 + $0xc] sm:$0xf]
    %v159 = vld [vmem:[%s0 + $0x14] sm:$0xf]
    %v160 = vld [vmem:[%s0 + $0x18] sm:$0xf]
    %v161 = vld [vmem:[%s0 + $0x1c] sm:$0xf]
    %v162 = vld [vmem:[%s0 + $0x20] sm:$0xf]
    %v163 = vld [vmem:[#allocation4] sm:$0xff]
    %v164 = vld [vmem:[#allocation4 + $0x8] sm:$0xff]
    %v165 = vld [vmem:[#allocation4 + $0x10] sm:$0xff]
    %v166 = vld [vmem:[#allocation4 + $0x18] sm:$0xff]
    %v167 = vld [vmem:[#allocation4 + $0x20] sm:$0xff]
    %v168 = vld [vmem:[#allocation4 + $0x28] sm:$0xff]
    %v169 = vld [vmem:[#allocation4 + $0x30] sm:$0xff]
    %v170 = vld [vmem:[#allocation4 + $0x38] sm:$0xff]
    %v171 = vld [vmem:[#allocation4 + $0x40] sm:$0xff]
    %v172 = vld [vmem:[#allocation4 + $0x48] sm:$0xff]
    %v173 = vld [vmem:[#allocation4 + $0x50] sm:$0xff]
    %v174 = vld [vmem:[#allocation4 + $0x58] sm:$0xff]
    %v175 = vld [vmem:[#allocation4 + $0x60] sm:$0xff]
    %v176 = vld [vmem:[#allocation4 + $0x68] sm:$0xff]
    %v177 = vld [vmem:[#allocation4 + $0x70] sm:$0xff]
    %v178 = vld [vmem:[#allocation4 + $0x78] sm:$0xff]
    %v179 = vld [vmem:[#allocation4 + $0x80] sm:$0xff]
    %v180 = vld [vmem:[#allocation4 + $0x88] sm:$0xff]
    %v181 = vld [vmem:[#allocation4 + $0x90] sm:$0xff]
    %v182 = vld [vmem:[#allocation4 + $0x98] sm:$0xff]
    %v183 = vld [vmem:[#allocation4 + $0xa0] sm:$0xff]
    %v184 = vld [vmem:[#allocation4 + $0xa8] sm:$0xff]
    %v185 = vld [vmem:[#allocation4 + $0xb0] sm:$0xff]
    %v186 = vld [vmem:[#allocation4 + $0xb8] sm:$0xff]
    %v187 = vld [vmem:[#allocation4 + $0xc0] sm:$0xff]
    %v188 = vld [vmem:[#allocation4 + $0xc8] sm:$0xff]
    %v189 = vld [vmem:[#allocation4 + $0xd0] sm:$0xff]
    %v190 = vld [vmem:[#allocation4 + $0xd8] sm:$0xff]
    %v191 = vld [vmem:[#allocation4 + $0xe0] sm:$0xff]
    %v192 = vld [vmem:[#allocation4 + $0xe8] sm:$0xff]
    %v193 = vld [vmem:[#allocation4 + $0xf0] sm:$0xff]
    %v194 = vld [vmem:[#allocation4 + $0xf8] sm:$0xff]
    %v195 = vld [vmem:[#allocation4 + $0x100] sm:$0xff]
    %v196 = vld [vmem:[#allocation4 + $0x108] sm:$0xff]
    %v197 = vld [vmem:[#allocation4 + $0x110] sm:$0xff]
    %v198 = vld [vmem:[#allocation4 + $0x118] sm:$0xff]
    %v199 = vld [vmem:[#allocation4 + $0x120] sm:$0xff]
    %v200 = vld [vmem:[#allocation4 + $0x128] sm:$0xff]
    %v201 = vld [vmem:[#allocation4 + $0x130] sm:$0xff]
    %v202 = vld [vmem:[#allocation4 + $0x138] sm:$0xff]
    %v203 = vld [vmem:[#allocation4 + $0x140] sm:$0xff]
    %v204 = vld [vmem:[#allocation4 + $0x148] sm:$0xff]
    %v205 = vld [vmem:[#allocation4 + $0x150] sm:$0xff]
    %v206 = vld [vmem:[#allocation4 + $0x158] sm:$0xff]
    %v207 = vld [vmem:[#allocation4 + $0x160] sm:$0xff]
    %v208 = vld [vmem:[#allocation4 + $0x168] sm:$0xff]
    %v209 = vld [vmem:[#allocation4 + $0x170] sm:$0xff]
    %v210 = vld [vmem:[#allocation4 + $0x178] sm:$0xff]
    %v211 = vld [vmem:[%s0 + $0x10] sm:$0x1]
    %v212 = vld [vmem:[%s0 + $0x24] sm:$0x1]
    %vm213 = vsmask.f32 3328
    %vm214 = vsmask.f32 7440
    %vm215 = vmor %vm213, %vm214
    %v217 = vshrl.u32 %v155, 16
    %v219 = vrot.slane %v217, 4
    %v220 = vshll.u32 %v155, 16
    %v222 = vrot.slane %v220, 5
    %v223 = vor.u32 %v219, %v222
    %v224 = vrot.slane %v223, 4
    %v226 = vshll.u32 %v156, 16
    %v228 = vrot.slane %v226, 5
    %v229 = vsel %vm215, %v224, %v228
    %v230 = vshrl.u32 %v156, 16
    %v232 = vrot.slane %v230, 4
    %v233 = vor.u32 %v232, %v228
    %v234 = vrot.slane %v233, 4
    %v236 = vshll.u32 %v157, 16
    %v238 = vrot.slane %v236, 5
    %v239 = vsel %vm215, %v234, %v238
    %v240 = vshrl.u32 %v157, 16
    %v242 = vrot.slane %v240, 4
    %v243 = vor.u32 %v242, %v238
    %v244 = vrot.slane %v243, 4
    %v246 = vshll.u32 %v158, 16
    %v248 = vrot.slane %v246, 5
    %v249 = vsel %vm215, %v244, %v248
    %v250 = vshrl.u32 %v158, 16
    %v252 = vrot.slane %v250, 4
    %v253 = vor.u32 %v252, %v248
    %v254 = vrot.slane %v253, 4
    %v256 = vshll.u32 %v211, 16
    %v258 = vrot.slane %v256, 5
    %v259 = vsel %vm215, %v254, %v258
    %v261 = vshrl.u32 %v159, 16
    %v263 = vrot.slane %v261, 4
    %v264 = vshll.u32 %v159, 16
    %v266 = vrot.slane %v264, 5
    %v267 = vor.u32 %v263, %v266
    %v268 = vrot.slane %v267, 4
    %v270 = vshll.u32 %v160, 16
    %v272 = vrot.slane %v270, 5
    %v273 = vsel %vm215, %v268, %v272
    %v274 = vshrl.u32 %v160, 16
    %v276 = vrot.slane %v274, 4
    %v277 = vor.u32 %v276, %v272
    %v278 = vrot.slane %v277, 4
    %v280 = vshll.u32 %v161, 16
    %v282 = vrot.slane %v280, 5
    %v283 = vsel %vm215, %v278, %v282
    %v284 = vshrl.u32 %v161, 16
    %v286 = vrot.slane %v284, 4
    %v287 = vor.u32 %v286, %v282
    %v288 = vrot.slane %v287, 4
    %v290 = vshll.u32 %v162, 16
    %v292 = vrot.slane %v290, 5
    %v293 = vsel %vm215, %v288, %v292
    %v294 = vshrl.u32 %v162, 16
    %v296 = vrot.slane %v294, 4
    %v297 = vor.u32 %v296, %v292
    %v298 = vrot.slane %v297, 4
    %v300 = vshll.u32 %v212, 16
    %v302 = vrot.slane %v300, 5
    %v303 = vsel %vm215, %v298, %v302
    %s304 = scalar_lea.vmem [#allocation4], 384
    %v305 = vld [vmem:[%s304] sm:$0xff]
    %v306 = vld [vmem:[%s304 + $0x8] sm:$0xff]
    %v307 = vld [vmem:[%s304 + $0x10] sm:$0xff]
    %v308 = vld [vmem:[%s304 + $0x18] sm:$0xff]
    %v309 = vld [vmem:[%s304 + $0x20] sm:$0xff]
    %v310 = vld [vmem:[%s304 + $0x28] sm:$0xff]
    %v311 = vld [vmem:[%s304 + $0x30] sm:$0xff]
    %v312 = vld [vmem:[%s304 + $0x38] sm:$0xff]
    %v313 = vld [vmem:[%s304 + $0x40] sm:$0xff]
    %v314 = vld [vmem:[%s304 + $0x48] sm:$0xff]
    %v315 = vld [vmem:[%s304 + $0x50] sm:$0xff]
    %v316 = vld [vmem:[%s304 + $0x58] sm:$0xff]
    %v317 = vld [vmem:[%s304 + $0x60] sm:$0xff]
    %v318 = vld [vmem:[%s304 + $0x68] sm:$0xff]
    %v319 = vld [vmem:[%s304 + $0x70] sm:$0xff]
    %v320 = vld [vmem:[%s304 + $0x78] sm:$0xff]
    %v321 = vld [vmem:[%s304 + $0x80] sm:$0xff]
    %v322 = vld [vmem:[%s304 + $0x88] sm:$0xff]
    %v323 = vld [vmem:[%s304 + $0x90] sm:$0xff]
    %v324 = vld [vmem:[%s304 + $0x98] sm:$0xff]
    %v325 = vld [vmem:[%s304 + $0xa0] sm:$0xff]
    %v326 = vld [vmem:[%s304 + $0xa8] sm:$0xff]
    %v327 = vld [vmem:[%s304 + $0xb0] sm:$0xff]
    %v328 = vld [vmem:[%s304 + $0xb8] sm:$0xff]
    %v329 = vld [vmem:[%s304 + $0xc0] sm:$0xff]
    %v330 = vld [vmem:[%s304 + $0xc8] sm:$0xff]
    %v331 = vld [vmem:[%s304 + $0xd0] sm:$0xff]
    %v332 = vld [vmem:[%s304 + $0xd8] sm:$0xff]
    %v333 = vld [vmem:[%s304 + $0xe0] sm:$0xff]
    %v334 = vld [vmem:[%s304 + $0xe8] sm:$0xff]
    %v335 = vld [vmem:[%s304 + $0xf0] sm:$0xff]
    %v336 = vld [vmem:[%s304 + $0xf8] sm:$0xff]
    %v337 = vld [vmem:[%s304 + $0x100] sm:$0xff]
    %v338 = vld [vmem:[%s304 + $0x108] sm:$0xff]
    %v339 = vld [vmem:[%s304 + $0x110] sm:$0xff]
    %v340 = vld [vmem:[%s304 + $0x118] sm:$0xff]
    %v341 = vld [vmem:[%s304 + $0x120] sm:$0xff]
    %v342 = vld [vmem:[%s304 + $0x128] sm:$0xff]
    %v343 = vld [vmem:[%s304 + $0x130] sm:$0xff]
    %v344 = vld [vmem:[%s304 + $0x138] sm:$0xff]
    %v345 = vld [vmem:[%s304 + $0x140] sm:$0xff]
    %v346 = vld [vmem:[%s304 + $0x148] sm:$0xff]
    %v347 = vld [vmem:[%s304 + $0x150] sm:$0xff]
    %v348 = vld [vmem:[%s304 + $0x158] sm:$0xff]
    %v349 = vld [vmem:[%s304 + $0x160] sm:$0xff]
    %v350 = vld [vmem:[%s304 + $0x168] sm:$0xff]
    %v351 = vld [vmem:[%s304 + $0x170] sm:$0xff]
    %v352 = vld [vmem:[%s304 + $0x178] sm:$0xff]
    %v353 = vunpack.c.l.b16 %v229
    %v354 = vunpack.c.l.b16 %v239
    %v355 = vunpack.c.l.b16 %v249
    %v356 = vunpack.c.l.b16 %v259
    %v357 = vunpack.c.l.b16 %v273
    %v358 = vunpack.c.l.b16 %v283
    %v359 = vunpack.c.l.b16 %v293
    %v360 = vunpack.c.l.b16 %v303
    %v361 = vpack.c.b16 %v354, %v353
    %v362 = vpack.c.b16 %v356, %v355
    %v363 = vpack.c.b16 %v358, %v357
    %v364 = vpack.c.b16 %v360, %v359
    %v413 = vunpack.c.l.b16 %v305
    %v414 = vunpack.c.h.b16 %v305
    %v415 = vunpack.c.l.b16 %v306
    %v416 = vunpack.c.h.b16 %v306
    %v417 = vunpack.c.l.b16 %v307
    %v418 = vunpack.c.h.b16 %v307
    %v419 = vunpack.c.l.b16 %v308
    %v420 = vunpack.c.h.b16 %v308
    %v421 = vunpack.c.l.b16 %v309
    %v422 = vunpack.c.h.b16 %v309
    %v423 = vunpack.c.l.b16 %v310
    %v424 = vunpack.c.h.b16 %v310
    %v425 = vunpack.c.l.b16 %v311
    %v426 = vunpack.c.h.b16 %v311
    %v427 = vunpack.c.l.b16 %v312
    %v428 = vunpack.c.h.b16 %v312
    %v429 = vunpack.c.l.b16 %v313
    %v430 = vunpack.c.h.b16 %v313
    %v431 = vunpack.c.l.b16 %v314
    %v432 = vunpack.c.h.b16 %v314
    %v433 = vunpack.c.l.b16 %v315
    %v434 = vunpack.c.h.b16 %v315
    %v435 = vunpack.c.l.b16 %v316
    %v436 = vunpack.c.h.b16 %v316
    %v437 = vunpack.c.l.b16 %v317
    %v438 = vunpack.c.h.b16 %v317
    %v439 = vunpack.c.l.b16 %v318
    %v440 = vunpack.c.h.b16 %v318
    %v441 = vunpack.c.l.b16 %v319
    %v442 = vunpack.c.h.b16 %v319
    %v443 = vunpack.c.l.b16 %v320
    %v444 = vunpack.c.h.b16 %v320
    %v445 = vunpack.c.l.b16 %v321
    %v446 = vunpack.c.h.b16 %v321
    %v447 = vunpack.c.l.b16 %v322
    %v448 = vunpack.c.h.b16 %v322
    %v449 = vunpack.c.l.b16 %v323
    %v450 = vunpack.c.h.b16 %v323
    %v451 = vunpack.c.l.b16 %v324
    %v452 = vunpack.c.h.b16 %v324
    %v453 = vunpack.c.l.b16 %v325
    %v454 = vunpack.c.h.b16 %v325
    %v455 = vunpack.c.l.b16 %v326
    %v456 = vunpack.c.h.b16 %v326
    %v457 = vunpack.c.l.b16 %v327
    %v458 = vunpack.c.h.b16 %v327
    %v459 = vunpack.c.l.b16 %v328
    %v460 = vunpack.c.h.b16 %v328
    %v461 = vunpack.c.l.b16 %v329
    %v462 = vunpack.c.h.b16 %v329
    %v463 = vunpack.c.l.b16 %v330
    %v464 = vunpack.c.h.b16 %v330
    %v465 = vunpack.c.l.b16 %v331
    %v466 = vunpack.c.h.b16 %v331
    %v467 = vunpack.c.l.b16 %v332
    %v468 = vunpack.c.h.b16 %v332
    %v469 = vunpack.c.l.b16 %v333
    %v470 = vunpack.c.h.b16 %v333
    %v471 = vunpack.c.l.b16 %v334
    %v472 = vunpack.c.h.b16 %v334
    %v473 = vunpack.c.l.b16 %v335
    %v474 = vunpack.c.h.b16 %v335
    %v475 = vunpack.c.l.b16 %v336
    %v476 = vunpack.c.h.b16 %v336
    %v477 = vunpack.c.l.b16 %v337
    %v478 = vunpack.c.h.b16 %v337
    %v479 = vunpack.c.l.b16 %v338
    %v480 = vunpack.c.h.b16 %v338
    %v481 = vunpack.c.l.b16 %v339
    %v482 = vunpack.c.h.b16 %v339
    %v483 = vunpack.c.l.b16 %v340
    %v484 = vunpack.c.h.b16 %v340
    %v485 = vunpack.c.l.b16 %v341
    %v486 = vunpack.c.h.b16 %v341
    %v487 = vunpack.c.l.b16 %v342
    %v488 = vunpack.c.h.b16 %v342
    %v489 = vunpack.c.l.b16 %v343
    %v490 = vunpack.c.h.b16 %v343
    %v491 = vunpack.c.l.b16 %v344
    %v492 = vunpack.c.h.b16 %v344
    %v493 = vunpack.c.l.b16 %v345
    %v494 = vunpack.c.h.b16 %v345
    %v495 = vunpack.c.l.b16 %v346
    %v496 = vunpack.c.h.b16 %v346
    %v497 = vunpack.c.l.b16 %v347
    %v498 = vunpack.c.h.b16 %v347
    %v499 = vunpack.c.l.b16 %v348
    %v500 = vunpack.c.h.b16 %v348
    %v501 = vunpack.c.l.b16 %v349
    %v502 = vunpack.c.h.b16 %v349
    %v503 = vunpack.c.l.b16 %v350
    %v504 = vunpack.c.h.b16 %v350
    %v505 = vunpack.c.l.b16 %v351
    %v506 = vunpack.c.h.b16 %v351
    %v507 = vunpack.c.l.b16 %v352
    %v508 = vunpack.c.h.b16 %v352
    %v509 = vpack.c.b16 %v421, %v413
    %v510 = vpack.c.b16 %v422, %v414
    %v511 = vpack.c.b16 %v423, %v415
    %v512 = vpack.c.b16 %v424, %v416
    %v513 = vpack.c.b16 %v425, %v417
    %v514 = vpack.c.b16 %v426, %v418
    %v515 = vpack.c.b16 %v427, %v419
    %v516 = vpack.c.b16 %v428, %v420
    %v517 = vpack.c.b16 %v437, %v429
    %v518 = vpack.c.b16 %v438, %v430
    %v519 = vpack.c.b16 %v439, %v431
    %v520 = vpack.c.b16 %v440, %v432
    %v521 = vpack.c.b16 %v441, %v433
    %v522 = vpack.c.b16 %v442, %v434
    %v523 = vpack.c.b16 %v443, %v435
    %v524 = vpack.c.b16 %v444, %v436
    %v525 = vpack.c.b16 %v453, %v445
    %v526 = vpack.c.b16 %v454, %v446
    %v527 = vpack.c.b16 %v455, %v447
    %v528 = vpack.c.b16 %v456, %v448
    %v529 = vpack.c.b16 %v457, %v449
    %v530 = vpack.c.b16 %v458, %v450
    %v531 = vpack.c.b16 %v459, %v451
    %v532 = vpack.c.b16 %v460, %v452
    %v533 = vpack.c.b16 %v469, %v461
    %v534 = vpack.c.b16 %v470, %v462
    %v535 = vpack.c.b16 %v471, %v463
    %v536 = vpack.c.b16 %v472, %v464
    %v537 = vpack.c.b16 %v473, %v465
    %v538 = vpack.c.b16 %v474, %v466
    %v539 = vpack.c.b16 %v475, %v467
    %v540 = vpack.c.b16 %v476, %v468
    %v541 = vpack.c.b16 %v485, %v477
    %v542 = vpack.c.b16 %v486, %v478
    %v543 = vpack.c.b16 %v487, %v479
    %v544 = vpack.c.b16 %v488, %v480
    %v545 = vpack.c.b16 %v489, %v481
    %v546 = vpack.c.b16 %v490, %v482
    %v547 = vpack.c.b16 %v491, %v483
    %v548 = vpack.c.b16 %v492, %v484
    %v549 = vpack.c.b16 %v501, %v493
    %v550 = vpack.c.b16 %v502, %v494
    %v551 = vpack.c.b16 %v503, %v495
    %v552 = vpack.c.b16 %v504, %v496
    %v553 = vpack.c.b16 %v505, %v497
    %v554 = vpack.c.b16 %v506, %v498
    %v555 = vpack.c.b16 %v507, %v499
    %v556 = vpack.c.b16 %v508, %v500
    %vm605 = vcmask 785408
    %v607 = vsel %vm605, %v361, 0
    %v610 = vsel %vm605, %v362, 0
    %v613 = vsel %vm605, %v363, 0
    %v616 = vsel %vm605, %v364, 0
    %618 = vmatpush.bf16.msra.mxu0 0
    %619 = vmatpush.bf16.msra.mxu0 0
    %620 = vmatpush.bf16.msra.mxu0 %v549
    %621 = vmatpush.bf16.msra.mxu0 %v541
    %622 = vmatpush.bf16.msra.mxu0 %v533
    %623 = vmatpush.bf16.msra.mxu0 %v525
    %624 = vmatpush.bf16.msra.mxu0 %v517
    %625 = vmatpush.bf16.msra.mxu0 %v509
    %626 = vmatmul.bf16.gmra.mxu0 %v607
    %v627 = vpop.f32.mrf.mxu0
    %v628 = vadd.f32 0.0, %v627
    %v629 = vpop.f32.mrf.mxu0
    %v630 = vadd.f32 0.0, %v629
    %631 = vmatmul.bf16.gmra.mxu0 %v610
    %v632 = vpop.f32.mrf.mxu0
    %v633 = vadd.f32 0.0, %v632
    %v634 = vpop.f32.mrf.mxu0
    %v635 = vadd.f32 0.0, %v634
    %636 = vmatmul.bf16.gmra.mxu0 %v613
    %v637 = vpop.f32.mrf.mxu0
    %v638 = vadd.f32 0.0, %v637
    %v639 = vpop.f32.mrf.mxu0
    %v640 = vadd.f32 0.0, %v639
    %641 = vmatmul.bf16.gmra.mxu0 %v616
    %v642 = vpop.f32.mrf.mxu0
    %v643 = vadd.f32 0.0, %v642
    %v644 = vpop.f32.mrf.mxu0
    %v645 = vadd.f32 0.0, %v644
    %646 = vdwg.mxu0
    %647 = vmatpush.bf16.msra.mxu0 0
    %648 = vmatpush.bf16.msra.mxu0 0
    %649 = vmatpush.bf16.msra.mxu0 %v550
    %650 = vmatpush.bf16.msra.mxu0 %v542
    %651 = vmatpush.bf16.msra.mxu0 %v534
    %652 = vmatpush.bf16.msra.mxu0 %v526
    %653 = vmatpush.bf16.msra.mxu0 %v518
    %654 = vmatpush.bf16.msra.mxu0 %v510
    %655 = vmatmul.bf16.gmra.mxu0 %v607
    %v656 = vpop.f32.mrf.mxu0
    %v657 = vadd.f32 0.0, %v656
    %v658 = vpop.f32.mrf.mxu0
    %v659 = vadd.f32 0.0, %v658
    %660 = vmatmul.bf16.gmra.mxu0 %v610
    %v661 = vpop.f32.mrf.mxu0
    %v662 = vadd.f32 0.0, %v661
    %v663 = vpop.f32.mrf.mxu0
    %v664 = vadd.f32 0.0, %v663
    %665 = vmatmul.bf16.gmra.mxu0 %v613
    %v666 = vpop.f32.mrf.mxu0
    %v667 = vadd.f32 0.0, %v666
    %v668 = vpop.f32.mrf.mxu0
    %v669 = vadd.f32 0.0, %v668
    %670 = vmatmul.bf16.gmra.mxu0 %v616
    %v671 = vpop.f32.mrf.mxu0
    %v672 = vadd.f32 0.0, %v671
    %v673 = vpop.f32.mrf.mxu0
    %v674 = vadd.f32 0.0, %v673
    %675 = vdwg.mxu0
    %676 = vmatpush.bf16.msra.mxu0 0
    %677 = vmatpush.bf16.msra.mxu0 0
    %678 = vmatpush.bf16.msra.mxu0 %v551
    %679 = vmatpush.bf16.msra.mxu0 %v543
    %680 = vmatpush.bf16.msra.mxu0 %v535
    %681 = vmatpush.bf16.msra.mxu0 %v527
    %682 = vmatpush.bf16.msra.mxu0 %v519
    %683 = vmatpush.bf16.msra.mxu0 %v511
    %684 = vmatmul.bf16.gmra.mxu0 %v607
    %v685 = vpop.f32.mrf.mxu0
    %v686 = vadd.f32 0.0, %v685
    %v687 = vpop.f32.mrf.mxu0
    %v688 = vadd.f32 0.0, %v687
    %689 = vmatmul.bf16.gmra.mxu0 %v610
    %v690 = vpop.f32.mrf.mxu0
    %v691 = vadd.f32 0.0, %v690
    %v692 = vpop.f32.mrf.mxu0
    %v693 = vadd.f32 0.0, %v692
    %694 = vmatmul.bf16.gmra.mxu0 %v613
    %v695 = vpop.f32.mrf.mxu0
    %v696 = vadd.f32 0.0, %v695
    %v697 = vpop.f32.mrf.mxu0
    %v698 = vadd.f32 0.0, %v697
    %699 = vmatmul.bf16.gmra.mxu0 %v616
    %v700 = vpop.f32.mrf.mxu0
    %v701 = vadd.f32 0.0, %v700
    %v702 = vpop.f32.mrf.mxu0
    %v703 = vadd.f32 0.0, %v702
    %704 = vdwg.mxu0
    %705 = vmatpush.bf16.msra.mxu0 0
    %706 = vmatpush.bf16.msra.mxu0 0
    %707 = vmatpush.bf16.msra.mxu0 %v552
    %708 = vmatpush.bf16.msra.mxu0 %v544
    %709 = vmatpush.bf16.msra.mxu0 %v536
    %710 = vmatpush.bf16.msra.mxu0 %v528
    %711 = vmatpush.bf16.msra.mxu0 %v520
    %712 = vmatpush.bf16.msra.mxu0 %v512
    %713 = vmatmul.bf16.gmra.mxu0 %v607
    %v714 = vpop.f32.mrf.mxu0
    %v715 = vadd.f32 0.0, %v714
    %v716 = vpop.f32.mrf.mxu0
    %v717 = vadd.f32 0.0, %v716
    %718 = vmatmul.bf16.gmra.mxu0 %v610
    %v719 = vpop.f32.mrf.mxu0
    %v720 = vadd.f32 0.0, %v719
    %v721 = vpop.f32.mrf.mxu0
    %v722 = vadd.f32 0.0, %v721
    %723 = vmatmul.bf16.gmra.mxu0 %v613
    %v724 = vpop.f32.mrf.mxu0
    %v725 = vadd.f32 0.0, %v724
    %v726 = vpop.f32.mrf.mxu0
    %v727 = vadd.f32 0.0, %v726
    %728 = vmatmul.bf16.gmra.mxu0 %v616
    %v729 = vpop.f32.mrf.mxu0
    %v730 = vadd.f32 0.0, %v729
    %v731 = vpop.f32.mrf.mxu0
    %v732 = vadd.f32 0.0, %v731
    %733 = vdwg.mxu0
    %734 = vmatpush.bf16.msra.mxu0 0
    %735 = vmatpush.bf16.msra.mxu0 0
    %736 = vmatpush.bf16.msra.mxu0 %v553
    %737 = vmatpush.bf16.msra.mxu0 %v545
    %738 = vmatpush.bf16.msra.mxu0 %v537
    %739 = vmatpush.bf16.msra.mxu0 %v529
    %740 = vmatpush.bf16.msra.mxu0 %v521
    %741 = vmatpush.bf16.msra.mxu0 %v513
    %742 = vmatmul.bf16.gmra.mxu0 %v607
    %v743 = vpop.f32.mrf.mxu0
    %v744 = vadd.f32 0.0, %v743
    %v745 = vpop.f32.mrf.mxu0
    %v746 = vadd.f32 0.0, %v745
    %747 = vmatmul.bf16.gmra.mxu0 %v610
    %v748 = vpop.f32.mrf.mxu0
    %v749 = vadd.f32 0.0, %v748
    %v750 = vpop.f32.mrf.mxu0
    %v751 = vadd.f32 0.0, %v750
    %752 = vmatmul.bf16.gmra.mxu0 %v613
    %v753 = vpop.f32.mrf.mxu0
    %v754 = vadd.f32 0.0, %v753
    %v755 = vpop.f32.mrf.mxu0
    %v756 = vadd.f32 0.0, %v755
    %757 = vmatmul.bf16.gmra.mxu0 %v616
    %v758 = vpop.f32.mrf.mxu0
    %v759 = vadd.f32 0.0, %v758
    %v760 = vpop.f32.mrf.mxu0
    %v761 = vadd.f32 0.0, %v760
    %762 = vdwg.mxu0
    %763 = vmatpush.bf16.msra.mxu0 0
    %764 = vmatpush.bf16.msra.mxu0 0
    %765 = vmatpush.bf16.msra.mxu0 %v554
    %766 = vmatpush.bf16.msra.mxu0 %v546
    %767 = vmatpush.bf16.msra.mxu0 %v538
    %768 = vmatpush.bf16.msra.mxu0 %v530
    %769 = vmatpush.bf16.msra.mxu0 %v522
    %770 = vmatpush.bf16.msra.mxu0 %v514
    %771 = vmatmul.bf16.gmra.mxu0 %v607
    %v772 = vpop.f32.mrf.mxu0
    %v773 = vadd.f32 0.0, %v772
    %v774 = vpop.f32.mrf.mxu0
    %v775 = vadd.f32 0.0, %v774
    %776 = vmatmul.bf16.gmra.mxu0 %v610
    %v777 = vpop.f32.mrf.mxu0
    %v778 = vadd.f32 0.0, %v777
    %v779 = vpop.f32.mrf.mxu0
    %v780 = vadd.f32 0.0, %v779
    %781 = vmatmul.bf16.gmra.mxu0 %v613
    %v782 = vpop.f32.mrf.mxu0
    %v783 = vadd.f32 0.0, %v782
    %v784 = vpop.f32.mrf.mxu0
    %v785 = vadd.f32 0.0, %v784
    %786 = vmatmul.bf16.gmra.mxu0 %v616
    %v787 = vpop.f32.mrf.mxu0
    %v788 = vadd.f32 0.0, %v787
    %v789 = vpop.f32.mrf.mxu0
    %v790 = vadd.f32 0.0, %v789
    %791 = vdwg.mxu0
    %792 = vmatpush.bf16.msra.mxu0 0
    %793 = vmatpush.bf16.msra.mxu0 0
    %794 = vmatpush.bf16.msra.mxu0 %v555
    %795 = vmatpush.bf16.msra.mxu0 %v547
    %796 = vmatpush.bf16.msra.mxu0 %v539
    %797 = vmatpush.bf16.msra.mxu0 %v531
    %798 = vmatpush.bf16.msra.mxu0 %v523
    %799 = vmatpush.bf16.msra.mxu0 %v515
    %800 = vmatmul.bf16.gmra.mxu0 %v607
    %v801 = vpop.f32.mrf.mxu0
    %v802 = vadd.f32 0.0, %v801
    %v803 = vpop.f32.mrf.mxu0
    %v804 = vadd.f32 0.0, %v803
    %805 = vmatmul.bf16.gmra.mxu0 %v610
    %v806 = vpop.f32.mrf.mxu0
    %v807 = vadd.f32 0.0, %v806
    %v808 = vpop.f32.mrf.mxu0
    %v809 = vadd.f32 0.0, %v808
    %810 = vmatmul.bf16.gmra.mxu0 %v613
    %v811 = vpop.f32.mrf.mxu0
    %v812 = vadd.f32 0.0, %v811
    %v813 = vpop.f32.mrf.mxu0
    %v814 = vadd.f32 0.0, %v813
    %815 = vmatmul.bf16.gmra.mxu0 %v616
    %v816 = vpop.f32.mrf.mxu0
    %v817 = vadd.f32 0.0, %v816
    %v818 = vpop.f32.mrf.mxu0
    %v819 = vadd.f32 0.0, %v818
    %820 = vdwg.mxu0
    %821 = vmatpush.bf16.msra.mxu0 0
    %822 = vmatpush.bf16.msra.mxu0 0
    %823 = vmatpush.bf16.msra.mxu0 %v556
    %824 = vmatpush.bf16.msra.mxu0 %v548
    %825 = vmatpush.bf16.msra.mxu0 %v540
    %826 = vmatpush.bf16.msra.mxu0 %v532
    %827 = vmatpush.bf16.msra.mxu0 %v524
    %828 = vmatpush.bf16.msra.mxu0 %v516
    %829 = vmatmul.bf16.gmra.mxu0 %v607
    %v830 = vpop.f32.mrf.mxu0
    %v831 = vadd.f32 0.0, %v830
    %v832 = vpop.f32.mrf.mxu0
    %v833 = vadd.f32 0.0, %v832
    %834 = vmatmul.bf16.gmra.mxu0 %v610
    %v835 = vpop.f32.mrf.mxu0
    %v836 = vadd.f32 0.0, %v835
    %v837 = vpop.f32.mrf.mxu0
    %v838 = vadd.f32 0.0, %v837
    %839 = vmatmul.bf16.gmra.mxu0 %v613
    %v840 = vpop.f32.mrf.mxu0
    %v841 = vadd.f32 0.0, %v840
    %v842 = vpop.f32.mrf.mxu0
    %v843 = vadd.f32 0.0, %v842
    %844 = vmatmul.bf16.gmra.mxu0 %v616
    %v845 = vpop.f32.mrf.mxu0
    %v846 = vadd.f32 0.0, %v845
    %v847 = vpop.f32.mrf.mxu0
    %v848 = vadd.f32 0.0, %v847
    %849 = vdwg.mxu0
    %v858 = vunpack.c.l.b16 %v155
    %v859 = vunpack.c.l.b16 %v156
    %v860 = vunpack.c.l.b16 %v157
    %v861 = vunpack.c.l.b16 %v158
    %v862 = vunpack.c.l.b16 %v159
    %v863 = vunpack.c.l.b16 %v160
    %v864 = vunpack.c.l.b16 %v161
    %v865 = vunpack.c.l.b16 %v162
    %v866 = vpack.c.b16 %v859, %v858
    %v867 = vpack.c.b16 %v861, %v860
    %v868 = vpack.c.b16 %v863, %v862
    %v869 = vpack.c.b16 %v865, %v864
    %v918 = vunpack.c.l.b16 %v163
    %v919 = vunpack.c.h.b16 %v163
    %v920 = vunpack.c.l.b16 %v164
    %v921 = vunpack.c.h.b16 %v164
    %v922 = vunpack.c.l.b16 %v165
    %v923 = vunpack.c.h.b16 %v165
    %v924 = vunpack.c.l.b16 %v166
    %v925 = vunpack.c.h.b16 %v166
    %v926 = vunpack.c.l.b16 %v167
    %v927 = vunpack.c.h.b16 %v167
    %v928 = vunpack.c.l.b16 %v168
    %v929 = vunpack.c.h.b16 %v168
    %v930 = vunpack.c.l.b16 %v169
    %v931 = vunpack.c.h.b16 %v169
    %v932 = vunpack.c.l.b16 %v170
    %v933 = vunpack.c.h.b16 %v170
    %v934 = vunpack.c.l.b16 %v171
    %v935 = vunpack.c.h.b16 %v171
    %v936 = vunpack.c.l.b16 %v172
    %v937 = vunpack.c.h.b16 %v172
    %v938 = vunpack.c.l.b16 %v173
    %v939 = vunpack.c.h.b16 %v173
    %v940 = vunpack.c.l.b16 %v174
    %v941 = vunpack.c.h.b16 %v174
    %v942 = vunpack.c.l.b16 %v175
    %v943 = vunpack.c.h.b16 %v175
    %v944 = vunpack.c.l.b16 %v176
    %v945 = vunpack.c.h.b16 %v176
    %v946 = vunpack.c.l.b16 %v177
    %v947 = vunpack.c.h.b16 %v177
    %v948 = vunpack.c.l.b16 %v178
    %v949 = vunpack.c.h.b16 %v178
    %v950 = vunpack.c.l.b16 %v179
    %v951 = vunpack.c.h.b16 %v179
    %v952 = vunpack.c.l.b16 %v180
    %v953 = vunpack.c.h.b16 %v180
    %v954 = vunpack.c.l.b16 %v181
    %v955 = vunpack.c.h.b16 %v181
    %v956 = vunpack.c.l.b16 %v182
    %v957 = vunpack.c.h.b16 %v182
    %v958 = vunpack.c.l.b16 %v183
    %v959 = vunpack.c.h.b16 %v183
    %v960 = vunpack.c.l.b16 %v184
    %v961 = vunpack.c.h.b16 %v184
    %v962 = vunpack.c.l.b16 %v185
    %v963 = vunpack.c.h.b16 %v185
    %v964 = vunpack.c.l.b16 %v186
    %v965 = vunpack.c.h.b16 %v186
    %v966 = vunpack.c.l.b16 %v187
    %v967 = vunpack.c.h.b16 %v187
    %v968 = vunpack.c.l.b16 %v188
    %v969 = vunpack.c.h.b16 %v188
    %v970 = vunpack.c.l.b16 %v189
    %v971 = vunpack.c.h.b16 %v189
    %v972 = vunpack.c.l.b16 %v190
    %v973 = vunpack.c.h.b16 %v190
    %v974 = vunpack.c.l.b16 %v191
    %v975 = vunpack.c.h.b16 %v191
    %v976 = vunpack.c.l.b16 %v192
    %v977 = vunpack.c.h.b16 %v192
    %v978 = vunpack.c.l.b16 %v193
    %v979 = vunpack.c.h.b16 %v193
    %v980 = vunpack.c.l.b16 %v194
    %v981 = vunpack.c.h.b16 %v194
    %v982 = vunpack.c.l.b16 %v195
    %v983 = vunpack.c.h.b16 %v195
    %v984 = vunpack.c.l.b16 %v196
    %v985 = vunpack.c.h.b16 %v196
    %v986 = vunpack.c.l.b16 %v197
    %v987 = vunpack.c.h.b16 %v197
    %v988 = vunpack.c.l.b16 %v198
    %v989 = vunpack.c.h.b16 %v198
    %v990 = vunpack.c.l.b16 %v199
    %v991 = vunpack.c.h.b16 %v199
    %v992 = vunpack.c.l.b16 %v200
    %v993 = vunpack.c.h.b16 %v200
    %v994 = vunpack.c.l.b16 %v201
    %v995 = vunpack.c.h.b16 %v201
    %v996 = vunpack.c.l.b16 %v202
    %v997 = vunpack.c.h.b16 %v202
    %v998 = vunpack.c.l.b16 %v203
    %v999 = vunpack.c.h.b16 %v203
    %v1000 = vunpack.c.l.b16 %v204
    %v1001 = vunpack.c.h.b16 %v204
    %v1002 = vunpack.c.l.b16 %v205
    %v1003 = vunpack.c.h.b16 %v205
    %v1004 = vunpack.c.l.b16 %v206
    %v1005 = vunpack.c.h.b16 %v206
    %v1006 = vunpack.c.l.b16 %v207
    %v1007 = vunpack.c.h.b16 %v207
    %v1008 = vunpack.c.l.b16 %v208
    %v1009 = vunpack.c.h.b16 %v208
    %v1010 = vunpack.c.l.b16 %v209
    %v1011 = vunpack.c.h.b16 %v209
    %v1012 = vunpack.c.l.b16 %v210
    %v1013 = vunpack.c.h.b16 %v210
    %v1014 = vpack.c.b16 %v926, %v918
    %v1015 = vpack.c.b16 %v927, %v919
    %v1016 = vpack.c.b16 %v928, %v920
    %v1017 = vpack.c.b16 %v929, %v921
    %v1018 = vpack.c.b16 %v930, %v922
    %v1019 = vpack.c.b16 %v931, %v923
    %v1020 = vpack.c.b16 %v932, %v924
    %v1021 = vpack.c.b16 %v933, %v925
    %v1022 = vpack.c.b16 %v942, %v934
    %v1023 = vpack.c.b16 %v943, %v935
    %v1024 = vpack.c.b16 %v944, %v936
    %v1025 = vpack.c.b16 %v945, %v937
    %v1026 = vpack.c.b16 %v946, %v938
    %v1027 = vpack.c.b16 %v947, %v939
    %v1028 = vpack.c.b16 %v948, %v940
    %v1029 = vpack.c.b16 %v949, %v941
    %v1030 = vpack.c.b16 %v958, %v950
    %v1031 = vpack.c.b16 %v959, %v951
    %v1032 = vpack.c.b16 %v960, %v952
    %v1033 = vpack.c.b16 %v961, %v953
    %v1034 = vpack.c.b16 %v962, %v954
    %v1035 = vpack.c.b16 %v963, %v955
    %v1036 = vpack.c.b16 %v964, %v956
    %v1037 = vpack.c.b16 %v965, %v957
    %v1038 = vpack.c.b16 %v974, %v966
    %v1039 = vpack.c.b16 %v975, %v967
    %v1040 = vpack.c.b16 %v976, %v968
    %v1041 = vpack.c.b16 %v977, %v969
    %v1042 = vpack.c.b16 %v978, %v970
    %v1043 = vpack.c.b16 %v979, %v971
    %v1044 = vpack.c.b16 %v980, %v972
    %v1045 = vpack.c.b16 %v981, %v973
    %v1046 = vpack.c.b16 %v990, %v982
    %v1047 = vpack.c.b16 %v991, %v983
    %v1048 = vpack.c.b16 %v992, %v984
    %v1049 = vpack.c.b16 %v993, %v985
    %v1050 = vpack.c.b16 %v994, %v986
    %v1051 = vpack.c.b16 %v995, %v987
    %v1052 = vpack.c.b16 %v996, %v988
    %v1053 = vpack.c.b16 %v997, %v989
    %v1054 = vpack.c.b16 %v1006, %v998
    %v1055 = vpack.c.b16 %v1007, %v999
    %v1056 = vpack.c.b16 %v1008, %v1000
    %v1057 = vpack.c.b16 %v1009, %v1001
    %v1058 = vpack.c.b16 %v1010, %v1002
    %v1059 = vpack.c.b16 %v1011, %v1003
    %v1060 = vpack.c.b16 %v1012, %v1004
    %v1061 = vpack.c.b16 %v1013, %v1005
    %v1111 = vsel %vm605, %v866, 0
    %v1114 = vsel %vm605, %v867, 0
    %v1117 = vsel %vm605, %v868, 0
    %v1120 = vsel %vm605, %v869, 0
    %1122 = vmatpush.bf16.msra.mxu0 0
    %1123 = vmatpush.bf16.msra.mxu0 0
    %1124 = vmatpush.bf16.msra.mxu0 %v1054
    %1125 = vmatpush.bf16.msra.mxu0 %v1046
    %1126 = vmatpush.bf16.msra.mxu0 %v1038
    %1127 = vmatpush.bf16.msra.mxu0 %v1030
    %1128 = vmatpush.bf16.msra.mxu0 %v1022
    %1129 = vmatpush.bf16.msra.mxu0 %v1014
    %1130 = vmatmul.bf16.gmra.mxu0 %v1111
    %v1131 = vpop.f32.mrf.mxu0
    %v1132 = vadd.f32 %v628, %v1131
    %v1133 = vpop.f32.mrf.mxu0
    %v1134 = vadd.f32 %v630, %v1133
    %1135 = vmatmul.bf16.gmra.mxu0 %v1114
    %v1136 = vpop.f32.mrf.mxu0
    %v1137 = vadd.f32 %v633, %v1136
    %v1138 = vpop.f32.mrf.mxu0
    %v1139 = vadd.f32 %v635, %v1138
    %1140 = vmatmul.bf16.gmra.mxu0 %v1117
    %v1141 = vpop.f32.mrf.mxu0
    %v1142 = vadd.f32 %v638, %v1141
    %v1143 = vpop.f32.mrf.mxu0
    %v1144 = vadd.f32 %v640, %v1143
    %1145 = vmatmul.bf16.gmra.mxu0 %v1120
    %v1146 = vpop.f32.mrf.mxu0
    %v1147 = vadd.f32 %v643, %v1146
    %v1148 = vpop.f32.mrf.mxu0
    %v1149 = vadd.f32 %v645, %v1148
    %1150 = vdwg.mxu0
    %1151 = vmatpush.bf16.msra.mxu0 0
    %1152 = vmatpush.bf16.msra.mxu0 0
    %1153 = vmatpush.bf16.msra.mxu0 %v1055
    %1154 = vmatpush.bf16.msra.mxu0 %v1047
    %1155 = vmatpush.bf16.msra.mxu0 %v1039
    %1156 = vmatpush.bf16.msra.mxu0 %v1031
    %1157 = vmatpush.bf16.msra.mxu0 %v1023
    %1158 = vmatpush.bf16.msra.mxu0 %v1015
    %1159 = vmatmul.bf16.gmra.mxu0 %v1111
    %v1160 = vpop.f32.mrf.mxu0
    %v1161 = vadd.f32 %v657, %v1160
    %v1162 = vpop.f32.mrf.mxu0
    %v1163 = vadd.f32 %v659, %v1162
    %1164 = vmatmul.bf16.gmra.mxu0 %v1114
    %v1165 = vpop.f32.mrf.mxu0
    %v1166 = vadd.f32 %v662, %v1165
    %v1167 = vpop.f32.mrf.mxu0
    %v1168 = vadd.f32 %v664, %v1167
    %1169 = vmatmul.bf16.gmra.mxu0 %v1117
    %v1170 = vpop.f32.mrf.mxu0
    %v1171 = vadd.f32 %v667, %v1170
    %v1172 = vpop.f32.mrf.mxu0
    %v1173 = vadd.f32 %v669, %v1172
    %1174 = vmatmul.bf16.gmra.mxu0 %v1120
    %v1175 = vpop.f32.mrf.mxu0
    %v1176 = vadd.f32 %v672, %v1175
    %v1177 = vpop.f32.mrf.mxu0
    %v1178 = vadd.f32 %v674, %v1177
    %1179 = vdwg.mxu0
    %1180 = vmatpush.bf16.msra.mxu0 0
    %1181 = vmatpush.bf16.msra.mxu0 0
    %1182 = vmatpush.bf16.msra.mxu0 %v1056
    %1183 = vmatpush.bf16.msra.mxu0 %v1048
    %1184 = vmatpush.bf16.msra.mxu0 %v1040
    %1185 = vmatpush.bf16.msra.mxu0 %v1032
    %1186 = vmatpush.bf16.msra.mxu0 %v1024
    %1187 = vmatpush.bf16.msra.mxu0 %v1016
    %1188 = vmatmul.bf16.gmra.mxu0 %v1111
    %v1189 = vpop.f32.mrf.mxu0
    %v1190 = vadd.f32 %v686, %v1189
    %v1191 = vpop.f32.mrf.mxu0
    %v1192 = vadd.f32 %v688, %v1191
    %1193 = vmatmul.bf16.gmra.mxu0 %v1114
    %v1194 = vpop.f32.mrf.mxu0
    %v1195 = vadd.f32 %v691, %v1194
    %v1196 = vpop.f32.mrf.mxu0
    %v1197 = vadd.f32 %v693, %v1196
    %1198 = vmatmul.bf16.gmra.mxu0 %v1117
    %v1199 = vpop.f32.mrf.mxu0
    %v1200 = vadd.f32 %v696, %v1199
    %v1201 = vpop.f32.mrf.mxu0
    %v1202 = vadd.f32 %v698, %v1201
    %1203 = vmatmul.bf16.gmra.mxu0 %v1120
    %v1204 = vpop.f32.mrf.mxu0
    %v1205 = vadd.f32 %v701, %v1204
    %v1206 = vpop.f32.mrf.mxu0
    %v1207 = vadd.f32 %v703, %v1206
    %1208 = vdwg.mxu0
    %1209 = vmatpush.bf16.msra.mxu0 0
    %1210 = vmatpush.bf16.msra.mxu0 0
    %1211 = vmatpush.bf16.msra.mxu0 %v1057
    %1212 = vmatpush.bf16.msra.mxu0 %v1049
    %1213 = vmatpush.bf16.msra.mxu0 %v1041
    %1214 = vmatpush.bf16.msra.mxu0 %v1033
    %1215 = vmatpush.bf16.msra.mxu0 %v1025
    %1216 = vmatpush.bf16.msra.mxu0 %v1017
    %1217 = vmatmul.bf16.gmra.mxu0 %v1111
    %v1218 = vpop.f32.mrf.mxu0
    %v1219 = vadd.f32 %v715, %v1218
    %v1220 = vpop.f32.mrf.mxu0
    %v1221 = vadd.f32 %v717, %v1220
    %1222 = vmatmul.bf16.gmra.mxu0 %v1114
    %v1223 = vpop.f32.mrf.mxu0
    %v1224 = vadd.f32 %v720, %v1223
    %v1225 = vpop.f32.mrf.mxu0
    %v1226 = vadd.f32 %v722, %v1225
    %1227 = vmatmul.bf16.gmra.mxu0 %v1117
    %v1228 = vpop.f32.mrf.mxu0
    %v1229 = vadd.f32 %v725, %v1228
    %v1230 = vpop.f32.mrf.mxu0
    %v1231 = vadd.f32 %v727, %v1230
    %1232 = vmatmul.bf16.gmra.mxu0 %v1120
    %v1233 = vpop.f32.mrf.mxu0
    %v1234 = vadd.f32 %v730, %v1233
    %v1235 = vpop.f32.mrf.mxu0
    %v1236 = vadd.f32 %v732, %v1235
    %1237 = vdwg.mxu0
    %1238 = vmatpush.bf16.msra.mxu0 0
    %1239 = vmatpush.bf16.msra.mxu0 0
    %1240 = vmatpush.bf16.msra.mxu0 %v1058
    %1241 = vmatpush.bf16.msra.mxu0 %v1050
    %1242 = vmatpush.bf16.msra.mxu0 %v1042
    %1243 = vmatpush.bf16.msra.mxu0 %v1034
    %1244 = vmatpush.bf16.msra.mxu0 %v1026
    %1245 = vmatpush.bf16.msra.mxu0 %v1018
    %1246 = vmatmul.bf16.gmra.mxu0 %v1111
    %v1247 = vpop.f32.mrf.mxu0
    %v1248 = vadd.f32 %v744, %v1247
    %v1249 = vpop.f32.mrf.mxu0
    %v1250 = vadd.f32 %v746, %v1249
    %1251 = vmatmul.bf16.gmra.mxu0 %v1114
    %v1252 = vpop.f32.mrf.mxu0
    %v1253 = vadd.f32 %v749, %v1252
    %v1254 = vpop.f32.mrf.mxu0
    %v1255 = vadd.f32 %v751, %v1254
    %1256 = vmatmul.bf16.gmra.mxu0 %v1117
    %v1257 = vpop.f32.mrf.mxu0
    %v1258 = vadd.f32 %v754, %v1257
    %v1259 = vpop.f32.mrf.mxu0
    %v1260 = vadd.f32 %v756, %v1259
    %1261 = vmatmul.bf16.gmra.mxu0 %v1120
    %v1262 = vpop.f32.mrf.mxu0
    %v1263 = vadd.f32 %v759, %v1262
    %v1264 = vpop.f32.mrf.mxu0
    %v1265 = vadd.f32 %v761, %v1264
    %1266 = vdwg.mxu0
    %1267 = vmatpush.bf16.msra.mxu0 0
    %1268 = vmatpush.bf16.msra.mxu0 0
    %1269 = vmatpush.bf16.msra.mxu0 %v1059
    %1270 = vmatpush.bf16.msra.mxu0 %v1051
    %1271 = vmatpush.bf16.msra.mxu0 %v1043
    %1272 = vmatpush.bf16.msra.mxu0 %v1035
    %1273 = vmatpush.bf16.msra.mxu0 %v1027
    %1274 = vmatpush.bf16.msra.mxu0 %v1019
    %1275 = vmatmul.bf16.gmra.mxu0 %v1111
    %v1276 = vpop.f32.mrf.mxu0
    %v1277 = vadd.f32 %v773, %v1276
    %v1278 = vpop.f32.mrf.mxu0
    %v1279 = vadd.f32 %v775, %v1278
    %1280 = vmatmul.bf16.gmra.mxu0 %v1114
    %v1281 = vpop.f32.mrf.mxu0
    %v1282 = vadd.f32 %v778, %v1281
    %v1283 = vpop.f32.mrf.mxu0
    %v1284 = vadd.f32 %v780, %v1283
    %1285 = vmatmul.bf16.gmra.mxu0 %v1117
    %v1286 = vpop.f32.mrf.mxu0
    %v1287 = vadd.f32 %v783, %v1286
    %v1288 = vpop.f32.mrf.mxu0
    %v1289 = vadd.f32 %v785, %v1288
    %1290 = vmatmul.bf16.gmra.mxu0 %v1120
    %v1291 = vpop.f32.mrf.mxu0
    %v1292 = vadd.f32 %v788, %v1291
    %v1293 = vpop.f32.mrf.mxu0
    %v1294 = vadd.f32 %v790, %v1293
    %1295 = vdwg.mxu0
    %1296 = vmatpush.bf16.msra.mxu0 0
    %1297 = vmatpush.bf16.msra.mxu0 0
    %1298 = vmatpush.bf16.msra.mxu0 %v1060
    %1299 = vmatpush.bf16.msra.mxu0 %v1052
    %1300 = vmatpush.bf16.msra.mxu0 %v1044
    %1301 = vmatpush.bf16.msra.mxu0 %v1036
    %1302 = vmatpush.bf16.msra.mxu0 %v1028
    %1303 = vmatpush.bf16.msra.mxu0 %v1020
    %1304 = vmatmul.bf16.gmra.mxu0 %v1111
    %v1305 = vpop.f32.mrf.mxu0
    %v1306 = vadd.f32 %v802, %v1305
    %v1307 = vpop.f32.mrf.mxu0
    %v1308 = vadd.f32 %v804, %v1307
    %1309 = vmatmul.bf16.gmra.mxu0 %v1114
    %v1310 = vpop.f32.mrf.mxu0
    %v1311 = vadd.f32 %v807, %v1310
    %v1312 = vpop.f32.mrf.mxu0
    %v1313 = vadd.f32 %v809, %v1312
    %1314 = vmatmul.bf16.gmra.mxu0 %v1117
    %v1315 = vpop.f32.mrf.mxu0
    %v1316 = vadd.f32 %v812, %v1315
    %v1317 = vpop.f32.mrf.mxu0
    %v1318 = vadd.f32 %v814, %v1317
    %1319 = vmatmul.bf16.gmra.mxu0 %v1120
    %v1320 = vpop.f32.mrf.mxu0
    %v1321 = vadd.f32 %v817, %v1320
    %v1322 = vpop.f32.mrf.mxu0
    %v1323 = vadd.f32 %v819, %v1322
    %1324 = vdwg.mxu0
    %1325 = vmatpush.bf16.msra.mxu0 0
    %1326 = vmatpush.bf16.msra.mxu0 0
    %1327 = vmatpush.bf16.msra.mxu0 %v1061
    %1328 = vmatpush.bf16.msra.mxu0 %v1053
    %1329 = vmatpush.bf16.msra.mxu0 %v1045
    %1330 = vmatpush.bf16.msra.mxu0 %v1037
    %1331 = vmatpush.bf16.msra.mxu0 %v1029
    %1332 = vmatpush.bf16.msra.mxu0 %v1021
    %1333 = vmatmul.bf16.gmra.mxu0 %v1111
    %v1334 = vpop.f32.mrf.mxu0
    %v1335 = vadd.f32 %v831, %v1334
    %v1336 = vpop.f32.mrf.mxu0
    %v1337 = vadd.f32 %v833, %v1336
    %1338 = vmatmul.bf16.gmra.mxu0 %v1114
    %v1339 = vpop.f32.mrf.mxu0
    %v1340 = vadd.f32 %v836, %v1339
    %v1341 = vpop.f32.mrf.mxu0
    %v1342 = vadd.f32 %v838, %v1341
    %1343 = vmatmul.bf16.gmra.mxu0 %v1117
    %v1344 = vpop.f32.mrf.mxu0
    %v1345 = vadd.f32 %v841, %v1344
    %v1346 = vpop.f32.mrf.mxu0
    %v1347 = vadd.f32 %v843, %v1346
    %1348 = vmatmul.bf16.gmra.mxu0 %v1120
    %v1349 = vpop.f32.mrf.mxu0
    %v1350 = vadd.f32 %v846, %v1349
    %v1351 = vpop.f32.mrf.mxu0
    %v1352 = vadd.f32 %v848, %v1351
    %1353 = vdwg.mxu0
    %v1354 = vld [vmem:[%s0] sm:$0xe]
    %v1355 = vld [vmem:[%s0 + $0x14] sm:$0xe]
    %vm1360 = vcmask 1042432
    %vm1361 = vcmask 1046532
    %vm1362 = vmor %vm1360, %vm1361
    %v1363 = vrot.slane %v1354, 5
    %v1364 = vrot.slane %v1363, 4
    %v1365 = vrot.slane %v156, 5
    %v1366 = vsel %vm1362, %v1364, %v1365
    %v1367 = vrot.slane %v1365, 4
    %v1368 = vrot.slane %v157, 5
    %v1369 = vsel %vm1362, %v1367, %v1368
    %v1370 = vrot.slane %v1368, 4
    %v1371 = vrot.slane %v158, 5
    %v1372 = vsel %vm1362, %v1370, %v1371
    %v1373 = vrot.slane %v1371, 4
    %v1374 = vrot.slane %v211, 5
    %v1375 = vsel %vm1362, %v1373, %v1374
    %v1376 = vrot.slane %v1355, 5
    %v1377 = vrot.slane %v1376, 4
    %v1378 = vrot.slane %v160, 5
    %v1379 = vsel %vm1362, %v1377, %v1378
    %v1380 = vrot.slane %v1378, 4
    %v1381 = vrot.slane %v161, 5
    %v1382 = vsel %vm1362, %v1380, %v1381
    %v1383 = vrot.slane %v1381, 4
    %v1384 = vrot.slane %v162, 5
    %v1385 = vsel %vm1362, %v1383, %v1384
    %v1386 = vrot.slane %v1384, 4
    %v1387 = vrot.slane %v212, 5
    %v1388 = vsel %vm1362, %v1386, %v1387
    %s1389 = scalar_lea.vmem [#allocation4], 768
    %v1390 = vld [vmem:[%s1389] sm:$0xff]
    %v1391 = vld [vmem:[%s1389 + $0x8] sm:$0xff]
    %v1392 = vld [vmem:[%s1389 + $0x10] sm:$0xff]
    %v1393 = vld [vmem:[%s1389 + $0x18] sm:$0xff]
    %v1394 = vld [vmem:[%s1389 + $0x20] sm:$0xff]
    %v1395 = vld [vmem:[%s1389 + $0x28] sm:$0xff]
    %v1396 = vld [vmem:[%s1389 + $0x30] sm:$0xff]
    %v1397 = vld [vmem:[%s1389 + $0x38] sm:$0xff]
    %v1398 = vld [vmem:[%s1389 + $0x40] sm:$0xff]
    %v1399 = vld [vmem:[%s1389 + $0x48] sm:$0xff]
    %v1400 = vld [vmem:[%s1389 + $0x50] sm:$0xff]
    %v1401 = vld [vmem:[%s1389 + $0x58] sm:$0xff]
    %v1402 = vld [vmem:[%s1389 + $0x60] sm:$0xff]
    %v1403 = vld [vmem:[%s1389 + $0x68] sm:$0xff]
    %v1404 = vld [vmem:[%s1389 + $0x70] sm:$0xff]
    %v1405 = vld [vmem:[%s1389 + $0x78] sm:$0xff]
    %v1406 = vld [vmem:[%s1389 + $0x80] sm:$0xff]
    %v1407 = vld [vmem:[%s1389 + $0x88] sm:$0xff]
    %v1408 = vld [vmem:[%s1389 + $0x90] sm:$0xff]
    %v1409 = vld [vmem:[%s1389 + $0x98] sm:$0xff]
    %v1410 = vld [vmem:[%s1389 + $0xa0] sm:$0xff]
    %v1411 = vld [vmem:[%s1389 + $0xa8] sm:$0xff]
    %v1412 = vld [vmem:[%s1389 + $0xb0] sm:$0xff]
    %v1413 = vld [vmem:[%s1389 + $0xb8] sm:$0xff]
    %v1414 = vld [vmem:[%s1389 + $0xc0] sm:$0xff]
    %v1415 = vld [vmem:[%s1389 + $0xc8] sm:$0xff]
    %v1416 = vld [vmem:[%s1389 + $0xd0] sm:$0xff]
    %v1417 = vld [vmem:[%s1389 + $0xd8] sm:$0xff]
    %v1418 = vld [vmem:[%s1389 + $0xe0] sm:$0xff]
    %v1419 = vld [vmem:[%s1389 + $0xe8] sm:$0xff]
    %v1420 = vld [vmem:[%s1389 + $0xf0] sm:$0xff]
    %v1421 = vld [vmem:[%s1389 + $0xf8] sm:$0xff]
    %v1422 = vld [vmem:[%s1389 + $0x100] sm:$0xff]
    %v1423 = vld [vmem:[%s1389 + $0x108] sm:$0xff]
    %v1424 = vld [vmem:[%s1389 + $0x110] sm:$0xff]
    %v1425 = vld [vmem:[%s1389 + $0x118] sm:$0xff]
    %v1426 = vld [vmem:[%s1389 + $0x120] sm:$0xff]
    %v1427 = vld [vmem:[%s1389 + $0x128] sm:$0xff]
    %v1428 = vld [vmem:[%s1389 + $0x130] sm:$0xff]
    %v1429 = vld [vmem:[%s1389 + $0x138] sm:$0xff]
    %v1430 = vld [vmem:[%s1389 + $0x140] sm:$0xff]
    %v1431 = vld [vmem:[%s1389 + $0x148] sm:$0xff]
    %v1432 = vld [vmem:[%s1389 + $0x150] sm:$0xff]
    %v1433 = vld [vmem:[%s1389 + $0x158] sm:$0xff]
    %v1434 = vld [vmem:[%s1389 + $0x160] sm:$0xff]
    %v1435 = vld [vmem:[%s1389 + $0x168] sm:$0xff]
    %v1436 = vld [vmem:[%s1389 + $0x170] sm:$0xff]
    %v1437 = vld [vmem:[%s1389 + $0x178] sm:$0xff]
    %v1438 = vunpack.c.l.b16 %v1366
    %v1439 = vunpack.c.l.b16 %v1369
    %v1440 = vunpack.c.l.b16 %v1372
    %v1441 = vunpack.c.l.b16 %v1375
    %v1442 = vunpack.c.l.b16 %v1379
    %v1443 = vunpack.c.l.b16 %v1382
    %v1444 = vunpack.c.l.b16 %v1385
    %v1445 = vunpack.c.l.b16 %v1388
    %v1446 = vpack.c.b16 %v1439, %v1438
    %v1447 = vpack.c.b16 %v1441, %v1440
    %v1448 = vpack.c.b16 %v1443, %v1442
    %v1449 = vpack.c.b16 %v1445, %v1444
    %v1498 = vunpack.c.l.b16 %v1390
    %v1499 = vunpack.c.h.b16 %v1390
    %v1500 = vunpack.c.l.b16 %v1391
    %v1501 = vunpack.c.h.b16 %v1391
    %v1502 = vunpack.c.l.b16 %v1392
    %v1503 = vunpack.c.h.b16 %v1392
    %v1504 = vunpack.c.l.b16 %v1393
    %v1505 = vunpack.c.h.b16 %v1393
    %v1506 = vunpack.c.l.b16 %v1394
    %v1507 = vunpack.c.h.b16 %v1394
    %v1508 = vunpack.c.l.b16 %v1395
    %v1509 = vunpack.c.h.b16 %v1395
    %v1510 = vunpack.c.l.b16 %v1396
    %v1511 = vunpack.c.h.b16 %v1396
    %v1512 = vunpack.c.l.b16 %v1397
    %v1513 = vunpack.c.h.b16 %v1397
    %v1514 = vunpack.c.l.b16 %v1398
    %v1515 = vunpack.c.h.b16 %v1398
    %v1516 = vunpack.c.l.b16 %v1399
    %v1517 = vunpack.c.h.b16 %v1399
    %v1518 = vunpack.c.l.b16 %v1400
    %v1519 = vunpack.c.h.b16 %v1400
    %v1520 = vunpack.c.l.b16 %v1401
    %v1521 = vunpack.c.h.b16 %v1401
    %v1522 = vunpack.c.l.b16 %v1402
    %v1523 = vunpack.c.h.b16 %v1402
    %v1524 = vunpack.c.l.b16 %v1403
    %v1525 = vunpack.c.h.b16 %v1403
    %v1526 = vunpack.c.l.b16 %v1404
    %v1527 = vunpack.c.h.b16 %v1404
    %v1528 = vunpack.c.l.b16 %v1405
    %v1529 = vunpack.c.h.b16 %v1405
    %v1530 = vunpack.c.l.b16 %v1406
    %v1531 = vunpack.c.h.b16 %v1406
    %v1532 = vunpack.c.l.b16 %v1407
    %v1533 = vunpack.c.h.b16 %v1407
    %v1534 = vunpack.c.l.b16 %v1408
    %v1535 = vunpack.c.h.b16 %v1408
    %v1536 = vunpack.c.l.b16 %v1409
    %v1537 = vunpack.c.h.b16 %v1409
    %v1538 = vunpack.c.l.b16 %v1410
    %v1539 = vunpack.c.h.b16 %v1410
    %v1540 = vunpack.c.l.b16 %v1411
    %v1541 = vunpack.c.h.b16 %v1411
    %v1542 = vunpack.c.l.b16 %v1412
    %v1543 = vunpack.c.h.b16 %v1412
    %v1544 = vunpack.c.l.b16 %v1413
    %v1545 = vunpack.c.h.b16 %v1413
    %v1546 = vunpack.c.l.b16 %v1414
    %v1547 = vunpack.c.h.b16 %v1414
    %v1548 = vunpack.c.l.b16 %v1415
    %v1549 = vunpack.c.h.b16 %v1415
    %v1550 = vunpack.c.l.b16 %v1416
    %v1551 = vunpack.c.h.b16 %v1416
    %v1552 = vunpack.c.l.b16 %v1417
    %v1553 = vunpack.c.h.b16 %v1417
    %v1554 = vunpack.c.l.b16 %v1418
    %v1555 = vunpack.c.h.b16 %v1418
    %v1556 = vunpack.c.l.b16 %v1419
    %v1557 = vunpack.c.h.b16 %v1419
    %v1558 = vunpack.c.l.b16 %v1420
    %v1559 = vunpack.c.h.b16 %v1420
    %v1560 = vunpack.c.l.b16 %v1421
    %v1561 = vunpack.c.h.b16 %v1421
    %v1562 = vunpack.c.l.b16 %v1422
    %v1563 = vunpack.c.h.b16 %v1422
    %v1564 = vunpack.c.l.b16 %v1423
    %v1565 = vunpack.c.h.b16 %v1423
    %v1566 = vunpack.c.l.b16 %v1424
    %v1567 = vunpack.c.h.b16 %v1424
    %v1568 = vunpack.c.l.b16 %v1425
    %v1569 = vunpack.c.h.b16 %v1425
    %v1570 = vunpack.c.l.b16 %v1426
    %v1571 = vunpack.c.h.b16 %v1426
    %v1572 = vunpack.c.l.b16 %v1427
    %v1573 = vunpack.c.h.b16 %v1427
    %v1574 = vunpack.c.l.b16 %v1428
    %v1575 = vunpack.c.h.b16 %v1428
    %v1576 = vunpack.c.l.b16 %v1429
    %v1577 = vunpack.c.h.b16 %v1429
    %v1578 = vunpack.c.l.b16 %v1430
    %v1579 = vunpack.c.h.b16 %v1430
    %v1580 = vunpack.c.l.b16 %v1431
    %v1581 = vunpack.c.h.b16 %v1431
    %v1582 = vunpack.c.l.b16 %v1432
    %v1583 = vunpack.c.h.b16 %v1432
    %v1584 = vunpack.c.l.b16 %v1433
    %v1585 = vunpack.c.h.b16 %v1433
    %v1586 = vunpack.c.l.b16 %v1434
    %v1587 = vunpack.c.h.b16 %v1434
    %v1588 = vunpack.c.l.b16 %v1435
    %v1589 = vunpack.c.h.b16 %v1435
    %v1590 = vunpack.c.l.b16 %v1436
    %v1591 = vunpack.c.h.b16 %v1436
    %v1592 = vunpack.c.l.b16 %v1437
    %v1593 = vunpack.c.h.b16 %v1437
    %v1594 = vpack.c.b16 %v1506, %v1498
    %v1595 = vpack.c.b16 %v1507, %v1499
    %v1596 = vpack.c.b16 %v1508, %v1500
    %v1597 = vpack.c.b16 %v1509, %v1501
    %v1598 = vpack.c.b16 %v1510, %v1502
    %v1599 = vpack.c.b16 %v1511, %v1503
    %v1600 = vpack.c.b16 %v1512, %v1504
    %v1601 = vpack.c.b16 %v1513, %v1505
    %v1602 = vpack.c.b16 %v1522, %v1514
    %v1603 = vpack.c.b16 %v1523, %v1515
    %v1604 = vpack.c.b16 %v1524, %v1516
    %v1605 = vpack.c.b16 %v1525, %v1517
    %v1606 = vpack.c.b16 %v1526, %v1518
    %v1607 = vpack.c.b16 %v1527, %v1519
    %v1608 = vpack.c.b16 %v1528, %v1520
    %v1609 = vpack.c.b16 %v1529, %v1521
    %v1610 = vpack.c.b16 %v1538, %v1530
    %v1611 = vpack.c.b16 %v1539, %v1531
    %v1612 = vpack.c.b16 %v1540, %v1532
    %v1613 = vpack.c.b16 %v1541, %v1533
    %v1614 = vpack.c.b16 %v1542, %v1534
    %v1615 = vpack.c.b16 %v1543, %v1535
    %v1616 = vpack.c.b16 %v1544, %v1536
    %v1617 = vpack.c.b16 %v1545, %v1537
    %v1618 = vpack.c.b16 %v1554, %v1546
    %v1619 = vpack.c.b16 %v1555, %v1547
    %v1620 = vpack.c.b16 %v1556, %v1548
    %v1621 = vpack.c.b16 %v1557, %v1549
    %v1622 = vpack.c.b16 %v1558, %v1550
    %v1623 = vpack.c.b16 %v1559, %v1551
    %v1624 = vpack.c.b16 %v1560, %v1552
    %v1625 = vpack.c.b16 %v1561, %v1553
    %v1626 = vpack.c.b16 %v1570, %v1562
    %v1627 = vpack.c.b16 %v1571, %v1563
    %v1628 = vpack.c.b16 %v1572, %v1564
    %v1629 = vpack.c.b16 %v1573, %v1565
    %v1630 = vpack.c.b16 %v1574, %v1566
    %v1631 = vpack.c.b16 %v1575, %v1567
    %v1632 = vpack.c.b16 %v1576, %v1568
    %v1633 = vpack.c.b16 %v1577, %v1569
    %v1634 = vpack.c.b16 %v1586, %v1578
    %v1635 = vpack.c.b16 %v1587, %v1579
    %v1636 = vpack.c.b16 %v1588, %v1580
    %v1637 = vpack.c.b16 %v1589, %v1581
    %v1638 = vpack.c.b16 %v1590, %v1582
    %v1639 = vpack.c.b16 %v1591, %v1583
    %v1640 = vpack.c.b16 %v1592, %v1584
    %v1641 = vpack.c.b16 %v1593, %v1585
    %v1691 = vsel %vm605, %v1446, 0
    %v1694 = vsel %vm605, %v1447, 0
    %v1697 = vsel %vm605, %v1448, 0
    %v1700 = vsel %vm605, %v1449, 0
    %1702 = vmatpush.bf16.msra.mxu0 0
    %1703 = vmatpush.bf16.msra.mxu0 0
    %1704 = vmatpush.bf16.msra.mxu0 %v1634
    %1705 = vmatpush.bf16.msra.mxu0 %v1626
    %1706 = vmatpush.bf16.msra.mxu0 %v1618
    %1707 = vmatpush.bf16.msra.mxu0 %v1610
    %1708 = vmatpush.bf16.msra.mxu0 %v1602
    %1709 = vmatpush.bf16.msra.mxu0 %v1594
    %1710 = vmatmul.bf16.gmra.mxu0 %v1691
    %v1711 = vpop.f32.mrf.mxu0
    %v1712 = vadd.f32 0.0, %v1711
    %v1713 = vpop.f32.mrf.mxu0
    %v1714 = vadd.f32 0.0, %v1713
    %1715 = vmatmul.bf16.gmra.mxu0 %v1694
    %v1716 = vpop.f32.mrf.mxu0
    %v1717 = vadd.f32 0.0, %v1716
    %v1718 = vpop.f32.mrf.mxu0
    %v1719 = vadd.f32 0.0, %v1718
    %1720 = vmatmul.bf16.gmra.mxu0 %v1697
    %v1721 = vpop.f32.mrf.mxu0
    %v1722 = vadd.f32 0.0, %v1721
    %v1723 = vpop.f32.mrf.mxu0
    %v1724 = vadd.f32 0.0, %v1723
    %1725 = vmatmul.bf16.gmra.mxu0 %v1700
    %v1726 = vpop.f32.mrf.mxu0
    %v1727 = vadd.f32 0.0, %v1726
    %v1728 = vpop.f32.mrf.mxu0
    %v1729 = vadd.f32 0.0, %v1728
    %1730 = vdwg.mxu0
    %1731 = vmatpush.bf16.msra.mxu0 0
    %1732 = vmatpush.bf16.msra.mxu0 0
    %1733 = vmatpush.bf16.msra.mxu0 %v1635
    %1734 = vmatpush.bf16.msra.mxu0 %v1627
    %1735 = vmatpush.bf16.msra.mxu0 %v1619
    %1736 = vmatpush.bf16.msra.mxu0 %v1611
    %1737 = vmatpush.bf16.msra.mxu0 %v1603
    %1738 = vmatpush.bf16.msra.mxu0 %v1595
    %1739 = vmatmul.bf16.gmra.mxu0 %v1691
    %v1740 = vpop.f32.mrf.mxu0
    %v1741 = vadd.f32 0.0, %v1740
    %v1742 = vpop.f32.mrf.mxu0
    %v1743 = vadd.f32 0.0, %v1742
    %1744 = vmatmul.bf16.gmra.mxu0 %v1694
    %v1745 = vpop.f32.mrf.mxu0
    %v1746 = vadd.f32 0.0, %v1745
    %v1747 = vpop.f32.mrf.mxu0
    %v1748 = vadd.f32 0.0, %v1747
    %1749 = vmatmul.bf16.gmra.mxu0 %v1697
    %v1750 = vpop.f32.mrf.mxu0
    %v1751 = vadd.f32 0.0, %v1750
    %v1752 = vpop.f32.mrf.mxu0
    %v1753 = vadd.f32 0.0, %v1752
    %1754 = vmatmul.bf16.gmra.mxu0 %v1700
    %v1755 = vpop.f32.mrf.mxu0
    %v1756 = vadd.f32 0.0, %v1755
    %v1757 = vpop.f32.mrf.mxu0
    %v1758 = vadd.f32 0.0, %v1757
    %1759 = vdwg.mxu0
    %1760 = vmatpush.bf16.msra.mxu0 0
    %1761 = vmatpush.bf16.msra.mxu0 0
    %1762 = vmatpush.bf16.msra.mxu0 %v1636
    %1763 = vmatpush.bf16.msra.mxu0 %v1628
    %1764 = vmatpush.bf16.msra.mxu0 %v1620
    %1765 = vmatpush.bf16.msra.mxu0 %v1612
    %1766 = vmatpush.bf16.msra.mxu0 %v1604
    %1767 = vmatpush.bf16.msra.mxu0 %v1596
    %1768 = vmatmul.bf16.gmra.mxu0 %v1691
    %v1769 = vpop.f32.mrf.mxu0
    %v1770 = vadd.f32 0.0, %v1769
    %v1771 = vpop.f32.mrf.mxu0
    %v1772 = vadd.f32 0.0, %v1771
    %1773 = vmatmul.bf16.gmra.mxu0 %v1694
    %v1774 = vpop.f32.mrf.mxu0
    %v1775 = vadd.f32 0.0, %v1774
    %v1776 = vpop.f32.mrf.mxu0
    %v1777 = vadd.f32 0.0, %v1776
    %1778 = vmatmul.bf16.gmra.mxu0 %v1697
    %v1779 = vpop.f32.mrf.mxu0
    %v1780 = vadd.f32 0.0, %v1779
    %v1781 = vpop.f32.mrf.mxu0
    %v1782 = vadd.f32 0.0, %v1781
    %1783 = vmatmul.bf16.gmra.mxu0 %v1700
    %v1784 = vpop.f32.mrf.mxu0
    %v1785 = vadd.f32 0.0, %v1784
    %v1786 = vpop.f32.mrf.mxu0
    %v1787 = vadd.f32 0.0, %v1786
    %1788 = vdwg.mxu0
    %1789 = vmatpush.bf16.msra.mxu0 0
    %1790 = vmatpush.bf16.msra.mxu0 0
    %1791 = vmatpush.bf16.msra.mxu0 %v1637
    %1792 = vmatpush.bf16.msra.mxu0 %v1629
    %1793 = vmatpush.bf16.msra.mxu0 %v1621
    %1794 = vmatpush.bf16.msra.mxu0 %v1613
    %1795 = vmatpush.bf16.msra.mxu0 %v1605
    %1796 = vmatpush.bf16.msra.mxu0 %v1597
    %1797 = vmatmul.bf16.gmra.mxu0 %v1691
    %v1798 = vpop.f32.mrf.mxu0
    %v1799 = vadd.f32 0.0, %v1798
    %v1800 = vpop.f32.mrf.mxu0
    %v1801 = vadd.f32 0.0, %v1800
    %1802 = vmatmul.bf16.gmra.mxu0 %v1694
    %v1803 = vpop.f32.mrf.mxu0
    %v1804 = vadd.f32 0.0, %v1803
    %v1805 = vpop.f32.mrf.mxu0
    %v1806 = vadd.f32 0.0, %v1805
    %1807 = vmatmul.bf16.gmra.mxu0 %v1697
    %v1808 = vpop.f32.mrf.mxu0
    %v1809 = vadd.f32 0.0, %v1808
    %v1810 = vpop.f32.mrf.mxu0
    %v1811 = vadd.f32 0.0, %v1810
    %1812 = vmatmul.bf16.gmra.mxu0 %v1700
    %v1813 = vpop.f32.mrf.mxu0
    %v1814 = vadd.f32 0.0, %v1813
    %v1815 = vpop.f32.mrf.mxu0
    %v1816 = vadd.f32 0.0, %v1815
    %1817 = vdwg.mxu0
    %1818 = vmatpush.bf16.msra.mxu0 0
    %1819 = vmatpush.bf16.msra.mxu0 0
    %1820 = vmatpush.bf16.msra.mxu0 %v1638
    %1821 = vmatpush.bf16.msra.mxu0 %v1630
    %1822 = vmatpush.bf16.msra.mxu0 %v1622
    %1823 = vmatpush.bf16.msra.mxu0 %v1614
    %1824 = vmatpush.bf16.msra.mxu0 %v1606
    %1825 = vmatpush.bf16.msra.mxu0 %v1598
    %1826 = vmatmul.bf16.gmra.mxu0 %v1691
    %v1827 = vpop.f32.mrf.mxu0
    %v1828 = vadd.f32 0.0, %v1827
    %v1829 = vpop.f32.mrf.mxu0
    %v1830 = vadd.f32 0.0, %v1829
    %1831 = vmatmul.bf16.gmra.mxu0 %v1694
    %v1832 = vpop.f32.mrf.mxu0
    %v1833 = vadd.f32 0.0, %v1832
    %v1834 = vpop.f32.mrf.mxu0
    %v1835 = vadd.f32 0.0, %v1834
    %1836 = vmatmul.bf16.gmra.mxu0 %v1697
    %v1837 = vpop.f32.mrf.mxu0
    %v1838 = vadd.f32 0.0, %v1837
    %v1839 = vpop.f32.mrf.mxu0
    %v1840 = vadd.f32 0.0, %v1839
    %1841 = vmatmul.bf16.gmra.mxu0 %v1700
    %v1842 = vpop.f32.mrf.mxu0
    %v1843 = vadd.f32 0.0, %v1842
    %v1844 = vpop.f32.mrf.mxu0
    %v1845 = vadd.f32 0.0, %v1844
    %1846 = vdwg.mxu0
    %1847 = vmatpush.bf16.msra.mxu0 0
    %1848 = vmatpush.bf16.msra.mxu0 0
    %1849 = vmatpush.bf16.msra.mxu0 %v1639
    %1850 = vmatpush.bf16.msra.mxu0 %v1631
    %1851 = vmatpush.bf16.msra.mxu0 %v1623
    %1852 = vmatpush.bf16.msra.mxu0 %v1615
    %1853 = vmatpush.bf16.msra.mxu0 %v1607
    %1854 = vmatpush.bf16.msra.mxu0 %v1599
    %1855 = vmatmul.bf16.gmra.mxu0 %v1691
    %v1856 = vpop.f32.mrf.mxu0
    %v1857 = vadd.f32 0.0, %v1856
    %v1858 = vpop.f32.mrf.mxu0
    %v1859 = vadd.f32 0.0, %v1858
    %1860 = vmatmul.bf16.gmra.mxu0 %v1694
    %v1861 = vpop.f32.mrf.mxu0
    %v1862 = vadd.f32 0.0, %v1861
    %v1863 = vpop.f32.mrf.mxu0
    %v1864 = vadd.f32 0.0, %v1863
    %1865 = vmatmul.bf16.gmra.mxu0 %v1697
    %v1866 = vpop.f32.mrf.mxu0
    %v1867 = vadd.f32 0.0, %v1866
    %v1868 = vpop.f32.mrf.mxu0
    %v1869 = vadd.f32 0.0, %v1868
    %1870 = vmatmul.bf16.gmra.mxu0 %v1700
    %v1871 = vpop.f32.mrf.mxu0
    %v1872 = vadd.f32 0.0, %v1871
    %v1873 = vpop.f32.mrf.mxu0
    %v1874 = vadd.f32 0.0, %v1873
    %1875 = vdwg.mxu0
    %1876 = vmatpush.bf16.msra.mxu0 0
    %1877 = vmatpush.bf16.msra.mxu0 0
    %1878 = vmatpush.bf16.msra.mxu0 %v1640
    %1879 = vmatpush.bf16.msra.mxu0 %v1632
    %1880 = vmatpush.bf16.msra.mxu0 %v1624
    %1881 = vmatpush.bf16.msra.mxu0 %v1616
    %1882 = vmatpush.bf16.msra.mxu0 %v1608
    %1883 = vmatpush.bf16.msra.mxu0 %v1600
    %1884 = vmatmul.bf16.gmra.mxu0 %v1691
    %v1885 = vpop.f32.mrf.mxu0
    %v1886 = vadd.f32 0.0, %v1885
    %v1887 = vpop.f32.mrf.mxu0
    %v1888 = vadd.f32 0.0, %v1887
    %1889 = vmatmul.bf16.gmra.mxu0 %v1694
    %v1890 = vpop.f32.mrf.mxu0
    %v1891 = vadd.f32 0.0, %v1890
    %v1892 = vpop.f32.mrf.mxu0
    %v1893 = vadd.f32 0.0, %v1892
    %1894 = vmatmul.bf16.gmra.mxu0 %v1697
    %v1895 = vpop.f32.mrf.mxu0
    %v1896 = vadd.f32 0.0, %v1895
    %v1897 = vpop.f32.mrf.mxu0
    %v1898 = vadd.f32 0.0, %v1897
    %1899 = vmatmul.bf16.gmra.mxu0 %v1700
    %v1900 = vpop.f32.mrf.mxu0
    %v1901 = vadd.f32 0.0, %v1900
    %v1902 = vpop.f32.mrf.mxu0
    %v1903 = vadd.f32 0.0, %v1902
    %1904 = vdwg.mxu0
    %1905 = vmatpush.bf16.msra.mxu0 0
    %1906 = vmatpush.bf16.msra.mxu0 0
    %1907 = vmatpush.bf16.msra.mxu0 %v1641
    %1908 = vmatpush.bf16.msra.mxu0 %v1633
    %1909 = vmatpush.bf16.msra.mxu0 %v1625
    %1910 = vmatpush.bf16.msra.mxu0 %v1617
    %1911 = vmatpush.bf16.msra.mxu0 %v1609
    %1912 = vmatpush.bf16.msra.mxu0 %v1601
    %1913 = vmatmul.bf16.gmra.mxu0 %v1691
    %v1914 = vpop.f32.mrf.mxu0
    %v1915 = vadd.f32 0.0, %v1914
    %v1916 = vpop.f32.mrf.mxu0
    %v1917 = vadd.f32 0.0, %v1916
    %1918 = vmatmul.bf16.gmra.mxu0 %v1694
    %v1919 = vpop.f32.mrf.mxu0
    %v1920 = vadd.f32 0.0, %v1919
    %v1921 = vpop.f32.mrf.mxu0
    %v1922 = vadd.f32 0.0, %v1921
    %1923 = vmatmul.bf16.gmra.mxu0 %v1697
    %v1924 = vpop.f32.mrf.mxu0
    %v1925 = vadd.f32 0.0, %v1924
    %v1926 = vpop.f32.mrf.mxu0
    %v1927 = vadd.f32 0.0, %v1926
    %1928 = vmatmul.bf16.gmra.mxu0 %v1700
    %v1929 = vpop.f32.mrf.mxu0
    %v1930 = vadd.f32 0.0, %v1929
    %v1931 = vpop.f32.mrf.mxu0
    %v1932 = vadd.f32 0.0, %v1931
    %1933 = vdwg.mxu0
    %v1934 = vadd.f32 %v1132, %v1712
    %v1935 = vadd.f32 %v1161, %v1741
    %v1936 = vadd.f32 %v1190, %v1770
    %v1937 = vadd.f32 %v1219, %v1799
    %v1938 = vadd.f32 %v1248, %v1828
    %v1939 = vadd.f32 %v1277, %v1857
    %v1940 = vadd.f32 %v1306, %v1886
    %v1941 = vadd.f32 %v1335, %v1915
    %v1942 = vadd.f32 %v1134, %v1714
    %v1943 = vadd.f32 %v1163, %v1743
    %v1944 = vadd.f32 %v1192, %v1772
    %v1945 = vadd.f32 %v1221, %v1801
    %v1946 = vadd.f32 %v1250, %v1830
    %v1947 = vadd.f32 %v1279, %v1859
    %v1948 = vadd.f32 %v1308, %v1888
    %v1949 = vadd.f32 %v1337, %v1917
    %v1950 = vadd.f32 %v1137, %v1717
    %v1951 = vadd.f32 %v1166, %v1746
    %v1952 = vadd.f32 %v1195, %v1775
    %v1953 = vadd.f32 %v1224, %v1804
    %v1954 = vadd.f32 %v1253, %v1833
    %v1955 = vadd.f32 %v1282, %v1862
    %v1956 = vadd.f32 %v1311, %v1891
    %v1957 = vadd.f32 %v1340, %v1920
    %v1958 = vadd.f32 %v1139, %v1719
    %v1959 = vadd.f32 %v1168, %v1748
    %v1960 = vadd.f32 %v1197, %v1777
    %v1961 = vadd.f32 %v1226, %v1806
    %v1962 = vadd.f32 %v1255, %v1835
    %v1963 = vadd.f32 %v1284, %v1864
    %v1964 = vadd.f32 %v1313, %v1893
    %v1965 = vadd.f32 %v1342, %v1922
    %v1966 = vadd.f32 %v1142, %v1722
    %v1967 = vadd.f32 %v1171, %v1751
    %v1968 = vadd.f32 %v1200, %v1780
    %v1969 = vadd.f32 %v1229, %v1809
    %v1970 = vadd.f32 %v1258, %v1838
    %v1971 = vadd.f32 %v1287, %v1867
    %v1972 = vadd.f32 %v1316, %v1896
    %v1973 = vadd.f32 %v1345, %v1925
    %v1974 = vadd.f32 %v1144, %v1724
    %v1975 = vadd.f32 %v1173, %v1753
    %v1976 = vadd.f32 %v1202, %v1782
    %v1977 = vadd.f32 %v1231, %v1811
    %v1978 = vadd.f32 %v1260, %v1840
    %v1979 = vadd.f32 %v1289, %v1869
    %v1980 = vadd.f32 %v1318, %v1898
    %v1981 = vadd.f32 %v1347, %v1927
    %v1982 = vadd.f32 %v1147, %v1727
    %v1983 = vadd.f32 %v1176, %v1756
    %v1984 = vadd.f32 %v1205, %v1785
    %v1985 = vadd.f32 %v1234, %v1814
    %v1986 = vadd.f32 %v1263, %v1843
    %v1987 = vadd.f32 %v1292, %v1872
    %v1988 = vadd.f32 %v1321, %v1901
    %v1989 = vadd.f32 %v1350, %v1930
    %v1990 = vadd.f32 %v1149, %v1729
    %v1991 = vadd.f32 %v1178, %v1758
    %v1992 = vadd.f32 %v1207, %v1787
    %v1993 = vadd.f32 %v1236, %v1816
    %v1994 = vadd.f32 %v1265, %v1845
    %v1995 = vadd.f32 %v1294, %v1874
    %v1996 = vadd.f32 %v1323, %v1903
    %v1997 = vadd.f32 %v1352, %v1932
    %v1998 = vld [vmem:[%s0 + $0x10] sm:$0x3]
    %v1999 = vld [vmem:[%s0 + $0x24] sm:$0x3]
    %vm2000 = vsmask.f32 2304
    %vm2001 = vsmask.f32 6416
    %vm2002 = vmor %vm2000, %vm2001
    %v2004 = vshrl.u32 %v1354, 16
    %v2006 = vrot.slane %v2004, 5
    %v2007 = vshll.u32 %v1354, 16
    %v2009 = vrot.slane %v2007, 6
    %v2010 = vor.u32 %v2006, %v2009
    %v2011 = vrot.slane %v2010, 4
    %v2012 = vrot.slane %v230, 5
    %v2013 = vrot.slane %v226, 6
    %v2014 = vor.u32 %v2012, %v2013
    %v2015 = vsel %vm2002, %v2011, %v2014
    %v2016 = vrot.slane %v2014, 4
    %v2017 = vrot.slane %v240, 5
    %v2018 = vrot.slane %v236, 6
    %v2019 = vor.u32 %v2017, %v2018
    %v2020 = vsel %vm2002, %v2016, %v2019
    %v2021 = vrot.slane %v2019, 4
    %v2022 = vrot.slane %v250, 5
    %v2023 = vrot.slane %v246, 6
    %v2024 = vor.u32 %v2022, %v2023
    %v2025 = vsel %vm2002, %v2021, %v2024
    %v2026 = vrot.slane %v2024, 4
    %v2028 = vshrl.u32 %v1998, 16
    %v2030 = vrot.slane %v2028, 5
    %v2031 = vshll.u32 %v1998, 16
    %v2033 = vrot.slane %v2031, 6
    %v2034 = vor.u32 %v2030, %v2033
    %v2035 = vsel %vm2002, %v2026, %v2034
    %v2037 = vshrl.u32 %v1355, 16
    %v2039 = vrot.slane %v2037, 5
    %v2040 = vshll.u32 %v1355, 16
    %v2042 = vrot.slane %v2040, 6
    %v2043 = vor.u32 %v2039, %v2042
    %v2044 = vrot.slane %v2043, 4
    %v2045 = vrot.slane %v274, 5
    %v2046 = vrot.slane %v270, 6
    %v2047 = vor.u32 %v2045, %v2046
    %v2048 = vsel %vm2002, %v2044, %v2047
    %v2049 = vrot.slane %v2047, 4
    %v2050 = vrot.slane %v284, 5
    %v2051 = vrot.slane %v280, 6
    %v2052 = vor.u32 %v2050, %v2051
    %v2053 = vsel %vm2002, %v2049, %v2052
    %v2054 = vrot.slane %v2052, 4
    %v2055 = vrot.slane %v294, 5
    %v2056 = vrot.slane %v290, 6
    %v2057 = vor.u32 %v2055, %v2056
    %v2058 = vsel %vm2002, %v2054, %v2057
    %v2059 = vrot.slane %v2057, 4
    %v2061 = vshrl.u32 %v1999, 16
    %v2063 = vrot.slane %v2061, 5
    %v2064 = vshll.u32 %v1999, 16
    %v2066 = vrot.slane %v2064, 6
    %v2067 = vor.u32 %v2063, %v2066
    %v2068 = vsel %vm2002, %v2059, %v2067
    %s2069 = scalar_lea.vmem [#allocation4], 1152
    %v2070 = vld [vmem:[%s2069] sm:$0xff]
    %v2071 = vld [vmem:[%s2069 + $0x8] sm:$0xff]
    %v2072 = vld [vmem:[%s2069 + $0x10] sm:$0xff]
    %v2073 = vld [vmem:[%s2069 + $0x18] sm:$0xff]
    %v2074 = vld [vmem:[%s2069 + $0x20] sm:$0xff]
    %v2075 = vld [vmem:[%s2069 + $0x28] sm:$0xff]
    %v2076 = vld [vmem:[%s2069 + $0x30] sm:$0xff]
    %v2077 = vld [vmem:[%s2069 + $0x38] sm:$0xff]
    %v2078 = vld [vmem:[%s2069 + $0x40] sm:$0xff]
    %v2079 = vld [vmem:[%s2069 + $0x48] sm:$0xff]
    %v2080 = vld [vmem:[%s2069 + $0x50] sm:$0xff]
    %v2081 = vld [vmem:[%s2069 + $0x58] sm:$0xff]
    %v2082 = vld [vmem:[%s2069 + $0x60] sm:$0xff]
    %v2083 = vld [vmem:[%s2069 + $0x68] sm:$0xff]
    %v2084 = vld [vmem:[%s2069 + $0x70] sm:$0xff]
    %v2085 = vld [vmem:[%s2069 + $0x78] sm:$0xff]
    %v2086 = vld [vmem:[%s2069 + $0x80] sm:$0xff]
    %v2087 = vld [vmem:[%s2069 + $0x88] sm:$0xff]
    %v2088 = vld [vmem:[%s2069 + $0x90] sm:$0xff]
    %v2089 = vld [vmem:[%s2069 + $0x98] sm:$0xff]
    %v2090 = vld [vmem:[%s2069 + $0xa0] sm:$0xff]
    %v2091 = vld [vmem:[%s2069 + $0xa8] sm:$0xff]
    %v2092 = vld [vmem:[%s2069 + $0xb0] sm:$0xff]
    %v2093 = vld [vmem:[%s2069 + $0xb8] sm:$0xff]
    %v2094 = vld [vmem:[%s2069 + $0xc0] sm:$0xff]
    %v2095 = vld [vmem:[%s2069 + $0xc8] sm:$0xff]
    %v2096 = vld [vmem:[%s2069 + $0xd0] sm:$0xff]
    %v2097 = vld [vmem:[%s2069 + $0xd8] sm:$0xff]
    %v2098 = vld [vmem:[%s2069 + $0xe0] sm:$0xff]
    %v2099 = vld [vmem:[%s2069 + $0xe8] sm:$0xff]
    %v2100 = vld [vmem:[%s2069 + $0xf0] sm:$0xff]
    %v2101 = vld [vmem:[%s2069 + $0xf8] sm:$0xff]
    %v2102 = vld [vmem:[%s2069 + $0x100] sm:$0xff]
    %v2103 = vld [vmem:[%s2069 + $0x108] sm:$0xff]
    %v2104 = vld [vmem:[%s2069 + $0x110] sm:$0xff]
    %v2105 = vld [vmem:[%s2069 + $0x118] sm:$0xff]
    %v2106 = vld [vmem:[%s2069 + $0x120] sm:$0xff]
    %v2107 = vld [vmem:[%s2069 + $0x128] sm:$0xff]
    %v2108 = vld [vmem:[%s2069 + $0x130] sm:$0xff]
    %v2109 = vld [vmem:[%s2069 + $0x138] sm:$0xff]
    %v2110 = vld [vmem:[%s2069 + $0x140] sm:$0xff]
    %v2111 = vld [vmem:[%s2069 + $0x148] sm:$0xff]
    %v2112 = vld [vmem:[%s2069 + $0x150] sm:$0xff]
    %v2113 = vld [vmem:[%s2069 + $0x158] sm:$0xff]
    %v2114 = vld [vmem:[%s2069 + $0x160] sm:$0xff]
    %v2115 = vld [vmem:[%s2069 + $0x168] sm:$0xff]
    %v2116 = vld [vmem:[%s2069 + $0x170] sm:$0xff]
    %v2117 = vld [vmem:[%s2069 + $0x178] sm:$0xff]
    %v2118 = vunpack.c.l.b16 %v2015
    %v2119 = vunpack.c.l.b16 %v2020
    %v2120 = vunpack.c.l.b16 %v2025
    %v2121 = vunpack.c.l.b16 %v2035
    %v2122 = vunpack.c.l.b16 %v2048
    %v2123 = vunpack.c.l.b16 %v2053
    %v2124 = vunpack.c.l.b16 %v2058
    %v2125 = vunpack.c.l.b16 %v2068
    %v2126 = vpack.c.b16 %v2119, %v2118
    %v2127 = vpack.c.b16 %v2121, %v2120
    %v2128 = vpack.c.b16 %v2123, %v2122
    %v2129 = vpack.c.b16 %v2125, %v2124
    %v2178 = vunpack.c.l.b16 %v2070
    %v2179 = vunpack.c.h.b16 %v2070
    %v2180 = vunpack.c.l.b16 %v2071
    %v2181 = vunpack.c.h.b16 %v2071
    %v2182 = vunpack.c.l.b16 %v2072
    %v2183 = vunpack.c.h.b16 %v2072
    %v2184 = vunpack.c.l.b16 %v2073
    %v2185 = vunpack.c.h.b16 %v2073
    %v2186 = vunpack.c.l.b16 %v2074
    %v2187 = vunpack.c.h.b16 %v2074
    %v2188 = vunpack.c.l.b16 %v2075
    %v2189 = vunpack.c.h.b16 %v2075
    %v2190 = vunpack.c.l.b16 %v2076
    %v2191 = vunpack.c.h.b16 %v2076
    %v2192 = vunpack.c.l.b16 %v2077
    %v2193 = vunpack.c.h.b16 %v2077
    %v2194 = vunpack.c.l.b16 %v2078
    %v2195 = vunpack.c.h.b16 %v2078
    %v2196 = vunpack.c.l.b16 %v2079
    %v2197 = vunpack.c.h.b16 %v2079
    %v2198 = vunpack.c.l.b16 %v2080
    %v2199 = vunpack.c.h.b16 %v2080
    %v2200 = vunpack.c.l.b16 %v2081
    %v2201 = vunpack.c.h.b16 %v2081
    %v2202 = vunpack.c.l.b16 %v2082
    %v2203 = vunpack.c.h.b16 %v2082
    %v2204 = vunpack.c.l.b16 %v2083
    %v2205 = vunpack.c.h.b16 %v2083
    %v2206 = vunpack.c.l.b16 %v2084
    %v2207 = vunpack.c.h.b16 %v2084
    %v2208 = vunpack.c.l.b16 %v2085
    %v2209 = vunpack.c.h.b16 %v2085
    %v2210 = vunpack.c.l.b16 %v2086
    %v2211 = vunpack.c.h.b16 %v2086
    %v2212 = vunpack.c.l.b16 %v2087
    %v2213 = vunpack.c.h.b16 %v2087
    %v2214 = vunpack.c.l.b16 %v2088
    %v2215 = vunpack.c.h.b16 %v2088
    %v2216 = vunpack.c.l.b16 %v2089
    %v2217 = vunpack.c.h.b16 %v2089
    %v2218 = vunpack.c.l.b16 %v2090
    %v2219 = vunpack.c.h.b16 %v2090
    %v2220 = vunpack.c.l.b16 %v2091
    %v2221 = vunpack.c.h.b16 %v2091
    %v2222 = vunpack.c.l.b16 %v2092
    %v2223 = vunpack.c.h.b16 %v2092
    %v2224 = vunpack.c.l.b16 %v2093
    %v2225 = vunpack.c.h.b16 %v2093
    %v2226 = vunpack.c.l.b16 %v2094
    %v2227 = vunpack.c.h.b16 %v2094
    %v2228 = vunpack.c.l.b16 %v2095
    %v2229 = vunpack.c.h.b16 %v2095
    %v2230 = vunpack.c.l.b16 %v2096
    %v2231 = vunpack.c.h.b16 %v2096
    %v2232 = vunpack.c.l.b16 %v2097
    %v2233 = vunpack.c.h.b16 %v2097
    %v2234 = vunpack.c.l.b16 %v2098
    %v2235 = vunpack.c.h.b16 %v2098
    %v2236 = vunpack.c.l.b16 %v2099
    %v2237 = vunpack.c.h.b16 %v2099
    %v2238 = vunpack.c.l.b16 %v2100
    %v2239 = vunpack.c.h.b16 %v2100
    %v2240 = vunpack.c.l.b16 %v2101
    %v2241 = vunpack.c.h.b16 %v2101
    %v2242 = vunpack.c.l.b16 %v2102
    %v2243 = vunpack.c.h.b16 %v2102
    %v2244 = vunpack.c.l.b16 %v2103
    %v2245 = vunpack.c.h.b16 %v2103
    %v2246 = vunpack.c.l.b16 %v2104
    %v2247 = vunpack.c.h.b16 %v2104
    %v2248 = vunpack.c.l.b16 %v2105
    %v2249 = vunpack.c.h.b16 %v2105
    %v2250 = vunpack.c.l.b16 %v2106
    %v2251 = vunpack.c.h.b16 %v2106
    %v2252 = vunpack.c.l.b16 %v2107
    %v2253 = vunpack.c.h.b16 %v2107
    %v2254 = vunpack.c.l.b16 %v2108
    %v2255 = vunpack.c.h.b16 %v2108
    %v2256 = vunpack.c.l.b16 %v2109
    %v2257 = vunpack.c.h.b16 %v2109
    %v2258 = vunpack.c.l.b16 %v2110
    %v2259 = vunpack.c.h.b16 %v2110
    %v2260 = vunpack.c.l.b16 %v2111
    %v2261 = vunpack.c.h.b16 %v2111
    %v2262 = vunpack.c.l.b16 %v2112
    %v2263 = vunpack.c.h.b16 %v2112
    %v2264 = vunpack.c.l.b16 %v2113
    %v2265 = vunpack.c.h.b16 %v2113
    %v2266 = vunpack.c.l.b16 %v2114
    %v2267 = vunpack.c.h.b16 %v2114
    %v2268 = vunpack.c.l.b16 %v2115
    %v2269 = vunpack.c.h.b16 %v2115
    %v2270 = vunpack.c.l.b16 %v2116
    %v2271 = vunpack.c.h.b16 %v2116
    %v2272 = vunpack.c.l.b16 %v2117
    %v2273 = vunpack.c.h.b16 %v2117
    %v2274 = vpack.c.b16 %v2186, %v2178
    %v2275 = vpack.c.b16 %v2187, %v2179
    %v2276 = vpack.c.b16 %v2188, %v2180
    %v2277 = vpack.c.b16 %v2189, %v2181
    %v2278 = vpack.c.b16 %v2190, %v2182
    %v2279 = vpack.c.b16 %v2191, %v2183
    %v2280 = vpack.c.b16 %v2192, %v2184
    %v2281 = vpack.c.b16 %v2193, %v2185
    %v2282 = vpack.c.b16 %v2202, %v2194
    %v2283 = vpack.c.b16 %v2203, %v2195
    %v2284 = vpack.c.b16 %v2204, %v2196
    %v2285 = vpack.c.b16 %v2205, %v2197
    %v2286 = vpack.c.b16 %v2206, %v2198
    %v2287 = vpack.c.b16 %v2207, %v2199
    %v2288 = vpack.c.b16 %v2208, %v2200
    %v2289 = vpack.c.b16 %v2209, %v2201
    %v2290 = vpack.c.b16 %v2218, %v2210
    %v2291 = vpack.c.b16 %v2219, %v2211
    %v2292 = vpack.c.b16 %v2220, %v2212
    %v2293 = vpack.c.b16 %v2221, %v2213
    %v2294 = vpack.c.b16 %v2222, %v2214
    %v2295 = vpack.c.b16 %v2223, %v2215
    %v2296 = vpack.c.b16 %v2224, %v2216
    %v2297 = vpack.c.b16 %v2225, %v2217
    %v2298 = vpack.c.b16 %v2234, %v2226
    %v2299 = vpack.c.b16 %v2235, %v2227
    %v2300 = vpack.c.b16 %v2236, %v2228
    %v2301 = vpack.c.b16 %v2237, %v2229
    %v2302 = vpack.c.b16 %v2238, %v2230
    %v2303 = vpack.c.b16 %v2239, %v2231
    %v2304 = vpack.c.b16 %v2240, %v2232
    %v2305 = vpack.c.b16 %v2241, %v2233
    %v2306 = vpack.c.b16 %v2250, %v2242
    %v2307 = vpack.c.b16 %v2251, %v2243
    %v2308 = vpack.c.b16 %v2252, %v2244
    %v2309 = vpack.c.b16 %v2253, %v2245
    %v2310 = vpack.c.b16 %v2254, %v2246
    %v2311 = vpack.c.b16 %v2255, %v2247
    %v2312 = vpack.c.b16 %v2256, %v2248
    %v2313 = vpack.c.b16 %v2257, %v2249
    %v2314 = vpack.c.b16 %v2266, %v2258
    %v2315 = vpack.c.b16 %v2267, %v2259
    %v2316 = vpack.c.b16 %v2268, %v2260
    %v2317 = vpack.c.b16 %v2269, %v2261
    %v2318 = vpack.c.b16 %v2270, %v2262
    %v2319 = vpack.c.b16 %v2271, %v2263
    %v2320 = vpack.c.b16 %v2272, %v2264
    %v2321 = vpack.c.b16 %v2273, %v2265
    %v2371 = vsel %vm605, %v2126, 0
    %v2374 = vsel %vm605, %v2127, 0
    %v2377 = vsel %vm605, %v2128, 0
    %v2380 = vsel %vm605, %v2129, 0
    %2382 = vmatpush.bf16.msra.mxu0 0
    %2383 = vmatpush.bf16.msra.mxu0 0
    %2384 = vmatpush.bf16.msra.mxu0 %v2314
    %2385 = vmatpush.bf16.msra.mxu0 %v2306
    %2386 = vmatpush.bf16.msra.mxu0 %v2298
    %2387 = vmatpush.bf16.msra.mxu0 %v2290
    %2388 = vmatpush.bf16.msra.mxu0 %v2282
    %2389 = vmatpush.bf16.msra.mxu0 %v2274
    %2390 = vmatmul.bf16.gmra.mxu0 %v2371
    %v2391 = vpop.f32.mrf.mxu0
    %v2392 = vadd.f32 0.0, %v2391
    %v2393 = vpop.f32.mrf.mxu0
    %v2394 = vadd.f32 0.0, %v2393
    %2395 = vmatmul.bf16.gmra.mxu0 %v2374
    %v2396 = vpop.f32.mrf.mxu0
    %v2397 = vadd.f32 0.0, %v2396
    %v2398 = vpop.f32.mrf.mxu0
    %v2399 = vadd.f32 0.0, %v2398
    %2400 = vmatmul.bf16.gmra.mxu0 %v2377
    %v2401 = vpop.f32.mrf.mxu0
    %v2402 = vadd.f32 0.0, %v2401
    %v2403 = vpop.f32.mrf.mxu0
    %v2404 = vadd.f32 0.0, %v2403
    %2405 = vmatmul.bf16.gmra.mxu0 %v2380
    %v2406 = vpop.f32.mrf.mxu0
    %v2407 = vadd.f32 0.0, %v2406
    %v2408 = vpop.f32.mrf.mxu0
    %v2409 = vadd.f32 0.0, %v2408
    %2410 = vdwg.mxu0
    %2411 = vmatpush.bf16.msra.mxu0 0
    %2412 = vmatpush.bf16.msra.mxu0 0
    %2413 = vmatpush.bf16.msra.mxu0 %v2315
    %2414 = vmatpush.bf16.msra.mxu0 %v2307
    %2415 = vmatpush.bf16.msra.mxu0 %v2299
    %2416 = vmatpush.bf16.msra.mxu0 %v2291
    %2417 = vmatpush.bf16.msra.mxu0 %v2283
    %2418 = vmatpush.bf16.msra.mxu0 %v2275
    %2419 = vmatmul.bf16.gmra.mxu0 %v2371
    %v2420 = vpop.f32.mrf.mxu0
    %v2421 = vadd.f32 0.0, %v2420
    %v2422 = vpop.f32.mrf.mxu0
    %v2423 = vadd.f32 0.0, %v2422
    %2424 = vmatmul.bf16.gmra.mxu0 %v2374
    %v2425 = vpop.f32.mrf.mxu0
    %v2426 = vadd.f32 0.0, %v2425
    %v2427 = vpop.f32.mrf.mxu0
    %v2428 = vadd.f32 0.0, %v2427
    %2429 = vmatmul.bf16.gmra.mxu0 %v2377
    %v2430 = vpop.f32.mrf.mxu0
    %v2431 = vadd.f32 0.0, %v2430
    %v2432 = vpop.f32.mrf.mxu0
    %v2433 = vadd.f32 0.0, %v2432
    %2434 = vmatmul.bf16.gmra.mxu0 %v2380
    %v2435 = vpop.f32.mrf.mxu0
    %v2436 = vadd.f32 0.0, %v2435
    %v2437 = vpop.f32.mrf.mxu0
    %v2438 = vadd.f32 0.0, %v2437
    %2439 = vdwg.mxu0
    %2440 = vmatpush.bf16.msra.mxu0 0
    %2441 = vmatpush.bf16.msra.mxu0 0
    %2442 = vmatpush.bf16.msra.mxu0 %v2316
    %2443 = vmatpush.bf16.msra.mxu0 %v2308
    %2444 = vmatpush.bf16.msra.mxu0 %v2300
    %2445 = vmatpush.bf16.msra.mxu0 %v2292
    %2446 = vmatpush.bf16.msra.mxu0 %v2284
    %2447 = vmatpush.bf16.msra.mxu0 %v2276
    %2448 = vmatmul.bf16.gmra.mxu0 %v2371
    %v2449 = vpop.f32.mrf.mxu0
    %v2450 = vadd.f32 0.0, %v2449
    %v2451 = vpop.f32.mrf.mxu0
    %v2452 = vadd.f32 0.0, %v2451
    %2453 = vmatmul.bf16.gmra.mxu0 %v2374
    %v2454 = vpop.f32.mrf.mxu0
    %v2455 = vadd.f32 0.0, %v2454
    %v2456 = vpop.f32.mrf.mxu0
    %v2457 = vadd.f32 0.0, %v2456
    %2458 = vmatmul.bf16.gmra.mxu0 %v2377
    %v2459 = vpop.f32.mrf.mxu0
    %v2460 = vadd.f32 0.0, %v2459
    %v2461 = vpop.f32.mrf.mxu0
    %v2462 = vadd.f32 0.0, %v2461
    %2463 = vmatmul.bf16.gmra.mxu0 %v2380
    %v2464 = vpop.f32.mrf.mxu0
    %v2465 = vadd.f32 0.0, %v2464
    %v2466 = vpop.f32.mrf.mxu0
    %v2467 = vadd.f32 0.0, %v2466
    %2468 = vdwg.mxu0
    %2469 = vmatpush.bf16.msra.mxu0 0
    %2470 = vmatpush.bf16.msra.mxu0 0
    %2471 = vmatpush.bf16.msra.mxu0 %v2317
    %2472 = vmatpush.bf16.msra.mxu0 %v2309
    %2473 = vmatpush.bf16.msra.mxu0 %v2301
    %2474 = vmatpush.bf16.msra.mxu0 %v2293
    %2475 = vmatpush.bf16.msra.mxu0 %v2285
    %2476 = vmatpush.bf16.msra.mxu0 %v2277
    %2477 = vmatmul.bf16.gmra.mxu0 %v2371
    %v2478 = vpop.f32.mrf.mxu0
    %v2479 = vadd.f32 0.0, %v2478
    %v2480 = vpop.f32.mrf.mxu0
    %v2481 = vadd.f32 0.0, %v2480
    %2482 = vmatmul.bf16.gmra.mxu0 %v2374
    %v2483 = vpop.f32.mrf.mxu0
    %v2484 = vadd.f32 0.0, %v2483
    %v2485 = vpop.f32.mrf.mxu0
    %v2486 = vadd.f32 0.0, %v2485
    %2487 = vmatmul.bf16.gmra.mxu0 %v2377
    %v2488 = vpop.f32.mrf.mxu0
    %v2489 = vadd.f32 0.0, %v2488
    %v2490 = vpop.f32.mrf.mxu0
    %v2491 = vadd.f32 0.0, %v2490
    %2492 = vmatmul.bf16.gmra.mxu0 %v2380
    %v2493 = vpop.f32.mrf.mxu0
    %v2494 = vadd.f32 0.0, %v2493
    %v2495 = vpop.f32.mrf.mxu0
    %v2496 = vadd.f32 0.0, %v2495
    %2497 = vdwg.mxu0
    %2498 = vmatpush.bf16.msra.mxu0 0
    %2499 = vmatpush.bf16.msra.mxu0 0
    %2500 = vmatpush.bf16.msra.mxu0 %v2318
    %2501 = vmatpush.bf16.msra.mxu0 %v2310
    %2502 = vmatpush.bf16.msra.mxu0 %v2302
    %2503 = vmatpush.bf16.msra.mxu0 %v2294
    %2504 = vmatpush.bf16.msra.mxu0 %v2286
    %2505 = vmatpush.bf16.msra.mxu0 %v2278
    %2506 = vmatmul.bf16.gmra.mxu0 %v2371
    %v2507 = vpop.f32.mrf.mxu0
    %v2508 = vadd.f32 0.0, %v2507
    %v2509 = vpop.f32.mrf.mxu0
    %v2510 = vadd.f32 0.0, %v2509
    %2511 = vmatmul.bf16.gmra.mxu0 %v2374
    %v2512 = vpop.f32.mrf.mxu0
    %v2513 = vadd.f32 0.0, %v2512
    %v2514 = vpop.f32.mrf.mxu0
    %v2515 = vadd.f32 0.0, %v2514
    %2516 = vmatmul.bf16.gmra.mxu0 %v2377
    %v2517 = vpop.f32.mrf.mxu0
    %v2518 = vadd.f32 0.0, %v2517
    %v2519 = vpop.f32.mrf.mxu0
    %v2520 = vadd.f32 0.0, %v2519
    %2521 = vmatmul.bf16.gmra.mxu0 %v2380
    %v2522 = vpop.f32.mrf.mxu0
    %v2523 = vadd.f32 0.0, %v2522
    %v2524 = vpop.f32.mrf.mxu0
    %v2525 = vadd.f32 0.0, %v2524
    %2526 = vdwg.mxu0
    %2527 = vmatpush.bf16.msra.mxu0 0
    %2528 = vmatpush.bf16.msra.mxu0 0
    %2529 = vmatpush.bf16.msra.mxu0 %v2319
    %2530 = vmatpush.bf16.msra.mxu0 %v2311
    %2531 = vmatpush.bf16.msra.mxu0 %v2303
    %2532 = vmatpush.bf16.msra.mxu0 %v2295
    %2533 = vmatpush.bf16.msra.mxu0 %v2287
    %2534 = vmatpush.bf16.msra.mxu0 %v2279
    %2535 = vmatmul.bf16.gmra.mxu0 %v2371
    %v2536 = vpop.f32.mrf.mxu0
    %v2537 = vadd.f32 0.0, %v2536
    %v2538 = vpop.f32.mrf.mxu0
    %v2539 = vadd.f32 0.0, %v2538
    %2540 = vmatmul.bf16.gmra.mxu0 %v2374
    %v2541 = vpop.f32.mrf.mxu0
    %v2542 = vadd.f32 0.0, %v2541
    %v2543 = vpop.f32.mrf.mxu0
    %v2544 = vadd.f32 0.0, %v2543
    %2545 = vmatmul.bf16.gmra.mxu0 %v2377
    %v2546 = vpop.f32.mrf.mxu0
    %v2547 = vadd.f32 0.0, %v2546
    %v2548 = vpop.f32.mrf.mxu0
    %v2549 = vadd.f32 0.0, %v2548
    %2550 = vmatmul.bf16.gmra.mxu0 %v2380
    %v2551 = vpop.f32.mrf.mxu0
    %v2552 = vadd.f32 0.0, %v2551
    %v2553 = vpop.f32.mrf.mxu0
    %v2554 = vadd.f32 0.0, %v2553
    %2555 = vdwg.mxu0
    %2556 = vmatpush.bf16.msra.mxu0 0
    %2557 = vmatpush.bf16.msra.mxu0 0
    %2558 = vmatpush.bf16.msra.mxu0 %v2320
    %2559 = vmatpush.bf16.msra.mxu0 %v2312
    %2560 = vmatpush.bf16.msra.mxu0 %v2304
    %2561 = vmatpush.bf16.msra.mxu0 %v2296
    %2562 = vmatpush.bf16.msra.mxu0 %v2288
    %2563 = vmatpush.bf16.msra.mxu0 %v2280
    %2564 = vmatmul.bf16.gmra.mxu0 %v2371
    %v2565 = vpop.f32.mrf.mxu0
    %v2566 = vadd.f32 0.0, %v2565
    %v2567 = vpop.f32.mrf.mxu0
    %v2568 = vadd.f32 0.0, %v2567
    %2569 = vmatmul.bf16.gmra.mxu0 %v2374
    %v2570 = vpop.f32.mrf.mxu0
    %v2571 = vadd.f32 0.0, %v2570
    %v2572 = vpop.f32.mrf.mxu0
    %v2573 = vadd.f32 0.0, %v2572
    %2574 = vmatmul.bf16.gmra.mxu0 %v2377
    %v2575 = vpop.f32.mrf.mxu0
    %v2576 = vadd.f32 0.0, %v2575
    %v2577 = vpop.f32.mrf.mxu0
    %v2578 = vadd.f32 0.0, %v2577
    %2579 = vmatmul.bf16.gmra.mxu0 %v2380
    %v2580 = vpop.f32.mrf.mxu0
    %v2581 = vadd.f32 0.0, %v2580
    %v2582 = vpop.f32.mrf.mxu0
    %v2583 = vadd.f32 0.0, %v2582
    %2584 = vdwg.mxu0
    %2585 = vmatpush.bf16.msra.mxu0 0
    %2586 = vmatpush.bf16.msra.mxu0 0
    %2587 = vmatpush.bf16.msra.mxu0 %v2321
    %2588 = vmatpush.bf16.msra.mxu0 %v2313
    %2589 = vmatpush.bf16.msra.mxu0 %v2305
    %2590 = vmatpush.bf16.msra.mxu0 %v2297
    %2591 = vmatpush.bf16.msra.mxu0 %v2289
    %2592 = vmatpush.bf16.msra.mxu0 %v2281
    %2593 = vmatmul.bf16.gmra.mxu0 %v2371
    %v2594 = vpop.f32.mrf.mxu0
    %v2595 = vadd.f32 0.0, %v2594
    %v2596 = vpop.f32.mrf.mxu0
    %v2597 = vadd.f32 0.0, %v2596
    %2598 = vmatmul.bf16.gmra.mxu0 %v2374
    %v2599 = vpop.f32.mrf.mxu0
    %v2600 = vadd.f32 0.0, %v2599
    %v2601 = vpop.f32.mrf.mxu0
    %v2602 = vadd.f32 0.0, %v2601
    %2603 = vmatmul.bf16.gmra.mxu0 %v2377
    %v2604 = vpop.f32.mrf.mxu0
    %v2605 = vadd.f32 0.0, %v2604
    %v2606 = vpop.f32.mrf.mxu0
    %v2607 = vadd.f32 0.0, %v2606
    %2608 = vmatmul.bf16.gmra.mxu0 %v2380
    %v2609 = vpop.f32.mrf.mxu0
    %v2610 = vadd.f32 0.0, %v2609
    %v2611 = vpop.f32.mrf.mxu0
    %v2612 = vadd.f32 0.0, %v2611
    %2613 = vdwg.mxu0
    %v2614 = vadd.f32 %v1934, %v2392
    %v2615 = vadd.f32 %v1935, %v2421
    %v2616 = vadd.f32 %v1936, %v2450
    %v2617 = vadd.f32 %v1937, %v2479
    %v2618 = vadd.f32 %v1938, %v2508
    %v2619 = vadd.f32 %v1939, %v2537
    %v2620 = vadd.f32 %v1940, %v2566
    %v2621 = vadd.f32 %v1941, %v2595
    %v2622 = vadd.f32 %v1942, %v2394
    %v2623 = vadd.f32 %v1943, %v2423
    %v2624 = vadd.f32 %v1944, %v2452
    %v2625 = vadd.f32 %v1945, %v2481
    %v2626 = vadd.f32 %v1946, %v2510
    %v2627 = vadd.f32 %v1947, %v2539
    %v2628 = vadd.f32 %v1948, %v2568
    %v2629 = vadd.f32 %v1949, %v2597
    %v2630 = vadd.f32 %v1950, %v2397
    %v2631 = vadd.f32 %v1951, %v2426
    %v2632 = vadd.f32 %v1952, %v2455
    %v2633 = vadd.f32 %v1953, %v2484
    %v2634 = vadd.f32 %v1954, %v2513
    %v2635 = vadd.f32 %v1955, %v2542
    %v2636 = vadd.f32 %v1956, %v2571
    %v2637 = vadd.f32 %v1957, %v2600
    %v2638 = vadd.f32 %v1958, %v2399
    %v2639 = vadd.f32 %v1959, %v2428
    %v2640 = vadd.f32 %v1960, %v2457
    %v2641 = vadd.f32 %v1961, %v2486
    %v2642 = vadd.f32 %v1962, %v2515
    %v2643 = vadd.f32 %v1963, %v2544
    %v2644 = vadd.f32 %v1964, %v2573
    %v2645 = vadd.f32 %v1965, %v2602
    %v2646 = vadd.f32 %v1966, %v2402
    %v2647 = vadd.f32 %v1967, %v2431
    %v2648 = vadd.f32 %v1968, %v2460
    %v2649 = vadd.f32 %v1969, %v2489
    %v2650 = vadd.f32 %v1970, %v2518
    %v2651 = vadd.f32 %v1971, %v2547
    %v2652 = vadd.f32 %v1972, %v2576
    %v2653 = vadd.f32 %v1973, %v2605
    %v2654 = vadd.f32 %v1974, %v2404
    %v2655 = vadd.f32 %v1975, %v2433
    %v2656 = vadd.f32 %v1976, %v2462
    %v2657 = vadd.f32 %v1977, %v2491
    %v2658 = vadd.f32 %v1978, %v2520
    %v2659 = vadd.f32 %v1979, %v2549
    %v2660 = vadd.f32 %v1980, %v2578
    %v2661 = vadd.f32 %v1981, %v2607
    %v2662 = vadd.f32 %v1982, %v2407
    %v2663 = vadd.f32 %v1983, %v2436
    %v2664 = vadd.f32 %v1984, %v2465
    %v2665 = vadd.f32 %v1985, %v2494
    %v2666 = vadd.f32 %v1986, %v2523
    %v2667 = vadd.f32 %v1987, %v2552
    %v2668 = vadd.f32 %v1988, %v2581
    %v2669 = vadd.f32 %v1989, %v2610
    %v2670 = vadd.f32 %v1990, %v2409
    %v2671 = vadd.f32 %v1991, %v2438
    %v2672 = vadd.f32 %v1992, %v2467
    %v2673 = vadd.f32 %v1993, %v2496
    %v2674 = vadd.f32 %v1994, %v2525
    %v2675 = vadd.f32 %v1995, %v2554
    %v2676 = vadd.f32 %v1996, %v2583
    %v2677 = vadd.f32 %v1997, %v2612
    %v2678 = vld [vmem:[%s0] sm:$0xc]
    %v2679 = vld [vmem:[%s0 + $0x14] sm:$0xc]
    %vm2684 = vcmask 1041408
    %vm2685 = vcmask 1045508
    %vm2686 = vmor %vm2684, %vm2685
    %v2687 = vrot.slane %v2678, 6
    %v2688 = vrot.slane %v2687, 4
    %v2689 = vrot.slane %v156, 6
    %v2690 = vsel %vm2686, %v2688, %v2689
    %v2691 = vrot.slane %v2689, 4
    %v2692 = vrot.slane %v157, 6
    %v2693 = vsel %vm2686, %v2691, %v2692
    %v2694 = vrot.slane %v2692, 4
    %v2695 = vrot.slane %v158, 6
    %v2696 = vsel %vm2686, %v2694, %v2695
    %v2697 = vrot.slane %v2695, 4
    %v2698 = vrot.slane %v1998, 6
    %v2699 = vsel %vm2686, %v2697, %v2698
    %v2700 = vrot.slane %v2679, 6
    %v2701 = vrot.slane %v2700, 4
    %v2702 = vrot.slane %v160, 6
    %v2703 = vsel %vm2686, %v2701, %v2702
    %v2704 = vrot.slane %v2702, 4
    %v2705 = vrot.slane %v161, 6
    %v2706 = vsel %vm2686, %v2704, %v2705
    %v2707 = vrot.slane %v2705, 4
    %v2708 = vrot.slane %v162, 6
    %v2709 = vsel %vm2686, %v2707, %v2708
    %v2710 = vrot.slane %v2708, 4
    %v2711 = vrot.slane %v1999, 6
    %v2712 = vsel %vm2686, %v2710, %v2711
    %s2713 = scalar_lea.vmem [#allocation4], 1536
    %v2714 = vld [vmem:[%s2713] sm:$0xff]
    %v2715 = vld [vmem:[%s2713 + $0x8] sm:$0xff]
    %v2716 = vld [vmem:[%s2713 + $0x10] sm:$0xff]
    %v2717 = vld [vmem:[%s2713 + $0x18] sm:$0xff]
    %v2718 = vld [vmem:[%s2713 + $0x20] sm:$0xff]
    %v2719 = vld [vmem:[%s2713 + $0x28] sm:$0xff]
    %v2720 = vld [vmem:[%s2713 + $0x30] sm:$0xff]
    %v2721 = vld [vmem:[%s2713 + $0x38] sm:$0xff]
    %v2722 = vld [vmem:[%s2713 + $0x40] sm:$0xff]
    %v2723 = vld [vmem:[%s2713 + $0x48] sm:$0xff]
    %v2724 = vld [vmem:[%s2713 + $0x50] sm:$0xff]
    %v2725 = vld [vmem:[%s2713 + $0x58] sm:$0xff]
    %v2726 = vld [vmem:[%s2713 + $0x60] sm:$0xff]
    %v2727 = vld [vmem:[%s2713 + $0x68] sm:$0xff]
    %v2728 = vld [vmem:[%s2713 + $0x70] sm:$0xff]
    %v2729 = vld [vmem:[%s2713 + $0x78] sm:$0xff]
    %v2730 = vld [vmem:[%s2713 + $0x80] sm:$0xff]
    %v2731 = vld [vmem:[%s2713 + $0x88] sm:$0xff]
    %v2732 = vld [vmem:[%s2713 + $0x90] sm:$0xff]
    %v2733 = vld [vmem:[%s2713 + $0x98] sm:$0xff]
    %v2734 = vld [vmem:[%s2713 + $0xa0] sm:$0xff]
    %v2735 = vld [vmem:[%s2713 + $0xa8] sm:$0xff]
    %v2736 = vld [vmem:[%s2713 + $0xb0] sm:$0xff]
    %v2737 = vld [vmem:[%s2713 + $0xb8] sm:$0xff]
    %v2738 = vld [vmem:[%s2713 + $0xc0] sm:$0xff]
    %v2739 = vld [vmem:[%s2713 + $0xc8] sm:$0xff]
    %v2740 = vld [vmem:[%s2713 + $0xd0] sm:$0xff]
    %v2741 = vld [vmem:[%s2713 + $0xd8] sm:$0xff]
    %v2742 = vld [vmem:[%s2713 + $0xe0] sm:$0xff]
    %v2743 = vld [vmem:[%s2713 + $0xe8] sm:$0xff]
    %v2744 = vld [vmem:[%s2713 + $0xf0] sm:$0xff]
    %v2745 = vld [vmem:[%s2713 + $0xf8] sm:$0xff]
    %v2746 = vld [vmem:[%s2713 + $0x100] sm:$0xff]
    %v2747 = vld [vmem:[%s2713 + $0x108] sm:$0xff]
    %v2748 = vld [vmem:[%s2713 + $0x110] sm:$0xff]
    %v2749 = vld [vmem:[%s2713 + $0x118] sm:$0xff]
    %v2750 = vld [vmem:[%s2713 + $0x120] sm:$0xff]
    %v2751 = vld [vmem:[%s2713 + $0x128] sm:$0xff]
    %v2752 = vld [vmem:[%s2713 + $0x130] sm:$0xff]
    %v2753 = vld [vmem:[%s2713 + $0x138] sm:$0xff]
    %v2754 = vld [vmem:[%s2713 + $0x140] sm:$0xff]
    %v2755 = vld [vmem:[%s2713 + $0x148] sm:$0xff]
    %v2756 = vld [vmem:[%s2713 + $0x150] sm:$0xff]
    %v2757 = vld [vmem:[%s2713 + $0x158] sm:$0xff]
    %v2758 = vld [vmem:[%s2713 + $0x160] sm:$0xff]
    %v2759 = vld [vmem:[%s2713 + $0x168] sm:$0xff]
    %v2760 = vld [vmem:[%s2713 + $0x170] sm:$0xff]
    %v2761 = vld [vmem:[%s2713 + $0x178] sm:$0xff]
    %v2762 = vunpack.c.l.b16 %v2690
    %v2763 = vunpack.c.l.b16 %v2693
    %v2764 = vunpack.c.l.b16 %v2696
    %v2765 = vunpack.c.l.b16 %v2699
    %v2766 = vunpack.c.l.b16 %v2703
    %v2767 = vunpack.c.l.b16 %v2706
    %v2768 = vunpack.c.l.b16 %v2709
    %v2769 = vunpack.c.l.b16 %v2712
    %v2770 = vpack.c.b16 %v2763, %v2762
    %v2771 = vpack.c.b16 %v2765, %v2764
    %v2772 = vpack.c.b16 %v2767, %v2766
    %v2773 = vpack.c.b16 %v2769, %v2768
    %v2822 = vunpack.c.l.b16 %v2714
    %v2823 = vunpack.c.h.b16 %v2714
    %v2824 = vunpack.c.l.b16 %v2715
    %v2825 = vunpack.c.h.b16 %v2715
    %v2826 = vunpack.c.l.b16 %v2716
    %v2827 = vunpack.c.h.b16 %v2716
    %v2828 = vunpack.c.l.b16 %v2717
    %v2829 = vunpack.c.h.b16 %v2717
    %v2830 = vunpack.c.l.b16 %v2718
    %v2831 = vunpack.c.h.b16 %v2718
    %v2832 = vunpack.c.l.b16 %v2719
    %v2833 = vunpack.c.h.b16 %v2719
    %v2834 = vunpack.c.l.b16 %v2720
    %v2835 = vunpack.c.h.b16 %v2720
    %v2836 = vunpack.c.l.b16 %v2721
    %v2837 = vunpack.c.h.b16 %v2721
    %v2838 = vunpack.c.l.b16 %v2722
    %v2839 = vunpack.c.h.b16 %v2722
    %v2840 = vunpack.c.l.b16 %v2723
    %v2841 = vunpack.c.h.b16 %v2723
    %v2842 = vunpack.c.l.b16 %v2724
    %v2843 = vunpack.c.h.b16 %v2724
    %v2844 = vunpack.c.l.b16 %v2725
    %v2845 = vunpack.c.h.b16 %v2725
    %v2846 = vunpack.c.l.b16 %v2726
    %v2847 = vunpack.c.h.b16 %v2726
    %v2848 = vunpack.c.l.b16 %v2727
    %v2849 = vunpack.c.h.b16 %v2727
    %v2850 = vunpack.c.l.b16 %v2728
    %v2851 = vunpack.c.h.b16 %v2728
    %v2852 = vunpack.c.l.b16 %v2729
    %v2853 = vunpack.c.h.b16 %v2729
    %v2854 = vunpack.c.l.b16 %v2730
    %v2855 = vunpack.c.h.b16 %v2730
    %v2856 = vunpack.c.l.b16 %v2731
    %v2857 = vunpack.c.h.b16 %v2731
    %v2858 = vunpack.c.l.b16 %v2732
    %v2859 = vunpack.c.h.b16 %v2732
    %v2860 = vunpack.c.l.b16 %v2733
    %v2861 = vunpack.c.h.b16 %v2733
    %v2862 = vunpack.c.l.b16 %v2734
    %v2863 = vunpack.c.h.b16 %v2734
    %v2864 = vunpack.c.l.b16 %v2735
    %v2865 = vunpack.c.h.b16 %v2735
    %v2866 = vunpack.c.l.b16 %v2736
    %v2867 = vunpack.c.h.b16 %v2736
    %v2868 = vunpack.c.l.b16 %v2737
    %v2869 = vunpack.c.h.b16 %v2737
    %v2870 = vunpack.c.l.b16 %v2738
    %v2871 = vunpack.c.h.b16 %v2738
    %v2872 = vunpack.c.l.b16 %v2739
    %v2873 = vunpack.c.h.b16 %v2739
    %v2874 = vunpack.c.l.b16 %v2740
    %v2875 = vunpack.c.h.b16 %v2740
    %v2876 = vunpack.c.l.b16 %v2741
    %v2877 = vunpack.c.h.b16 %v2741
    %v2878 = vunpack.c.l.b16 %v2742
    %v2879 = vunpack.c.h.b16 %v2742
    %v2880 = vunpack.c.l.b16 %v2743
    %v2881 = vunpack.c.h.b16 %v2743
    %v2882 = vunpack.c.l.b16 %v2744
    %v2883 = vunpack.c.h.b16 %v2744
    %v2884 = vunpack.c.l.b16 %v2745
    %v2885 = vunpack.c.h.b16 %v2745
    %v2886 = vunpack.c.l.b16 %v2746
    %v2887 = vunpack.c.h.b16 %v2746
    %v2888 = vunpack.c.l.b16 %v2747
    %v2889 = vunpack.c.h.b16 %v2747
    %v2890 = vunpack.c.l.b16 %v2748
    %v2891 = vunpack.c.h.b16 %v2748
    %v2892 = vunpack.c.l.b16 %v2749
    %v2893 = vunpack.c.h.b16 %v2749
    %v2894 = vunpack.c.l.b16 %v2750
    %v2895 = vunpack.c.h.b16 %v2750
    %v2896 = vunpack.c.l.b16 %v2751
    %v2897 = vunpack.c.h.b16 %v2751
    %v2898 = vunpack.c.l.b16 %v2752
    %v2899 = vunpack.c.h.b16 %v2752
    %v2900 = vunpack.c.l.b16 %v2753
    %v2901 = vunpack.c.h.b16 %v2753
    %v2902 = vunpack.c.l.b16 %v2754
    %v2903 = vunpack.c.h.b16 %v2754
    %v2904 = vunpack.c.l.b16 %v2755
    %v2905 = vunpack.c.h.b16 %v2755
    %v2906 = vunpack.c.l.b16 %v2756
    %v2907 = vunpack.c.h.b16 %v2756
    %v2908 = vunpack.c.l.b16 %v2757
    %v2909 = vunpack.c.h.b16 %v2757
    %v2910 = vunpack.c.l.b16 %v2758
    %v2911 = vunpack.c.h.b16 %v2758
    %v2912 = vunpack.c.l.b16 %v2759
    %v2913 = vunpack.c.h.b16 %v2759
    %v2914 = vunpack.c.l.b16 %v2760
    %v2915 = vunpack.c.h.b16 %v2760
    %v2916 = vunpack.c.l.b16 %v2761
    %v2917 = vunpack.c.h.b16 %v2761
    %v2918 = vpack.c.b16 %v2830, %v2822
    %v2919 = vpack.c.b16 %v2831, %v2823
    %v2920 = vpack.c.b16 %v2832, %v2824
    %v2921 = vpack.c.b16 %v2833, %v2825
    %v2922 = vpack.c.b16 %v2834, %v2826
    %v2923 = vpack.c.b16 %v2835, %v2827
    %v2924 = vpack.c.b16 %v2836, %v2828
    %v2925 = vpack.c.b16 %v2837, %v2829
    %v2926 = vpack.c.b16 %v2846, %v2838
    %v2927 = vpack.c.b16 %v2847, %v2839
    %v2928 = vpack.c.b16 %v2848, %v2840
    %v2929 = vpack.c.b16 %v2849, %v2841
    %v2930 = vpack.c.b16 %v2850, %v2842
    %v2931 = vpack.c.b16 %v2851, %v2843
    %v2932 = vpack.c.b16 %v2852, %v2844
    %v2933 = vpack.c.b16 %v2853, %v2845
    %v2934 = vpack.c.b16 %v2862, %v2854
    %v2935 = vpack.c.b16 %v2863, %v2855
    %v2936 = vpack.c.b16 %v2864, %v2856
    %v2937 = vpack.c.b16 %v2865, %v2857
    %v2938 = vpack.c.b16 %v2866, %v2858
    %v2939 = vpack.c.b16 %v2867, %v2859
    %v2940 = vpack.c.b16 %v2868, %v2860
    %v2941 = vpack.c.b16 %v2869, %v2861
    %v2942 = vpack.c.b16 %v2878, %v2870
    %v2943 = vpack.c.b16 %v2879, %v2871
    %v2944 = vpack.c.b16 %v2880, %v2872
    %v2945 = vpack.c.b16 %v2881, %v2873
    %v2946 = vpack.c.b16 %v2882, %v2874
    %v2947 = vpack.c.b16 %v2883, %v2875
    %v2948 = vpack.c.b16 %v2884, %v2876
    %v2949 = vpack.c.b16 %v2885, %v2877
    %v2950 = vpack.c.b16 %v2894, %v2886
    %v2951 = vpack.c.b16 %v2895, %v2887
    %v2952 = vpack.c.b16 %v2896, %v2888
    %v2953 = vpack.c.b16 %v2897, %v2889
    %v2954 = vpack.c.b16 %v2898, %v2890
    %v2955 = vpack.c.b16 %v2899, %v2891
    %v2956 = vpack.c.b16 %v2900, %v2892
    %v2957 = vpack.c.b16 %v2901, %v2893
    %v2958 = vpack.c.b16 %v2910, %v2902
    %v2959 = vpack.c.b16 %v2911, %v2903
    %v2960 = vpack.c.b16 %v2912, %v2904
    %v2961 = vpack.c.b16 %v2913, %v2905
    %v2962 = vpack.c.b16 %v2914, %v2906
    %v2963 = vpack.c.b16 %v2915, %v2907
    %v2964 = vpack.c.b16 %v2916, %v2908
    %v2965 = vpack.c.b16 %v2917, %v2909
    %v3015 = vsel %vm605, %v2770, 0
    %v3018 = vsel %vm605, %v2771, 0
    %v3021 = vsel %vm605, %v2772, 0
    %v3024 = vsel %vm605, %v2773, 0
    %3026 = vmatpush.bf16.msra.mxu0 0
    %3027 = vmatpush.bf16.msra.mxu0 0
    %3028 = vmatpush.bf16.msra.mxu0 %v2958
    %3029 = vmatpush.bf16.msra.mxu0 %v2950
    %3030 = vmatpush.bf16.msra.mxu0 %v2942
    %3031 = vmatpush.bf16.msra.mxu0 %v2934
    %3032 = vmatpush.bf16.msra.mxu0 %v2926
    %3033 = vmatpush.bf16.msra.mxu0 %v2918
    %3034 = vmatmul.bf16.gmra.mxu0 %v3015
    %v3035 = vpop.f32.mrf.mxu0
    %v3036 = vadd.f32 0.0, %v3035
    %v3037 = vpop.f32.mrf.mxu0
    %v3038 = vadd.f32 0.0, %v3037
    %3039 = vmatmul.bf16.gmra.mxu0 %v3018
    %v3040 = vpop.f32.mrf.mxu0
    %v3041 = vadd.f32 0.0, %v3040
    %v3042 = vpop.f32.mrf.mxu0
    %v3043 = vadd.f32 0.0, %v3042
    %3044 = vmatmul.bf16.gmra.mxu0 %v3021
    %v3045 = vpop.f32.mrf.mxu0
    %v3046 = vadd.f32 0.0, %v3045
    %v3047 = vpop.f32.mrf.mxu0
    %v3048 = vadd.f32 0.0, %v3047
    %3049 = vmatmul.bf16.gmra.mxu0 %v3024
    %v3050 = vpop.f32.mrf.mxu0
    %v3051 = vadd.f32 0.0, %v3050
    %v3052 = vpop.f32.mrf.mxu0
    %v3053 = vadd.f32 0.0, %v3052
    %3054 = vdwg.mxu0
    %3055 = vmatpush.bf16.msra.mxu0 0
    %3056 = vmatpush.bf16.msra.mxu0 0
    %3057 = vmatpush.bf16.msra.mxu0 %v2959
    %3058 = vmatpush.bf16.msra.mxu0 %v2951
    %3059 = vmatpush.bf16.msra.mxu0 %v2943
    %3060 = vmatpush.bf16.msra.mxu0 %v2935
    %3061 = vmatpush.bf16.msra.mxu0 %v2927
    %3062 = vmatpush.bf16.msra.mxu0 %v2919
    %3063 = vmatmul.bf16.gmra.mxu0 %v3015
    %v3064 = vpop.f32.mrf.mxu0
    %v3065 = vadd.f32 0.0, %v3064
    %v3066 = vpop.f32.mrf.mxu0
    %v3067 = vadd.f32 0.0, %v3066
    %3068 = vmatmul.bf16.gmra.mxu0 %v3018
    %v3069 = vpop.f32.mrf.mxu0
    %v3070 = vadd.f32 0.0, %v3069
    %v3071 = vpop.f32.mrf.mxu0
    %v3072 = vadd.f32 0.0, %v3071
    %3073 = vmatmul.bf16.gmra.mxu0 %v3021
    %v3074 = vpop.f32.mrf.mxu0
    %v3075 = vadd.f32 0.0, %v3074
    %v3076 = vpop.f32.mrf.mxu0
    %v3077 = vadd.f32 0.0, %v3076
    %3078 = vmatmul.bf16.gmra.mxu0 %v3024
    %v3079 = vpop.f32.mrf.mxu0
    %v3080 = vadd.f32 0.0, %v3079
    %v3081 = vpop.f32.mrf.mxu0
    %v3082 = vadd.f32 0.0, %v3081
    %3083 = vdwg.mxu0
    %3084 = vmatpush.bf16.msra.mxu0 0
    %3085 = vmatpush.bf16.msra.mxu0 0
    %3086 = vmatpush.bf16.msra.mxu0 %v2960
    %3087 = vmatpush.bf16.msra.mxu0 %v2952
    %3088 = vmatpush.bf16.msra.mxu0 %v2944
    %3089 = vmatpush.bf16.msra.mxu0 %v2936
    %3090 = vmatpush.bf16.msra.mxu0 %v2928
    %3091 = vmatpush.bf16.msra.mxu0 %v2920
    %3092 = vmatmul.bf16.gmra.mxu0 %v3015
    %v3093 = vpop.f32.mrf.mxu0
    %v3094 = vadd.f32 0.0, %v3093
    %v3095 = vpop.f32.mrf.mxu0
    %v3096 = vadd.f32 0.0, %v3095
    %3097 = vmatmul.bf16.gmra.mxu0 %v3018
    %v3098 = vpop.f32.mrf.mxu0
    %v3099 = vadd.f32 0.0, %v3098
    %v3100 = vpop.f32.mrf.mxu0
    %v3101 = vadd.f32 0.0, %v3100
    %3102 = vmatmul.bf16.gmra.mxu0 %v3021
    %v3103 = vpop.f32.mrf.mxu0
    %v3104 = vadd.f32 0.0, %v3103
    %v3105 = vpop.f32.mrf.mxu0
    %v3106 = vadd.f32 0.0, %v3105
    %3107 = vmatmul.bf16.gmra.mxu0 %v3024
    %v3108 = vpop.f32.mrf.mxu0
    %v3109 = vadd.f32 0.0, %v3108
    %v3110 = vpop.f32.mrf.mxu0
    %v3111 = vadd.f32 0.0, %v3110
    %3112 = vdwg.mxu0
    %3113 = vmatpush.bf16.msra.mxu0 0
    %3114 = vmatpush.bf16.msra.mxu0 0
    %3115 = vmatpush.bf16.msra.mxu0 %v2961
    %3116 = vmatpush.bf16.msra.mxu0 %v2953
    %3117 = vmatpush.bf16.msra.mxu0 %v2945
    %3118 = vmatpush.bf16.msra.mxu0 %v2937
    %3119 = vmatpush.bf16.msra.mxu0 %v2929
    %3120 = vmatpush.bf16.msra.mxu0 %v2921
    %3121 = vmatmul.bf16.gmra.mxu0 %v3015
    %v3122 = vpop.f32.mrf.mxu0
    %v3123 = vadd.f32 0.0, %v3122
    %v3124 = vpop.f32.mrf.mxu0
    %v3125 = vadd.f32 0.0, %v3124
    %3126 = vmatmul.bf16.gmra.mxu0 %v3018
    %v3127 = vpop.f32.mrf.mxu0
    %v3128 = vadd.f32 0.0, %v3127
    %v3129 = vpop.f32.mrf.mxu0
    %v3130 = vadd.f32 0.0, %v3129
    %3131 = vmatmul.bf16.gmra.mxu0 %v3021
    %v3132 = vpop.f32.mrf.mxu0
    %v3133 = vadd.f32 0.0, %v3132
    %v3134 = vpop.f32.mrf.mxu0
    %v3135 = vadd.f32 0.0, %v3134
    %3136 = vmatmul.bf16.gmra.mxu0 %v3024
    %v3137 = vpop.f32.mrf.mxu0
    %v3138 = vadd.f32 0.0, %v3137
    %v3139 = vpop.f32.mrf.mxu0
    %v3140 = vadd.f32 0.0, %v3139
    %3141 = vdwg.mxu0
    %3142 = vmatpush.bf16.msra.mxu0 0
    %3143 = vmatpush.bf16.msra.mxu0 0
    %3144 = vmatpush.bf16.msra.mxu0 %v2962
    %3145 = vmatpush.bf16.msra.mxu0 %v2954
    %3146 = vmatpush.bf16.msra.mxu0 %v2946
    %3147 = vmatpush.bf16.msra.mxu0 %v2938
    %3148 = vmatpush.bf16.msra.mxu0 %v2930
    %3149 = vmatpush.bf16.msra.mxu0 %v2922
    %3150 = vmatmul.bf16.gmra.mxu0 %v3015
    %v3151 = vpop.f32.mrf.mxu0
    %v3152 = vadd.f32 0.0, %v3151
    %v3153 = vpop.f32.mrf.mxu0
    %v3154 = vadd.f32 0.0, %v3153
    %3155 = vmatmul.bf16.gmra.mxu0 %v3018
    %v3156 = vpop.f32.mrf.mxu0
    %v3157 = vadd.f32 0.0, %v3156
    %v3158 = vpop.f32.mrf.mxu0
    %v3159 = vadd.f32 0.0, %v3158
    %3160 = vmatmul.bf16.gmra.mxu0 %v3021
    %v3161 = vpop.f32.mrf.mxu0
    %v3162 = vadd.f32 0.0, %v3161
    %v3163 = vpop.f32.mrf.mxu0
    %v3164 = vadd.f32 0.0, %v3163
    %3165 = vmatmul.bf16.gmra.mxu0 %v3024
    %v3166 = vpop.f32.mrf.mxu0
    %v3167 = vadd.f32 0.0, %v3166
    %v3168 = vpop.f32.mrf.mxu0
    %v3169 = vadd.f32 0.0, %v3168
    %3170 = vdwg.mxu0
    %3171 = vmatpush.bf16.msra.mxu0 0
    %3172 = vmatpush.bf16.msra.mxu0 0
    %3173 = vmatpush.bf16.msra.mxu0 %v2963
    %3174 = vmatpush.bf16.msra.mxu0 %v2955
    %3175 = vmatpush.bf16.msra.mxu0 %v2947
    %3176 = vmatpush.bf16.msra.mxu0 %v2939
    %3177 = vmatpush.bf16.msra.mxu0 %v2931
    %3178 = vmatpush.bf16.msra.mxu0 %v2923
    %3179 = vmatmul.bf16.gmra.mxu0 %v3015
    %v3180 = vpop.f32.mrf.mxu0
    %v3181 = vadd.f32 0.0, %v3180
    %v3182 = vpop.f32.mrf.mxu0
    %v3183 = vadd.f32 0.0, %v3182
    %3184 = vmatmul.bf16.gmra.mxu0 %v3018
    %v3185 = vpop.f32.mrf.mxu0
    %v3186 = vadd.f32 0.0, %v3185
    %v3187 = vpop.f32.mrf.mxu0
    %v3188 = vadd.f32 0.0, %v3187
    %3189 = vmatmul.bf16.gmra.mxu0 %v3021
    %v3190 = vpop.f32.mrf.mxu0
    %v3191 = vadd.f32 0.0, %v3190
    %v3192 = vpop.f32.mrf.mxu0
    %v3193 = vadd.f32 0.0, %v3192
    %3194 = vmatmul.bf16.gmra.mxu0 %v3024
    %v3195 = vpop.f32.mrf.mxu0
    %v3196 = vadd.f32 0.0, %v3195
    %v3197 = vpop.f32.mrf.mxu0
    %v3198 = vadd.f32 0.0, %v3197
    %3199 = vdwg.mxu0
    %3200 = vmatpush.bf16.msra.mxu0 0
    %3201 = vmatpush.bf16.msra.mxu0 0
    %3202 = vmatpush.bf16.msra.mxu0 %v2964
    %3203 = vmatpush.bf16.msra.mxu0 %v2956
    %3204 = vmatpush.bf16.msra.mxu0 %v2948
    %3205 = vmatpush.bf16.msra.mxu0 %v2940
    %3206 = vmatpush.bf16.msra.mxu0 %v2932
    %3207 = vmatpush.bf16.msra.mxu0 %v2924
    %3208 = vmatmul.bf16.gmra.mxu0 %v3015
    %v3209 = vpop.f32.mrf.mxu0
    %v3210 = vadd.f32 0.0, %v3209
    %v3211 = vpop.f32.mrf.mxu0
    %v3212 = vadd.f32 0.0, %v3211
    %3213 = vmatmul.bf16.gmra.mxu0 %v3018
    %v3214 = vpop.f32.mrf.mxu0
    %v3215 = vadd.f32 0.0, %v3214
    %v3216 = vpop.f32.mrf.mxu0
    %v3217 = vadd.f32 0.0, %v3216
    %3218 = vmatmul.bf16.gmra.mxu0 %v3021
    %v3219 = vpop.f32.mrf.mxu0
    %v3220 = vadd.f32 0.0, %v3219
    %v3221 = vpop.f32.mrf.mxu0
    %v3222 = vadd.f32 0.0, %v3221
    %3223 = vmatmul.bf16.gmra.mxu0 %v3024
    %v3224 = vpop.f32.mrf.mxu0
    %v3225 = vadd.f32 0.0, %v3224
    %v3226 = vpop.f32.mrf.mxu0
    %v3227 = vadd.f32 0.0, %v3226
    %3228 = vdwg.mxu0
    %3229 = vmatpush.bf16.msra.mxu0 0
    %3230 = vmatpush.bf16.msra.mxu0 0
    %3231 = vmatpush.bf16.msra.mxu0 %v2965
    %3232 = vmatpush.bf16.msra.mxu0 %v2957
    %3233 = vmatpush.bf16.msra.mxu0 %v2949
    %3234 = vmatpush.bf16.msra.mxu0 %v2941
    %3235 = vmatpush.bf16.msra.mxu0 %v2933
    %3236 = vmatpush.bf16.msra.mxu0 %v2925
    %3237 = vmatmul.bf16.gmra.mxu0 %v3015
    %v3238 = vpop.f32.mrf.mxu0
    %v3239 = vadd.f32 0.0, %v3238
    %v3240 = vpop.f32.mrf.mxu0
    %v3241 = vadd.f32 0.0, %v3240
    %3242 = vmatmul.bf16.gmra.mxu0 %v3018
    %v3243 = vpop.f32.mrf.mxu0
    %v3244 = vadd.f32 0.0, %v3243
    %v3245 = vpop.f32.mrf.mxu0
    %v3246 = vadd.f32 0.0, %v3245
    %3247 = vmatmul.bf16.gmra.mxu0 %v3021
    %v3248 = vpop.f32.mrf.mxu0
    %v3249 = vadd.f32 0.0, %v3248
    %v3250 = vpop.f32.mrf.mxu0
    %v3251 = vadd.f32 0.0, %v3250
    %3252 = vmatmul.bf16.gmra.mxu0 %v3024
    %v3253 = vpop.f32.mrf.mxu0
    %v3254 = vadd.f32 0.0, %v3253
    %v3255 = vpop.f32.mrf.mxu0
    %v3256 = vadd.f32 0.0, %v3255
    %3257 = vdwg.mxu0
    %v3258 = vadd.f32 %v2614, %v3036
    %v3259 = vadd.f32 %v2615, %v3065
    %v3260 = vadd.f32 %v2616, %v3094
    %v3261 = vadd.f32 %v2617, %v3123
    %v3262 = vadd.f32 %v2618, %v3152
    %v3263 = vadd.f32 %v2619, %v3181
    %v3264 = vadd.f32 %v2620, %v3210
    %v3265 = vadd.f32 %v2621, %v3239
    %v3266 = vadd.f32 %v2622, %v3038
    %v3267 = vadd.f32 %v2623, %v3067
    %v3268 = vadd.f32 %v2624, %v3096
    %v3269 = vadd.f32 %v2625, %v3125
    %v3270 = vadd.f32 %v2626, %v3154
    %v3271 = vadd.f32 %v2627, %v3183
    %v3272 = vadd.f32 %v2628, %v3212
    %v3273 = vadd.f32 %v2629, %v3241
    %v3274 = vadd.f32 %v2630, %v3041
    %v3275 = vadd.f32 %v2631, %v3070
    %v3276 = vadd.f32 %v2632, %v3099
    %v3277 = vadd.f32 %v2633, %v3128
    %v3278 = vadd.f32 %v2634, %v3157
    %v3279 = vadd.f32 %v2635, %v3186
    %v3280 = vadd.f32 %v2636, %v3215
    %v3281 = vadd.f32 %v2637, %v3244
    %v3282 = vadd.f32 %v2638, %v3043
    %v3283 = vadd.f32 %v2639, %v3072
    %v3284 = vadd.f32 %v2640, %v3101
    %v3285 = vadd.f32 %v2641, %v3130
    %v3286 = vadd.f32 %v2642, %v3159
    %v3287 = vadd.f32 %v2643, %v3188
    %v3288 = vadd.f32 %v2644, %v3217
    %v3289 = vadd.f32 %v2645, %v3246
    %v3290 = vadd.f32 %v2646, %v3046
    %v3291 = vadd.f32 %v2647, %v3075
    %v3292 = vadd.f32 %v2648, %v3104
    %v3293 = vadd.f32 %v2649, %v3133
    %v3294 = vadd.f32 %v2650, %v3162
    %v3295 = vadd.f32 %v2651, %v3191
    %v3296 = vadd.f32 %v2652, %v3220
    %v3297 = vadd.f32 %v2653, %v3249
    %v3298 = vadd.f32 %v2654, %v3048
    %v3299 = vadd.f32 %v2655, %v3077
    %v3300 = vadd.f32 %v2656, %v3106
    %v3301 = vadd.f32 %v2657, %v3135
    %v3302 = vadd.f32 %v2658, %v3164
    %v3303 = vadd.f32 %v2659, %v3193
    %v3304 = vadd.f32 %v2660, %v3222
    %v3305 = vadd.f32 %v2661, %v3251
    %v3306 = vadd.f32 %v2662, %v3051
    %v3307 = vadd.f32 %v2663, %v3080
    %v3308 = vadd.f32 %v2664, %v3109
    %v3309 = vadd.f32 %v2665, %v3138
    %v3310 = vadd.f32 %v2666, %v3167
    %v3311 = vadd.f32 %v2667, %v3196
    %v3312 = vadd.f32 %v2668, %v3225
    %v3313 = vadd.f32 %v2669, %v3254
    %v3314 = vadd.f32 %v2670, %v3053
    %v3315 = vadd.f32 %v2671, %v3082
    %v3316 = vadd.f32 %v2672, %v3111
    %v3317 = vadd.f32 %v2673, %v3140
    %v3318 = vadd.f32 %v2674, %v3169
    %v3319 = vadd.f32 %v2675, %v3198
    %v3320 = vadd.f32 %v2676, %v3227
    %v3321 = vadd.f32 %v2677, %v3256
    %v3322 = vld [vmem:[#allocation7] sm:$0xff]
    %v3324 = vperm.slane %v3322, 0
    %v3325 = vperm.slane %v3322, 1
    %v3326 = vperm.slane %v3322, 2
    %v3327 = vperm.slane %v3322, 3
    %v3328 = vperm.slane %v3322, 4
    %v3329 = vperm.slane %v3322, 5
    %v3330 = vperm.slane %v3322, 6
    %v3331 = vperm.slane %v3322, 7
    %v3340 = vadd.f32 %v3258, %v3324
    %v3341 = vadd.f32 %v3259, %v3325
    %v3342 = vadd.f32 %v3260, %v3326
    %v3343 = vadd.f32 %v3261, %v3327
    %v3344 = vadd.f32 %v3262, %v3328
    %v3345 = vadd.f32 %v3263, %v3329
    %v3346 = vadd.f32 %v3264, %v3330
    %v3347 = vadd.f32 %v3265, %v3331
    %v3348 = vadd.f32 %v3266, %v3324
    %v3349 = vadd.f32 %v3267, %v3325
    %v3350 = vadd.f32 %v3268, %v3326
    %v3351 = vadd.f32 %v3269, %v3327
    %v3352 = vadd.f32 %v3270, %v3328
    %v3353 = vadd.f32 %v3271, %v3329
    %v3354 = vadd.f32 %v3272, %v3330
    %v3355 = vadd.f32 %v3273, %v3331
    %v3356 = vadd.f32 %v3274, %v3324
    %v3357 = vadd.f32 %v3275, %v3325
    %v3358 = vadd.f32 %v3276, %v3326
    %v3359 = vadd.f32 %v3277, %v3327
    %v3360 = vadd.f32 %v3278, %v3328
    %v3361 = vadd.f32 %v3279, %v3329
    %v3362 = vadd.f32 %v3280, %v3330
    %v3363 = vadd.f32 %v3281, %v3331
    %v3364 = vadd.f32 %v3282, %v3324
    %v3365 = vadd.f32 %v3283, %v3325
    %v3366 = vadd.f32 %v3284, %v3326
    %v3367 = vadd.f32 %v3285, %v3327
    %v3368 = vadd.f32 %v3286, %v3328
    %v3369 = vadd.f32 %v3287, %v3329
    %v3370 = vadd.f32 %v3288, %v3330
    %v3371 = vadd.f32 %v3289, %v3331
    %v3372 = vadd.f32 %v3290, %v3324
    %v3373 = vadd.f32 %v3291, %v3325
    %v3374 = vadd.f32 %v3292, %v3326
    %v3375 = vadd.f32 %v3293, %v3327
    %v3376 = vadd.f32 %v3294, %v3328
    %v3377 = vadd.f32 %v3295, %v3329
    %v3378 = vadd.f32 %v3296, %v3330
    %v3379 = vadd.f32 %v3297, %v3331
    %v3380 = vadd.f32 %v3298, %v3324
    %v3381 = vadd.f32 %v3299, %v3325
    %v3382 = vadd.f32 %v3300, %v3326
    %v3383 = vadd.f32 %v3301, %v3327
    %v3384 = vadd.f32 %v3302, %v3328
    %v3385 = vadd.f32 %v3303, %v3329
    %v3386 = vadd.f32 %v3304, %v3330
    %v3387 = vadd.f32 %v3305, %v3331
    %v3388 = vadd.f32 %v3306, %v3324
    %v3389 = vadd.f32 %v3307, %v3325
    %v3390 = vadd.f32 %v3308, %v3326
    %v3391 = vadd.f32 %v3309, %v3327
    %v3392 = vadd.f32 %v3310, %v3328
    %v3393 = vadd.f32 %v3311, %v3329
    %v3394 = vadd.f32 %v3312, %v3330
    %v3395 = vadd.f32 %v3313, %v3331
    %v3396 = vadd.f32 %v3314, %v3324
    %v3397 = vadd.f32 %v3315, %v3325
    %v3398 = vadd.f32 %v3316, %v3326
    %v3399 = vadd.f32 %v3317, %v3327
    %v3400 = vadd.f32 %v3318, %v3328
    %v3401 = vadd.f32 %v3319, %v3329
    %v3402 = vadd.f32 %v3320, %v3330
    %v3403 = vadd.f32 %v3321, %v3331
    %v3404 = vmax.f32 %v3340, %v3344
    %v3405 = vmax.f32 %v3341, %v3345
    %v3406 = vmax.f32 %v3342, %v3346
    %v3407 = vmax.f32 %v3343, %v3347
    %v3408 = vmax.f32 %v3348, %v3352
    %v3409 = vmax.f32 %v3349, %v3353
    %v3410 = vmax.f32 %v3350, %v3354
    %v3411 = vmax.f32 %v3351, %v3355
    %v3412 = vmax.f32 %v3356, %v3360
    %v3413 = vmax.f32 %v3357, %v3361
    %v3414 = vmax.f32 %v3358, %v3362
    %v3415 = vmax.f32 %v3359, %v3363
    %v3416 = vmax.f32 %v3364, %v3368
    %v3417 = vmax.f32 %v3365, %v3369
    %v3418 = vmax.f32 %v3366, %v3370
    %v3419 = vmax.f32 %v3367, %v3371
    %v3420 = vmax.f32 %v3372, %v3376
    %v3421 = vmax.f32 %v3373, %v3377
    %v3422 = vmax.f32 %v3374, %v3378
    %v3423 = vmax.f32 %v3375, %v3379
    %v3424 = vmax.f32 %v3380, %v3384
    %v3425 = vmax.f32 %v3381, %v3385
    %v3426 = vmax.f32 %v3382, %v3386
    %v3427 = vmax.f32 %v3383, %v3387
    %v3428 = vmax.f32 %v3388, %v3392
    %v3429 = vmax.f32 %v3389, %v3393
    %v3430 = vmax.f32 %v3390, %v3394
    %v3431 = vmax.f32 %v3391, %v3395
    %v3432 = vmax.f32 %v3396, %v3400
    %v3433 = vmax.f32 %v3397, %v3401
    %v3434 = vmax.f32 %v3398, %v3402
    %v3435 = vmax.f32 %v3399, %v3403
    %v3468 = vrot.slane %v3405, 6
    %v3469 = vrot.slane %v3406, 4
    %v3470 = vrot.slane %v3407, 2
    %v3471 = vrot.slane %v3409, 6
    %v3472 = vrot.slane %v3410, 4
    %v3473 = vrot.slane %v3411, 2
    %v3474 = vrot.slane %v3413, 6
    %v3475 = vrot.slane %v3414, 4
    %v3476 = vrot.slane %v3415, 2
    %v3477 = vrot.slane %v3417, 6
    %v3478 = vrot.slane %v3418, 4
    %v3479 = vrot.slane %v3419, 2
    %v3480 = vrot.slane %v3421, 6
    %v3481 = vrot.slane %v3422, 4
    %v3482 = vrot.slane %v3423, 2
    %v3483 = vrot.slane %v3425, 6
    %v3484 = vrot.slane %v3426, 4
    %v3485 = vrot.slane %v3427, 2
    %v3486 = vrot.slane %v3429, 6
    %v3487 = vrot.slane %v3430, 4
    %v3488 = vrot.slane %v3431, 2
    %v3489 = vrot.slane %v3433, 6
    %v3490 = vrot.slane %v3434, 4
    %v3491 = vrot.slane %v3435, 2
    %vm3492 = vcmask 1041408
    %v3493 = vsel %vm3492, %v3404, %v3468
    %vm3494 = vcmask 1045508
    %v3495 = vsel %vm3494, %v3469, %v3470
    %vm3496 = vcmask 1043456
    %v3497 = vsel %vm3496, %v3493, %v3495
    %vm3498 = vcmask 1043458
    %v3499 = vsel %vm3498, %v3404, %v3468
    %vm3500 = vcmask 1045504
    %v3501 = vsel %vm3500, %v3470, %v3469
    %vm3502 = vcmask 1045506
    %v3503 = vsel %vm3502, %v3499, %v3501
    %v3504 = vrot.slane %v3503, 2
    %v3505 = vsel %vm3494, %v3404, %v3468
    %v3506 = vsel %vm3492, %v3469, %v3470
    %v3507 = vsel %vm3496, %v3506, %v3505
    %v3508 = vrot.slane %v3507, 4
    %v3509 = vsel %vm3500, %v3468, %v3404
    %v3510 = vsel %vm3498, %v3469, %v3470
    %v3511 = vsel %vm3502, %v3510, %v3509
    %v3512 = vrot.slane %v3511, 6
    %v3513 = vsel %vm3492, %v3408, %v3471
    %v3514 = vsel %vm3494, %v3472, %v3473
    %v3515 = vsel %vm3496, %v3513, %v3514
    %v3516 = vsel %vm3498, %v3408, %v3471
    %v3517 = vsel %vm3500, %v3473, %v3472
    %v3518 = vsel %vm3502, %v3516, %v3517
    %v3519 = vrot.slane %v3518, 2
    %v3520 = vsel %vm3494, %v3408, %v3471
    %v3521 = vsel %vm3492, %v3472, %v3473
    %v3522 = vsel %vm3496, %v3521, %v3520
    %v3523 = vrot.slane %v3522, 4
    %v3524 = vsel %vm3500, %v3471, %v3408
    %v3525 = vsel %vm3498, %v3472, %v3473
    %v3526 = vsel %vm3502, %v3525, %v3524
    %v3527 = vrot.slane %v3526, 6
    %v3528 = vsel %vm3492, %v3412, %v3474
    %v3529 = vsel %vm3494, %v3475, %v3476
    %v3530 = vsel %vm3496, %v3528, %v3529
    %v3531 = vsel %vm3498, %v3412, %v3474
    %v3532 = vsel %vm3500, %v3476, %v3475
    %v3533 = vsel %vm3502, %v3531, %v3532
    %v3534 = vrot.slane %v3533, 2
    %v3535 = vsel %vm3494, %v3412, %v3474
    %v3536 = vsel %vm3492, %v3475, %v3476
    %v3537 = vsel %vm3496, %v3536, %v3535
    %v3538 = vrot.slane %v3537, 4
    %v3539 = vsel %vm3500, %v3474, %v3412
    %v3540 = vsel %vm3498, %v3475, %v3476
    %v3541 = vsel %vm3502, %v3540, %v3539
    %v3542 = vrot.slane %v3541, 6
    %v3543 = vsel %vm3492, %v3416, %v3477
    %v3544 = vsel %vm3494, %v3478, %v3479
    %v3545 = vsel %vm3496, %v3543, %v3544
    %v3546 = vsel %vm3498, %v3416, %v3477
    %v3547 = vsel %vm3500, %v3479, %v3478
    %v3548 = vsel %vm3502, %v3546, %v3547
    %v3549 = vrot.slane %v3548, 2
    %v3550 = vsel %vm3494, %v3416, %v3477
    %v3551 = vsel %vm3492, %v3478, %v3479
    %v3552 = vsel %vm3496, %v3551, %v3550
    %v3553 = vrot.slane %v3552, 4
    %v3554 = vsel %vm3500, %v3477, %v3416
    %v3555 = vsel %vm3498, %v3478, %v3479
    %v3556 = vsel %vm3502, %v3555, %v3554
    %v3557 = vrot.slane %v3556, 6
    %v3558 = vsel %vm3492, %v3420, %v3480
    %v3559 = vsel %vm3494, %v3481, %v3482
    %v3560 = vsel %vm3496, %v3558, %v3559
    %v3561 = vsel %vm3498, %v3420, %v3480
    %v3562 = vsel %vm3500, %v3482, %v3481
    %v3563 = vsel %vm3502, %v3561, %v3562
    %v3564 = vrot.slane %v3563, 2
    %v3565 = vsel %vm3494, %v3420, %v3480
    %v3566 = vsel %vm3492, %v3481, %v3482
    %v3567 = vsel %vm3496, %v3566, %v3565
    %v3568 = vrot.slane %v3567, 4
    %v3569 = vsel %vm3500, %v3480, %v3420
    %v3570 = vsel %vm3498, %v3481, %v3482
    %v3571 = vsel %vm3502, %v3570, %v3569
    %v3572 = vrot.slane %v3571, 6
    %v3573 = vsel %vm3492, %v3424, %v3483
    %v3574 = vsel %vm3494, %v3484, %v3485
    %v3575 = vsel %vm3496, %v3573, %v3574
    %v3576 = vsel %vm3498, %v3424, %v3483
    %v3577 = vsel %vm3500, %v3485, %v3484
    %v3578 = vsel %vm3502, %v3576, %v3577
    %v3579 = vrot.slane %v3578, 2
    %v3580 = vsel %vm3494, %v3424, %v3483
    %v3581 = vsel %vm3492, %v3484, %v3485
    %v3582 = vsel %vm3496, %v3581, %v3580
    %v3583 = vrot.slane %v3582, 4
    %v3584 = vsel %vm3500, %v3483, %v3424
    %v3585 = vsel %vm3498, %v3484, %v3485
    %v3586 = vsel %vm3502, %v3585, %v3584
    %v3587 = vrot.slane %v3586, 6
    %v3588 = vsel %vm3492, %v3428, %v3486
    %v3589 = vsel %vm3494, %v3487, %v3488
    %v3590 = vsel %vm3496, %v3588, %v3589
    %v3591 = vsel %vm3498, %v3428, %v3486
    %v3592 = vsel %vm3500, %v3488, %v3487
    %v3593 = vsel %vm3502, %v3591, %v3592
    %v3594 = vrot.slane %v3593, 2
    %v3595 = vsel %vm3494, %v3428, %v3486
    %v3596 = vsel %vm3492, %v3487, %v3488
    %v3597 = vsel %vm3496, %v3596, %v3595
    %v3598 = vrot.slane %v3597, 4
    %v3599 = vsel %vm3500, %v3486, %v3428
    %v3600 = vsel %vm3498, %v3487, %v3488
    %v3601 = vsel %vm3502, %v3600, %v3599
    %v3602 = vrot.slane %v3601, 6
    %v3603 = vsel %vm3492, %v3432, %v3489
    %v3604 = vsel %vm3494, %v3490, %v3491
    %v3605 = vsel %vm3496, %v3603, %v3604
    %v3606 = vsel %vm3498, %v3432, %v3489
    %v3607 = vsel %vm3500, %v3491, %v3490
    %v3608 = vsel %vm3502, %v3606, %v3607
    %v3609 = vrot.slane %v3608, 2
    %v3610 = vsel %vm3494, %v3432, %v3489
    %v3611 = vsel %vm3492, %v3490, %v3491
    %v3612 = vsel %vm3496, %v3611, %v3610
    %v3613 = vrot.slane %v3612, 4
    %v3614 = vsel %vm3500, %v3489, %v3432
    %v3615 = vsel %vm3498, %v3490, %v3491
    %v3616 = vsel %vm3502, %v3615, %v3614
    %v3617 = vrot.slane %v3616, 6
    %v3651 = vunpack.c.l.s4 1966171168
    %v3652 = vunpack.c.0.s8 %v3651
    %v3653 = vperm.slane %v3497, %v3652
    %v3655 = vunpack.c.l.s4 1966171168
    %v3656 = vunpack.c.0.s8 %v3655
    %v3657 = vperm.slane %v3504, %v3656
    %v3659 = vunpack.c.l.s4 1966171168
    %v3660 = vunpack.c.0.s8 %v3659
    %v3661 = vperm.slane %v3508, %v3660
    %v3663 = vunpack.c.l.s4 1966171168
    %v3664 = vunpack.c.0.s8 %v3663
    %v3665 = vperm.slane %v3512, %v3664
    %v3667 = vunpack.c.l.s4 1966171168
    %v3668 = vunpack.c.0.s8 %v3667
    %v3669 = vperm.slane %v3515, %v3668
    %v3671 = vunpack.c.l.s4 1966171168
    %v3672 = vunpack.c.0.s8 %v3671
    %v3673 = vperm.slane %v3519, %v3672
    %v3675 = vunpack.c.l.s4 1966171168
    %v3676 = vunpack.c.0.s8 %v3675
    %v3677 = vperm.slane %v3523, %v3676
    %v3679 = vunpack.c.l.s4 1966171168
    %v3680 = vunpack.c.0.s8 %v3679
    %v3681 = vperm.slane %v3527, %v3680
    %v3683 = vunpack.c.l.s4 1966171168
    %v3684 = vunpack.c.0.s8 %v3683
    %v3685 = vperm.slane %v3530, %v3684
    %v3687 = vunpack.c.l.s4 1966171168
    %v3688 = vunpack.c.0.s8 %v3687
    %v3689 = vperm.slane %v3534, %v3688
    %v3691 = vunpack.c.l.s4 1966171168
    %v3692 = vunpack.c.0.s8 %v3691
    %v3693 = vperm.slane %v3538, %v3692
    %v3695 = vunpack.c.l.s4 1966171168
    %v3696 = vunpack.c.0.s8 %v3695
    %v3697 = vperm.slane %v3542, %v3696
    %v3699 = vunpack.c.l.s4 1966171168
    %v3700 = vunpack.c.0.s8 %v3699
    %v3701 = vperm.slane %v3545, %v3700
    %v3703 = vunpack.c.l.s4 1966171168
    %v3704 = vunpack.c.0.s8 %v3703
    %v3705 = vperm.slane %v3549, %v3704
    %v3707 = vunpack.c.l.s4 1966171168
    %v3708 = vunpack.c.0.s8 %v3707
    %v3709 = vperm.slane %v3553, %v3708
    %v3711 = vunpack.c.l.s4 1966171168
    %v3712 = vunpack.c.0.s8 %v3711
    %v3713 = vperm.slane %v3557, %v3712
    %v3715 = vunpack.c.l.s4 1966171168
    %v3716 = vunpack.c.0.s8 %v3715
    %v3717 = vperm.slane %v3560, %v3716
    %v3719 = vunpack.c.l.s4 1966171168
    %v3720 = vunpack.c.0.s8 %v3719
    %v3721 = vperm.slane %v3564, %v3720
    %v3723 = vunpack.c.l.s4 1966171168
    %v3724 = vunpack.c.0.s8 %v3723
    %v3725 = vperm.slane %v3568, %v3724
    %v3727 = vunpack.c.l.s4 1966171168
    %v3728 = vunpack.c.0.s8 %v3727
    %v3729 = vperm.slane %v3572, %v3728
    %v3731 = vunpack.c.l.s4 1966171168
    %v3732 = vunpack.c.0.s8 %v3731
    %v3733 = vperm.slane %v3575, %v3732
    %v3735 = vunpack.c.l.s4 1966171168
    %v3736 = vunpack.c.0.s8 %v3735
    %v3737 = vperm.slane %v3579, %v3736
    %v3739 = vunpack.c.l.s4 1966171168
    %v3740 = vunpack.c.0.s8 %v3739
    %v3741 = vperm.slane %v3583, %v3740
    %v3743 = vunpack.c.l.s4 1966171168
    %v3744 = vunpack.c.0.s8 %v3743
    %v3745 = vperm.slane %v3587, %v3744
    %v3747 = vunpack.c.l.s4 1966171168
    %v3748 = vunpack.c.0.s8 %v3747
    %v3749 = vperm.slane %v3590, %v3748
    %v3751 = vunpack.c.l.s4 1966171168
    %v3752 = vunpack.c.0.s8 %v3751
    %v3753 = vperm.slane %v3594, %v3752
    %v3755 = vunpack.c.l.s4 1966171168
    %v3756 = vunpack.c.0.s8 %v3755
    %v3757 = vperm.slane %v3598, %v3756
    %v3759 = vunpack.c.l.s4 1966171168
    %v3760 = vunpack.c.0.s8 %v3759
    %v3761 = vperm.slane %v3602, %v3760
    %v3763 = vunpack.c.l.s4 1966171168
    %v3764 = vunpack.c.0.s8 %v3763
    %v3765 = vperm.slane %v3605, %v3764
    %v3767 = vunpack.c.l.s4 1966171168
    %v3768 = vunpack.c.0.s8 %v3767
    %v3769 = vperm.slane %v3609, %v3768
    %v3771 = vunpack.c.l.s4 1966171168
    %v3772 = vunpack.c.0.s8 %v3771
    %v3773 = vperm.slane %v3613, %v3772
    %v3775 = vunpack.c.l.s4 1966171168
    %v3776 = vunpack.c.0.s8 %v3775
    %v3777 = vperm.slane %v3617, %v3776
    %v3810 = vrot.slane %v3653, 4
    %v3811 = vrot.slane %v3657, 4
    %v3812 = vrot.slane %v3661, 4
    %v3813 = vrot.slane %v3665, 4
    %v3814 = vrot.slane %v3669, 4
    %v3815 = vrot.slane %v3673, 4
    %v3816 = vrot.slane %v3677, 4
    %v3817 = vrot.slane %v3681, 4
    %v3818 = vrot.slane %v3685, 4
    %v3819 = vrot.slane %v3689, 4
    %v3820 = vrot.slane %v3693, 4
    %v3821 = vrot.slane %v3697, 4
    %v3822 = vrot.slane %v3701, 4
    %v3823 = vrot.slane %v3705, 4
    %v3824 = vrot.slane %v3709, 4
    %v3825 = vrot.slane %v3713, 4
    %v3826 = vrot.slane %v3717, 4
    %v3827 = vrot.slane %v3721, 4
    %v3828 = vrot.slane %v3725, 4
    %v3829 = vrot.slane %v3729, 4
    %v3830 = vrot.slane %v3733, 4
    %v3831 = vrot.slane %v3737, 4
    %v3832 = vrot.slane %v3741, 4
    %v3833 = vrot.slane %v3745, 4
    %v3834 = vrot.slane %v3749, 4
    %v3835 = vrot.slane %v3753, 4
    %v3836 = vrot.slane %v3757, 4
    %v3837 = vrot.slane %v3761, 4
    %v3838 = vrot.slane %v3765, 4
    %v3839 = vrot.slane %v3769, 4
    %v3840 = vrot.slane %v3773, 4
    %v3841 = vrot.slane %v3777, 4
    %v3874 = vmax.f32 %v3653, %v3810
    %v3875 = vmax.f32 %v3657, %v3811
    %v3876 = vmax.f32 %v3661, %v3812
    %v3877 = vmax.f32 %v3665, %v3813
    %v3878 = vmax.f32 %v3669, %v3814
    %v3879 = vmax.f32 %v3673, %v3815
    %v3880 = vmax.f32 %v3677, %v3816
    %v3881 = vmax.f32 %v3681, %v3817
    %v3882 = vmax.f32 %v3685, %v3818
    %v3883 = vmax.f32 %v3689, %v3819
    %v3884 = vmax.f32 %v3693, %v3820
    %v3885 = vmax.f32 %v3697, %v3821
    %v3886 = vmax.f32 %v3701, %v3822
    %v3887 = vmax.f32 %v3705, %v3823
    %v3888 = vmax.f32 %v3709, %v3824
    %v3889 = vmax.f32 %v3713, %v3825
    %v3890 = vmax.f32 %v3717, %v3826
    %v3891 = vmax.f32 %v3721, %v3827
    %v3892 = vmax.f32 %v3725, %v3828
    %v3893 = vmax.f32 %v3729, %v3829
    %v3894 = vmax.f32 %v3733, %v3830
    %v3895 = vmax.f32 %v3737, %v3831
    %v3896 = vmax.f32 %v3741, %v3832
    %v3897 = vmax.f32 %v3745, %v3833
    %v3898 = vmax.f32 %v3749, %v3834
    %v3899 = vmax.f32 %v3753, %v3835
    %v3900 = vmax.f32 %v3757, %v3836
    %v3901 = vmax.f32 %v3761, %v3837
    %v3902 = vmax.f32 %v3765, %v3838
    %v3903 = vmax.f32 %v3769, %v3839
    %v3904 = vmax.f32 %v3773, %v3840
    %v3905 = vmax.f32 %v3777, %v3841
    %3906 = vst [vmem:[#allocation2] sm:$0x11] 0
    %3907 = vst [vmem:[#allocation2 + $0x8] sm:$0x11] 0
    %3908 = vst [vmem:[#allocation2 + $0x30] sm:$0x11] 0
    %3909 = vst [vmem:[#allocation2 + $0x38] sm:$0x11] 0
    %3910 = vst [vmem:[#allocation2 + $0x20] sm:$0x22] 0
    %3911 = vst [vmem:[#allocation2 + $0x28] sm:$0x22] 0
    %3912 = vst [vmem:[#allocation2 + $0x50] sm:$0x22] 0
    %3913 = vst [vmem:[#allocation2 + $0x58] sm:$0x22] 0
    %3946 = vst [vmem:[#allocation1] ss:$9 sm:$0xff] %v3874
    %s3947 = scalar_lea.vmem [#allocation1], 1
    %3948 = vst [vmem:[%s3947] ss:$9 sm:$0xff] %v3875
    %s3949 = scalar_lea.vmem [#allocation1], 2
    %3950 = vst [vmem:[%s3949] ss:$9 sm:$0xff] %v3876
    %s3951 = scalar_lea.vmem [#allocation1], 3
    %3952 = vst [vmem:[%s3951] ss:$9 sm:$0xff] %v3877
    %s3953 = scalar_lea.vmem [#allocation1], 4
    %3954 = vst [vmem:[%s3953] ss:$9 sm:$0xff] %v3878
    %s3955 = scalar_lea.vmem [#allocation1], 5
    %3956 = vst [vmem:[%s3955] ss:$9 sm:$0xff] %v3879
    %s3957 = scalar_lea.vmem [#allocation1], 6
    %3958 = vst [vmem:[%s3957] ss:$9 sm:$0xff] %v3880
    %s3959 = scalar_lea.vmem [#allocation1], 7
    %3960 = vst [vmem:[%s3959] ss:$9 sm:$0xff] %v3881
    %v3961 = vld [vmem:[#allocation1] sm:$0xff]
    %v3962 = vld [vmem:[#allocation1 + $0x9] sm:$0xff]
    %v3963 = vld [vmem:[#allocation1 + $0x12] sm:$0xff]
    %v3964 = vld [vmem:[#allocation1 + $0x1b] sm:$0xff]
    %3965 = vst [vmem:[#allocation1] ss:$9 sm:$0xff] %v3882
    %3966 = vst [vmem:[%s3947] ss:$9 sm:$0xff] %v3883
    %3967 = vst [vmem:[%s3949] ss:$9 sm:$0xff] %v3884
    %3968 = vst [vmem:[%s3951] ss:$9 sm:$0xff] %v3885
    %3969 = vst [vmem:[%s3953] ss:$9 sm:$0xff] %v3886
    %3970 = vst [vmem:[%s3955] ss:$9 sm:$0xff] %v3887
    %3971 = vst [vmem:[%s3957] ss:$9 sm:$0xff] %v3888
    %3972 = vst [vmem:[%s3959] ss:$9 sm:$0xff] %v3889
    %v3973 = vld [vmem:[#allocation1] sm:$0xff]
    %v3974 = vld [vmem:[#allocation1 + $0x9] sm:$0xff]
    %v3975 = vld [vmem:[#allocation1 + $0x12] sm:$0xff]
    %v3976 = vld [vmem:[#allocation1 + $0x1b] sm:$0xff]
    %3977 = vst [vmem:[#allocation1] ss:$9 sm:$0xff] %v3890
    %3978 = vst [vmem:[%s3947] ss:$9 sm:$0xff] %v3891
    %3979 = vst [vmem:[%s3949] ss:$9 sm:$0xff] %v3892
    %3980 = vst [vmem:[%s3951] ss:$9 sm:$0xff] %v3893
    %3981 = vst [vmem:[%s3953] ss:$9 sm:$0xff] %v3894
    %3982 = vst [vmem:[%s3955] ss:$9 sm:$0xff] %v3895
    %3983 = vst [vmem:[%s3957] ss:$9 sm:$0xff] %v3896
    %3984 = vst [vmem:[%s3959] ss:$9 sm:$0xff] %v3897
    %v3985 = vld [vmem:[#allocation1] sm:$0xff]
    %v3986 = vld [vmem:[#allocation1 + $0x9] sm:$0xff]
    %v3987 = vld [vmem:[#allocation1 + $0x12] sm:$0xff]
    %v3988 = vld [vmem:[#allocation1 + $0x1b] sm:$0xff]
    %3989 = vst [vmem:[#allocation1] ss:$9 sm:$0xff] %v3898
    %3990 = vst [vmem:[%s3947] ss:$9 sm:$0xff] %v3899
    %3991 = vst [vmem:[%s3949] ss:$9 sm:$0xff] %v3900
    %3992 = vst [vmem:[%s3951] ss:$9 sm:$0xff] %v3901
    %3993 = vst [vmem:[%s3953] ss:$9 sm:$0xff] %v3902
    %3994 = vst [vmem:[%s3955] ss:$9 sm:$0xff] %v3903
    %3995 = vst [vmem:[%s3957] ss:$9 sm:$0xff] %v3904
    %3996 = vst [vmem:[%s3959] ss:$9 sm:$0xff] %v3905
    %v3997 = vld [vmem:[#allocation1] sm:$0xff]
    %v3998 = vld [vmem:[#allocation1 + $0x9] sm:$0xff]
    %v3999 = vld [vmem:[#allocation1 + $0x12] sm:$0xff]
    %v4000 = vld [vmem:[#allocation1 + $0x1b] sm:$0xff]
    %v4017 = vpack.c.bf16 %v3962, %v3961
    %v4018 = vpack.c.bf16 %v3964, %v3963
    %v4019 = vpack.c.bf16 %v3974, %v3973
    %v4020 = vpack.c.bf16 %v3976, %v3975
    %v4021 = vpack.c.bf16 %v3986, %v3985
    %v4022 = vpack.c.bf16 %v3988, %v3987
    %v4023 = vpack.c.bf16 %v3998, %v3997
    %v4024 = vpack.c.bf16 %v4000, %v3999
    %vm4033 = vcmask 1040384
    %vm4034 = vcmask 1044484
    %vm4035 = vmor %vm4033, %vm4034
    %v4036 = vrot.slane %v4017, 7
    %v4037 = vrot.slane %v4018, 7
    %v4038 = vrot.slane %v4036, 4
    %v4039 = vrot.slane %v4019, 7
    %v4040 = vsel %vm4035, %v4038, %v4039
    %v4041 = vrot.slane %v4037, 4
    %v4042 = vrot.slane %v4020, 7
    %v4043 = vsel %vm4035, %v4041, %v4042
    %v4044 = vrot.slane %v4039, 4
    %v4045 = vrot.slane %v4042, 4
    %v4046 = vrot.slane %v4021, 7
    %v4047 = vrot.slane %v4022, 7
    %v4048 = vrot.slane %v4046, 4
    %v4049 = vrot.slane %v4023, 7
    %v4050 = vsel %vm4035, %v4048, %v4049
    %v4051 = vrot.slane %v4047, 4
    %v4052 = vrot.slane %v4024, 7
    %v4053 = vsel %vm4035, %v4051, %v4052
    %v4054 = vrot.slane %v4049, 4
    %v4055 = vrot.slane %v4052, 4
    %4068 = vst [vmem:[#allocation2] sm:$0xee] %v4036
    %4069 = vst [vmem:[#allocation2 + $0x8] sm:$0xee] %v4037
    %4070 = vst [vmem:[#allocation2 + $0x10] sm:$0xff] %v4040
    %4071 = vst [vmem:[#allocation2 + $0x18] sm:$0xff] %v4043
    %4072 = vst [vmem:[#allocation2 + $0x20] sm:$0x11] %v4044
    %4073 = vst [vmem:[#allocation2 + $0x28] sm:$0x11] %v4045
    %4074 = vst [vmem:[#allocation2 + $0x30] sm:$0xee] %v4046
    %4075 = vst [vmem:[#allocation2 + $0x38] sm:$0xee] %v4047
    %4076 = vst [vmem:[#allocation2 + $0x40] sm:$0xff] %v4050
    %4077 = vst [vmem:[#allocation2 + $0x48] sm:$0xff] %v4053
    %4078 = vst [vmem:[#allocation2 + $0x50] sm:$0x11] %v4054
    %4079 = vst [vmem:[#allocation2 + $0x58] sm:$0x11] %v4055
    %v4080 = vld [vmem:[#allocation2] sm:$0xff]
    %v4081 = vld [vmem:[#allocation2 + $0x8] sm:$0xff]
    %v4082 = vld [vmem:[#allocation2 + $0x10] sm:$0xff]
    %v4083 = vld [vmem:[#allocation2 + $0x18] sm:$0xff]
    %v4084 = vld [vmem:[#allocation2 + $0x30] sm:$0xff]
    %v4085 = vld [vmem:[#allocation2 + $0x38] sm:$0xff]
    %v4086 = vld [vmem:[#allocation2 + $0x40] sm:$0xff]
    %v4087 = vld [vmem:[#allocation2 + $0x48] sm:$0xff]
    %v4088 = vld [vmem:[#allocation9] sm:$0xff]
    %v4089 = vld [vmem:[#allocation9 + $0x8] sm:$0xff]
    %v4090 = vld [vmem:[#allocation9 + $0x10] sm:$0xff]
    %v4091 = vld [vmem:[#allocation9 + $0x18] sm:$0xff]
    %v4092 = vld [vmem:[#allocation9 + $0x20] sm:$0xff]
    %v4093 = vld [vmem:[#allocation9 + $0x28] sm:$0xff]
    %v4094 = vld [vmem:[#allocation9 + $0x30] sm:$0xff]
    %v4095 = vld [vmem:[#allocation9 + $0x38] sm:$0xff]
    %v4096 = vld [vmem:[#allocation9 + $0x40] sm:$0xff]
    %v4097 = vld [vmem:[#allocation9 + $0x48] sm:$0xff]
    %v4098 = vld [vmem:[#allocation9 + $0x50] sm:$0xff]
    %v4099 = vld [vmem:[#allocation9 + $0x58] sm:$0xff]
    %v4100 = vld [vmem:[#allocation9 + $0x60] sm:$0xff]
    %v4101 = vld [vmem:[#allocation9 + $0x68] sm:$0xff]
    %v4102 = vld [vmem:[#allocation9 + $0x70] sm:$0xff]
    %v4103 = vld [vmem:[#allocation9 + $0x78] sm:$0xff]
    %v4104 = vld [vmem:[#allocation9 + $0x80] sm:$0xff]
    %v4105 = vld [vmem:[#allocation9 + $0x88] sm:$0xff]
    %v4106 = vld [vmem:[#allocation9 + $0x90] sm:$0xff]
    %v4107 = vld [vmem:[#allocation9 + $0x98] sm:$0xff]
    %v4108 = vld [vmem:[#allocation9 + $0xa0] sm:$0xff]
    %v4109 = vld [vmem:[#allocation9 + $0xa8] sm:$0xff]
    %v4110 = vld [vmem:[#allocation9 + $0xb0] sm:$0xff]
    %v4111 = vld [vmem:[#allocation9 + $0xb8] sm:$0xff]
    %v4112 = vld [vmem:[#allocation9 + $0xc0] sm:$0xff]
    %v4113 = vld [vmem:[#allocation9 + $0xc8] sm:$0xff]
    %v4114 = vld [vmem:[#allocation9 + $0xd0] sm:$0xff]
    %v4115 = vld [vmem:[#allocation9 + $0xd8] sm:$0xff]
    %v4116 = vld [vmem:[#allocation9 + $0xe0] sm:$0xff]
    %v4117 = vld [vmem:[#allocation9 + $0xe8] sm:$0xff]
    %v4118 = vld [vmem:[#allocation9 + $0xf0] sm:$0xff]
    %v4119 = vld [vmem:[#allocation9 + $0xf8] sm:$0xff]
    %v4120 = vld [vmem:[#allocation9 + $0x100] sm:$0xff]
    %v4121 = vld [vmem:[#allocation9 + $0x108] sm:$0xff]
    %v4122 = vld [vmem:[#allocation9 + $0x110] sm:$0xff]
    %v4123 = vld [vmem:[#allocation9 + $0x118] sm:$0xff]
    %v4124 = vld [vmem:[#allocation9 + $0x120] sm:$0xff]
    %v4125 = vld [vmem:[#allocation9 + $0x128] sm:$0xff]
    %v4126 = vld [vmem:[#allocation9 + $0x130] sm:$0xff]
    %v4127 = vld [vmem:[#allocation9 + $0x138] sm:$0xff]
    %v4128 = vld [vmem:[#allocation9 + $0x140] sm:$0xff]
    %v4129 = vld [vmem:[#allocation9 + $0x148] sm:$0xff]
    %v4130 = vld [vmem:[#allocation9 + $0x150] sm:$0xff]
    %v4131 = vld [vmem:[#allocation9 + $0x158] sm:$0xff]
    %v4132 = vld [vmem:[#allocation9 + $0x160] sm:$0xff]
    %v4133 = vld [vmem:[#allocation9 + $0x168] sm:$0xff]
    %v4134 = vld [vmem:[#allocation9 + $0x170] sm:$0xff]
    %v4135 = vld [vmem:[#allocation9 + $0x178] sm:$0xff]
    %v4136 = vld [vmem:[#allocation9 + $0x180] sm:$0xff]
    %v4137 = vld [vmem:[#allocation9 + $0x188] sm:$0xff]
    %v4138 = vld [vmem:[#allocation9 + $0x190] sm:$0xff]
    %v4139 = vld [vmem:[#allocation9 + $0x198] sm:$0xff]
    %v4140 = vld [vmem:[#allocation9 + $0x1a0] sm:$0xff]
    %v4141 = vld [vmem:[#allocation9 + $0x1a8] sm:$0xff]
    %v4142 = vld [vmem:[#allocation9 + $0x1b0] sm:$0xff]
    %v4143 = vld [vmem:[#allocation9 + $0x1b8] sm:$0xff]
    %v4144 = vld [vmem:[#allocation9 + $0x1c0] sm:$0xff]
    %v4145 = vld [vmem:[#allocation9 + $0x1c8] sm:$0xff]
    %v4146 = vld [vmem:[#allocation9 + $0x1d0] sm:$0xff]
    %v4147 = vld [vmem:[#allocation9 + $0x1d8] sm:$0xff]
    %v4148 = vld [vmem:[#allocation9 + $0x1e0] sm:$0xff]
    %v4149 = vld [vmem:[#allocation9 + $0x1e8] sm:$0xff]
    %v4150 = vld [vmem:[#allocation9 + $0x1f0] sm:$0xff]
    %v4151 = vld [vmem:[#allocation9 + $0x1f8] sm:$0xff]
    %v4152 = vld [vmem:[#allocation9 + $0x200] sm:$0xff]
    %v4153 = vld [vmem:[#allocation9 + $0x208] sm:$0xff]
    %v4154 = vld [vmem:[#allocation9 + $0x210] sm:$0xff]
    %v4155 = vld [vmem:[#allocation9 + $0x218] sm:$0xff]
    %v4156 = vld [vmem:[#allocation9 + $0x220] sm:$0xff]
    %v4157 = vld [vmem:[#allocation9 + $0x228] sm:$0xff]
    %v4158 = vld [vmem:[#allocation9 + $0x230] sm:$0xff]
    %v4159 = vld [vmem:[#allocation9 + $0x238] sm:$0xff]
    %v4160 = vld [vmem:[#allocation9 + $0x240] sm:$0xff]
    %v4161 = vld [vmem:[#allocation9 + $0x248] sm:$0xff]
    %v4162 = vld [vmem:[#allocation9 + $0x250] sm:$0xff]
    %v4163 = vld [vmem:[#allocation9 + $0x258] sm:$0xff]
    %v4164 = vld [vmem:[#allocation9 + $0x260] sm:$0xff]
    %v4165 = vld [vmem:[#allocation9 + $0x268] sm:$0xff]
    %v4166 = vld [vmem:[#allocation9 + $0x270] sm:$0xff]
    %v4167 = vld [vmem:[#allocation9 + $0x278] sm:$0xff]
    %v4168 = vld [vmem:[#allocation9 + $0x280] sm:$0xff]
    %v4169 = vld [vmem:[#allocation9 + $0x288] sm:$0xff]
    %v4170 = vld [vmem:[#allocation9 + $0x290] sm:$0xff]
    %v4171 = vld [vmem:[#allocation9 + $0x298] sm:$0xff]
    %v4172 = vld [vmem:[#allocation9 + $0x2a0] sm:$0xff]
    %v4173 = vld [vmem:[#allocation9 + $0x2a8] sm:$0xff]
    %v4174 = vld [vmem:[#allocation9 + $0x2b0] sm:$0xff]
    %v4175 = vld [vmem:[#allocation9 + $0x2b8] sm:$0xff]
    %v4176 = vld [vmem:[#allocation9 + $0x2c0] sm:$0xff]
    %v4177 = vld [vmem:[#allocation9 + $0x2c8] sm:$0xff]
    %v4178 = vld [vmem:[#allocation9 + $0x2d0] sm:$0xff]
    %v4179 = vld [vmem:[#allocation9 + $0x2d8] sm:$0xff]
    %v4180 = vld [vmem:[#allocation9 + $0x2e0] sm:$0xff]
    %v4181 = vld [vmem:[#allocation9 + $0x2e8] sm:$0xff]
    %v4182 = vld [vmem:[#allocation9 + $0x2f0] sm:$0xff]
    %v4183 = vld [vmem:[#allocation9 + $0x2f8] sm:$0xff]
    %v4184 = vld [vmem:[#allocation9 + $0x300] sm:$0xff]
    %v4185 = vld [vmem:[#allocation9 + $0x308] sm:$0xff]
    %v4186 = vld [vmem:[#allocation9 + $0x310] sm:$0xff]
    %v4187 = vld [vmem:[#allocation9 + $0x318] sm:$0xff]
    %v4188 = vld [vmem:[#allocation9 + $0x320] sm:$0xff]
    %v4189 = vld [vmem:[#allocation9 + $0x328] sm:$0xff]
    %v4190 = vld [vmem:[#allocation9 + $0x330] sm:$0xff]
    %v4191 = vld [vmem:[#allocation9 + $0x338] sm:$0xff]
    %v4192 = vld [vmem:[#allocation9 + $0x340] sm:$0xff]
    %v4193 = vld [vmem:[#allocation9 + $0x348] sm:$0xff]
    %v4194 = vld [vmem:[#allocation9 + $0x350] sm:$0xff]
    %v4195 = vld [vmem:[#allocation9 + $0x358] sm:$0xff]
    %v4196 = vld [vmem:[#allocation9 + $0x360] sm:$0xff]
    %v4197 = vld [vmem:[#allocation9 + $0x368] sm:$0xff]
    %v4198 = vld [vmem:[#allocation9 + $0x370] sm:$0xff]
    %v4199 = vld [vmem:[#allocation9 + $0x378] sm:$0xff]
    %v4200 = vld [vmem:[#allocation9 + $0x380] sm:$0xff]
    %v4201 = vld [vmem:[#allocation9 + $0x388] sm:$0xff]
    %v4202 = vld [vmem:[#allocation9 + $0x390] sm:$0xff]
    %v4203 = vld [vmem:[#allocation9 + $0x398] sm:$0xff]
    %v4204 = vld [vmem:[#allocation9 + $0x3a0] sm:$0xff]
    %v4205 = vld [vmem:[#allocation9 + $0x3a8] sm:$0xff]
    %v4206 = vld [vmem:[#allocation9 + $0x3b0] sm:$0xff]
    %v4207 = vld [vmem:[#allocation9 + $0x3b8] sm:$0xff]
    %v4208 = vld [vmem:[#allocation9 + $0x3c0] sm:$0xff]
    %v4209 = vld [vmem:[#allocation9 + $0x3c8] sm:$0xff]
    %v4210 = vld [vmem:[#allocation9 + $0x3d0] sm:$0xff]
    %v4211 = vld [vmem:[#allocation9 + $0x3d8] sm:$0xff]
    %v4212 = vld [vmem:[#allocation9 + $0x3e0] sm:$0xff]
    %v4213 = vld [vmem:[#allocation9 + $0x3e8] sm:$0xff]
    %v4214 = vld [vmem:[#allocation9 + $0x3f0] sm:$0xff]
    %v4215 = vld [vmem:[#allocation9 + $0x3f8] sm:$0xff]
    %v4216 = vld [vmem:[#allocation2] sm:$0xff]
    %v4217 = vld [vmem:[#allocation2 + $0x8] sm:$0xff]
    %v4218 = vld [vmem:[#allocation2 + $0x10] sm:$0xff]
    %v4219 = vld [vmem:[#allocation2 + $0x18] sm:$0xff]
    %v4220 = vld [vmem:[#allocation2 + $0x20] sm:$0x11]
    %v4221 = vld [vmem:[#allocation2 + $0x28] sm:$0x11]
    %v4222 = vld [vmem:[#allocation2 + $0x30] sm:$0xff]
    %v4223 = vld [vmem:[#allocation2 + $0x38] sm:$0xff]
    %v4224 = vld [vmem:[#allocation2 + $0x40] sm:$0xff]
    %v4225 = vld [vmem:[#allocation2 + $0x48] sm:$0xff]
    %v4226 = vld [vmem:[#allocation2 + $0x50] sm:$0x11]
    %v4227 = vld [vmem:[#allocation2 + $0x58] sm:$0x11]
    %v4229 = vshrl.u32 %v4216, 16
    %v4231 = vrot.slane %v4229, 4
    %v4232 = vshll.u32 %v4216, 16
    %v4234 = vrot.slane %v4232, 5
    %v4235 = vor.u32 %v4231, %v4234
    %v4236 = vrot.slane %v4235, 4
    %v4238 = vshll.u32 %v4218, 16
    %v4240 = vrot.slane %v4238, 5
    %v4241 = vsel %vm215, %v4236, %v4240
    %v4243 = vshrl.u32 %v4217, 16
    %v4245 = vrot.slane %v4243, 4
    %v4246 = vshll.u32 %v4217, 16
    %v4248 = vrot.slane %v4246, 5
    %v4249 = vor.u32 %v4245, %v4248
    %v4250 = vrot.slane %v4249, 4
    %v4252 = vshll.u32 %v4219, 16
    %v4254 = vrot.slane %v4252, 5
    %v4255 = vsel %vm215, %v4250, %v4254
    %v4256 = vshrl.u32 %v4218, 16
    %v4258 = vrot.slane %v4256, 4
    %v4259 = vor.u32 %v4258, %v4240
    %v4260 = vrot.slane %v4259, 4
    %v4262 = vshll.u32 %v4220, 16
    %v4264 = vrot.slane %v4262, 5
    %v4265 = vsel %vm215, %v4260, %v4264
    %v4266 = vshrl.u32 %v4219, 16
    %v4268 = vrot.slane %v4266, 4
    %v4269 = vor.u32 %v4268, %v4254
    %v4270 = vrot.slane %v4269, 4
    %v4272 = vshll.u32 %v4221, 16
    %v4274 = vrot.slane %v4272, 5
    %v4275 = vsel %vm215, %v4270, %v4274
    %v4277 = vshrl.u32 %v4222, 16
    %v4279 = vrot.slane %v4277, 4
    %v4280 = vshll.u32 %v4222, 16
    %v4282 = vrot.slane %v4280, 5
    %v4283 = vor.u32 %v4279, %v4282
    %v4284 = vrot.slane %v4283, 4
    %v4286 = vshll.u32 %v4224, 16
    %v4288 = vrot.slane %v4286, 5
    %v4289 = vsel %vm215, %v4284, %v4288
    %v4291 = vshrl.u32 %v4223, 16
    %v4293 = vrot.slane %v4291, 4
    %v4294 = vshll.u32 %v4223, 16
    %v4296 = vrot.slane %v4294, 5
    %v4297 = vor.u32 %v4293, %v4296
    %v4298 = vrot.slane %v4297, 4
    %v4300 = vshll.u32 %v4225, 16
    %v4302 = vrot.slane %v4300, 5
    %v4303 = vsel %vm215, %v4298, %v4302
    %v4304 = vshrl.u32 %v4224, 16
    %v4306 = vrot.slane %v4304, 4
    %v4307 = vor.u32 %v4306, %v4288
    %v4308 = vrot.slane %v4307, 4
    %v4310 = vshll.u32 %v4226, 16
    %v4312 = vrot.slane %v4310, 5
    %v4313 = vsel %vm215, %v4308, %v4312
    %v4314 = vshrl.u32 %v4225, 16
    %v4316 = vrot.slane %v4314, 4
    %v4317 = vor.u32 %v4316, %v4302
    %v4318 = vrot.slane %v4317, 4
    %v4320 = vshll.u32 %v4227, 16
    %v4322 = vrot.slane %v4320, 5
    %v4323 = vsel %vm215, %v4318, %v4322
    %s4324 = scalar_lea.vmem [#allocation9], 1024
    %v4325 = vld [vmem:[%s4324] sm:$0xff]
    %v4326 = vld [vmem:[%s4324 + $0x8] sm:$0xff]
    %v4327 = vld [vmem:[%s4324 + $0x10] sm:$0xff]
    %v4328 = vld [vmem:[%s4324 + $0x18] sm:$0xff]
    %v4329 = vld [vmem:[%s4324 + $0x20] sm:$0xff]
    %v4330 = vld [vmem:[%s4324 + $0x28] sm:$0xff]
    %v4331 = vld [vmem:[%s4324 + $0x30] sm:$0xff]
    %v4332 = vld [vmem:[%s4324 + $0x38] sm:$0xff]
    %v4333 = vld [vmem:[%s4324 + $0x40] sm:$0xff]
    %v4334 = vld [vmem:[%s4324 + $0x48] sm:$0xff]
    %v4335 = vld [vmem:[%s4324 + $0x50] sm:$0xff]
    %v4336 = vld [vmem:[%s4324 + $0x58] sm:$0xff]
    %v4337 = vld [vmem:[%s4324 + $0x60] sm:$0xff]
    %v4338 = vld [vmem:[%s4324 + $0x68] sm:$0xff]
    %v4339 = vld [vmem:[%s4324 + $0x70] sm:$0xff]
    %v4340 = vld [vmem:[%s4324 + $0x78] sm:$0xff]
    %v4341 = vld [vmem:[%s4324 + $0x80] sm:$0xff]
    %v4342 = vld [vmem:[%s4324 + $0x88] sm:$0xff]
    %v4343 = vld [vmem:[%s4324 + $0x90] sm:$0xff]
    %v4344 = vld [vmem:[%s4324 + $0x98] sm:$0xff]
    %v4345 = vld [vmem:[%s4324 + $0xa0] sm:$0xff]
    %v4346 = vld [vmem:[%s4324 + $0xa8] sm:$0xff]
    %v4347 = vld [vmem:[%s4324 + $0xb0] sm:$0xff]
    %v4348 = vld [vmem:[%s4324 + $0xb8] sm:$0xff]
    %v4349 = vld [vmem:[%s4324 + $0xc0] sm:$0xff]
    %v4350 = vld [vmem:[%s4324 + $0xc8] sm:$0xff]
    %v4351 = vld [vmem:[%s4324 + $0xd0] sm:$0xff]
    %v4352 = vld [vmem:[%s4324 + $0xd8] sm:$0xff]
    %v4353 = vld [vmem:[%s4324 + $0xe0] sm:$0xff]
    %v4354 = vld [vmem:[%s4324 + $0xe8] sm:$0xff]
    %v4355 = vld [vmem:[%s4324 + $0xf0] sm:$0xff]
    %v4356 = vld [vmem:[%s4324 + $0xf8] sm:$0xff]
    %v4357 = vld [vmem:[%s4324 + $0x100] sm:$0xff]
    %v4358 = vld [vmem:[%s4324 + $0x108] sm:$0xff]
    %v4359 = vld [vmem:[%s4324 + $0x110] sm:$0xff]
    %v4360 = vld [vmem:[%s4324 + $0x118] sm:$0xff]
    %v4361 = vld [vmem:[%s4324 + $0x120] sm:$0xff]
    %v4362 = vld [vmem:[%s4324 + $0x128] sm:$0xff]
    %v4363 = vld [vmem:[%s4324 + $0x130] sm:$0xff]
    %v4364 = vld [vmem:[%s4324 + $0x138] sm:$0xff]
    %v4365 = vld [vmem:[%s4324 + $0x140] sm:$0xff]
    %v4366 = vld [vmem:[%s4324 + $0x148] sm:$0xff]
    %v4367 = vld [vmem:[%s4324 + $0x150] sm:$0xff]
    %v4368 = vld [vmem:[%s4324 + $0x158] sm:$0xff]
    %v4369 = vld [vmem:[%s4324 + $0x160] sm:$0xff]
    %v4370 = vld [vmem:[%s4324 + $0x168] sm:$0xff]
    %v4371 = vld [vmem:[%s4324 + $0x170] sm:$0xff]
    %v4372 = vld [vmem:[%s4324 + $0x178] sm:$0xff]
    %v4373 = vld [vmem:[%s4324 + $0x180] sm:$0xff]
    %v4374 = vld [vmem:[%s4324 + $0x188] sm:$0xff]
    %v4375 = vld [vmem:[%s4324 + $0x190] sm:$0xff]
    %v4376 = vld [vmem:[%s4324 + $0x198] sm:$0xff]
    %v4377 = vld [vmem:[%s4324 + $0x1a0] sm:$0xff]
    %v4378 = vld [vmem:[%s4324 + $0x1a8] sm:$0xff]
    %v4379 = vld [vmem:[%s4324 + $0x1b0] sm:$0xff]
    %v4380 = vld [vmem:[%s4324 + $0x1b8] sm:$0xff]
    %v4381 = vld [vmem:[%s4324 + $0x1c0] sm:$0xff]
    %v4382 = vld [vmem:[%s4324 + $0x1c8] sm:$0xff]
    %v4383 = vld [vmem:[%s4324 + $0x1d0] sm:$0xff]
    %v4384 = vld [vmem:[%s4324 + $0x1d8] sm:$0xff]
    %v4385 = vld [vmem:[%s4324 + $0x1e0] sm:$0xff]
    %v4386 = vld [vmem:[%s4324 + $0x1e8] sm:$0xff]
    %v4387 = vld [vmem:[%s4324 + $0x1f0] sm:$0xff]
    %v4388 = vld [vmem:[%s4324 + $0x1f8] sm:$0xff]
    %v4389 = vld [vmem:[%s4324 + $0x200] sm:$0xff]
    %v4390 = vld [vmem:[%s4324 + $0x208] sm:$0xff]
    %v4391 = vld [vmem:[%s4324 + $0x210] sm:$0xff]
    %v4392 = vld [vmem:[%s4324 + $0x218] sm:$0xff]
    %v4393 = vld [vmem:[%s4324 + $0x220] sm:$0xff]
    %v4394 = vld [vmem:[%s4324 + $0x228] sm:$0xff]
    %v4395 = vld [vmem:[%s4324 + $0x230] sm:$0xff]
    %v4396 = vld [vmem:[%s4324 + $0x238] sm:$0xff]
    %v4397 = vld [vmem:[%s4324 + $0x240] sm:$0xff]
    %v4398 = vld [vmem:[%s4324 + $0x248] sm:$0xff]
    %v4399 = vld [vmem:[%s4324 + $0x250] sm:$0xff]
    %v4400 = vld [vmem:[%s4324 + $0x258] sm:$0xff]
    %v4401 = vld [vmem:[%s4324 + $0x260] sm:$0xff]
    %v4402 = vld [vmem:[%s4324 + $0x268] sm:$0xff]
    %v4403 = vld [vmem:[%s4324 + $0x270] sm:$0xff]
    %v4404 = vld [vmem:[%s4324 + $0x278] sm:$0xff]
    %v4405 = vld [vmem:[%s4324 + $0x280] sm:$0xff]
    %v4406 = vld [vmem:[%s4324 + $0x288] sm:$0xff]
    %v4407 = vld [vmem:[%s4324 + $0x290] sm:$0xff]
    %v4408 = vld [vmem:[%s4324 + $0x298] sm:$0xff]
    %v4409 = vld [vmem:[%s4324 + $0x2a0] sm:$0xff]
    %v4410 = vld [vmem:[%s4324 + $0x2a8] sm:$0xff]
    %v4411 = vld [vmem:[%s4324 + $0x2b0] sm:$0xff]
    %v4412 = vld [vmem:[%s4324 + $0x2b8] sm:$0xff]
    %v4413 = vld [vmem:[%s4324 + $0x2c0] sm:$0xff]
    %v4414 = vld [vmem:[%s4324 + $0x2c8] sm:$0xff]
    %v4415 = vld [vmem:[%s4324 + $0x2d0] sm:$0xff]
    %v4416 = vld [vmem:[%s4324 + $0x2d8] sm:$0xff]
    %v4417 = vld [vmem:[%s4324 + $0x2e0] sm:$0xff]
    %v4418 = vld [vmem:[%s4324 + $0x2e8] sm:$0xff]
    %v4419 = vld [vmem:[%s4324 + $0x2f0] sm:$0xff]
    %v4420 = vld [vmem:[%s4324 + $0x2f8] sm:$0xff]
    %v4421 = vld [vmem:[%s4324 + $0x300] sm:$0xff]
    %v4422 = vld [vmem:[%s4324 + $0x308] sm:$0xff]
    %v4423 = vld [vmem:[%s4324 + $0x310] sm:$0xff]
    %v4424 = vld [vmem:[%s4324 + $0x318] sm:$0xff]
    %v4425 = vld [vmem:[%s4324 + $0x320] sm:$0xff]
    %v4426 = vld [vmem:[%s4324 + $0x328] sm:$0xff]
    %v4427 = vld [vmem:[%s4324 + $0x330] sm:$0xff]
    %v4428 = vld [vmem:[%s4324 + $0x338] sm:$0xff]
    %v4429 = vld [vmem:[%s4324 + $0x340] sm:$0xff]
    %v4430 = vld [vmem:[%s4324 + $0x348] sm:$0xff]
    %v4431 = vld [vmem:[%s4324 + $0x350] sm:$0xff]
    %v4432 = vld [vmem:[%s4324 + $0x358] sm:$0xff]
    %v4433 = vld [vmem:[%s4324 + $0x360] sm:$0xff]
    %v4434 = vld [vmem:[%s4324 + $0x368] sm:$0xff]
    %v4435 = vld [vmem:[%s4324 + $0x370] sm:$0xff]
    %v4436 = vld [vmem:[%s4324 + $0x378] sm:$0xff]
    %v4437 = vld [vmem:[%s4324 + $0x380] sm:$0xff]
    %v4438 = vld [vmem:[%s4324 + $0x388] sm:$0xff]
    %v4439 = vld [vmem:[%s4324 + $0x390] sm:$0xff]
    %v4440 = vld [vmem:[%s4324 + $0x398] sm:$0xff]
    %v4441 = vld [vmem:[%s4324 + $0x3a0] sm:$0xff]
    %v4442 = vld [vmem:[%s4324 + $0x3a8] sm:$0xff]
    %v4443 = vld [vmem:[%s4324 + $0x3b0] sm:$0xff]
    %v4444 = vld [vmem:[%s4324 + $0x3b8] sm:$0xff]
    %v4445 = vld [vmem:[%s4324 + $0x3c0] sm:$0xff]
    %v4446 = vld [vmem:[%s4324 + $0x3c8] sm:$0xff]
    %v4447 = vld [vmem:[%s4324 + $0x3d0] sm:$0xff]
    %v4448 = vld [vmem:[%s4324 + $0x3d8] sm:$0xff]
    %v4449 = vld [vmem:[%s4324 + $0x3e0] sm:$0xff]
    %v4450 = vld [vmem:[%s4324 + $0x3e8] sm:$0xff]
    %v4451 = vld [vmem:[%s4324 + $0x3f0] sm:$0xff]
    %v4452 = vld [vmem:[%s4324 + $0x3f8] sm:$0xff]
    %v4453 = vunpack.c.l.b16 %v4241
    %v4454 = vunpack.c.h.b16 %v4241
    %v4455 = vunpack.c.l.b16 %v4255
    %v4456 = vunpack.c.h.b16 %v4255
    %v4457 = vunpack.c.l.b16 %v4265
    %v4458 = vunpack.c.h.b16 %v4265
    %v4459 = vunpack.c.l.b16 %v4275
    %v4460 = vunpack.c.h.b16 %v4275
    %v4461 = vunpack.c.l.b16 %v4289
    %v4462 = vunpack.c.h.b16 %v4289
    %v4463 = vunpack.c.l.b16 %v4303
    %v4464 = vunpack.c.h.b16 %v4303
    %v4465 = vunpack.c.l.b16 %v4313
    %v4466 = vunpack.c.h.b16 %v4313
    %v4467 = vunpack.c.l.b16 %v4323
    %v4468 = vunpack.c.h.b16 %v4323
    %v4469 = vpack.c.b16 %v4457, %v4453
    %v4470 = vpack.c.b16 %v4458, %v4454
    %v4471 = vpack.c.b16 %v4459, %v4455
    %v4472 = vpack.c.b16 %v4460, %v4456
    %v4473 = vpack.c.b16 %v4465, %v4461
    %v4474 = vpack.c.b16 %v4466, %v4462
    %v4475 = vpack.c.b16 %v4467, %v4463
    %v4476 = vpack.c.b16 %v4468, %v4464
    %v4613 = vunpack.c.l.b16 %v4325
    %v4614 = vunpack.c.h.b16 %v4325
    %v4615 = vunpack.c.l.b16 %v4326
    %v4616 = vunpack.c.h.b16 %v4326
    %v4617 = vunpack.c.l.b16 %v4327
    %v4618 = vunpack.c.h.b16 %v4327
    %v4619 = vunpack.c.l.b16 %v4328
    %v4620 = vunpack.c.h.b16 %v4328
    %v4621 = vunpack.c.l.b16 %v4329
    %v4622 = vunpack.c.h.b16 %v4329
    %v4623 = vunpack.c.l.b16 %v4330
    %v4624 = vunpack.c.h.b16 %v4330
    %v4625 = vunpack.c.l.b16 %v4331
    %v4626 = vunpack.c.h.b16 %v4331
    %v4627 = vunpack.c.l.b16 %v4332
    %v4628 = vunpack.c.h.b16 %v4332
    %v4629 = vunpack.c.l.b16 %v4333
    %v4630 = vunpack.c.h.b16 %v4333
    %v4631 = vunpack.c.l.b16 %v4334
    %v4632 = vunpack.c.h.b16 %v4334
    %v4633 = vunpack.c.l.b16 %v4335
    %v4634 = vunpack.c.h.b16 %v4335
    %v4635 = vunpack.c.l.b16 %v4336
    %v4636 = vunpack.c.h.b16 %v4336
    %v4637 = vunpack.c.l.b16 %v4337
    %v4638 = vunpack.c.h.b16 %v4337
    %v4639 = vunpack.c.l.b16 %v4338
    %v4640 = vunpack.c.h.b16 %v4338
    %v4641 = vunpack.c.l.b16 %v4339
    %v4642 = vunpack.c.h.b16 %v4339
    %v4643 = vunpack.c.l.b16 %v4340
    %v4644 = vunpack.c.h.b16 %v4340
    %v4645 = vunpack.c.l.b16 %v4341
    %v4646 = vunpack.c.h.b16 %v4341
    %v4647 = vunpack.c.l.b16 %v4342
    %v4648 = vunpack.c.h.b16 %v4342
    %v4649 = vunpack.c.l.b16 %v4343
    %v4650 = vunpack.c.h.b16 %v4343
    %v4651 = vunpack.c.l.b16 %v4344
    %v4652 = vunpack.c.h.b16 %v4344
    %v4653 = vunpack.c.l.b16 %v4345
    %v4654 = vunpack.c.h.b16 %v4345
    %v4655 = vunpack.c.l.b16 %v4346
    %v4656 = vunpack.c.h.b16 %v4346
    %v4657 = vunpack.c.l.b16 %v4347
    %v4658 = vunpack.c.h.b16 %v4347
    %v4659 = vunpack.c.l.b16 %v4348
    %v4660 = vunpack.c.h.b16 %v4348
    %v4661 = vunpack.c.l.b16 %v4349
    %v4662 = vunpack.c.h.b16 %v4349
    %v4663 = vunpack.c.l.b16 %v4350
    %v4664 = vunpack.c.h.b16 %v4350
    %v4665 = vunpack.c.l.b16 %v4351
    %v4666 = vunpack.c.h.b16 %v4351
    %v4667 = vunpack.c.l.b16 %v4352
    %v4668 = vunpack.c.h.b16 %v4352
    %v4669 = vunpack.c.l.b16 %v4353
    %v4670 = vunpack.c.h.b16 %v4353
    %v4671 = vunpack.c.l.b16 %v4354
    %v4672 = vunpack.c.h.b16 %v4354
    %v4673 = vunpack.c.l.b16 %v4355
    %v4674 = vunpack.c.h.b16 %v4355
    %v4675 = vunpack.c.l.b16 %v4356
    %v4676 = vunpack.c.h.b16 %v4356
    %v4677 = vunpack.c.l.b16 %v4357
    %v4678 = vunpack.c.h.b16 %v4357
    %v4679 = vunpack.c.l.b16 %v4358
    %v4680 = vunpack.c.h.b16 %v4358
    %v4681 = vunpack.c.l.b16 %v4359
    %v4682 = vunpack.c.h.b16 %v4359
    %v4683 = vunpack.c.l.b16 %v4360
    %v4684 = vunpack.c.h.b16 %v4360
    %v4685 = vunpack.c.l.b16 %v4361
    %v4686 = vunpack.c.h.b16 %v4361
    %v4687 = vunpack.c.l.b16 %v4362
    %v4688 = vunpack.c.h.b16 %v4362
    %v4689 = vunpack.c.l.b16 %v4363
    %v4690 = vunpack.c.h.b16 %v4363
    %v4691 = vunpack.c.l.b16 %v4364
    %v4692 = vunpack.c.h.b16 %v4364
    %v4693 = vunpack.c.l.b16 %v4365
    %v4694 = vunpack.c.h.b16 %v4365
    %v4695 = vunpack.c.l.b16 %v4366
    %v4696 = vunpack.c.h.b16 %v4366
    %v4697 = vunpack.c.l.b16 %v4367
    %v4698 = vunpack.c.h.b16 %v4367
    %v4699 = vunpack.c.l.b16 %v4368
    %v4700 = vunpack.c.h.b16 %v4368
    %v4701 = vunpack.c.l.b16 %v4369
    %v4702 = vunpack.c.h.b16 %v4369
    %v4703 = vunpack.c.l.b16 %v4370
    %v4704 = vunpack.c.h.b16 %v4370
    %v4705 = vunpack.c.l.b16 %v4371
    %v4706 = vunpack.c.h.b16 %v4371
    %v4707 = vunpack.c.l.b16 %v4372
    %v4708 = vunpack.c.h.b16 %v4372
    %v4709 = vunpack.c.l.b16 %v4373
    %v4710 = vunpack.c.h.b16 %v4373
    %v4711 = vunpack.c.l.b16 %v4374
    %v4712 = vunpack.c.h.b16 %v4374
    %v4713 = vunpack.c.l.b16 %v4375
    %v4714 = vunpack.c.h.b16 %v4375
    %v4715 = vunpack.c.l.b16 %v4376
    %v4716 = vunpack.c.h.b16 %v4376
    %v4717 = vunpack.c.l.b16 %v4377
    %v4718 = vunpack.c.h.b16 %v4377
    %v4719 = vunpack.c.l.b16 %v4378
    %v4720 = vunpack.c.h.b16 %v4378
    %v4721 = vunpack.c.l.b16 %v4379
    %v4722 = vunpack.c.h.b16 %v4379
    %v4723 = vunpack.c.l.b16 %v4380
    %v4724 = vunpack.c.h.b16 %v4380
    %v4725 = vunpack.c.l.b16 %v4381
    %v4726 = vunpack.c.h.b16 %v4381
    %v4727 = vunpack.c.l.b16 %v4382
    %v4728 = vunpack.c.h.b16 %v4382
    %v4729 = vunpack.c.l.b16 %v4383
    %v4730 = vunpack.c.h.b16 %v4383
    %v4731 = vunpack.c.l.b16 %v4384
    %v4732 = vunpack.c.h.b16 %v4384
    %v4733 = vunpack.c.l.b16 %v4385
    %v4734 = vunpack.c.h.b16 %v4385
    %v4735 = vunpack.c.l.b16 %v4386
    %v4736 = vunpack.c.h.b16 %v4386
    %v4737 = vunpack.c.l.b16 %v4387
    %v4738 = vunpack.c.h.b16 %v4387
    %v4739 = vunpack.c.l.b16 %v4388
    %v4740 = vunpack.c.h.b16 %v4388
    %v4741 = vunpack.c.l.b16 %v4389
    %v4742 = vunpack.c.h.b16 %v4389
    %v4743 = vunpack.c.l.b16 %v4390
    %v4744 = vunpack.c.h.b16 %v4390
    %v4745 = vunpack.c.l.b16 %v4391
    %v4746 = vunpack.c.h.b16 %v4391
    %v4747 = vunpack.c.l.b16 %v4392
    %v4748 = vunpack.c.h.b16 %v4392
    %v4749 = vunpack.c.l.b16 %v4393
    %v4750 = vunpack.c.h.b16 %v4393
    %v4751 = vunpack.c.l.b16 %v4394
    %v4752 = vunpack.c.h.b16 %v4394
    %v4753 = vunpack.c.l.b16 %v4395
    %v4754 = vunpack.c.h.b16 %v4395
    %v4755 = vunpack.c.l.b16 %v4396
    %v4756 = vunpack.c.h.b16 %v4396
    %v4757 = vunpack.c.l.b16 %v4397
    %v4758 = vunpack.c.h.b16 %v4397
    %v4759 = vunpack.c.l.b16 %v4398
    %v4760 = vunpack.c.h.b16 %v4398
    %v4761 = vunpack.c.l.b16 %v4399
    %v4762 = vunpack.c.h.b16 %v4399
    %v4763 = vunpack.c.l.b16 %v4400
    %v4764 = vunpack.c.h.b16 %v4400
    %v4765 = vunpack.c.l.b16 %v4401
    %v4766 = vunpack.c.h.b16 %v4401
    %v4767 = vunpack.c.l.b16 %v4402
    %v4768 = vunpack.c.h.b16 %v4402
    %v4769 = vunpack.c.l.b16 %v4403
    %v4770 = vunpack.c.h.b16 %v4403
    %v4771 = vunpack.c.l.b16 %v4404
    %v4772 = vunpack.c.h.b16 %v4404
    %v4773 = vunpack.c.l.b16 %v4405
    %v4774 = vunpack.c.h.b16 %v4405
    %v4775 = vunpack.c.l.b16 %v4406
    %v4776 = vunpack.c.h.b16 %v4406
    %v4777 = vunpack.c.l.b16 %v4407
    %v4778 = vunpack.c.h.b16 %v4407
    %v4779 = vunpack.c.l.b16 %v4408
    %v4780 = vunpack.c.h.b16 %v4408
    %v4781 = vunpack.c.l.b16 %v4409
    %v4782 = vunpack.c.h.b16 %v4409
    %v4783 = vunpack.c.l.b16 %v4410
    %v4784 = vunpack.c.h.b16 %v4410
    %v4785 = vunpack.c.l.b16 %v4411
    %v4786 = vunpack.c.h.b16 %v4411
    %v4787 = vunpack.c.l.b16 %v4412
    %v4788 = vunpack.c.h.b16 %v4412
    %v4789 = vunpack.c.l.b16 %v4413
    %v4790 = vunpack.c.h.b16 %v4413
    %v4791 = vunpack.c.l.b16 %v4414
    %v4792 = vunpack.c.h.b16 %v4414
    %v4793 = vunpack.c.l.b16 %v4415
    %v4794 = vunpack.c.h.b16 %v4415
    %v4795 = vunpack.c.l.b16 %v4416
    %v4796 = vunpack.c.h.b16 %v4416
    %v4797 = vunpack.c.l.b16 %v4417
    %v4798 = vunpack.c.h.b16 %v4417
    %v4799 = vunpack.c.l.b16 %v4418
    %v4800 = vunpack.c.h.b16 %v4418
    %v4801 = vunpack.c.l.b16 %v4419
    %v4802 = vunpack.c.h.b16 %v4419
    %v4803 = vunpack.c.l.b16 %v4420
    %v4804 = vunpack.c.h.b16 %v4420
    %v4805 = vunpack.c.l.b16 %v4421
    %v4806 = vunpack.c.h.b16 %v4421
    %v4807 = vunpack.c.l.b16 %v4422
    %v4808 = vunpack.c.h.b16 %v4422
    %v4809 = vunpack.c.l.b16 %v4423
    %v4810 = vunpack.c.h.b16 %v4423
    %v4811 = vunpack.c.l.b16 %v4424
    %v4812 = vunpack.c.h.b16 %v4424
    %v4813 = vunpack.c.l.b16 %v4425
    %v4814 = vunpack.c.h.b16 %v4425
    %v4815 = vunpack.c.l.b16 %v4426
    %v4816 = vunpack.c.h.b16 %v4426
    %v4817 = vunpack.c.l.b16 %v4427
    %v4818 = vunpack.c.h.b16 %v4427
    %v4819 = vunpack.c.l.b16 %v4428
    %v4820 = vunpack.c.h.b16 %v4428
    %v4821 = vunpack.c.l.b16 %v4429
    %v4822 = vunpack.c.h.b16 %v4429
    %v4823 = vunpack.c.l.b16 %v4430
    %v4824 = vunpack.c.h.b16 %v4430
    %v4825 = vunpack.c.l.b16 %v4431
    %v4826 = vunpack.c.h.b16 %v4431
    %v4827 = vunpack.c.l.b16 %v4432
    %v4828 = vunpack.c.h.b16 %v4432
    %v4829 = vunpack.c.l.b16 %v4433
    %v4830 = vunpack.c.h.b16 %v4433
    %v4831 = vunpack.c.l.b16 %v4434
    %v4832 = vunpack.c.h.b16 %v4434
    %v4833 = vunpack.c.l.b16 %v4435
    %v4834 = vunpack.c.h.b16 %v4435
    %v4835 = vunpack.c.l.b16 %v4436
    %v4836 = vunpack.c.h.b16 %v4436
    %v4837 = vunpack.c.l.b16 %v4437
    %v4838 = vunpack.c.h.b16 %v4437
    %v4839 = vunpack.c.l.b16 %v4438
    %v4840 = vunpack.c.h.b16 %v4438
    %v4841 = vunpack.c.l.b16 %v4439
    %v4842 = vunpack.c.h.b16 %v4439
    %v4843 = vunpack.c.l.b16 %v4440
    %v4844 = vunpack.c.h.b16 %v4440
    %v4845 = vunpack.c.l.b16 %v4441
    %v4846 = vunpack.c.h.b16 %v4441
    %v4847 = vunpack.c.l.b16 %v4442
    %v4848 = vunpack.c.h.b16 %v4442
    %v4849 = vunpack.c.l.b16 %v4443
    %v4850 = vunpack.c.h.b16 %v4443
    %v4851 = vunpack.c.l.b16 %v4444
    %v4852 = vunpack.c.h.b16 %v4444
    %v4853 = vunpack.c.l.b16 %v4445
    %v4854 = vunpack.c.h.b16 %v4445
    %v4855 = vunpack.c.l.b16 %v4446
    %v4856 = vunpack.c.h.b16 %v4446
    %v4857 = vunpack.c.l.b16 %v4447
    %v4858 = vunpack.c.h.b16 %v4447
    %v4859 = vunpack.c.l.b16 %v4448
    %v4860 = vunpack.c.h.b16 %v4448
    %v4861 = vunpack.c.l.b16 %v4449
    %v4862 = vunpack.c.h.b16 %v4449
    %v4863 = vunpack.c.l.b16 %v4450
    %v4864 = vunpack.c.h.b16 %v4450
    %v4865 = vunpack.c.l.b16 %v4451
    %v4866 = vunpack.c.h.b16 %v4451
    %v4867 = vunpack.c.l.b16 %v4452
    %v4868 = vunpack.c.h.b16 %v4452
    %v4869 = vpack.c.b16 %v4617, %v4613
    %v4870 = vpack.c.b16 %v4618, %v4614
    %v4871 = vpack.c.b16 %v4619, %v4615
    %v4872 = vpack.c.b16 %v4620, %v4616
    %v4873 = vpack.c.b16 %v4625, %v4621
    %v4874 = vpack.c.b16 %v4626, %v4622
    %v4875 = vpack.c.b16 %v4627, %v4623
    %v4876 = vpack.c.b16 %v4628, %v4624
    %v4877 = vpack.c.b16 %v4633, %v4629
    %v4878 = vpack.c.b16 %v4634, %v4630
    %v4879 = vpack.c.b16 %v4635, %v4631
    %v4880 = vpack.c.b16 %v4636, %v4632
    %v4881 = vpack.c.b16 %v4641, %v4637
    %v4882 = vpack.c.b16 %v4642, %v4638
    %v4883 = vpack.c.b16 %v4643, %v4639
    %v4884 = vpack.c.b16 %v4644, %v4640
    %v4885 = vpack.c.b16 %v4649, %v4645
    %v4886 = vpack.c.b16 %v4650, %v4646
    %v4887 = vpack.c.b16 %v4651, %v4647
    %v4888 = vpack.c.b16 %v4652, %v4648
    %v4889 = vpack.c.b16 %v4657, %v4653
    %v4890 = vpack.c.b16 %v4658, %v4654
    %v4891 = vpack.c.b16 %v4659, %v4655
    %v4892 = vpack.c.b16 %v4660, %v4656
    %v4893 = vpack.c.b16 %v4665, %v4661
    %v4894 = vpack.c.b16 %v4666, %v4662
    %v4895 = vpack.c.b16 %v4667, %v4663
    %v4896 = vpack.c.b16 %v4668, %v4664
    %v4897 = vpack.c.b16 %v4673, %v4669
    %v4898 = vpack.c.b16 %v4674, %v4670
    %v4899 = vpack.c.b16 %v4675, %v4671
    %v4900 = vpack.c.b16 %v4676, %v4672
    %v4901 = vpack.c.b16 %v4681, %v4677
    %v4902 = vpack.c.b16 %v4682, %v4678
    %v4903 = vpack.c.b16 %v4683, %v4679
    %v4904 = vpack.c.b16 %v4684, %v4680
    %v4905 = vpack.c.b16 %v4689, %v4685
    %v4906 = vpack.c.b16 %v4690, %v4686
    %v4907 = vpack.c.b16 %v4691, %v4687
    %v4908 = vpack.c.b16 %v4692, %v4688
    %v4909 = vpack.c.b16 %v4697, %v4693
    %v4910 = vpack.c.b16 %v4698, %v4694
    %v4911 = vpack.c.b16 %v4699, %v4695
    %v4912 = vpack.c.b16 %v4700, %v4696
    %v4913 = vpack.c.b16 %v4705, %v4701
    %v4914 = vpack.c.b16 %v4706, %v4702
    %v4915 = vpack.c.b16 %v4707, %v4703
    %v4916 = vpack.c.b16 %v4708, %v4704
    %v4917 = vpack.c.b16 %v4713, %v4709
    %v4918 = vpack.c.b16 %v4714, %v4710
    %v4919 = vpack.c.b16 %v4715, %v4711
    %v4920 = vpack.c.b16 %v4716, %v4712
    %v4921 = vpack.c.b16 %v4721, %v4717
    %v4922 = vpack.c.b16 %v4722, %v4718
    %v4923 = vpack.c.b16 %v4723, %v4719
    %v4924 = vpack.c.b16 %v4724, %v4720
    %v4925 = vpack.c.b16 %v4729, %v4725
    %v4926 = vpack.c.b16 %v4730, %v4726
    %v4927 = vpack.c.b16 %v4731, %v4727
    %v4928 = vpack.c.b16 %v4732, %v4728
    %v4929 = vpack.c.b16 %v4737, %v4733
    %v4930 = vpack.c.b16 %v4738, %v4734
    %v4931 = vpack.c.b16 %v4739, %v4735
    %v4932 = vpack.c.b16 %v4740, %v4736
    %v4933 = vpack.c.b16 %v4745, %v4741
    %v4934 = vpack.c.b16 %v4746, %v4742
    %v4935 = vpack.c.b16 %v4747, %v4743
    %v4936 = vpack.c.b16 %v4748, %v4744
    %v4937 = vpack.c.b16 %v4753, %v4749
    %v4938 = vpack.c.b16 %v4754, %v4750
    %v4939 = vpack.c.b16 %v4755, %v4751
    %v4940 = vpack.c.b16 %v4756, %v4752
    %v4941 = vpack.c.b16 %v4761, %v4757
    %v4942 = vpack.c.b16 %v4762, %v4758
    %v4943 = vpack.c.b16 %v4763, %v4759
    %v4944 = vpack.c.b16 %v4764, %v4760
    %v4945 = vpack.c.b16 %v4769, %v4765
    %v4946 = vpack.c.b16 %v4770, %v4766
    %v4947 = vpack.c.b16 %v4771, %v4767
    %v4948 = vpack.c.b16 %v4772, %v4768
    %v4949 = vpack.c.b16 %v4777, %v4773
    %v4950 = vpack.c.b16 %v4778, %v4774
    %v4951 = vpack.c.b16 %v4779, %v4775
    %v4952 = vpack.c.b16 %v4780, %v4776
    %v4953 = vpack.c.b16 %v4785, %v4781
    %v4954 = vpack.c.b16 %v4786, %v4782
    %v4955 = vpack.c.b16 %v4787, %v4783
    %v4956 = vpack.c.b16 %v4788, %v4784
    %v4957 = vpack.c.b16 %v4793, %v4789
    %v4958 = vpack.c.b16 %v4794, %v4790
    %v4959 = vpack.c.b16 %v4795, %v4791
    %v4960 = vpack.c.b16 %v4796, %v4792
    %v4961 = vpack.c.b16 %v4801, %v4797
    %v4962 = vpack.c.b16 %v4802, %v4798
    %v4963 = vpack.c.b16 %v4803, %v4799
    %v4964 = vpack.c.b16 %v4804, %v4800
    %v4965 = vpack.c.b16 %v4809, %v4805
    %v4966 = vpack.c.b16 %v4810, %v4806
    %v4967 = vpack.c.b16 %v4811, %v4807
    %v4968 = vpack.c.b16 %v4812, %v4808
    %v4969 = vpack.c.b16 %v4817, %v4813
    %v4970 = vpack.c.b16 %v4818, %v4814
    %v4971 = vpack.c.b16 %v4819, %v4815
    %v4972 = vpack.c.b16 %v4820, %v4816
    %v4973 = vpack.c.b16 %v4825, %v4821
    %v4974 = vpack.c.b16 %v4826, %v4822
    %v4975 = vpack.c.b16 %v4827, %v4823
    %v4976 = vpack.c.b16 %v4828, %v4824
    %v4977 = vpack.c.b16 %v4833, %v4829
    %v4978 = vpack.c.b16 %v4834, %v4830
    %v4979 = vpack.c.b16 %v4835, %v4831
    %v4980 = vpack.c.b16 %v4836, %v4832
    %v4981 = vpack.c.b16 %v4841, %v4837
    %v4982 = vpack.c.b16 %v4842, %v4838
    %v4983 = vpack.c.b16 %v4843, %v4839
    %v4984 = vpack.c.b16 %v4844, %v4840
    %v4985 = vpack.c.b16 %v4849, %v4845
    %v4986 = vpack.c.b16 %v4850, %v4846
    %v4987 = vpack.c.b16 %v4851, %v4847
    %v4988 = vpack.c.b16 %v4852, %v4848
    %v4989 = vpack.c.b16 %v4857, %v4853
    %v4990 = vpack.c.b16 %v4858, %v4854
    %v4991 = vpack.c.b16 %v4859, %v4855
    %v4992 = vpack.c.b16 %v4860, %v4856
    %v4993 = vpack.c.b16 %v4865, %v4861
    %v4994 = vpack.c.b16 %v4866, %v4862
    %v4995 = vpack.c.b16 %v4867, %v4863
    %v4996 = vpack.c.b16 %v4868, %v4864
    %5125 = vmatpush.bf16.msra.mxu0 %v4897
    %5126 = vmatpush.bf16.msra.mxu0 %v4893
    %5127 = vmatpush.bf16.msra.mxu0 %v4889
    %5128 = vmatpush.bf16.msra.mxu0 %v4885
    %5129 = vmatpush.bf16.msra.mxu0 %v4881
    %5130 = vmatpush.bf16.msra.mxu0 %v4877
    %5131 = vmatpush.bf16.msra.mxu0 %v4873
    %5132 = vmatpush.bf16.msra.mxu0 %v4869
    %5133 = vmatmul.bf16.gmra.mxu0 %v4469
    %v5134 = vpop.f32.mrf.mxu0
    %v5135 = vadd.f32 0.0, %v5134
    %v5136 = vpop.f32.mrf.mxu0
    %v5137 = vadd.f32 0.0, %v5136
    %5138 = vmatmul.bf16.gmra.mxu0 %v4473
    %v5139 = vpop.f32.mrf.mxu0
    %v5140 = vadd.f32 0.0, %v5139
    %v5141 = vpop.f32.mrf.mxu0
    %v5142 = vadd.f32 0.0, %v5141
    %5143 = vdwg.mxu0
    %5144 = vmatpush.bf16.msra.mxu0 %v4929
    %5145 = vmatpush.bf16.msra.mxu0 %v4925
    %5146 = vmatpush.bf16.msra.mxu0 %v4921
    %5147 = vmatpush.bf16.msra.mxu0 %v4917
    %5148 = vmatpush.bf16.msra.mxu0 %v4913
    %5149 = vmatpush.bf16.msra.mxu0 %v4909
    %5150 = vmatpush.bf16.msra.mxu0 %v4905
    %5151 = vmatpush.bf16.msra.mxu0 %v4901
    %5152 = vmatmul.bf16.gmra.mxu0 %v4470
    %v5153 = vpop.f32.mrf.mxu0
    %v5154 = vadd.f32 %v5135, %v5153
    %v5155 = vpop.f32.mrf.mxu0
    %v5156 = vadd.f32 %v5137, %v5155
    %5157 = vmatmul.bf16.gmra.mxu0 %v4474
    %v5158 = vpop.f32.mrf.mxu0
    %v5159 = vadd.f32 %v5140, %v5158
    %v5160 = vpop.f32.mrf.mxu0
    %v5161 = vadd.f32 %v5142, %v5160
    %5162 = vdwg.mxu0
    %5163 = vmatpush.bf16.msra.mxu0 %v4961
    %5164 = vmatpush.bf16.msra.mxu0 %v4957
    %5165 = vmatpush.bf16.msra.mxu0 %v4953
    %5166 = vmatpush.bf16.msra.mxu0 %v4949
    %5167 = vmatpush.bf16.msra.mxu0 %v4945
    %5168 = vmatpush.bf16.msra.mxu0 %v4941
    %5169 = vmatpush.bf16.msra.mxu0 %v4937
    %5170 = vmatpush.bf16.msra.mxu0 %v4933
    %5171 = vmatmul.bf16.gmra.mxu0 %v4471
    %v5172 = vpop.f32.mrf.mxu0
    %v5173 = vadd.f32 %v5154, %v5172
    %v5174 = vpop.f32.mrf.mxu0
    %v5175 = vadd.f32 %v5156, %v5174
    %5176 = vmatmul.bf16.gmra.mxu0 %v4475
    %v5177 = vpop.f32.mrf.mxu0
    %v5178 = vadd.f32 %v5159, %v5177
    %v5179 = vpop.f32.mrf.mxu0
    %v5180 = vadd.f32 %v5161, %v5179
    %5181 = vdwg.mxu0
    %5182 = vmatpush.bf16.msra.mxu0 %v4993
    %5183 = vmatpush.bf16.msra.mxu0 %v4989
    %5184 = vmatpush.bf16.msra.mxu0 %v4985
    %5185 = vmatpush.bf16.msra.mxu0 %v4981
    %5186 = vmatpush.bf16.msra.mxu0 %v4977
    %5187 = vmatpush.bf16.msra.mxu0 %v4973
    %5188 = vmatpush.bf16.msra.mxu0 %v4969
    %5189 = vmatpush.bf16.msra.mxu0 %v4965
    %5190 = vmatmul.bf16.gmra.mxu0 %v4472
    %v5191 = vpop.f32.mrf.mxu0
    %v5192 = vadd.f32 %v5173, %v5191
    %v5193 = vpop.f32.mrf.mxu0
    %v5194 = vadd.f32 %v5175, %v5193
    %5195 = vmatmul.bf16.gmra.mxu0 %v4476
    %v5196 = vpop.f32.mrf.mxu0
    %v5197 = vadd.f32 %v5178, %v5196
    %v5198 = vpop.f32.mrf.mxu0
    %v5199 = vadd.f32 %v5180, %v5198
    %5200 = vdwg.mxu0
    %5201 = vmatpush.bf16.msra.mxu0 %v4898
    %5202 = vmatpush.bf16.msra.mxu0 %v4894
    %5203 = vmatpush.bf16.msra.mxu0 %v4890
    %5204 = vmatpush.bf16.msra.mxu0 %v4886
    %5205 = vmatpush.bf16.msra.mxu0 %v4882
    %5206 = vmatpush.bf16.msra.mxu0 %v4878
    %5207 = vmatpush.bf16.msra.mxu0 %v4874
    %5208 = vmatpush.bf16.msra.mxu0 %v4870
    %5209 = vmatmul.bf16.gmra.mxu0 %v4469
    %v5210 = vpop.f32.mrf.mxu0
    %v5211 = vadd.f32 0.0, %v5210
    %v5212 = vpop.f32.mrf.mxu0
    %v5213 = vadd.f32 0.0, %v5212
    %5214 = vmatmul.bf16.gmra.mxu0 %v4473
    %v5215 = vpop.f32.mrf.mxu0
    %v5216 = vadd.f32 0.0, %v5215
    %v5217 = vpop.f32.mrf.mxu0
    %v5218 = vadd.f32 0.0, %v5217
    %5219 = vdwg.mxu0
    %5220 = vmatpush.bf16.msra.mxu0 %v4930
    %5221 = vmatpush.bf16.msra.mxu0 %v4926
    %5222 = vmatpush.bf16.msra.mxu0 %v4922
    %5223 = vmatpush.bf16.msra.mxu0 %v4918
    %5224 = vmatpush.bf16.msra.mxu0 %v4914
    %5225 = vmatpush.bf16.msra.mxu0 %v4910
    %5226 = vmatpush.bf16.msra.mxu0 %v4906
    %5227 = vmatpush.bf16.msra.mxu0 %v4902
    %5228 = vmatmul.bf16.gmra.mxu0 %v4470
    %v5229 = vpop.f32.mrf.mxu0
    %v5230 = vadd.f32 %v5211, %v5229
    %v5231 = vpop.f32.mrf.mxu0
    %v5232 = vadd.f32 %v5213, %v5231
    %5233 = vmatmul.bf16.gmra.mxu0 %v4474
    %v5234 = vpop.f32.mrf.mxu0
    %v5235 = vadd.f32 %v5216, %v5234
    %v5236 = vpop.f32.mrf.mxu0
    %v5237 = vadd.f32 %v5218, %v5236
    %5238 = vdwg.mxu0
    %5239 = vmatpush.bf16.msra.mxu0 %v4962
    %5240 = vmatpush.bf16.msra.mxu0 %v4958
    %5241 = vmatpush.bf16.msra.mxu0 %v4954
    %5242 = vmatpush.bf16.msra.mxu0 %v4950
    %5243 = vmatpush.bf16.msra.mxu0 %v4946
    %5244 = vmatpush.bf16.msra.mxu0 %v4942
    %5245 = vmatpush.bf16.msra.mxu0 %v4938
    %5246 = vmatpush.bf16.msra.mxu0 %v4934
    %5247 = vmatmul.bf16.gmra.mxu0 %v4471
    %v5248 = vpop.f32.mrf.mxu0
    %v5249 = vadd.f32 %v5230, %v5248
    %v5250 = vpop.f32.mrf.mxu0
    %v5251 = vadd.f32 %v5232, %v5250
    %5252 = vmatmul.bf16.gmra.mxu0 %v4475
    %v5253 = vpop.f32.mrf.mxu0
    %v5254 = vadd.f32 %v5235, %v5253
    %v5255 = vpop.f32.mrf.mxu0
    %v5256 = vadd.f32 %v5237, %v5255
    %5257 = vdwg.mxu0
    %5258 = vmatpush.bf16.msra.mxu0 %v4994
    %5259 = vmatpush.bf16.msra.mxu0 %v4990
    %5260 = vmatpush.bf16.msra.mxu0 %v4986
    %5261 = vmatpush.bf16.msra.mxu0 %v4982
    %5262 = vmatpush.bf16.msra.mxu0 %v4978
    %5263 = vmatpush.bf16.msra.mxu0 %v4974
    %5264 = vmatpush.bf16.msra.mxu0 %v4970
    %5265 = vmatpush.bf16.msra.mxu0 %v4966
    %5266 = vmatmul.bf16.gmra.mxu0 %v4472
    %v5267 = vpop.f32.mrf.mxu0
    %v5268 = vadd.f32 %v5249, %v5267
    %v5269 = vpop.f32.mrf.mxu0
    %v5270 = vadd.f32 %v5251, %v5269
    %5271 = vmatmul.bf16.gmra.mxu0 %v4476
    %v5272 = vpop.f32.mrf.mxu0
    %v5273 = vadd.f32 %v5254, %v5272
    %v5274 = vpop.f32.mrf.mxu0
    %v5275 = vadd.f32 %v5256, %v5274
    %5276 = vdwg.mxu0
    %5277 = vmatpush.bf16.msra.mxu0 %v4899
    %5278 = vmatpush.bf16.msra.mxu0 %v4895
    %5279 = vmatpush.bf16.msra.mxu0 %v4891
    %5280 = vmatpush.bf16.msra.mxu0 %v4887
    %5281 = vmatpush.bf16.msra.mxu0 %v4883
    %5282 = vmatpush.bf16.msra.mxu0 %v4879
    %5283 = vmatpush.bf16.msra.mxu0 %v4875
    %5284 = vmatpush.bf16.msra.mxu0 %v4871
    %5285 = vmatmul.bf16.gmra.mxu0 %v4469
    %v5286 = vpop.f32.mrf.mxu0
    %v5287 = vadd.f32 0.0, %v5286
    %v5288 = vpop.f32.mrf.mxu0
    %v5289 = vadd.f32 0.0, %v5288
    %5290 = vmatmul.bf16.gmra.mxu0 %v4473
    %v5291 = vpop.f32.mrf.mxu0
    %v5292 = vadd.f32 0.0, %v5291
    %v5293 = vpop.f32.mrf.mxu0
    %v5294 = vadd.f32 0.0, %v5293
    %5295 = vdwg.mxu0
    %5296 = vmatpush.bf16.msra.mxu0 %v4931
    %5297 = vmatpush.bf16.msra.mxu0 %v4927
    %5298 = vmatpush.bf16.msra.mxu0 %v4923
    %5299 = vmatpush.bf16.msra.mxu0 %v4919
    %5300 = vmatpush.bf16.msra.mxu0 %v4915
    %5301 = vmatpush.bf16.msra.mxu0 %v4911
    %5302 = vmatpush.bf16.msra.mxu0 %v4907
    %5303 = vmatpush.bf16.msra.mxu0 %v4903
    %5304 = vmatmul.bf16.gmra.mxu0 %v4470
    %v5305 = vpop.f32.mrf.mxu0
    %v5306 = vadd.f32 %v5287, %v5305
    %v5307 = vpop.f32.mrf.mxu0
    %v5308 = vadd.f32 %v5289, %v5307
    %5309 = vmatmul.bf16.gmra.mxu0 %v4474
    %v5310 = vpop.f32.mrf.mxu0
    %v5311 = vadd.f32 %v5292, %v5310
    %v5312 = vpop.f32.mrf.mxu0
    %v5313 = vadd.f32 %v5294, %v5312
    %5314 = vdwg.mxu0
    %5315 = vmatpush.bf16.msra.mxu0 %v4963
    %5316 = vmatpush.bf16.msra.mxu0 %v4959
    %5317 = vmatpush.bf16.msra.mxu0 %v4955
    %5318 = vmatpush.bf16.msra.mxu0 %v4951
    %5319 = vmatpush.bf16.msra.mxu0 %v4947
    %5320 = vmatpush.bf16.msra.mxu0 %v4943
    %5321 = vmatpush.bf16.msra.mxu0 %v4939
    %5322 = vmatpush.bf16.msra.mxu0 %v4935
    %5323 = vmatmul.bf16.gmra.mxu0 %v4471
    %v5324 = vpop.f32.mrf.mxu0
    %v5325 = vadd.f32 %v5306, %v5324
    %v5326 = vpop.f32.mrf.mxu0
    %v5327 = vadd.f32 %v5308, %v5326
    %5328 = vmatmul.bf16.gmra.mxu0 %v4475
    %v5329 = vpop.f32.mrf.mxu0
    %v5330 = vadd.f32 %v5311, %v5329
    %v5331 = vpop.f32.mrf.mxu0
    %v5332 = vadd.f32 %v5313, %v5331
    %5333 = vdwg.mxu0
    %5334 = vmatpush.bf16.msra.mxu0 %v4995
    %5335 = vmatpush.bf16.msra.mxu0 %v4991
    %5336 = vmatpush.bf16.msra.mxu0 %v4987
    %5337 = vmatpush.bf16.msra.mxu0 %v4983
    %5338 = vmatpush.bf16.msra.mxu0 %v4979
    %5339 = vmatpush.bf16.msra.mxu0 %v4975
    %5340 = vmatpush.bf16.msra.mxu0 %v4971
    %5341 = vmatpush.bf16.msra.mxu0 %v4967
    %5342 = vmatmul.bf16.gmra.mxu0 %v4472
    %v5343 = vpop.f32.mrf.mxu0
    %v5344 = vadd.f32 %v5325, %v5343
    %v5345 = vpop.f32.mrf.mxu0
    %v5346 = vadd.f32 %v5327, %v5345
    %5347 = vmatmul.bf16.gmra.mxu0 %v4476
    %v5348 = vpop.f32.mrf.mxu0
    %v5349 = vadd.f32 %v5330, %v5348
    %v5350 = vpop.f32.mrf.mxu0
    %v5351 = vadd.f32 %v5332, %v5350
    %5352 = vdwg.mxu0
    %5353 = vmatpush.bf16.msra.mxu0 %v4900
    %5354 = vmatpush.bf16.msra.mxu0 %v4896
    %5355 = vmatpush.bf16.msra.mxu0 %v4892
    %5356 = vmatpush.bf16.msra.mxu0 %v4888
    %5357 = vmatpush.bf16.msra.mxu0 %v4884
    %5358 = vmatpush.bf16.msra.mxu0 %v4880
    %5359 = vmatpush.bf16.msra.mxu0 %v4876
    %5360 = vmatpush.bf16.msra.mxu0 %v4872
    %5361 = vmatmul.bf16.gmra.mxu0 %v4469
    %v5362 = vpop.f32.mrf.mxu0
    %v5363 = vadd.f32 0.0, %v5362
    %v5364 = vpop.f32.mrf.mxu0
    %v5365 = vadd.f32 0.0, %v5364
    %5366 = vmatmul.bf16.gmra.mxu0 %v4473
    %v5367 = vpop.f32.mrf.mxu0
    %v5368 = vadd.f32 0.0, %v5367
    %v5369 = vpop.f32.mrf.mxu0
    %v5370 = vadd.f32 0.0, %v5369
    %5371 = vdwg.mxu0
    %5372 = vmatpush.bf16.msra.mxu0 %v4932
    %5373 = vmatpush.bf16.msra.mxu0 %v4928
    %5374 = vmatpush.bf16.msra.mxu0 %v4924
    %5375 = vmatpush.bf16.msra.mxu0 %v4920
    %5376 = vmatpush.bf16.msra.mxu0 %v4916
    %5377 = vmatpush.bf16.msra.mxu0 %v4912
    %5378 = vmatpush.bf16.msra.mxu0 %v4908
    %5379 = vmatpush.bf16.msra.mxu0 %v4904
    %5380 = vmatmul.bf16.gmra.mxu0 %v4470
    %v5381 = vpop.f32.mrf.mxu0
    %v5382 = vadd.f32 %v5363, %v5381
    %v5383 = vpop.f32.mrf.mxu0
    %v5384 = vadd.f32 %v5365, %v5383
    %5385 = vmatmul.bf16.gmra.mxu0 %v4474
    %v5386 = vpop.f32.mrf.mxu0
    %v5387 = vadd.f32 %v5368, %v5386
    %v5388 = vpop.f32.mrf.mxu0
    %v5389 = vadd.f32 %v5370, %v5388
    %5390 = vdwg.mxu0
    %5391 = vmatpush.bf16.msra.mxu0 %v4964
    %5392 = vmatpush.bf16.msra.mxu0 %v4960
    %5393 = vmatpush.bf16.msra.mxu0 %v4956
    %5394 = vmatpush.bf16.msra.mxu0 %v4952
    %5395 = vmatpush.bf16.msra.mxu0 %v4948
    %5396 = vmatpush.bf16.msra.mxu0 %v4944
    %5397 = vmatpush.bf16.msra.mxu0 %v4940
    %5398 = vmatpush.bf16.msra.mxu0 %v4936
    %5399 = vmatmul.bf16.gmra.mxu0 %v4471
    %v5400 = vpop.f32.mrf.mxu0
    %v5401 = vadd.f32 %v5382, %v5400
    %v5402 = vpop.f32.mrf.mxu0
    %v5403 = vadd.f32 %v5384, %v5402
    %5404 = vmatmul.bf16.gmra.mxu0 %v4475
    %v5405 = vpop.f32.mrf.mxu0
    %v5406 = vadd.f32 %v5387, %v5405
    %v5407 = vpop.f32.mrf.mxu0
    %v5408 = vadd.f32 %v5389, %v5407
    %5409 = vdwg.mxu0
    %5410 = vmatpush.bf16.msra.mxu0 %v4996
    %5411 = vmatpush.bf16.msra.mxu0 %v4992
    %5412 = vmatpush.bf16.msra.mxu0 %v4988
    %5413 = vmatpush.bf16.msra.mxu0 %v4984
    %5414 = vmatpush.bf16.msra.mxu0 %v4980
    %5415 = vmatpush.bf16.msra.mxu0 %v4976
    %5416 = vmatpush.bf16.msra.mxu0 %v4972
    %5417 = vmatpush.bf16.msra.mxu0 %v4968
    %5418 = vmatmul.bf16.gmra.mxu0 %v4472
    %v5419 = vpop.f32.mrf.mxu0
    %v5420 = vadd.f32 %v5401, %v5419
    %v5421 = vpop.f32.mrf.mxu0
    %v5422 = vadd.f32 %v5403, %v5421
    %5423 = vmatmul.bf16.gmra.mxu0 %v4476
    %v5424 = vpop.f32.mrf.mxu0
    %v5425 = vadd.f32 %v5406, %v5424
    %v5426 = vpop.f32.mrf.mxu0
    %v5427 = vadd.f32 %v5408, %v5426
    %5428 = vdwg.mxu0
    %v5437 = vunpack.c.l.b16 %v4080
    %v5438 = vunpack.c.h.b16 %v4080
    %v5439 = vunpack.c.l.b16 %v4081
    %v5440 = vunpack.c.h.b16 %v4081
    %v5441 = vunpack.c.l.b16 %v4082
    %v5442 = vunpack.c.h.b16 %v4082
    %v5443 = vunpack.c.l.b16 %v4083
    %v5444 = vunpack.c.h.b16 %v4083
    %v5445 = vunpack.c.l.b16 %v4084
    %v5446 = vunpack.c.h.b16 %v4084
    %v5447 = vunpack.c.l.b16 %v4085
    %v5448 = vunpack.c.h.b16 %v4085
    %v5449 = vunpack.c.l.b16 %v4086
    %v5450 = vunpack.c.h.b16 %v4086
    %v5451 = vunpack.c.l.b16 %v4087
    %v5452 = vunpack.c.h.b16 %v4087
    %v5453 = vpack.c.b16 %v5441, %v5437
    %v5454 = vpack.c.b16 %v5442, %v5438
    %v5455 = vpack.c.b16 %v5443, %v5439
    %v5456 = vpack.c.b16 %v5444, %v5440
    %v5457 = vpack.c.b16 %v5449, %v5445
    %v5458 = vpack.c.b16 %v5450, %v5446
    %v5459 = vpack.c.b16 %v5451, %v5447
    %v5460 = vpack.c.b16 %v5452, %v5448
    %v5597 = vunpack.c.l.b16 %v4088
    %v5598 = vunpack.c.h.b16 %v4088
    %v5599 = vunpack.c.l.b16 %v4089
    %v5600 = vunpack.c.h.b16 %v4089
    %v5601 = vunpack.c.l.b16 %v4090
    %v5602 = vunpack.c.h.b16 %v4090
    %v5603 = vunpack.c.l.b16 %v4091
    %v5604 = vunpack.c.h.b16 %v4091
    %v5605 = vunpack.c.l.b16 %v4092
    %v5606 = vunpack.c.h.b16 %v4092
    %v5607 = vunpack.c.l.b16 %v4093
    %v5608 = vunpack.c.h.b16 %v4093
    %v5609 = vunpack.c.l.b16 %v4094
    %v5610 = vunpack.c.h.b16 %v4094
    %v5611 = vunpack.c.l.b16 %v4095
    %v5612 = vunpack.c.h.b16 %v4095
    %v5613 = vunpack.c.l.b16 %v4096
    %v5614 = vunpack.c.h.b16 %v4096
    %v5615 = vunpack.c.l.b16 %v4097
    %v5616 = vunpack.c.h.b16 %v4097
    %v5617 = vunpack.c.l.b16 %v4098
    %v5618 = vunpack.c.h.b16 %v4098
    %v5619 = vunpack.c.l.b16 %v4099
    %v5620 = vunpack.c.h.b16 %v4099
    %v5621 = vunpack.c.l.b16 %v4100
    %v5622 = vunpack.c.h.b16 %v4100
    %v5623 = vunpack.c.l.b16 %v4101
    %v5624 = vunpack.c.h.b16 %v4101
    %v5625 = vunpack.c.l.b16 %v4102
    %v5626 = vunpack.c.h.b16 %v4102
    %v5627 = vunpack.c.l.b16 %v4103
    %v5628 = vunpack.c.h.b16 %v4103
    %v5629 = vunpack.c.l.b16 %v4104
    %v5630 = vunpack.c.h.b16 %v4104
    %v5631 = vunpack.c.l.b16 %v4105
    %v5632 = vunpack.c.h.b16 %v4105
    %v5633 = vunpack.c.l.b16 %v4106
    %v5634 = vunpack.c.h.b16 %v4106
    %v5635 = vunpack.c.l.b16 %v4107
    %v5636 = vunpack.c.h.b16 %v4107
    %v5637 = vunpack.c.l.b16 %v4108
    %v5638 = vunpack.c.h.b16 %v4108
    %v5639 = vunpack.c.l.b16 %v4109
    %v5640 = vunpack.c.h.b16 %v4109
    %v5641 = vunpack.c.l.b16 %v4110
    %v5642 = vunpack.c.h.b16 %v4110
    %v5643 = vunpack.c.l.b16 %v4111
    %v5644 = vunpack.c.h.b16 %v4111
    %v5645 = vunpack.c.l.b16 %v4112
    %v5646 = vunpack.c.h.b16 %v4112
    %v5647 = vunpack.c.l.b16 %v4113
    %v5648 = vunpack.c.h.b16 %v4113
    %v5649 = vunpack.c.l.b16 %v4114
    %v5650 = vunpack.c.h.b16 %v4114
    %v5651 = vunpack.c.l.b16 %v4115
    %v5652 = vunpack.c.h.b16 %v4115
    %v5653 = vunpack.c.l.b16 %v4116
    %v5654 = vunpack.c.h.b16 %v4116
    %v5655 = vunpack.c.l.b16 %v4117
    %v5656 = vunpack.c.h.b16 %v4117
    %v5657 = vunpack.c.l.b16 %v4118
    %v5658 = vunpack.c.h.b16 %v4118
    %v5659 = vunpack.c.l.b16 %v4119
    %v5660 = vunpack.c.h.b16 %v4119
    %v5661 = vunpack.c.l.b16 %v4120
    %v5662 = vunpack.c.h.b16 %v4120
    %v5663 = vunpack.c.l.b16 %v4121
    %v5664 = vunpack.c.h.b16 %v4121
    %v5665 = vunpack.c.l.b16 %v4122
    %v5666 = vunpack.c.h.b16 %v4122
    %v5667 = vunpack.c.l.b16 %v4123
    %v5668 = vunpack.c.h.b16 %v4123
    %v5669 = vunpack.c.l.b16 %v4124
    %v5670 = vunpack.c.h.b16 %v4124
    %v5671 = vunpack.c.l.b16 %v4125
    %v5672 = vunpack.c.h.b16 %v4125
    %v5673 = vunpack.c.l.b16 %v4126
    %v5674 = vunpack.c.h.b16 %v4126
    %v5675 = vunpack.c.l.b16 %v4127
    %v5676 = vunpack.c.h.b16 %v4127
    %v5677 = vunpack.c.l.b16 %v4128
    %v5678 = vunpack.c.h.b16 %v4128
    %v5679 = vunpack.c.l.b16 %v4129
    %v5680 = vunpack.c.h.b16 %v4129
    %v5681 = vunpack.c.l.b16 %v4130
    %v5682 = vunpack.c.h.b16 %v4130
    %v5683 = vunpack.c.l.b16 %v4131
    %v5684 = vunpack.c.h.b16 %v4131
    %v5685 = vunpack.c.l.b16 %v4132
    %v5686 = vunpack.c.h.b16 %v4132
    %v5687 = vunpack.c.l.b16 %v4133
    %v5688 = vunpack.c.h.b16 %v4133
    %v5689 = vunpack.c.l.b16 %v4134
    %v5690 = vunpack.c.h.b16 %v4134
    %v5691 = vunpack.c.l.b16 %v4135
    %v5692 = vunpack.c.h.b16 %v4135
    %v5693 = vunpack.c.l.b16 %v4136
    %v5694 = vunpack.c.h.b16 %v4136
    %v5695 = vunpack.c.l.b16 %v4137
    %v5696 = vunpack.c.h.b16 %v4137
    %v5697 = vunpack.c.l.b16 %v4138
    %v5698 = vunpack.c.h.b16 %v4138
    %v5699 = vunpack.c.l.b16 %v4139
    %v5700 = vunpack.c.h.b16 %v4139
    %v5701 = vunpack.c.l.b16 %v4140
    %v5702 = vunpack.c.h.b16 %v4140
    %v5703 = vunpack.c.l.b16 %v4141
    %v5704 = vunpack.c.h.b16 %v4141
    %v5705 = vunpack.c.l.b16 %v4142
    %v5706 = vunpack.c.h.b16 %v4142
    %v5707 = vunpack.c.l.b16 %v4143
    %v5708 = vunpack.c.h.b16 %v4143
    %v5709 = vunpack.c.l.b16 %v4144
    %v5710 = vunpack.c.h.b16 %v4144
    %v5711 = vunpack.c.l.b16 %v4145
    %v5712 = vunpack.c.h.b16 %v4145
    %v5713 = vunpack.c.l.b16 %v4146
    %v5714 = vunpack.c.h.b16 %v4146
    %v5715 = vunpack.c.l.b16 %v4147
    %v5716 = vunpack.c.h.b16 %v4147
    %v5717 = vunpack.c.l.b16 %v4148
    %v5718 = vunpack.c.h.b16 %v4148
    %v5719 = vunpack.c.l.b16 %v4149
    %v5720 = vunpack.c.h.b16 %v4149
    %v5721 = vunpack.c.l.b16 %v4150
    %v5722 = vunpack.c.h.b16 %v4150
    %v5723 = vunpack.c.l.b16 %v4151
    %v5724 = vunpack.c.h.b16 %v4151
    %v5725 = vunpack.c.l.b16 %v4152
    %v5726 = vunpack.c.h.b16 %v4152
    %v5727 = vunpack.c.l.b16 %v4153
    %v5728 = vunpack.c.h.b16 %v4153
    %v5729 = vunpack.c.l.b16 %v4154
    %v5730 = vunpack.c.h.b16 %v4154
    %v5731 = vunpack.c.l.b16 %v4155
    %v5732 = vunpack.c.h.b16 %v4155
    %v5733 = vunpack.c.l.b16 %v4156
    %v5734 = vunpack.c.h.b16 %v4156
    %v5735 = vunpack.c.l.b16 %v4157
    %v5736 = vunpack.c.h.b16 %v4157
    %v5737 = vunpack.c.l.b16 %v4158
    %v5738 = vunpack.c.h.b16 %v4158
    %v5739 = vunpack.c.l.b16 %v4159
    %v5740 = vunpack.c.h.b16 %v4159
    %v5741 = vunpack.c.l.b16 %v4160
    %v5742 = vunpack.c.h.b16 %v4160
    %v5743 = vunpack.c.l.b16 %v4161
    %v5744 = vunpack.c.h.b16 %v4161
    %v5745 = vunpack.c.l.b16 %v4162
    %v5746 = vunpack.c.h.b16 %v4162
    %v5747 = vunpack.c.l.b16 %v4163
    %v5748 = vunpack.c.h.b16 %v4163
    %v5749 = vunpack.c.l.b16 %v4164
    %v5750 = vunpack.c.h.b16 %v4164
    %v5751 = vunpack.c.l.b16 %v4165
    %v5752 = vunpack.c.h.b16 %v4165
    %v5753 = vunpack.c.l.b16 %v4166
    %v5754 = vunpack.c.h.b16 %v4166
    %v5755 = vunpack.c.l.b16 %v4167
    %v5756 = vunpack.c.h.b16 %v4167
    %v5757 = vunpack.c.l.b16 %v4168
    %v5758 = vunpack.c.h.b16 %v4168
    %v5759 = vunpack.c.l.b16 %v4169
    %v5760 = vunpack.c.h.b16 %v4169
    %v5761 = vunpack.c.l.b16 %v4170
    %v5762 = vunpack.c.h.b16 %v4170
    %v5763 = vunpack.c.l.b16 %v4171
    %v5764 = vunpack.c.h.b16 %v4171
    %v5765 = vunpack.c.l.b16 %v4172
    %v5766 = vunpack.c.h.b16 %v4172
    %v5767 = vunpack.c.l.b16 %v4173
    %v5768 = vunpack.c.h.b16 %v4173
    %v5769 = vunpack.c.l.b16 %v4174
    %v5770 = vunpack.c.h.b16 %v4174
    %v5771 = vunpack.c.l.b16 %v4175
    %v5772 = vunpack.c.h.b16 %v4175
    %v5773 = vunpack.c.l.b16 %v4176
    %v5774 = vunpack.c.h.b16 %v4176
    %v5775 = vunpack.c.l.b16 %v4177
    %v5776 = vunpack.c.h.b16 %v4177
    %v5777 = vunpack.c.l.b16 %v4178
    %v5778 = vunpack.c.h.b16 %v4178
    %v5779 = vunpack.c.l.b16 %v4179
    %v5780 = vunpack.c.h.b16 %v4179
    %v5781 = vunpack.c.l.b16 %v4180
    %v5782 = vunpack.c.h.b16 %v4180
    %v5783 = vunpack.c.l.b16 %v4181
    %v5784 = vunpack.c.h.b16 %v4181
    %v5785 = vunpack.c.l.b16 %v4182
    %v5786 = vunpack.c.h.b16 %v4182
    %v5787 = vunpack.c.l.b16 %v4183
    %v5788 = vunpack.c.h.b16 %v4183
    %v5789 = vunpack.c.l.b16 %v4184
    %v5790 = vunpack.c.h.b16 %v4184
    %v5791 = vunpack.c.l.b16 %v4185
    %v5792 = vunpack.c.h.b16 %v4185
    %v5793 = vunpack.c.l.b16 %v4186
    %v5794 = vunpack.c.h.b16 %v4186
    %v5795 = vunpack.c.l.b16 %v4187
    %v5796 = vunpack.c.h.b16 %v4187
    %v5797 = vunpack.c.l.b16 %v4188
    %v5798 = vunpack.c.h.b16 %v4188
    %v5799 = vunpack.c.l.b16 %v4189
    %v5800 = vunpack.c.h.b16 %v4189
    %v5801 = vunpack.c.l.b16 %v4190
    %v5802 = vunpack.c.h.b16 %v4190
    %v5803 = vunpack.c.l.b16 %v4191
    %v5804 = vunpack.c.h.b16 %v4191
    %v5805 = vunpack.c.l.b16 %v4192
    %v5806 = vunpack.c.h.b16 %v4192
    %v5807 = vunpack.c.l.b16 %v4193
    %v5808 = vunpack.c.h.b16 %v4193
    %v5809 = vunpack.c.l.b16 %v4194
    %v5810 = vunpack.c.h.b16 %v4194
    %v5811 = vunpack.c.l.b16 %v4195
    %v5812 = vunpack.c.h.b16 %v4195
    %v5813 = vunpack.c.l.b16 %v4196
    %v5814 = vunpack.c.h.b16 %v4196
    %v5815 = vunpack.c.l.b16 %v4197
    %v5816 = vunpack.c.h.b16 %v4197
    %v5817 = vunpack.c.l.b16 %v4198
    %v5818 = vunpack.c.h.b16 %v4198
    %v5819 = vunpack.c.l.b16 %v4199
    %v5820 = vunpack.c.h.b16 %v4199
    %v5821 = vunpack.c.l.b16 %v4200
    %v5822 = vunpack.c.h.b16 %v4200
    %v5823 = vunpack.c.l.b16 %v4201
    %v5824 = vunpack.c.h.b16 %v4201
    %v5825 = vunpack.c.l.b16 %v4202
    %v5826 = vunpack.c.h.b16 %v4202
    %v5827 = vunpack.c.l.b16 %v4203
    %v5828 = vunpack.c.h.b16 %v4203
    %v5829 = vunpack.c.l.b16 %v4204
    %v5830 = vunpack.c.h.b16 %v4204
    %v5831 = vunpack.c.l.b16 %v4205
    %v5832 = vunpack.c.h.b16 %v4205
    %v5833 = vunpack.c.l.b16 %v4206
    %v5834 = vunpack.c.h.b16 %v4206
    %v5835 = vunpack.c.l.b16 %v4207
    %v5836 = vunpack.c.h.b16 %v4207
    %v5837 = vunpack.c.l.b16 %v4208
    %v5838 = vunpack.c.h.b16 %v4208
    %v5839 = vunpack.c.l.b16 %v4209
    %v5840 = vunpack.c.h.b16 %v4209
    %v5841 = vunpack.c.l.b16 %v4210
    %v5842 = vunpack.c.h.b16 %v4210
    %v5843 = vunpack.c.l.b16 %v4211
    %v5844 = vunpack.c.h.b16 %v4211
    %v5845 = vunpack.c.l.b16 %v4212
    %v5846 = vunpack.c.h.b16 %v4212
    %v5847 = vunpack.c.l.b16 %v4213
    %v5848 = vunpack.c.h.b16 %v4213
    %v5849 = vunpack.c.l.b16 %v4214
    %v5850 = vunpack.c.h.b16 %v4214
    %v5851 = vunpack.c.l.b16 %v4215
    %v5852 = vunpack.c.h.b16 %v4215
    %v5853 = vpack.c.b16 %v5601, %v5597
    %v5854 = vpack.c.b16 %v5602, %v5598
    %v5855 = vpack.c.b16 %v5603, %v5599
    %v5856 = vpack.c.b16 %v5604, %v5600
    %v5857 = vpack.c.b16 %v5609, %v5605
    %v5858 = vpack.c.b16 %v5610, %v5606
    %v5859 = vpack.c.b16 %v5611, %v5607
    %v5860 = vpack.c.b16 %v5612, %v5608
    %v5861 = vpack.c.b16 %v5617, %v5613
    %v5862 = vpack.c.b16 %v5618, %v5614
    %v5863 = vpack.c.b16 %v5619, %v5615
    %v5864 = vpack.c.b16 %v5620, %v5616
    %v5865 = vpack.c.b16 %v5625, %v5621
    %v5866 = vpack.c.b16 %v5626, %v5622
    %v5867 = vpack.c.b16 %v5627, %v5623
    %v5868 = vpack.c.b16 %v5628, %v5624
    %v5869 = vpack.c.b16 %v5633, %v5629
    %v5870 = vpack.c.b16 %v5634, %v5630
    %v5871 = vpack.c.b16 %v5635, %v5631
    %v5872 = vpack.c.b16 %v5636, %v5632
    %v5873 = vpack.c.b16 %v5641, %v5637
    %v5874 = vpack.c.b16 %v5642, %v5638
    %v5875 = vpack.c.b16 %v5643, %v5639
    %v5876 = vpack.c.b16 %v5644, %v5640
    %v5877 = vpack.c.b16 %v5649, %v5645
    %v5878 = vpack.c.b16 %v5650, %v5646
    %v5879 = vpack.c.b16 %v5651, %v5647
    %v5880 = vpack.c.b16 %v5652, %v5648
    %v5881 = vpack.c.b16 %v5657, %v5653
    %v5882 = vpack.c.b16 %v5658, %v5654
    %v5883 = vpack.c.b16 %v5659, %v5655
    %v5884 = vpack.c.b16 %v5660, %v5656
    %v5885 = vpack.c.b16 %v5665, %v5661
    %v5886 = vpack.c.b16 %v5666, %v5662
    %v5887 = vpack.c.b16 %v5667, %v5663
    %v5888 = vpack.c.b16 %v5668, %v5664
    %v5889 = vpack.c.b16 %v5673, %v5669
    %v5890 = vpack.c.b16 %v5674, %v5670
    %v5891 = vpack.c.b16 %v5675, %v5671
    %v5892 = vpack.c.b16 %v5676, %v5672
    %v5893 = vpack.c.b16 %v5681, %v5677
    %v5894 = vpack.c.b16 %v5682, %v5678
    %v5895 = vpack.c.b16 %v5683, %v5679
    %v5896 = vpack.c.b16 %v5684, %v5680
    %v5897 = vpack.c.b16 %v5689, %v5685
    %v5898 = vpack.c.b16 %v5690, %v5686
    %v5899 = vpack.c.b16 %v5691, %v5687
    %v5900 = vpack.c.b16 %v5692, %v5688
    %v5901 = vpack.c.b16 %v5697, %v5693
    %v5902 = vpack.c.b16 %v5698, %v5694
    %v5903 = vpack.c.b16 %v5699, %v5695
    %v5904 = vpack.c.b16 %v5700, %v5696
    %v5905 = vpack.c.b16 %v5705, %v5701
    %v5906 = vpack.c.b16 %v5706, %v5702
    %v5907 = vpack.c.b16 %v5707, %v5703
    %v5908 = vpack.c.b16 %v5708, %v5704
    %v5909 = vpack.c.b16 %v5713, %v5709
    %v5910 = vpack.c.b16 %v5714, %v5710
    %v5911 = vpack.c.b16 %v5715, %v5711
    %v5912 = vpack.c.b16 %v5716, %v5712
    %v5913 = vpack.c.b16 %v5721, %v5717
    %v5914 = vpack.c.b16 %v5722, %v5718
    %v5915 = vpack.c.b16 %v5723, %v5719
    %v5916 = vpack.c.b16 %v5724, %v5720
    %v5917 = vpack.c.b16 %v5729, %v5725
    %v5918 = vpack.c.b16 %v5730, %v5726
    %v5919 = vpack.c.b16 %v5731, %v5727
    %v5920 = vpack.c.b16 %v5732, %v5728
    %v5921 = vpack.c.b16 %v5737, %v5733
    %v5922 = vpack.c.b16 %v5738, %v5734
    %v5923 = vpack.c.b16 %v5739, %v5735
    %v5924 = vpack.c.b16 %v5740, %v5736
    %v5925 = vpack.c.b16 %v5745, %v5741
    %v5926 = vpack.c.b16 %v5746, %v5742
    %v5927 = vpack.c.b16 %v5747, %v5743
    %v5928 = vpack.c.b16 %v5748, %v5744
    %v5929 = vpack.c.b16 %v5753, %v5749
    %v5930 = vpack.c.b16 %v5754, %v5750
    %v5931 = vpack.c.b16 %v5755, %v5751
    %v5932 = vpack.c.b16 %v5756, %v5752
    %v5933 = vpack.c.b16 %v5761, %v5757
    %v5934 = vpack.c.b16 %v5762, %v5758
    %v5935 = vpack.c.b16 %v5763, %v5759
    %v5936 = vpack.c.b16 %v5764, %v5760
    %v5937 = vpack.c.b16 %v5769, %v5765
    %v5938 = vpack.c.b16 %v5770, %v5766
    %v5939 = vpack.c.b16 %v5771, %v5767
    %v5940 = vpack.c.b16 %v5772, %v5768
    %v5941 = vpack.c.b16 %v5777, %v5773
    %v5942 = vpack.c.b16 %v5778, %v5774
    %v5943 = vpack.c.b16 %v5779, %v5775
    %v5944 = vpack.c.b16 %v5780, %v5776
    %v5945 = vpack.c.b16 %v5785, %v5781
    %v5946 = vpack.c.b16 %v5786, %v5782
    %v5947 = vpack.c.b16 %v5787, %v5783
    %v5948 = vpack.c.b16 %v5788, %v5784
    %v5949 = vpack.c.b16 %v5793, %v5789
    %v5950 = vpack.c.b16 %v5794, %v5790
    %v5951 = vpack.c.b16 %v5795, %v5791
    %v5952 = vpack.c.b16 %v5796, %v5792
    %v5953 = vpack.c.b16 %v5801, %v5797
    %v5954 = vpack.c.b16 %v5802, %v5798
    %v5955 = vpack.c.b16 %v5803, %v5799
    %v5956 = vpack.c.b16 %v5804, %v5800
    %v5957 = vpack.c.b16 %v5809, %v5805
    %v5958 = vpack.c.b16 %v5810, %v5806
    %v5959 = vpack.c.b16 %v5811, %v5807
    %v5960 = vpack.c.b16 %v5812, %v5808
    %v5961 = vpack.c.b16 %v5817, %v5813
    %v5962 = vpack.c.b16 %v5818, %v5814
    %v5963 = vpack.c.b16 %v5819, %v5815
    %v5964 = vpack.c.b16 %v5820, %v5816
    %v5965 = vpack.c.b16 %v5825, %v5821
    %v5966 = vpack.c.b16 %v5826, %v5822
    %v5967 = vpack.c.b16 %v5827, %v5823
    %v5968 = vpack.c.b16 %v5828, %v5824
    %v5969 = vpack.c.b16 %v5833, %v5829
    %v5970 = vpack.c.b16 %v5834, %v5830
    %v5971 = vpack.c.b16 %v5835, %v5831
    %v5972 = vpack.c.b16 %v5836, %v5832
    %v5973 = vpack.c.b16 %v5841, %v5837
    %v5974 = vpack.c.b16 %v5842, %v5838
    %v5975 = vpack.c.b16 %v5843, %v5839
    %v5976 = vpack.c.b16 %v5844, %v5840
    %v5977 = vpack.c.b16 %v5849, %v5845
    %v5978 = vpack.c.b16 %v5850, %v5846
    %v5979 = vpack.c.b16 %v5851, %v5847
    %v5980 = vpack.c.b16 %v5852, %v5848
    %6109 = vmatpush.bf16.msra.mxu0 %v5881
    %6110 = vmatpush.bf16.msra.mxu0 %v5877
    %6111 = vmatpush.bf16.msra.mxu0 %v5873
    %6112 = vmatpush.bf16.msra.mxu0 %v5869
    %6113 = vmatpush.bf16.msra.mxu0 %v5865
    %6114 = vmatpush.bf16.msra.mxu0 %v5861
    %6115 = vmatpush.bf16.msra.mxu0 %v5857
    %6116 = vmatpush.bf16.msra.mxu0 %v5853
    %6117 = vmatmul.bf16.gmra.mxu0 %v5453
    %v6118 = vpop.f32.mrf.mxu0
    %v6119 = vadd.f32 %v5192, %v6118
    %v6120 = vpop.f32.mrf.mxu0
    %v6121 = vadd.f32 %v5194, %v6120
    %6122 = vmatmul.bf16.gmra.mxu0 %v5457
    %v6123 = vpop.f32.mrf.mxu0
    %v6124 = vadd.f32 %v5197, %v6123
    %v6125 = vpop.f32.mrf.mxu0
    %v6126 = vadd.f32 %v5199, %v6125
    %6127 = vdwg.mxu0
    %6128 = vmatpush.bf16.msra.mxu0 %v5913
    %6129 = vmatpush.bf16.msra.mxu0 %v5909
    %6130 = vmatpush.bf16.msra.mxu0 %v5905
    %6131 = vmatpush.bf16.msra.mxu0 %v5901
    %6132 = vmatpush.bf16.msra.mxu0 %v5897
    %6133 = vmatpush.bf16.msra.mxu0 %v5893
    %6134 = vmatpush.bf16.msra.mxu0 %v5889
    %6135 = vmatpush.bf16.msra.mxu0 %v5885
    %6136 = vmatmul.bf16.gmra.mxu0 %v5454
    %v6137 = vpop.f32.mrf.mxu0
    %v6138 = vadd.f32 %v6119, %v6137
    %v6139 = vpop.f32.mrf.mxu0
    %v6140 = vadd.f32 %v6121, %v6139
    %6141 = vmatmul.bf16.gmra.mxu0 %v5458
    %v6142 = vpop.f32.mrf.mxu0
    %v6143 = vadd.f32 %v6124, %v6142
    %v6144 = vpop.f32.mrf.mxu0
    %v6145 = vadd.f32 %v6126, %v6144
    %6146 = vdwg.mxu0
    %6147 = vmatpush.bf16.msra.mxu0 %v5945
    %6148 = vmatpush.bf16.msra.mxu0 %v5941
    %6149 = vmatpush.bf16.msra.mxu0 %v5937
    %6150 = vmatpush.bf16.msra.mxu0 %v5933
    %6151 = vmatpush.bf16.msra.mxu0 %v5929
    %6152 = vmatpush.bf16.msra.mxu0 %v5925
    %6153 = vmatpush.bf16.msra.mxu0 %v5921
    %6154 = vmatpush.bf16.msra.mxu0 %v5917
    %6155 = vmatmul.bf16.gmra.mxu0 %v5455
    %v6156 = vpop.f32.mrf.mxu0
    %v6157 = vadd.f32 %v6138, %v6156
    %v6158 = vpop.f32.mrf.mxu0
    %v6159 = vadd.f32 %v6140, %v6158
    %6160 = vmatmul.bf16.gmra.mxu0 %v5459
    %v6161 = vpop.f32.mrf.mxu0
    %v6162 = vadd.f32 %v6143, %v6161
    %v6163 = vpop.f32.mrf.mxu0
    %v6164 = vadd.f32 %v6145, %v6163
    %6165 = vdwg.mxu0
    %6166 = vmatpush.bf16.msra.mxu0 %v5977
    %6167 = vmatpush.bf16.msra.mxu0 %v5973
    %6168 = vmatpush.bf16.msra.mxu0 %v5969
    %6169 = vmatpush.bf16.msra.mxu0 %v5965
    %6170 = vmatpush.bf16.msra.mxu0 %v5961
    %6171 = vmatpush.bf16.msra.mxu0 %v5957
    %6172 = vmatpush.bf16.msra.mxu0 %v5953
    %6173 = vmatpush.bf16.msra.mxu0 %v5949
    %6174 = vmatmul.bf16.gmra.mxu0 %v5456
    %v6175 = vpop.f32.mrf.mxu0
    %v6176 = vadd.f32 %v6157, %v6175
    %v6177 = vpop.f32.mrf.mxu0
    %v6178 = vadd.f32 %v6159, %v6177
    %6179 = vmatmul.bf16.gmra.mxu0 %v5460
    %v6180 = vpop.f32.mrf.mxu0
    %v6181 = vadd.f32 %v6162, %v6180
    %v6182 = vpop.f32.mrf.mxu0
    %v6183 = vadd.f32 %v6164, %v6182
    %6184 = vdwg.mxu0
    %6185 = vmatpush.bf16.msra.mxu0 %v5882
    %6186 = vmatpush.bf16.msra.mxu0 %v5878
    %6187 = vmatpush.bf16.msra.mxu0 %v5874
    %6188 = vmatpush.bf16.msra.mxu0 %v5870
    %6189 = vmatpush.bf16.msra.mxu0 %v5866
    %6190 = vmatpush.bf16.msra.mxu0 %v5862
    %6191 = vmatpush.bf16.msra.mxu0 %v5858
    %6192 = vmatpush.bf16.msra.mxu0 %v5854
    %6193 = vmatmul.bf16.gmra.mxu0 %v5453
    %v6194 = vpop.f32.mrf.mxu0
    %v6195 = vadd.f32 %v5268, %v6194
    %v6196 = vpop.f32.mrf.mxu0
    %v6197 = vadd.f32 %v5270, %v6196
    %6198 = vmatmul.bf16.gmra.mxu0 %v5457
    %v6199 = vpop.f32.mrf.mxu0
    %v6200 = vadd.f32 %v5273, %v6199
    %v6201 = vpop.f32.mrf.mxu0
    %v6202 = vadd.f32 %v5275, %v6201
    %6203 = vdwg.mxu0
    %6204 = vmatpush.bf16.msra.mxu0 %v5914
    %6205 = vmatpush.bf16.msra.mxu0 %v5910
    %6206 = vmatpush.bf16.msra.mxu0 %v5906
    %6207 = vmatpush.bf16.msra.mxu0 %v5902
    %6208 = vmatpush.bf16.msra.mxu0 %v5898
    %6209 = vmatpush.bf16.msra.mxu0 %v5894
    %6210 = vmatpush.bf16.msra.mxu0 %v5890
    %6211 = vmatpush.bf16.msra.mxu0 %v5886
    %6212 = vmatmul.bf16.gmra.mxu0 %v5454
    %v6213 = vpop.f32.mrf.mxu0
    %v6214 = vadd.f32 %v6195, %v6213
    %v6215 = vpop.f32.mrf.mxu0
    %v6216 = vadd.f32 %v6197, %v6215
    %6217 = vmatmul.bf16.gmra.mxu0 %v5458
    %v6218 = vpop.f32.mrf.mxu0
    %v6219 = vadd.f32 %v6200, %v6218
    %v6220 = vpop.f32.mrf.mxu0
    %v6221 = vadd.f32 %v6202, %v6220
    %6222 = vdwg.mxu0
    %6223 = vmatpush.bf16.msra.mxu0 %v5946
    %6224 = vmatpush.bf16.msra.mxu0 %v5942
    %6225 = vmatpush.bf16.msra.mxu0 %v5938
    %6226 = vmatpush.bf16.msra.mxu0 %v5934
    %6227 = vmatpush.bf16.msra.mxu0 %v5930
    %6228 = vmatpush.bf16.msra.mxu0 %v5926
    %6229 = vmatpush.bf16.msra.mxu0 %v5922
    %6230 = vmatpush.bf16.msra.mxu0 %v5918
    %6231 = vmatmul.bf16.gmra.mxu0 %v5455
    %v6232 = vpop.f32.mrf.mxu0
    %v6233 = vadd.f32 %v6214, %v6232
    %v6234 = vpop.f32.mrf.mxu0
    %v6235 = vadd.f32 %v6216, %v6234
    %6236 = vmatmul.bf16.gmra.mxu0 %v5459
    %v6237 = vpop.f32.mrf.mxu0
    %v6238 = vadd.f32 %v6219, %v6237
    %v6239 = vpop.f32.mrf.mxu0
    %v6240 = vadd.f32 %v6221, %v6239
    %6241 = vdwg.mxu0
    %6242 = vmatpush.bf16.msra.mxu0 %v5978
    %6243 = vmatpush.bf16.msra.mxu0 %v5974
    %6244 = vmatpush.bf16.msra.mxu0 %v5970
    %6245 = vmatpush.bf16.msra.mxu0 %v5966
    %6246 = vmatpush.bf16.msra.mxu0 %v5962
    %6247 = vmatpush.bf16.msra.mxu0 %v5958
    %6248 = vmatpush.bf16.msra.mxu0 %v5954
    %6249 = vmatpush.bf16.msra.mxu0 %v5950
    %6250 = vmatmul.bf16.gmra.mxu0 %v5456
    %v6251 = vpop.f32.mrf.mxu0
    %v6252 = vadd.f32 %v6233, %v6251
    %v6253 = vpop.f32.mrf.mxu0
    %v6254 = vadd.f32 %v6235, %v6253
    %6255 = vmatmul.bf16.gmra.mxu0 %v5460
    %v6256 = vpop.f32.mrf.mxu0
    %v6257 = vadd.f32 %v6238, %v6256
    %v6258 = vpop.f32.mrf.mxu0
    %v6259 = vadd.f32 %v6240, %v6258
    %6260 = vdwg.mxu0
    %6261 = vmatpush.bf16.msra.mxu0 %v5883
    %6262 = vmatpush.bf16.msra.mxu0 %v5879
    %6263 = vmatpush.bf16.msra.mxu0 %v5875
    %6264 = vmatpush.bf16.msra.mxu0 %v5871
    %6265 = vmatpush.bf16.msra.mxu0 %v5867
    %6266 = vmatpush.bf16.msra.mxu0 %v5863
    %6267 = vmatpush.bf16.msra.mxu0 %v5859
    %6268 = vmatpush.bf16.msra.mxu0 %v5855
    %6269 = vmatmul.bf16.gmra.mxu0 %v5453
    %v6270 = vpop.f32.mrf.mxu0
    %v6271 = vadd.f32 %v5344, %v6270
    %v6272 = vpop.f32.mrf.mxu0
    %v6273 = vadd.f32 %v5346, %v6272
    %6274 = vmatmul.bf16.gmra.mxu0 %v5457
    %v6275 = vpop.f32.mrf.mxu0
    %v6276 = vadd.f32 %v5349, %v6275
    %v6277 = vpop.f32.mrf.mxu0
    %v6278 = vadd.f32 %v5351, %v6277
    %6279 = vdwg.mxu0
    %6280 = vmatpush.bf16.msra.mxu0 %v5915
    %6281 = vmatpush.bf16.msra.mxu0 %v5911
    %6282 = vmatpush.bf16.msra.mxu0 %v5907
    %6283 = vmatpush.bf16.msra.mxu0 %v5903
    %6284 = vmatpush.bf16.msra.mxu0 %v5899
    %6285 = vmatpush.bf16.msra.mxu0 %v5895
    %6286 = vmatpush.bf16.msra.mxu0 %v5891
    %6287 = vmatpush.bf16.msra.mxu0 %v5887
    %6288 = vmatmul.bf16.gmra.mxu0 %v5454
    %v6289 = vpop.f32.mrf.mxu0
    %v6290 = vadd.f32 %v6271, %v6289
    %v6291 = vpop.f32.mrf.mxu0
    %v6292 = vadd.f32 %v6273, %v6291
    %6293 = vmatmul.bf16.gmra.mxu0 %v5458
    %v6294 = vpop.f32.mrf.mxu0
    %v6295 = vadd.f32 %v6276, %v6294
    %v6296 = vpop.f32.mrf.mxu0
    %v6297 = vadd.f32 %v6278, %v6296
    %6298 = vdwg.mxu0
    %6299 = vmatpush.bf16.msra.mxu0 %v5947
    %6300 = vmatpush.bf16.msra.mxu0 %v5943
    %6301 = vmatpush.bf16.msra.mxu0 %v5939
    %6302 = vmatpush.bf16.msra.mxu0 %v5935
    %6303 = vmatpush.bf16.msra.mxu0 %v5931
    %6304 = vmatpush.bf16.msra.mxu0 %v5927
    %6305 = vmatpush.bf16.msra.mxu0 %v5923
    %6306 = vmatpush.bf16.msra.mxu0 %v5919
    %6307 = vmatmul.bf16.gmra.mxu0 %v5455
    %v6308 = vpop.f32.mrf.mxu0
    %v6309 = vadd.f32 %v6290, %v6308
    %v6310 = vpop.f32.mrf.mxu0
    %v6311 = vadd.f32 %v6292, %v6310
    %6312 = vmatmul.bf16.gmra.mxu0 %v5459
    %v6313 = vpop.f32.mrf.mxu0
    %v6314 = vadd.f32 %v6295, %v6313
    %v6315 = vpop.f32.mrf.mxu0
    %v6316 = vadd.f32 %v6297, %v6315
    %6317 = vdwg.mxu0
    %6318 = vmatpush.bf16.msra.mxu0 %v5979
    %6319 = vmatpush.bf16.msra.mxu0 %v5975
    %6320 = vmatpush.bf16.msra.mxu0 %v5971
    %6321 = vmatpush.bf16.msra.mxu0 %v5967
    %6322 = vmatpush.bf16.msra.mxu0 %v5963
    %6323 = vmatpush.bf16.msra.mxu0 %v5959
    %6324 = vmatpush.bf16.msra.mxu0 %v5955
    %6325 = vmatpush.bf16.msra.mxu0 %v5951
    %6326 = vmatmul.bf16.gmra.mxu0 %v5456
    %v6327 = vpop.f32.mrf.mxu0
    %v6328 = vadd.f32 %v6309, %v6327
    %v6329 = vpop.f32.mrf.mxu0
    %v6330 = vadd.f32 %v6311, %v6329
    %6331 = vmatmul.bf16.gmra.mxu0 %v5460
    %v6332 = vpop.f32.mrf.mxu0
    %v6333 = vadd.f32 %v6314, %v6332
    %v6334 = vpop.f32.mrf.mxu0
    %v6335 = vadd.f32 %v6316, %v6334
    %6336 = vdwg.mxu0
    %6337 = vmatpush.bf16.msra.mxu0 %v5884
    %6338 = vmatpush.bf16.msra.mxu0 %v5880
    %6339 = vmatpush.bf16.msra.mxu0 %v5876
    %6340 = vmatpush.bf16.msra.mxu0 %v5872
    %6341 = vmatpush.bf16.msra.mxu0 %v5868
    %6342 = vmatpush.bf16.msra.mxu0 %v5864
    %6343 = vmatpush.bf16.msra.mxu0 %v5860
    %6344 = vmatpush.bf16.msra.mxu0 %v5856
    %6345 = vmatmul.bf16.gmra.mxu0 %v5453
    %v6346 = vpop.f32.mrf.mxu0
    %v6347 = vadd.f32 %v5420, %v6346
    %v6348 = vpop.f32.mrf.mxu0
    %v6349 = vadd.f32 %v5422, %v6348
    %6350 = vmatmul.bf16.gmra.mxu0 %v5457
    %v6351 = vpop.f32.mrf.mxu0
    %v6352 = vadd.f32 %v5425, %v6351
    %v6353 = vpop.f32.mrf.mxu0
    %v6354 = vadd.f32 %v5427, %v6353
    %6355 = vdwg.mxu0
    %6356 = vmatpush.bf16.msra.mxu0 %v5916
    %6357 = vmatpush.bf16.msra.mxu0 %v5912
    %6358 = vmatpush.bf16.msra.mxu0 %v5908
    %6359 = vmatpush.bf16.msra.mxu0 %v5904
    %6360 = vmatpush.bf16.msra.mxu0 %v5900
    %6361 = vmatpush.bf16.msra.mxu0 %v5896
    %6362 = vmatpush.bf16.msra.mxu0 %v5892
    %6363 = vmatpush.bf16.msra.mxu0 %v5888
    %6364 = vmatmul.bf16.gmra.mxu0 %v5454
    %v6365 = vpop.f32.mrf.mxu0
    %v6366 = vadd.f32 %v6347, %v6365
    %v6367 = vpop.f32.mrf.mxu0
    %v6368 = vadd.f32 %v6349, %v6367
    %6369 = vmatmul.bf16.gmra.mxu0 %v5458
    %v6370 = vpop.f32.mrf.mxu0
    %v6371 = vadd.f32 %v6352, %v6370
    %v6372 = vpop.f32.mrf.mxu0
    %v6373 = vadd.f32 %v6354, %v6372
    %6374 = vdwg.mxu0
    %6375 = vmatpush.bf16.msra.mxu0 %v5948
    %6376 = vmatpush.bf16.msra.mxu0 %v5944
    %6377 = vmatpush.bf16.msra.mxu0 %v5940
    %6378 = vmatpush.bf16.msra.mxu0 %v5936
    %6379 = vmatpush.bf16.msra.mxu0 %v5932
    %6380 = vmatpush.bf16.msra.mxu0 %v5928
    %6381 = vmatpush.bf16.msra.mxu0 %v5924
    %6382 = vmatpush.bf16.msra.mxu0 %v5920
    %6383 = vmatmul.bf16.gmra.mxu0 %v5455
    %v6384 = vpop.f32.mrf.mxu0
    %v6385 = vadd.f32 %v6366, %v6384
    %v6386 = vpop.f32.mrf.mxu0
    %v6387 = vadd.f32 %v6368, %v6386
    %6388 = vmatmul.bf16.gmra.mxu0 %v5459
    %v6389 = vpop.f32.mrf.mxu0
    %v6390 = vadd.f32 %v6371, %v6389
    %v6391 = vpop.f32.mrf.mxu0
    %v6392 = vadd.f32 %v6373, %v6391
    %6393 = vdwg.mxu0
    %6394 = vmatpush.bf16.msra.mxu0 %v5980
    %6395 = vmatpush.bf16.msra.mxu0 %v5976
    %6396 = vmatpush.bf16.msra.mxu0 %v5972
    %6397 = vmatpush.bf16.msra.mxu0 %v5968
    %6398 = vmatpush.bf16.msra.mxu0 %v5964
    %6399 = vmatpush.bf16.msra.mxu0 %v5960
    %6400 = vmatpush.bf16.msra.mxu0 %v5956
    %6401 = vmatpush.bf16.msra.mxu0 %v5952
    %6402 = vmatmul.bf16.gmra.mxu0 %v5456
    %v6403 = vpop.f32.mrf.mxu0
    %v6404 = vadd.f32 %v6385, %v6403
    %v6405 = vpop.f32.mrf.mxu0
    %v6406 = vadd.f32 %v6387, %v6405
    %6407 = vmatmul.bf16.gmra.mxu0 %v5460
    %v6408 = vpop.f32.mrf.mxu0
    %v6409 = vadd.f32 %v6390, %v6408
    %v6410 = vpop.f32.mrf.mxu0
    %v6411 = vadd.f32 %v6392, %v6410
    %6412 = vdwg.mxu0
    %v6413 = vld [vmem:[#allocation2] sm:$0xee]
    %v6414 = vld [vmem:[#allocation2 + $0x8] sm:$0xee]
    %v6415 = vld [vmem:[#allocation2 + $0x30] sm:$0xee]
    %v6416 = vld [vmem:[#allocation2 + $0x38] sm:$0xee]
    %v6429 = vrot.slane %v6413, 5
    %v6430 = vrot.slane %v6429, 4
    %v6431 = vrot.slane %v4218, 5
    %v6432 = vsel %vm1362, %v6430, %v6431
    %v6433 = vrot.slane %v6414, 5
    %v6434 = vrot.slane %v6433, 4
    %v6435 = vrot.slane %v4219, 5
    %v6436 = vsel %vm1362, %v6434, %v6435
    %v6437 = vrot.slane %v6431, 4
    %v6438 = vrot.slane %v4220, 5
    %v6439 = vsel %vm1362, %v6437, %v6438
    %v6440 = vrot.slane %v6435, 4
    %v6441 = vrot.slane %v4221, 5
    %v6442 = vsel %vm1362, %v6440, %v6441
    %v6443 = vrot.slane %v6415, 5
    %v6444 = vrot.slane %v6443, 4
    %v6445 = vrot.slane %v4224, 5
    %v6446 = vsel %vm1362, %v6444, %v6445
    %v6447 = vrot.slane %v6416, 5
    %v6448 = vrot.slane %v6447, 4
    %v6449 = vrot.slane %v4225, 5
    %v6450 = vsel %vm1362, %v6448, %v6449
    %v6451 = vrot.slane %v6445, 4
    %v6452 = vrot.slane %v4226, 5
    %v6453 = vsel %vm1362, %v6451, %v6452
    %v6454 = vrot.slane %v6449, 4
    %v6455 = vrot.slane %v4227, 5
    %v6456 = vsel %vm1362, %v6454, %v6455
    %s6457 = scalar_lea.vmem [#allocation9], 2048
    %v6458 = vld [vmem:[%s6457] sm:$0xff]
    %v6459 = vld [vmem:[%s6457 + $0x8] sm:$0xff]
    %v6460 = vld [vmem:[%s6457 + $0x10] sm:$0xff]
    %v6461 = vld [vmem:[%s6457 + $0x18] sm:$0xff]
    %v6462 = vld [vmem:[%s6457 + $0x20] sm:$0xff]
    %v6463 = vld [vmem:[%s6457 + $0x28] sm:$0xff]
    %v6464 = vld [vmem:[%s6457 + $0x30] sm:$0xff]
    %v6465 = vld [vmem:[%s6457 + $0x38] sm:$0xff]
    %v6466 = vld [vmem:[%s6457 + $0x40] sm:$0xff]
    %v6467 = vld [vmem:[%s6457 + $0x48] sm:$0xff]
    %v6468 = vld [vmem:[%s6457 + $0x50] sm:$0xff]
    %v6469 = vld [vmem:[%s6457 + $0x58] sm:$0xff]
    %v6470 = vld [vmem:[%s6457 + $0x60] sm:$0xff]
    %v6471 = vld [vmem:[%s6457 + $0x68] sm:$0xff]
    %v6472 = vld [vmem:[%s6457 + $0x70] sm:$0xff]
    %v6473 = vld [vmem:[%s6457 + $0x78] sm:$0xff]
    %v6474 = vld [vmem:[%s6457 + $0x80] sm:$0xff]
    %v6475 = vld [vmem:[%s6457 + $0x88] sm:$0xff]
    %v6476 = vld [vmem:[%s6457 + $0x90] sm:$0xff]
    %v6477 = vld [vmem:[%s6457 + $0x98] sm:$0xff]
    %v6478 = vld [vmem:[%s6457 + $0xa0] sm:$0xff]
    %v6479 = vld [vmem:[%s6457 + $0xa8] sm:$0xff]
    %v6480 = vld [vmem:[%s6457 + $0xb0] sm:$0xff]
    %v6481 = vld [vmem:[%s6457 + $0xb8] sm:$0xff]
    %v6482 = vld [vmem:[%s6457 + $0xc0] sm:$0xff]
    %v6483 = vld [vmem:[%s6457 + $0xc8] sm:$0xff]
    %v6484 = vld [vmem:[%s6457 + $0xd0] sm:$0xff]
    %v6485 = vld [vmem:[%s6457 + $0xd8] sm:$0xff]
    %v6486 = vld [vmem:[%s6457 + $0xe0] sm:$0xff]
    %v6487 = vld [vmem:[%s6457 + $0xe8] sm:$0xff]
    %v6488 = vld [vmem:[%s6457 + $0xf0] sm:$0xff]
    %v6489 = vld [vmem:[%s6457 + $0xf8] sm:$0xff]
    %v6490 = vld [vmem:[%s6457 + $0x100] sm:$0xff]
    %v6491 = vld [vmem:[%s6457 + $0x108] sm:$0xff]
    %v6492 = vld [vmem:[%s6457 + $0x110] sm:$0xff]
    %v6493 = vld [vmem:[%s6457 + $0x118] sm:$0xff]
    %v6494 = vld [vmem:[%s6457 + $0x120] sm:$0xff]
    %v6495 = vld [vmem:[%s6457 + $0x128] sm:$0xff]
    %v6496 = vld [vmem:[%s6457 + $0x130] sm:$0xff]
    %v6497 = vld [vmem:[%s6457 + $0x138] sm:$0xff]
    %v6498 = vld [vmem:[%s6457 + $0x140] sm:$0xff]
    %v6499 = vld [vmem:[%s6457 + $0x148] sm:$0xff]
    %v6500 = vld [vmem:[%s6457 + $0x150] sm:$0xff]
    %v6501 = vld [vmem:[%s6457 + $0x158] sm:$0xff]
    %v6502 = vld [vmem:[%s6457 + $0x160] sm:$0xff]
    %v6503 = vld [vmem:[%s6457 + $0x168] sm:$0xff]
    %v6504 = vld [vmem:[%s6457 + $0x170] sm:$0xff]
    %v6505 = vld [vmem:[%s6457 + $0x178] sm:$0xff]
    %v6506 = vld [vmem:[%s6457 + $0x180] sm:$0xff]
    %v6507 = vld [vmem:[%s6457 + $0x188] sm:$0xff]
    %v6508 = vld [vmem:[%s6457 + $0x190] sm:$0xff]
    %v6509 = vld [vmem:[%s6457 + $0x198] sm:$0xff]
    %v6510 = vld [vmem:[%s6457 + $0x1a0] sm:$0xff]
    %v6511 = vld [vmem:[%s6457 + $0x1a8] sm:$0xff]
    %v6512 = vld [vmem:[%s6457 + $0x1b0] sm:$0xff]
    %v6513 = vld [vmem:[%s6457 + $0x1b8] sm:$0xff]
    %v6514 = vld [vmem:[%s6457 + $0x1c0] sm:$0xff]
    %v6515 = vld [vmem:[%s6457 + $0x1c8] sm:$0xff]
    %v6516 = vld [vmem:[%s6457 + $0x1d0] sm:$0xff]
    %v6517 = vld [vmem:[%s6457 + $0x1d8] sm:$0xff]
    %v6518 = vld [vmem:[%s6457 + $0x1e0] sm:$0xff]
    %v6519 = vld [vmem:[%s6457 + $0x1e8] sm:$0xff]
    %v6520 = vld [vmem:[%s6457 + $0x1f0] sm:$0xff]
    %v6521 = vld [vmem:[%s6457 + $0x1f8] sm:$0xff]
    %v6522 = vld [vmem:[%s6457 + $0x200] sm:$0xff]
    %v6523 = vld [vmem:[%s6457 + $0x208] sm:$0xff]
    %v6524 = vld [vmem:[%s6457 + $0x210] sm:$0xff]
    %v6525 = vld [vmem:[%s6457 + $0x218] sm:$0xff]
    %v6526 = vld [vmem:[%s6457 + $0x220] sm:$0xff]
    %v6527 = vld [vmem:[%s6457 + $0x228] sm:$0xff]
    %v6528 = vld [vmem:[%s6457 + $0x230] sm:$0xff]
    %v6529 = vld [vmem:[%s6457 + $0x238] sm:$0xff]
    %v6530 = vld [vmem:[%s6457 + $0x240] sm:$0xff]
    %v6531 = vld [vmem:[%s6457 + $0x248] sm:$0xff]
    %v6532 = vld [vmem:[%s6457 + $0x250] sm:$0xff]
    %v6533 = vld [vmem:[%s6457 + $0x258] sm:$0xff]
    %v6534 = vld [vmem:[%s6457 + $0x260] sm:$0xff]
    %v6535 = vld [vmem:[%s6457 + $0x268] sm:$0xff]
    %v6536 = vld [vmem:[%s6457 + $0x270] sm:$0xff]
    %v6537 = vld [vmem:[%s6457 + $0x278] sm:$0xff]
    %v6538 = vld [vmem:[%s6457 + $0x280] sm:$0xff]
    %v6539 = vld [vmem:[%s6457 + $0x288] sm:$0xff]
    %v6540 = vld [vmem:[%s6457 + $0x290] sm:$0xff]
    %v6541 = vld [vmem:[%s6457 + $0x298] sm:$0xff]
    %v6542 = vld [vmem:[%s6457 + $0x2a0] sm:$0xff]
    %v6543 = vld [vmem:[%s6457 + $0x2a8] sm:$0xff]
    %v6544 = vld [vmem:[%s6457 + $0x2b0] sm:$0xff]
    %v6545 = vld [vmem:[%s6457 + $0x2b8] sm:$0xff]
    %v6546 = vld [vmem:[%s6457 + $0x2c0] sm:$0xff]
    %v6547 = vld [vmem:[%s6457 + $0x2c8] sm:$0xff]
    %v6548 = vld [vmem:[%s6457 + $0x2d0] sm:$0xff]
    %v6549 = vld [vmem:[%s6457 + $0x2d8] sm:$0xff]
    %v6550 = vld [vmem:[%s6457 + $0x2e0] sm:$0xff]
    %v6551 = vld [vmem:[%s6457 + $0x2e8] sm:$0xff]
    %v6552 = vld [vmem:[%s6457 + $0x2f0] sm:$0xff]
    %v6553 = vld [vmem:[%s6457 + $0x2f8] sm:$0xff]
    %v6554 = vld [vmem:[%s6457 + $0x300] sm:$0xff]
    %v6555 = vld [vmem:[%s6457 + $0x308] sm:$0xff]
    %v6556 = vld [vmem:[%s6457 + $0x310] sm:$0xff]
    %v6557 = vld [vmem:[%s6457 + $0x318] sm:$0xff]
    %v6558 = vld [vmem:[%s6457 + $0x320] sm:$0xff]
    %v6559 = vld [vmem:[%s6457 + $0x328] sm:$0xff]
    %v6560 = vld [vmem:[%s6457 + $0x330] sm:$0xff]
    %v6561 = vld [vmem:[%s6457 + $0x338] sm:$0xff]
    %v6562 = vld [vmem:[%s6457 + $0x340] sm:$0xff]
    %v6563 = vld [vmem:[%s6457 + $0x348] sm:$0xff]
    %v6564 = vld [vmem:[%s6457 + $0x350] sm:$0xff]
    %v6565 = vld [vmem:[%s6457 + $0x358] sm:$0xff]
    %v6566 = vld [vmem:[%s6457 + $0x360] sm:$0xff]
    %v6567 = vld [vmem:[%s6457 + $0x368] sm:$0xff]
    %v6568 = vld [vmem:[%s6457 + $0x370] sm:$0xff]
    %v6569 = vld [vmem:[%s6457 + $0x378] sm:$0xff]
    %v6570 = vld [vmem:[%s6457 + $0x380] sm:$0xff]
    %v6571 = vld [vmem:[%s6457 + $0x388] sm:$0xff]
    %v6572 = vld [vmem:[%s6457 + $0x390] sm:$0xff]
    %v6573 = vld [vmem:[%s6457 + $0x398] sm:$0xff]
    %v6574 = vld [vmem:[%s6457 + $0x3a0] sm:$0xff]
    %v6575 = vld [vmem:[%s6457 + $0x3a8] sm:$0xff]
    %v6576 = vld [vmem:[%s6457 + $0x3b0] sm:$0xff]
    %v6577 = vld [vmem:[%s6457 + $0x3b8] sm:$0xff]
    %v6578 = vld [vmem:[%s6457 + $0x3c0] sm:$0xff]
    %v6579 = vld [vmem:[%s6457 + $0x3c8] sm:$0xff]
    %v6580 = vld [vmem:[%s6457 + $0x3d0] sm:$0xff]
    %v6581 = vld [vmem:[%s6457 + $0x3d8] sm:$0xff]
    %v6582 = vld [vmem:[%s6457 + $0x3e0] sm:$0xff]
    %v6583 = vld [vmem:[%s6457 + $0x3e8] sm:$0xff]
    %v6584 = vld [vmem:[%s6457 + $0x3f0] sm:$0xff]
    %v6585 = vld [vmem:[%s6457 + $0x3f8] sm:$0xff]
    %v6586 = vunpack.c.l.b16 %v6432
    %v6587 = vunpack.c.h.b16 %v6432
    %v6588 = vunpack.c.l.b16 %v6436
    %v6589 = vunpack.c.h.b16 %v6436
    %v6590 = vunpack.c.l.b16 %v6439
    %v6591 = vunpack.c.h.b16 %v6439
    %v6592 = vunpack.c.l.b16 %v6442
    %v6593 = vunpack.c.h.b16 %v6442
    %v6594 = vunpack.c.l.b16 %v6446
    %v6595 = vunpack.c.h.b16 %v6446
    %v6596 = vunpack.c.l.b16 %v6450
    %v6597 = vunpack.c.h.b16 %v6450
    %v6598 = vunpack.c.l.b16 %v6453
    %v6599 = vunpack.c.h.b16 %v6453
    %v6600 = vunpack.c.l.b16 %v6456
    %v6601 = vunpack.c.h.b16 %v6456
    %v6602 = vpack.c.b16 %v6590, %v6586
    %v6603 = vpack.c.b16 %v6591, %v6587
    %v6604 = vpack.c.b16 %v6592, %v6588
    %v6605 = vpack.c.b16 %v6593, %v6589
    %v6606 = vpack.c.b16 %v6598, %v6594
    %v6607 = vpack.c.b16 %v6599, %v6595
    %v6608 = vpack.c.b16 %v6600, %v6596
    %v6609 = vpack.c.b16 %v6601, %v6597
    %v6746 = vunpack.c.l.b16 %v6458
    %v6747 = vunpack.c.h.b16 %v6458
    %v6748 = vunpack.c.l.b16 %v6459
    %v6749 = vunpack.c.h.b16 %v6459
    %v6750 = vunpack.c.l.b16 %v6460
    %v6751 = vunpack.c.h.b16 %v6460
    %v6752 = vunpack.c.l.b16 %v6461
    %v6753 = vunpack.c.h.b16 %v6461
    %v6754 = vunpack.c.l.b16 %v6462
    %v6755 = vunpack.c.h.b16 %v6462
    %v6756 = vunpack.c.l.b16 %v6463
    %v6757 = vunpack.c.h.b16 %v6463
    %v6758 = vunpack.c.l.b16 %v6464
    %v6759 = vunpack.c.h.b16 %v6464
    %v6760 = vunpack.c.l.b16 %v6465
    %v6761 = vunpack.c.h.b16 %v6465
    %v6762 = vunpack.c.l.b16 %v6466
    %v6763 = vunpack.c.h.b16 %v6466
    %v6764 = vunpack.c.l.b16 %v6467
    %v6765 = vunpack.c.h.b16 %v6467
    %v6766 = vunpack.c.l.b16 %v6468
    %v6767 = vunpack.c.h.b16 %v6468
    %v6768 = vunpack.c.l.b16 %v6469
    %v6769 = vunpack.c.h.b16 %v6469
    %v6770 = vunpack.c.l.b16 %v6470
    %v6771 = vunpack.c.h.b16 %v6470
    %v6772 = vunpack.c.l.b16 %v6471
    %v6773 = vunpack.c.h.b16 %v6471
    %v6774 = vunpack.c.l.b16 %v6472
    %v6775 = vunpack.c.h.b16 %v6472
    %v6776 = vunpack.c.l.b16 %v6473
    %v6777 = vunpack.c.h.b16 %v6473
    %v6778 = vunpack.c.l.b16 %v6474
    %v6779 = vunpack.c.h.b16 %v6474
    %v6780 = vunpack.c.l.b16 %v6475
    %v6781 = vunpack.c.h.b16 %v6475
    %v6782 = vunpack.c.l.b16 %v6476
    %v6783 = vunpack.c.h.b16 %v6476
    %v6784 = vunpack.c.l.b16 %v6477
    %v6785 = vunpack.c.h.b16 %v6477
    %v6786 = vunpack.c.l.b16 %v6478
    %v6787 = vunpack.c.h.b16 %v6478
    %v6788 = vunpack.c.l.b16 %v6479
    %v6789 = vunpack.c.h.b16 %v6479
    %v6790 = vunpack.c.l.b16 %v6480
    %v6791 = vunpack.c.h.b16 %v6480
    %v6792 = vunpack.c.l.b16 %v6481
    %v6793 = vunpack.c.h.b16 %v6481
    %v6794 = vunpack.c.l.b16 %v6482
    %v6795 = vunpack.c.h.b16 %v6482
    %v6796 = vunpack.c.l.b16 %v6483
    %v6797 = vunpack.c.h.b16 %v6483
    %v6798 = vunpack.c.l.b16 %v6484
    %v6799 = vunpack.c.h.b16 %v6484
    %v6800 = vunpack.c.l.b16 %v6485
    %v6801 = vunpack.c.h.b16 %v6485
    %v6802 = vunpack.c.l.b16 %v6486
    %v6803 = vunpack.c.h.b16 %v6486
    %v6804 = vunpack.c.l.b16 %v6487
    %v6805 = vunpack.c.h.b16 %v6487
    %v6806 = vunpack.c.l.b16 %v6488
    %v6807 = vunpack.c.h.b16 %v6488
    %v6808 = vunpack.c.l.b16 %v6489
    %v6809 = vunpack.c.h.b16 %v6489
    %v6810 = vunpack.c.l.b16 %v6490
    %v6811 = vunpack.c.h.b16 %v6490
    %v6812 = vunpack.c.l.b16 %v6491
    %v6813 = vunpack.c.h.b16 %v6491
    %v6814 = vunpack.c.l.b16 %v6492
    %v6815 = vunpack.c.h.b16 %v6492
    %v6816 = vunpack.c.l.b16 %v6493
    %v6817 = vunpack.c.h.b16 %v6493
    %v6818 = vunpack.c.l.b16 %v6494
    %v6819 = vunpack.c.h.b16 %v6494
    %v6820 = vunpack.c.l.b16 %v6495
    %v6821 = vunpack.c.h.b16 %v6495
    %v6822 = vunpack.c.l.b16 %v6496
    %v6823 = vunpack.c.h.b16 %v6496
    %v6824 = vunpack.c.l.b16 %v6497
    %v6825 = vunpack.c.h.b16 %v6497
    %v6826 = vunpack.c.l.b16 %v6498
    %v6827 = vunpack.c.h.b16 %v6498
    %v6828 = vunpack.c.l.b16 %v6499
    %v6829 = vunpack.c.h.b16 %v6499
    %v6830 = vunpack.c.l.b16 %v6500
    %v6831 = vunpack.c.h.b16 %v6500
    %v6832 = vunpack.c.l.b16 %v6501
    %v6833 = vunpack.c.h.b16 %v6501
    %v6834 = vunpack.c.l.b16 %v6502
    %v6835 = vunpack.c.h.b16 %v6502
    %v6836 = vunpack.c.l.b16 %v6503
    %v6837 = vunpack.c.h.b16 %v6503
    %v6838 = vunpack.c.l.b16 %v6504
    %v6839 = vunpack.c.h.b16 %v6504
    %v6840 = vunpack.c.l.b16 %v6505
    %v6841 = vunpack.c.h.b16 %v6505
    %v6842 = vunpack.c.l.b16 %v6506
    %v6843 = vunpack.c.h.b16 %v6506
    %v6844 = vunpack.c.l.b16 %v6507
    %v6845 = vunpack.c.h.b16 %v6507
    %v6846 = vunpack.c.l.b16 %v6508
    %v6847 = vunpack.c.h.b16 %v6508
    %v6848 = vunpack.c.l.b16 %v6509
    %v6849 = vunpack.c.h.b16 %v6509
    %v6850 = vunpack.c.l.b16 %v6510
    %v6851 = vunpack.c.h.b16 %v6510
    %v6852 = vunpack.c.l.b16 %v6511
    %v6853 = vunpack.c.h.b16 %v6511
    %v6854 = vunpack.c.l.b16 %v6512
    %v6855 = vunpack.c.h.b16 %v6512
    %v6856 = vunpack.c.l.b16 %v6513
    %v6857 = vunpack.c.h.b16 %v6513
    %v6858 = vunpack.c.l.b16 %v6514
    %v6859 = vunpack.c.h.b16 %v6514
    %v6860 = vunpack.c.l.b16 %v6515
    %v6861 = vunpack.c.h.b16 %v6515
    %v6862 = vunpack.c.l.b16 %v6516
    %v6863 = vunpack.c.h.b16 %v6516
    %v6864 = vunpack.c.l.b16 %v6517
    %v6865 = vunpack.c.h.b16 %v6517
    %v6866 = vunpack.c.l.b16 %v6518
    %v6867 = vunpack.c.h.b16 %v6518
    %v6868 = vunpack.c.l.b16 %v6519
    %v6869 = vunpack.c.h.b16 %v6519
    %v6870 = vunpack.c.l.b16 %v6520
    %v6871 = vunpack.c.h.b16 %v6520
    %v6872 = vunpack.c.l.b16 %v6521
    %v6873 = vunpack.c.h.b16 %v6521
    %v6874 = vunpack.c.l.b16 %v6522
    %v6875 = vunpack.c.h.b16 %v6522
    %v6876 = vunpack.c.l.b16 %v6523
    %v6877 = vunpack.c.h.b16 %v6523
    %v6878 = vunpack.c.l.b16 %v6524
    %v6879 = vunpack.c.h.b16 %v6524
    %v6880 = vunpack.c.l.b16 %v6525
    %v6881 = vunpack.c.h.b16 %v6525
    %v6882 = vunpack.c.l.b16 %v6526
    %v6883 = vunpack.c.h.b16 %v6526
    %v6884 = vunpack.c.l.b16 %v6527
    %v6885 = vunpack.c.h.b16 %v6527
    %v6886 = vunpack.c.l.b16 %v6528
    %v6887 = vunpack.c.h.b16 %v6528
    %v6888 = vunpack.c.l.b16 %v6529
    %v6889 = vunpack.c.h.b16 %v6529
    %v6890 = vunpack.c.l.b16 %v6530
    %v6891 = vunpack.c.h.b16 %v6530
    %v6892 = vunpack.c.l.b16 %v6531
    %v6893 = vunpack.c.h.b16 %v6531
    %v6894 = vunpack.c.l.b16 %v6532
    %v6895 = vunpack.c.h.b16 %v6532
    %v6896 = vunpack.c.l.b16 %v6533
    %v6897 = vunpack.c.h.b16 %v6533
    %v6898 = vunpack.c.l.b16 %v6534
    %v6899 = vunpack.c.h.b16 %v6534
    %v6900 = vunpack.c.l.b16 %v6535
    %v6901 = vunpack.c.h.b16 %v6535
    %v6902 = vunpack.c.l.b16 %v6536
    %v6903 = vunpack.c.h.b16 %v6536
    %v6904 = vunpack.c.l.b16 %v6537
    %v6905 = vunpack.c.h.b16 %v6537
    %v6906 = vunpack.c.l.b16 %v6538
    %v6907 = vunpack.c.h.b16 %v6538
    %v6908 = vunpack.c.l.b16 %v6539
    %v6909 = vunpack.c.h.b16 %v6539
    %v6910 = vunpack.c.l.b16 %v6540
    %v6911 = vunpack.c.h.b16 %v6540
    %v6912 = vunpack.c.l.b16 %v6541
    %v6913 = vunpack.c.h.b16 %v6541
    %v6914 = vunpack.c.l.b16 %v6542
    %v6915 = vunpack.c.h.b16 %v6542
    %v6916 = vunpack.c.l.b16 %v6543
    %v6917 = vunpack.c.h.b16 %v6543
    %v6918 = vunpack.c.l.b16 %v6544
    %v6919 = vunpack.c.h.b16 %v6544
    %v6920 = vunpack.c.l.b16 %v6545
    %v6921 = vunpack.c.h.b16 %v6545
    %v6922 = vunpack.c.l.b16 %v6546
    %v6923 = vunpack.c.h.b16 %v6546
    %v6924 = vunpack.c.l.b16 %v6547
    %v6925 = vunpack.c.h.b16 %v6547
    %v6926 = vunpack.c.l.b16 %v6548
    %v6927 = vunpack.c.h.b16 %v6548
    %v6928 = vunpack.c.l.b16 %v6549
    %v6929 = vunpack.c.h.b16 %v6549
    %v6930 = vunpack.c.l.b16 %v6550
    %v6931 = vunpack.c.h.b16 %v6550
    %v6932 = vunpack.c.l.b16 %v6551
    %v6933 = vunpack.c.h.b16 %v6551
    %v6934 = vunpack.c.l.b16 %v6552
    %v6935 = vunpack.c.h.b16 %v6552
    %v6936 = vunpack.c.l.b16 %v6553
    %v6937 = vunpack.c.h.b16 %v6553
    %v6938 = vunpack.c.l.b16 %v6554
    %v6939 = vunpack.c.h.b16 %v6554
    %v6940 = vunpack.c.l.b16 %v6555
    %v6941 = vunpack.c.h.b16 %v6555
    %v6942 = vunpack.c.l.b16 %v6556
    %v6943 = vunpack.c.h.b16 %v6556
    %v6944 = vunpack.c.l.b16 %v6557
    %v6945 = vunpack.c.h.b16 %v6557
    %v6946 = vunpack.c.l.b16 %v6558
    %v6947 = vunpack.c.h.b16 %v6558
    %v6948 = vunpack.c.l.b16 %v6559
    %v6949 = vunpack.c.h.b16 %v6559
    %v6950 = vunpack.c.l.b16 %v6560
    %v6951 = vunpack.c.h.b16 %v6560
    %v6952 = vunpack.c.l.b16 %v6561
    %v6953 = vunpack.c.h.b16 %v6561
    %v6954 = vunpack.c.l.b16 %v6562
    %v6955 = vunpack.c.h.b16 %v6562
    %v6956 = vunpack.c.l.b16 %v6563
    %v6957 = vunpack.c.h.b16 %v6563
    %v6958 = vunpack.c.l.b16 %v6564
    %v6959 = vunpack.c.h.b16 %v6564
    %v6960 = vunpack.c.l.b16 %v6565
    %v6961 = vunpack.c.h.b16 %v6565
    %v6962 = vunpack.c.l.b16 %v6566
    %v6963 = vunpack.c.h.b16 %v6566
    %v6964 = vunpack.c.l.b16 %v6567
    %v6965 = vunpack.c.h.b16 %v6567
    %v6966 = vunpack.c.l.b16 %v6568
    %v6967 = vunpack.c.h.b16 %v6568
    %v6968 = vunpack.c.l.b16 %v6569
    %v6969 = vunpack.c.h.b16 %v6569
    %v6970 = vunpack.c.l.b16 %v6570
    %v6971 = vunpack.c.h.b16 %v6570
    %v6972 = vunpack.c.l.b16 %v6571
    %v6973 = vunpack.c.h.b16 %v6571
    %v6974 = vunpack.c.l.b16 %v6572
    %v6975 = vunpack.c.h.b16 %v6572
    %v6976 = vunpack.c.l.b16 %v6573
    %v6977 = vunpack.c.h.b16 %v6573
    %v6978 = vunpack.c.l.b16 %v6574
    %v6979 = vunpack.c.h.b16 %v6574
    %v6980 = vunpack.c.l.b16 %v6575
    %v6981 = vunpack.c.h.b16 %v6575
    %v6982 = vunpack.c.l.b16 %v6576
    %v6983 = vunpack.c.h.b16 %v6576
    %v6984 = vunpack.c.l.b16 %v6577
    %v6985 = vunpack.c.h.b16 %v6577
    %v6986 = vunpack.c.l.b16 %v6578
    %v6987 = vunpack.c.h.b16 %v6578
    %v6988 = vunpack.c.l.b16 %v6579
    %v6989 = vunpack.c.h.b16 %v6579
    %v6990 = vunpack.c.l.b16 %v6580
    %v6991 = vunpack.c.h.b16 %v6580
    %v6992 = vunpack.c.l.b16 %v6581
    %v6993 = vunpack.c.h.b16 %v6581
    %v6994 = vunpack.c.l.b16 %v6582
    %v6995 = vunpack.c.h.b16 %v6582
    %v6996 = vunpack.c.l.b16 %v6583
    %v6997 = vunpack.c.h.b16 %v6583
    %v6998 = vunpack.c.l.b16 %v6584
    %v6999 = vunpack.c.h.b16 %v6584
    %v7000 = vunpack.c.l.b16 %v6585
    %v7001 = vunpack.c.h.b16 %v6585
    %v7002 = vpack.c.b16 %v6750, %v6746
    %v7003 = vpack.c.b16 %v6751, %v6747
    %v7004 = vpack.c.b16 %v6752, %v6748
    %v7005 = vpack.c.b16 %v6753, %v6749
    %v7006 = vpack.c.b16 %v6758, %v6754
    %v7007 = vpack.c.b16 %v6759, %v6755
    %v7008 = vpack.c.b16 %v6760, %v6756
    %v7009 = vpack.c.b16 %v6761, %v6757
    %v7010 = vpack.c.b16 %v6766, %v6762
    %v7011 = vpack.c.b16 %v6767, %v6763
    %v7012 = vpack.c.b16 %v6768, %v6764
    %v7013 = vpack.c.b16 %v6769, %v6765
    %v7014 = vpack.c.b16 %v6774, %v6770
    %v7015 = vpack.c.b16 %v6775, %v6771
    %v7016 = vpack.c.b16 %v6776, %v6772
    %v7017 = vpack.c.b16 %v6777, %v6773
    %v7018 = vpack.c.b16 %v6782, %v6778
    %v7019 = vpack.c.b16 %v6783, %v6779
    %v7020 = vpack.c.b16 %v6784, %v6780
    %v7021 = vpack.c.b16 %v6785, %v6781
    %v7022 = vpack.c.b16 %v6790, %v6786
    %v7023 = vpack.c.b16 %v6791, %v6787
    %v7024 = vpack.c.b16 %v6792, %v6788
    %v7025 = vpack.c.b16 %v6793, %v6789
    %v7026 = vpack.c.b16 %v6798, %v6794
    %v7027 = vpack.c.b16 %v6799, %v6795
    %v7028 = vpack.c.b16 %v6800, %v6796
    %v7029 = vpack.c.b16 %v6801, %v6797
    %v7030 = vpack.c.b16 %v6806, %v6802
    %v7031 = vpack.c.b16 %v6807, %v6803
    %v7032 = vpack.c.b16 %v6808, %v6804
    %v7033 = vpack.c.b16 %v6809, %v6805
    %v7034 = vpack.c.b16 %v6814, %v6810
    %v7035 = vpack.c.b16 %v6815, %v6811
    %v7036 = vpack.c.b16 %v6816, %v6812
    %v7037 = vpack.c.b16 %v6817, %v6813
    %v7038 = vpack.c.b16 %v6822, %v6818
    %v7039 = vpack.c.b16 %v6823, %v6819
    %v7040 = vpack.c.b16 %v6824, %v6820
    %v7041 = vpack.c.b16 %v6825, %v6821
    %v7042 = vpack.c.b16 %v6830, %v6826
    %v7043 = vpack.c.b16 %v6831, %v6827
    %v7044 = vpack.c.b16 %v6832, %v6828
    %v7045 = vpack.c.b16 %v6833, %v6829
    %v7046 = vpack.c.b16 %v6838, %v6834
    %v7047 = vpack.c.b16 %v6839, %v6835
    %v7048 = vpack.c.b16 %v6840, %v6836
    %v7049 = vpack.c.b16 %v6841, %v6837
    %v7050 = vpack.c.b16 %v6846, %v6842
    %v7051 = vpack.c.b16 %v6847, %v6843
    %v7052 = vpack.c.b16 %v6848, %v6844
    %v7053 = vpack.c.b16 %v6849, %v6845
    %v7054 = vpack.c.b16 %v6854, %v6850
    %v7055 = vpack.c.b16 %v6855, %v6851
    %v7056 = vpack.c.b16 %v6856, %v6852
    %v7057 = vpack.c.b16 %v6857, %v6853
    %v7058 = vpack.c.b16 %v6862, %v6858
    %v7059 = vpack.c.b16 %v6863, %v6859
    %v7060 = vpack.c.b16 %v6864, %v6860
    %v7061 = vpack.c.b16 %v6865, %v6861
    %v7062 = vpack.c.b16 %v6870, %v6866
    %v7063 = vpack.c.b16 %v6871, %v6867
    %v7064 = vpack.c.b16 %v6872, %v6868
    %v7065 = vpack.c.b16 %v6873, %v6869
    %v7066 = vpack.c.b16 %v6878, %v6874
    %v7067 = vpack.c.b16 %v6879, %v6875
    %v7068 = vpack.c.b16 %v6880, %v6876
    %v7069 = vpack.c.b16 %v6881, %v6877
    %v7070 = vpack.c.b16 %v6886, %v6882
    %v7071 = vpack.c.b16 %v6887, %v6883
    %v7072 = vpack.c.b16 %v6888, %v6884
    %v7073 = vpack.c.b16 %v6889, %v6885
    %v7074 = vpack.c.b16 %v6894, %v6890
    %v7075 = vpack.c.b16 %v6895, %v6891
    %v7076 = vpack.c.b16 %v6896, %v6892
    %v7077 = vpack.c.b16 %v6897, %v6893
    %v7078 = vpack.c.b16 %v6902, %v6898
    %v7079 = vpack.c.b16 %v6903, %v6899
    %v7080 = vpack.c.b16 %v6904, %v6900
    %v7081 = vpack.c.b16 %v6905, %v6901
    %v7082 = vpack.c.b16 %v6910, %v6906
    %v7083 = vpack.c.b16 %v6911, %v6907
    %v7084 = vpack.c.b16 %v6912, %v6908
    %v7085 = vpack.c.b16 %v6913, %v6909
    %v7086 = vpack.c.b16 %v6918, %v6914
    %v7087 = vpack.c.b16 %v6919, %v6915
    %v7088 = vpack.c.b16 %v6920, %v6916
    %v7089 = vpack.c.b16 %v6921, %v6917
    %v7090 = vpack.c.b16 %v6926, %v6922
    %v7091 = vpack.c.b16 %v6927, %v6923
    %v7092 = vpack.c.b16 %v6928, %v6924
    %v7093 = vpack.c.b16 %v6929, %v6925
    %v7094 = vpack.c.b16 %v6934, %v6930
    %v7095 = vpack.c.b16 %v6935, %v6931
    %v7096 = vpack.c.b16 %v6936, %v6932
    %v7097 = vpack.c.b16 %v6937, %v6933
    %v7098 = vpack.c.b16 %v6942, %v6938
    %v7099 = vpack.c.b16 %v6943, %v6939
    %v7100 = vpack.c.b16 %v6944, %v6940
    %v7101 = vpack.c.b16 %v6945, %v6941
    %v7102 = vpack.c.b16 %v6950, %v6946
    %v7103 = vpack.c.b16 %v6951, %v6947
    %v7104 = vpack.c.b16 %v6952, %v6948
    %v7105 = vpack.c.b16 %v6953, %v6949
    %v7106 = vpack.c.b16 %v6958, %v6954
    %v7107 = vpack.c.b16 %v6959, %v6955
    %v7108 = vpack.c.b16 %v6960, %v6956
    %v7109 = vpack.c.b16 %v6961, %v6957
    %v7110 = vpack.c.b16 %v6966, %v6962
    %v7111 = vpack.c.b16 %v6967, %v6963
    %v7112 = vpack.c.b16 %v6968, %v6964
    %v7113 = vpack.c.b16 %v6969, %v6965
    %v7114 = vpack.c.b16 %v6974, %v6970
    %v7115 = vpack.c.b16 %v6975, %v6971
    %v7116 = vpack.c.b16 %v6976, %v6972
    %v7117 = vpack.c.b16 %v6977, %v6973
    %v7118 = vpack.c.b16 %v6982, %v6978
    %v7119 = vpack.c.b16 %v6983, %v6979
    %v7120 = vpack.c.b16 %v6984, %v6980
    %v7121 = vpack.c.b16 %v6985, %v6981
    %v7122 = vpack.c.b16 %v6990, %v6986
    %v7123 = vpack.c.b16 %v6991, %v6987
    %v7124 = vpack.c.b16 %v6992, %v6988
    %v7125 = vpack.c.b16 %v6993, %v6989
    %v7126 = vpack.c.b16 %v6998, %v6994
    %v7127 = vpack.c.b16 %v6999, %v6995
    %v7128 = vpack.c.b16 %v7000, %v6996
    %v7129 = vpack.c.b16 %v7001, %v6997
    %7258 = vmatpush.bf16.msra.mxu0 %v7030
    %7259 = vmatpush.bf16.msra.mxu0 %v7026
    %7260 = vmatpush.bf16.msra.mxu0 %v7022
    %7261 = vmatpush.bf16.msra.mxu0 %v7018
    %7262 = vmatpush.bf16.msra.mxu0 %v7014
    %7263 = vmatpush.bf16.msra.mxu0 %v7010
    %7264 = vmatpush.bf16.msra.mxu0 %v7006
    %7265 = vmatpush.bf16.msra.mxu0 %v7002
    %7266 = vmatmul.bf16.gmra.mxu0 %v6602
    %v7267 = vpop.f32.mrf.mxu0
    %v7268 = vadd.f32 0.0, %v7267
    %v7269 = vpop.f32.mrf.mxu0
    %v7270 = vadd.f32 0.0, %v7269
    %7271 = vmatmul.bf16.gmra.mxu0 %v6606
    %v7272 = vpop.f32.mrf.mxu0
    %v7273 = vadd.f32 0.0, %v7272
    %v7274 = vpop.f32.mrf.mxu0
    %v7275 = vadd.f32 0.0, %v7274
    %7276 = vdwg.mxu0
    %7277 = vmatpush.bf16.msra.mxu0 %v7062
    %7278 = vmatpush.bf16.msra.mxu0 %v7058
    %7279 = vmatpush.bf16.msra.mxu0 %v7054
    %7280 = vmatpush.bf16.msra.mxu0 %v7050
    %7281 = vmatpush.bf16.msra.mxu0 %v7046
    %7282 = vmatpush.bf16.msra.mxu0 %v7042
    %7283 = vmatpush.bf16.msra.mxu0 %v7038
    %7284 = vmatpush.bf16.msra.mxu0 %v7034
    %7285 = vmatmul.bf16.gmra.mxu0 %v6603
    %v7286 = vpop.f32.mrf.mxu0
    %v7287 = vadd.f32 %v7268, %v7286
    %v7288 = vpop.f32.mrf.mxu0
    %v7289 = vadd.f32 %v7270, %v7288
    %7290 = vmatmul.bf16.gmra.mxu0 %v6607
    %v7291 = vpop.f32.mrf.mxu0
    %v7292 = vadd.f32 %v7273, %v7291
    %v7293 = vpop.f32.mrf.mxu0
    %v7294 = vadd.f32 %v7275, %v7293
    %7295 = vdwg.mxu0
    %7296 = vmatpush.bf16.msra.mxu0 %v7094
    %7297 = vmatpush.bf16.msra.mxu0 %v7090
    %7298 = vmatpush.bf16.msra.mxu0 %v7086
    %7299 = vmatpush.bf16.msra.mxu0 %v7082
    %7300 = vmatpush.bf16.msra.mxu0 %v7078
    %7301 = vmatpush.bf16.msra.mxu0 %v7074
    %7302 = vmatpush.bf16.msra.mxu0 %v7070
    %7303 = vmatpush.bf16.msra.mxu0 %v7066
    %7304 = vmatmul.bf16.gmra.mxu0 %v6604
    %v7305 = vpop.f32.mrf.mxu0
    %v7306 = vadd.f32 %v7287, %v7305
    %v7307 = vpop.f32.mrf.mxu0
    %v7308 = vadd.f32 %v7289, %v7307
    %7309 = vmatmul.bf16.gmra.mxu0 %v6608
    %v7310 = vpop.f32.mrf.mxu0
    %v7311 = vadd.f32 %v7292, %v7310
    %v7312 = vpop.f32.mrf.mxu0
    %v7313 = vadd.f32 %v7294, %v7312
    %7314 = vdwg.mxu0
    %7315 = vmatpush.bf16.msra.mxu0 %v7126
    %7316 = vmatpush.bf16.msra.mxu0 %v7122
    %7317 = vmatpush.bf16.msra.mxu0 %v7118
    %7318 = vmatpush.bf16.msra.mxu0 %v7114
    %7319 = vmatpush.bf16.msra.mxu0 %v7110
    %7320 = vmatpush.bf16.msra.mxu0 %v7106
    %7321 = vmatpush.bf16.msra.mxu0 %v7102
    %7322 = vmatpush.bf16.msra.mxu0 %v7098
    %7323 = vmatmul.bf16.gmra.mxu0 %v6605
    %v7324 = vpop.f32.mrf.mxu0
    %v7325 = vadd.f32 %v7306, %v7324
    %v7326 = vpop.f32.mrf.mxu0
    %v7327 = vadd.f32 %v7308, %v7326
    %7328 = vmatmul.bf16.gmra.mxu0 %v6609
    %v7329 = vpop.f32.mrf.mxu0
    %v7330 = vadd.f32 %v7311, %v7329
    %v7331 = vpop.f32.mrf.mxu0
    %v7332 = vadd.f32 %v7313, %v7331
    %7333 = vdwg.mxu0
    %7334 = vmatpush.bf16.msra.mxu0 %v7031
    %7335 = vmatpush.bf16.msra.mxu0 %v7027
    %7336 = vmatpush.bf16.msra.mxu0 %v7023
    %7337 = vmatpush.bf16.msra.mxu0 %v7019
    %7338 = vmatpush.bf16.msra.mxu0 %v7015
    %7339 = vmatpush.bf16.msra.mxu0 %v7011
    %7340 = vmatpush.bf16.msra.mxu0 %v7007
    %7341 = vmatpush.bf16.msra.mxu0 %v7003
    %7342 = vmatmul.bf16.gmra.mxu0 %v6602
    %v7343 = vpop.f32.mrf.mxu0
    %v7344 = vadd.f32 0.0, %v7343
    %v7345 = vpop.f32.mrf.mxu0
    %v7346 = vadd.f32 0.0, %v7345
    %7347 = vmatmul.bf16.gmra.mxu0 %v6606
    %v7348 = vpop.f32.mrf.mxu0
    %v7349 = vadd.f32 0.0, %v7348
    %v7350 = vpop.f32.mrf.mxu0
    %v7351 = vadd.f32 0.0, %v7350
    %7352 = vdwg.mxu0
    %7353 = vmatpush.bf16.msra.mxu0 %v7063
    %7354 = vmatpush.bf16.msra.mxu0 %v7059
    %7355 = vmatpush.bf16.msra.mxu0 %v7055
    %7356 = vmatpush.bf16.msra.mxu0 %v7051
    %7357 = vmatpush.bf16.msra.mxu0 %v7047
    %7358 = vmatpush.bf16.msra.mxu0 %v7043
    %7359 = vmatpush.bf16.msra.mxu0 %v7039
    %7360 = vmatpush.bf16.msra.mxu0 %v7035
    %7361 = vmatmul.bf16.gmra.mxu0 %v6603
    %v7362 = vpop.f32.mrf.mxu0
    %v7363 = vadd.f32 %v7344, %v7362
    %v7364 = vpop.f32.mrf.mxu0
    %v7365 = vadd.f32 %v7346, %v7364
    %7366 = vmatmul.bf16.gmra.mxu0 %v6607
    %v7367 = vpop.f32.mrf.mxu0
    %v7368 = vadd.f32 %v7349, %v7367
    %v7369 = vpop.f32.mrf.mxu0
    %v7370 = vadd.f32 %v7351, %v7369
    %7371 = vdwg.mxu0
    %7372 = vmatpush.bf16.msra.mxu0 %v7095
    %7373 = vmatpush.bf16.msra.mxu0 %v7091
    %7374 = vmatpush.bf16.msra.mxu0 %v7087
    %7375 = vmatpush.bf16.msra.mxu0 %v7083
    %7376 = vmatpush.bf16.msra.mxu0 %v7079
    %7377 = vmatpush.bf16.msra.mxu0 %v7075
    %7378 = vmatpush.bf16.msra.mxu0 %v7071
    %7379 = vmatpush.bf16.msra.mxu0 %v7067
    %7380 = vmatmul.bf16.gmra.mxu0 %v6604
    %v7381 = vpop.f32.mrf.mxu0
    %v7382 = vadd.f32 %v7363, %v7381
    %v7383 = vpop.f32.mrf.mxu0
    %v7384 = vadd.f32 %v7365, %v7383
    %7385 = vmatmul.bf16.gmra.mxu0 %v6608
    %v7386 = vpop.f32.mrf.mxu0
    %v7387 = vadd.f32 %v7368, %v7386
    %v7388 = vpop.f32.mrf.mxu0
    %v7389 = vadd.f32 %v7370, %v7388
    %7390 = vdwg.mxu0
    %7391 = vmatpush.bf16.msra.mxu0 %v7127
    %7392 = vmatpush.bf16.msra.mxu0 %v7123
    %7393 = vmatpush.bf16.msra.mxu0 %v7119
    %7394 = vmatpush.bf16.msra.mxu0 %v7115
    %7395 = vmatpush.bf16.msra.mxu0 %v7111
    %7396 = vmatpush.bf16.msra.mxu0 %v7107
    %7397 = vmatpush.bf16.msra.mxu0 %v7103
    %7398 = vmatpush.bf16.msra.mxu0 %v7099
    %7399 = vmatmul.bf16.gmra.mxu0 %v6605
    %v7400 = vpop.f32.mrf.mxu0
    %v7401 = vadd.f32 %v7382, %v7400
    %v7402 = vpop.f32.mrf.mxu0
    %v7403 = vadd.f32 %v7384, %v7402
    %7404 = vmatmul.bf16.gmra.mxu0 %v6609
    %v7405 = vpop.f32.mrf.mxu0
    %v7406 = vadd.f32 %v7387, %v7405
    %v7407 = vpop.f32.mrf.mxu0
    %v7408 = vadd.f32 %v7389, %v7407
    %7409 = vdwg.mxu0
    %7410 = vmatpush.bf16.msra.mxu0 %v7032
    %7411 = vmatpush.bf16.msra.mxu0 %v7028
    %7412 = vmatpush.bf16.msra.mxu0 %v7024
    %7413 = vmatpush.bf16.msra.mxu0 %v7020
    %7414 = vmatpush.bf16.msra.mxu0 %v7016
    %7415 = vmatpush.bf16.msra.mxu0 %v7012
    %7416 = vmatpush.bf16.msra.mxu0 %v7008
    %7417 = vmatpush.bf16.msra.mxu0 %v7004
    %7418 = vmatmul.bf16.gmra.mxu0 %v6602
    %v7419 = vpop.f32.mrf.mxu0
    %v7420 = vadd.f32 0.0, %v7419
    %v7421 = vpop.f32.mrf.mxu0
    %v7422 = vadd.f32 0.0, %v7421
    %7423 = vmatmul.bf16.gmra.mxu0 %v6606
    %v7424 = vpop.f32.mrf.mxu0
    %v7425 = vadd.f32 0.0, %v7424
    %v7426 = vpop.f32.mrf.mxu0
    %v7427 = vadd.f32 0.0, %v7426
    %7428 = vdwg.mxu0
    %7429 = vmatpush.bf16.msra.mxu0 %v7064
    %7430 = vmatpush.bf16.msra.mxu0 %v7060
    %7431 = vmatpush.bf16.msra.mxu0 %v7056
    %7432 = vmatpush.bf16.msra.mxu0 %v7052
    %7433 = vmatpush.bf16.msra.mxu0 %v7048
    %7434 = vmatpush.bf16.msra.mxu0 %v7044
    %7435 = vmatpush.bf16.msra.mxu0 %v7040
    %7436 = vmatpush.bf16.msra.mxu0 %v7036
    %7437 = vmatmul.bf16.gmra.mxu0 %v6603
    %v7438 = vpop.f32.mrf.mxu0
    %v7439 = vadd.f32 %v7420, %v7438
    %v7440 = vpop.f32.mrf.mxu0
    %v7441 = vadd.f32 %v7422, %v7440
    %7442 = vmatmul.bf16.gmra.mxu0 %v6607
    %v7443 = vpop.f32.mrf.mxu0
    %v7444 = vadd.f32 %v7425, %v7443
    %v7445 = vpop.f32.mrf.mxu0
    %v7446 = vadd.f32 %v7427, %v7445
    %7447 = vdwg.mxu0
    %7448 = vmatpush.bf16.msra.mxu0 %v7096
    %7449 = vmatpush.bf16.msra.mxu0 %v7092
    %7450 = vmatpush.bf16.msra.mxu0 %v7088
    %7451 = vmatpush.bf16.msra.mxu0 %v7084
    %7452 = vmatpush.bf16.msra.mxu0 %v7080
    %7453 = vmatpush.bf16.msra.mxu0 %v7076
    %7454 = vmatpush.bf16.msra.mxu0 %v7072
    %7455 = vmatpush.bf16.msra.mxu0 %v7068
    %7456 = vmatmul.bf16.gmra.mxu0 %v6604
    %v7457 = vpop.f32.mrf.mxu0
    %v7458 = vadd.f32 %v7439, %v7457
    %v7459 = vpop.f32.mrf.mxu0
    %v7460 = vadd.f32 %v7441, %v7459
    %7461 = vmatmul.bf16.gmra.mxu0 %v6608
    %v7462 = vpop.f32.mrf.mxu0
    %v7463 = vadd.f32 %v7444, %v7462
    %v7464 = vpop.f32.mrf.mxu0
    %v7465 = vadd.f32 %v7446, %v7464
    %7466 = vdwg.mxu0
    %7467 = vmatpush.bf16.msra.mxu0 %v7128
    %7468 = vmatpush.bf16.msra.mxu0 %v7124
    %7469 = vmatpush.bf16.msra.mxu0 %v7120
    %7470 = vmatpush.bf16.msra.mxu0 %v7116
    %7471 = vmatpush.bf16.msra.mxu0 %v7112
    %7472 = vmatpush.bf16.msra.mxu0 %v7108
    %7473 = vmatpush.bf16.msra.mxu0 %v7104
    %7474 = vmatpush.bf16.msra.mxu0 %v7100
    %7475 = vmatmul.bf16.gmra.mxu0 %v6605
    %v7476 = vpop.f32.mrf.mxu0
    %v7477 = vadd.f32 %v7458, %v7476
    %v7478 = vpop.f32.mrf.mxu0
    %v7479 = vadd.f32 %v7460, %v7478
    %7480 = vmatmul.bf16.gmra.mxu0 %v6609
    %v7481 = vpop.f32.mrf.mxu0
    %v7482 = vadd.f32 %v7463, %v7481
    %v7483 = vpop.f32.mrf.mxu0
    %v7484 = vadd.f32 %v7465, %v7483
    %7485 = vdwg.mxu0
    %7486 = vmatpush.bf16.msra.mxu0 %v7033
    %7487 = vmatpush.bf16.msra.mxu0 %v7029
    %7488 = vmatpush.bf16.msra.mxu0 %v7025
    %7489 = vmatpush.bf16.msra.mxu0 %v7021
    %7490 = vmatpush.bf16.msra.mxu0 %v7017
    %7491 = vmatpush.bf16.msra.mxu0 %v7013
    %7492 = vmatpush.bf16.msra.mxu0 %v7009
    %7493 = vmatpush.bf16.msra.mxu0 %v7005
    %7494 = vmatmul.bf16.gmra.mxu0 %v6602
    %v7495 = vpop.f32.mrf.mxu0
    %v7496 = vadd.f32 0.0, %v7495
    %v7497 = vpop.f32.mrf.mxu0
    %v7498 = vadd.f32 0.0, %v7497
    %7499 = vmatmul.bf16.gmra.mxu0 %v6606
    %v7500 = vpop.f32.mrf.mxu0
    %v7501 = vadd.f32 0.0, %v7500
    %v7502 = vpop.f32.mrf.mxu0
    %v7503 = vadd.f32 0.0, %v7502
    %7504 = vdwg.mxu0
    %7505 = vmatpush.bf16.msra.mxu0 %v7065
    %7506 = vmatpush.bf16.msra.mxu0 %v7061
    %7507 = vmatpush.bf16.msra.mxu0 %v7057
    %7508 = vmatpush.bf16.msra.mxu0 %v7053
    %7509 = vmatpush.bf16.msra.mxu0 %v7049
    %7510 = vmatpush.bf16.msra.mxu0 %v7045
    %7511 = vmatpush.bf16.msra.mxu0 %v7041
    %7512 = vmatpush.bf16.msra.mxu0 %v7037
    %7513 = vmatmul.bf16.gmra.mxu0 %v6603
    %v7514 = vpop.f32.mrf.mxu0
    %v7515 = vadd.f32 %v7496, %v7514
    %v7516 = vpop.f32.mrf.mxu0
    %v7517 = vadd.f32 %v7498, %v7516
    %7518 = vmatmul.bf16.gmra.mxu0 %v6607
    %v7519 = vpop.f32.mrf.mxu0
    %v7520 = vadd.f32 %v7501, %v7519
    %v7521 = vpop.f32.mrf.mxu0
    %v7522 = vadd.f32 %v7503, %v7521
    %7523 = vdwg.mxu0
    %7524 = vmatpush.bf16.msra.mxu0 %v7097
    %7525 = vmatpush.bf16.msra.mxu0 %v7093
    %7526 = vmatpush.bf16.msra.mxu0 %v7089
    %7527 = vmatpush.bf16.msra.mxu0 %v7085
    %7528 = vmatpush.bf16.msra.mxu0 %v7081
    %7529 = vmatpush.bf16.msra.mxu0 %v7077
    %7530 = vmatpush.bf16.msra.mxu0 %v7073
    %7531 = vmatpush.bf16.msra.mxu0 %v7069
    %7532 = vmatmul.bf16.gmra.mxu0 %v6604
    %v7533 = vpop.f32.mrf.mxu0
    %v7534 = vadd.f32 %v7515, %v7533
    %v7535 = vpop.f32.mrf.mxu0
    %v7536 = vadd.f32 %v7517, %v7535
    %7537 = vmatmul.bf16.gmra.mxu0 %v6608
    %v7538 = vpop.f32.mrf.mxu0
    %v7539 = vadd.f32 %v7520, %v7538
    %v7540 = vpop.f32.mrf.mxu0
    %v7541 = vadd.f32 %v7522, %v7540
    %7542 = vdwg.mxu0
    %7543 = vmatpush.bf16.msra.mxu0 %v7129
    %7544 = vmatpush.bf16.msra.mxu0 %v7125
    %7545 = vmatpush.bf16.msra.mxu0 %v7121
    %7546 = vmatpush.bf16.msra.mxu0 %v7117
    %7547 = vmatpush.bf16.msra.mxu0 %v7113
    %7548 = vmatpush.bf16.msra.mxu0 %v7109
    %7549 = vmatpush.bf16.msra.mxu0 %v7105
    %7550 = vmatpush.bf16.msra.mxu0 %v7101
    %7551 = vmatmul.bf16.gmra.mxu0 %v6605
    %v7552 = vpop.f32.mrf.mxu0
    %v7553 = vadd.f32 %v7534, %v7552
    %v7554 = vpop.f32.mrf.mxu0
    %v7555 = vadd.f32 %v7536, %v7554
    %7556 = vmatmul.bf16.gmra.mxu0 %v6609
    %v7557 = vpop.f32.mrf.mxu0
    %v7558 = vadd.f32 %v7539, %v7557
    %v7559 = vpop.f32.mrf.mxu0
    %v7560 = vadd.f32 %v7541, %v7559
    %7561 = vdwg.mxu0
    %v7562 = vadd.f32 %v6176, %v7325
    %v7563 = vadd.f32 %v6252, %v7401
    %v7564 = vadd.f32 %v6328, %v7477
    %v7565 = vadd.f32 %v6404, %v7553
    %v7566 = vadd.f32 %v6178, %v7327
    %v7567 = vadd.f32 %v6254, %v7403
    %v7568 = vadd.f32 %v6330, %v7479
    %v7569 = vadd.f32 %v6406, %v7555
    %v7570 = vadd.f32 %v6181, %v7330
    %v7571 = vadd.f32 %v6257, %v7406
    %v7572 = vadd.f32 %v6333, %v7482
    %v7573 = vadd.f32 %v6409, %v7558
    %v7574 = vadd.f32 %v6183, %v7332
    %v7575 = vadd.f32 %v6259, %v7408
    %v7576 = vadd.f32 %v6335, %v7484
    %v7577 = vadd.f32 %v6411, %v7560
    %v7578 = vld [vmem:[#allocation2 + $0x20] sm:$0x33]
    %v7579 = vld [vmem:[#allocation2 + $0x28] sm:$0x33]
    %v7580 = vld [vmem:[#allocation2 + $0x50] sm:$0x33]
    %v7581 = vld [vmem:[#allocation2 + $0x58] sm:$0x33]
    %v7583 = vshrl.u32 %v6413, 16
    %v7585 = vrot.slane %v7583, 5
    %v7586 = vshll.u32 %v6413, 16
    %v7588 = vrot.slane %v7586, 6
    %v7589 = vor.u32 %v7585, %v7588
    %v7590 = vrot.slane %v7589, 4
    %v7591 = vrot.slane %v4256, 5
    %v7592 = vrot.slane %v4238, 6
    %v7593 = vor.u32 %v7591, %v7592
    %v7594 = vsel %vm2002, %v7590, %v7593
    %v7596 = vshrl.u32 %v6414, 16
    %v7598 = vrot.slane %v7596, 5
    %v7599 = vshll.u32 %v6414, 16
    %v7601 = vrot.slane %v7599, 6
    %v7602 = vor.u32 %v7598, %v7601
    %v7603 = vrot.slane %v7602, 4
    %v7604 = vrot.slane %v4266, 5
    %v7605 = vrot.slane %v4252, 6
    %v7606 = vor.u32 %v7604, %v7605
    %v7607 = vsel %vm2002, %v7603, %v7606
    %v7608 = vrot.slane %v7593, 4
    %v7610 = vshrl.u32 %v7578, 16
    %v7612 = vrot.slane %v7610, 5
    %v7613 = vshll.u32 %v7578, 16
    %v7615 = vrot.slane %v7613, 6
    %v7616 = vor.u32 %v7612, %v7615
    %v7617 = vsel %vm2002, %v7608, %v7616
    %v7618 = vrot.slane %v7606, 4
    %v7620 = vshrl.u32 %v7579, 16
    %v7622 = vrot.slane %v7620, 5
    %v7623 = vshll.u32 %v7579, 16
    %v7625 = vrot.slane %v7623, 6
    %v7626 = vor.u32 %v7622, %v7625
    %v7627 = vsel %vm2002, %v7618, %v7626
    %v7629 = vshrl.u32 %v6415, 16
    %v7631 = vrot.slane %v7629, 5
    %v7632 = vshll.u32 %v6415, 16
    %v7634 = vrot.slane %v7632, 6
    %v7635 = vor.u32 %v7631, %v7634
    %v7636 = vrot.slane %v7635, 4
    %v7637 = vrot.slane %v4304, 5
    %v7638 = vrot.slane %v4286, 6
    %v7639 = vor.u32 %v7637, %v7638
    %v7640 = vsel %vm2002, %v7636, %v7639
    %v7642 = vshrl.u32 %v6416, 16
    %v7644 = vrot.slane %v7642, 5
    %v7645 = vshll.u32 %v6416, 16
    %v7647 = vrot.slane %v7645, 6
    %v7648 = vor.u32 %v7644, %v7647
    %v7649 = vrot.slane %v7648, 4
    %v7650 = vrot.slane %v4314, 5
    %v7651 = vrot.slane %v4300, 6
    %v7652 = vor.u32 %v7650, %v7651
    %v7653 = vsel %vm2002, %v7649, %v7652
    %v7654 = vrot.slane %v7639, 4
    %v7656 = vshrl.u32 %v7580, 16
    %v7658 = vrot.slane %v7656, 5
    %v7659 = vshll.u32 %v7580, 16
    %v7661 = vrot.slane %v7659, 6
    %v7662 = vor.u32 %v7658, %v7661
    %v7663 = vsel %vm2002, %v7654, %v7662
    %v7664 = vrot.slane %v7652, 4
    %v7666 = vshrl.u32 %v7581, 16
    %v7668 = vrot.slane %v7666, 5
    %v7669 = vshll.u32 %v7581, 16
    %v7671 = vrot.slane %v7669, 6
    %v7672 = vor.u32 %v7668, %v7671
    %v7673 = vsel %vm2002, %v7664, %v7672
    %s7674 = scalar_lea.vmem [#allocation9], 3072
    %v7675 = vld [vmem:[%s7674] sm:$0xff]
    %v7676 = vld [vmem:[%s7674 + $0x8] sm:$0xff]
    %v7677 = vld [vmem:[%s7674 + $0x10] sm:$0xff]
    %v7678 = vld [vmem:[%s7674 + $0x18] sm:$0xff]
    %v7679 = vld [vmem:[%s7674 + $0x20] sm:$0xff]
    %v7680 = vld [vmem:[%s7674 + $0x28] sm:$0xff]
    %v7681 = vld [vmem:[%s7674 + $0x30] sm:$0xff]
    %v7682 = vld [vmem:[%s7674 + $0x38] sm:$0xff]
    %v7683 = vld [vmem:[%s7674 + $0x40] sm:$0xff]
    %v7684 = vld [vmem:[%s7674 + $0x48] sm:$0xff]
    %v7685 = vld [vmem:[%s7674 + $0x50] sm:$0xff]
    %v7686 = vld [vmem:[%s7674 + $0x58] sm:$0xff]
    %v7687 = vld [vmem:[%s7674 + $0x60] sm:$0xff]
    %v7688 = vld [vmem:[%s7674 + $0x68] sm:$0xff]
    %v7689 = vld [vmem:[%s7674 + $0x70] sm:$0xff]
    %v7690 = vld [vmem:[%s7674 + $0x78] sm:$0xff]
    %v7691 = vld [vmem:[%s7674 + $0x80] sm:$0xff]
    %v7692 = vld [vmem:[%s7674 + $0x88] sm:$0xff]
    %v7693 = vld [vmem:[%s7674 + $0x90] sm:$0xff]
    %v7694 = vld [vmem:[%s7674 + $0x98] sm:$0xff]
    %v7695 = vld [vmem:[%s7674 + $0xa0] sm:$0xff]
    %v7696 = vld [vmem:[%s7674 + $0xa8] sm:$0xff]
    %v7697 = vld [vmem:[%s7674 + $0xb0] sm:$0xff]
    %v7698 = vld [vmem:[%s7674 + $0xb8] sm:$0xff]
    %v7699 = vld [vmem:[%s7674 + $0xc0] sm:$0xff]
    %v7700 = vld [vmem:[%s7674 + $0xc8] sm:$0xff]
    %v7701 = vld [vmem:[%s7674 + $0xd0] sm:$0xff]
    %v7702 = vld [vmem:[%s7674 + $0xd8] sm:$0xff]
    %v7703 = vld [vmem:[%s7674 + $0xe0] sm:$0xff]
    %v7704 = vld [vmem:[%s7674 + $0xe8] sm:$0xff]
    %v7705 = vld [vmem:[%s7674 + $0xf0] sm:$0xff]
    %v7706 = vld [vmem:[%s7674 + $0xf8] sm:$0xff]
    %v7707 = vld [vmem:[%s7674 + $0x100] sm:$0xff]
    %v7708 = vld [vmem:[%s7674 + $0x108] sm:$0xff]
    %v7709 = vld [vmem:[%s7674 + $0x110] sm:$0xff]
    %v7710 = vld [vmem:[%s7674 + $0x118] sm:$0xff]
    %v7711 = vld [vmem:[%s7674 + $0x120] sm:$0xff]
    %v7712 = vld [vmem:[%s7674 + $0x128] sm:$0xff]
    %v7713 = vld [vmem:[%s7674 + $0x130] sm:$0xff]
    %v7714 = vld [vmem:[%s7674 + $0x138] sm:$0xff]
    %v7715 = vld [vmem:[%s7674 + $0x140] sm:$0xff]
    %v7716 = vld [vmem:[%s7674 + $0x148] sm:$0xff]
    %v7717 = vld [vmem:[%s7674 + $0x150] sm:$0xff]
    %v7718 = vld [vmem:[%s7674 + $0x158] sm:$0xff]
    %v7719 = vld [vmem:[%s7674 + $0x160] sm:$0xff]
    %v7720 = vld [vmem:[%s7674 + $0x168] sm:$0xff]
    %v7721 = vld [vmem:[%s7674 + $0x170] sm:$0xff]
    %v7722 = vld [vmem:[%s7674 + $0x178] sm:$0xff]
    %v7723 = vld [vmem:[%s7674 + $0x180] sm:$0xff]
    %v7724 = vld [vmem:[%s7674 + $0x188] sm:$0xff]
    %v7725 = vld [vmem:[%s7674 + $0x190] sm:$0xff]
    %v7726 = vld [vmem:[%s7674 + $0x198] sm:$0xff]
    %v7727 = vld [vmem:[%s7674 + $0x1a0] sm:$0xff]
    %v7728 = vld [vmem:[%s7674 + $0x1a8] sm:$0xff]
    %v7729 = vld [vmem:[%s7674 + $0x1b0] sm:$0xff]
    %v7730 = vld [vmem:[%s7674 + $0x1b8] sm:$0xff]
    %v7731 = vld [vmem:[%s7674 + $0x1c0] sm:$0xff]
    %v7732 = vld [vmem:[%s7674 + $0x1c8] sm:$0xff]
    %v7733 = vld [vmem:[%s7674 + $0x1d0] sm:$0xff]
    %v7734 = vld [vmem:[%s7674 + $0x1d8] sm:$0xff]
    %v7735 = vld [vmem:[%s7674 + $0x1e0] sm:$0xff]
    %v7736 = vld [vmem:[%s7674 + $0x1e8] sm:$0xff]
    %v7737 = vld [vmem:[%s7674 + $0x1f0] sm:$0xff]
    %v7738 = vld [vmem:[%s7674 + $0x1f8] sm:$0xff]
    %v7739 = vld [vmem:[%s7674 + $0x200] sm:$0xff]
    %v7740 = vld [vmem:[%s7674 + $0x208] sm:$0xff]
    %v7741 = vld [vmem:[%s7674 + $0x210] sm:$0xff]
    %v7742 = vld [vmem:[%s7674 + $0x218] sm:$0xff]
    %v7743 = vld [vmem:[%s7674 + $0x220] sm:$0xff]
    %v7744 = vld [vmem:[%s7674 + $0x228] sm:$0xff]
    %v7745 = vld [vmem:[%s7674 + $0x230] sm:$0xff]
    %v7746 = vld [vmem:[%s7674 + $0x238] sm:$0xff]
    %v7747 = vld [vmem:[%s7674 + $0x240] sm:$0xff]
    %v7748 = vld [vmem:[%s7674 + $0x248] sm:$0xff]
    %v7749 = vld [vmem:[%s7674 + $0x250] sm:$0xff]
    %v7750 = vld [vmem:[%s7674 + $0x258] sm:$0xff]
    %v7751 = vld [vmem:[%s7674 + $0x260] sm:$0xff]
    %v7752 = vld [vmem:[%s7674 + $0x268] sm:$0xff]
    %v7753 = vld [vmem:[%s7674 + $0x270] sm:$0xff]
    %v7754 = vld [vmem:[%s7674 + $0x278] sm:$0xff]
    %v7755 = vld [vmem:[%s7674 + $0x280] sm:$0xff]
    %v7756 = vld [vmem:[%s7674 + $0x288] sm:$0xff]
    %v7757 = vld [vmem:[%s7674 + $0x290] sm:$0xff]
    %v7758 = vld [vmem:[%s7674 + $0x298] sm:$0xff]
    %v7759 = vld [vmem:[%s7674 + $0x2a0] sm:$0xff]
    %v7760 = vld [vmem:[%s7674 + $0x2a8] sm:$0xff]
    %v7761 = vld [vmem:[%s7674 + $0x2b0] sm:$0xff]
    %v7762 = vld [vmem:[%s7674 + $0x2b8] sm:$0xff]
    %v7763 = vld [vmem:[%s7674 + $0x2c0] sm:$0xff]
    %v7764 = vld [vmem:[%s7674 + $0x2c8] sm:$0xff]
    %v7765 = vld [vmem:[%s7674 + $0x2d0] sm:$0xff]
    %v7766 = vld [vmem:[%s7674 + $0x2d8] sm:$0xff]
    %v7767 = vld [vmem:[%s7674 + $0x2e0] sm:$0xff]
    %v7768 = vld [vmem:[%s7674 + $0x2e8] sm:$0xff]
    %v7769 = vld [vmem:[%s7674 + $0x2f0] sm:$0xff]
    %v7770 = vld [vmem:[%s7674 + $0x2f8] sm:$0xff]
    %v7771 = vld [vmem:[%s7674 + $0x300] sm:$0xff]
    %v7772 = vld [vmem:[%s7674 + $0x308] sm:$0xff]
    %v7773 = vld [vmem:[%s7674 + $0x310] sm:$0xff]
    %v7774 = vld [vmem:[%s7674 + $0x318] sm:$0xff]
    %v7775 = vld [vmem:[%s7674 + $0x320] sm:$0xff]
    %v7776 = vld [vmem:[%s7674 + $0x328] sm:$0xff]
    %v7777 = vld [vmem:[%s7674 + $0x330] sm:$0xff]
    %v7778 = vld [vmem:[%s7674 + $0x338] sm:$0xff]
    %v7779 = vld [vmem:[%s7674 + $0x340] sm:$0xff]
    %v7780 = vld [vmem:[%s7674 + $0x348] sm:$0xff]
    %v7781 = vld [vmem:[%s7674 + $0x350] sm:$0xff]
    %v7782 = vld [vmem:[%s7674 + $0x358] sm:$0xff]
    %v7783 = vld [vmem:[%s7674 + $0x360] sm:$0xff]
    %v7784 = vld [vmem:[%s7674 + $0x368] sm:$0xff]
    %v7785 = vld [vmem:[%s7674 + $0x370] sm:$0xff]
    %v7786 = vld [vmem:[%s7674 + $0x378] sm:$0xff]
    %v7787 = vld [vmem:[%s7674 + $0x380] sm:$0xff]
    %v7788 = vld [vmem:[%s7674 + $0x388] sm:$0xff]
    %v7789 = vld [vmem:[%s7674 + $0x390] sm:$0xff]
    %v7790 = vld [vmem:[%s7674 + $0x398] sm:$0xff]
    %v7791 = vld [vmem:[%s7674 + $0x3a0] sm:$0xff]
    %v7792 = vld [vmem:[%s7674 + $0x3a8] sm:$0xff]
    %v7793 = vld [vmem:[%s7674 + $0x3b0] sm:$0xff]
    %v7794 = vld [vmem:[%s7674 + $0x3b8] sm:$0xff]
    %v7795 = vld [vmem:[%s7674 + $0x3c0] sm:$0xff]
    %v7796 = vld [vmem:[%s7674 + $0x3c8] sm:$0xff]
    %v7797 = vld [vmem:[%s7674 + $0x3d0] sm:$0xff]
    %v7798 = vld [vmem:[%s7674 + $0x3d8] sm:$0xff]
    %v7799 = vld [vmem:[%s7674 + $0x3e0] sm:$0xff]
    %v7800 = vld [vmem:[%s7674 + $0x3e8] sm:$0xff]
    %v7801 = vld [vmem:[%s7674 + $0x3f0] sm:$0xff]
    %v7802 = vld [vmem:[%s7674 + $0x3f8] sm:$0xff]
    %v7803 = vunpack.c.l.b16 %v7594
    %v7804 = vunpack.c.h.b16 %v7594
    %v7805 = vunpack.c.l.b16 %v7607
    %v7806 = vunpack.c.h.b16 %v7607
    %v7807 = vunpack.c.l.b16 %v7617
    %v7808 = vunpack.c.h.b16 %v7617
    %v7809 = vunpack.c.l.b16 %v7627
    %v7810 = vunpack.c.h.b16 %v7627
    %v7811 = vunpack.c.l.b16 %v7640
    %v7812 = vunpack.c.h.b16 %v7640
    %v7813 = vunpack.c.l.b16 %v7653
    %v7814 = vunpack.c.h.b16 %v7653
    %v7815 = vunpack.c.l.b16 %v7663
    %v7816 = vunpack.c.h.b16 %v7663
    %v7817 = vunpack.c.l.b16 %v7673
    %v7818 = vunpack.c.h.b16 %v7673
    %v7819 = vpack.c.b16 %v7807, %v7803
    %v7820 = vpack.c.b16 %v7808, %v7804
    %v7821 = vpack.c.b16 %v7809, %v7805
    %v7822 = vpack.c.b16 %v7810, %v7806
    %v7823 = vpack.c.b16 %v7815, %v7811
    %v7824 = vpack.c.b16 %v7816, %v7812
    %v7825 = vpack.c.b16 %v7817, %v7813
    %v7826 = vpack.c.b16 %v7818, %v7814
    %v7963 = vunpack.c.l.b16 %v7675
    %v7964 = vunpack.c.h.b16 %v7675
    %v7965 = vunpack.c.l.b16 %v7676
    %v7966 = vunpack.c.h.b16 %v7676
    %v7967 = vunpack.c.l.b16 %v7677
    %v7968 = vunpack.c.h.b16 %v7677
    %v7969 = vunpack.c.l.b16 %v7678
    %v7970 = vunpack.c.h.b16 %v7678
    %v7971 = vunpack.c.l.b16 %v7679
    %v7972 = vunpack.c.h.b16 %v7679
    %v7973 = vunpack.c.l.b16 %v7680
    %v7974 = vunpack.c.h.b16 %v7680
    %v7975 = vunpack.c.l.b16 %v7681
    %v7976 = vunpack.c.h.b16 %v7681
    %v7977 = vunpack.c.l.b16 %v7682
    %v7978 = vunpack.c.h.b16 %v7682
    %v7979 = vunpack.c.l.b16 %v7683
    %v7980 = vunpack.c.h.b16 %v7683
    %v7981 = vunpack.c.l.b16 %v7684
    %v7982 = vunpack.c.h.b16 %v7684
    %v7983 = vunpack.c.l.b16 %v7685
    %v7984 = vunpack.c.h.b16 %v7685
    %v7985 = vunpack.c.l.b16 %v7686
    %v7986 = vunpack.c.h.b16 %v7686
    %v7987 = vunpack.c.l.b16 %v7687
    %v7988 = vunpack.c.h.b16 %v7687
    %v7989 = vunpack.c.l.b16 %v7688
    %v7990 = vunpack.c.h.b16 %v7688
    %v7991 = vunpack.c.l.b16 %v7689
    %v7992 = vunpack.c.h.b16 %v7689
    %v7993 = vunpack.c.l.b16 %v7690
    %v7994 = vunpack.c.h.b16 %v7690
    %v7995 = vunpack.c.l.b16 %v7691
    %v7996 = vunpack.c.h.b16 %v7691
    %v7997 = vunpack.c.l.b16 %v7692
    %v7998 = vunpack.c.h.b16 %v7692
    %v7999 = vunpack.c.l.b16 %v7693
    %v8000 = vunpack.c.h.b16 %v7693
    %v8001 = vunpack.c.l.b16 %v7694
    %v8002 = vunpack.c.h.b16 %v7694
    %v8003 = vunpack.c.l.b16 %v7695
    %v8004 = vunpack.c.h.b16 %v7695
    %v8005 = vunpack.c.l.b16 %v7696
    %v8006 = vunpack.c.h.b16 %v7696
    %v8007 = vunpack.c.l.b16 %v7697
    %v8008 = vunpack.c.h.b16 %v7697
    %v8009 = vunpack.c.l.b16 %v7698
    %v8010 = vunpack.c.h.b16 %v7698
    %v8011 = vunpack.c.l.b16 %v7699
    %v8012 = vunpack.c.h.b16 %v7699
    %v8013 = vunpack.c.l.b16 %v7700
    %v8014 = vunpack.c.h.b16 %v7700
    %v8015 = vunpack.c.l.b16 %v7701
    %v8016 = vunpack.c.h.b16 %v7701
    %v8017 = vunpack.c.l.b16 %v7702
    %v8018 = vunpack.c.h.b16 %v7702
    %v8019 = vunpack.c.l.b16 %v7703
    %v8020 = vunpack.c.h.b16 %v7703
    %v8021 = vunpack.c.l.b16 %v7704
    %v8022 = vunpack.c.h.b16 %v7704
    %v8023 = vunpack.c.l.b16 %v7705
    %v8024 = vunpack.c.h.b16 %v7705
    %v8025 = vunpack.c.l.b16 %v7706
    %v8026 = vunpack.c.h.b16 %v7706
    %v8027 = vunpack.c.l.b16 %v7707
    %v8028 = vunpack.c.h.b16 %v7707
    %v8029 = vunpack.c.l.b16 %v7708
    %v8030 = vunpack.c.h.b16 %v7708
    %v8031 = vunpack.c.l.b16 %v7709
    %v8032 = vunpack.c.h.b16 %v7709
    %v8033 = vunpack.c.l.b16 %v7710
    %v8034 = vunpack.c.h.b16 %v7710
    %v8035 = vunpack.c.l.b16 %v7711
    %v8036 = vunpack.c.h.b16 %v7711
    %v8037 = vunpack.c.l.b16 %v7712
    %v8038 = vunpack.c.h.b16 %v7712
    %v8039 = vunpack.c.l.b16 %v7713
    %v8040 = vunpack.c.h.b16 %v7713
    %v8041 = vunpack.c.l.b16 %v7714
    %v8042 = vunpack.c.h.b16 %v7714
    %v8043 = vunpack.c.l.b16 %v7715
    %v8044 = vunpack.c.h.b16 %v7715
    %v8045 = vunpack.c.l.b16 %v7716
    %v8046 = vunpack.c.h.b16 %v7716
    %v8047 = vunpack.c.l.b16 %v7717
    %v8048 = vunpack.c.h.b16 %v7717
    %v8049 = vunpack.c.l.b16 %v7718
    %v8050 = vunpack.c.h.b16 %v7718
    %v8051 = vunpack.c.l.b16 %v7719
    %v8052 = vunpack.c.h.b16 %v7719
    %v8053 = vunpack.c.l.b16 %v7720
    %v8054 = vunpack.c.h.b16 %v7720
    %v8055 = vunpack.c.l.b16 %v7721
    %v8056 = vunpack.c.h.b16 %v7721
    %v8057 = vunpack.c.l.b16 %v7722
    %v8058 = vunpack.c.h.b16 %v7722
    %v8059 = vunpack.c.l.b16 %v7723
    %v8060 = vunpack.c.h.b16 %v7723
    %v8061 = vunpack.c.l.b16 %v7724
    %v8062 = vunpack.c.h.b16 %v7724
    %v8063 = vunpack.c.l.b16 %v7725
    %v8064 = vunpack.c.h.b16 %v7725
    %v8065 = vunpack.c.l.b16 %v7726
    %v8066 = vunpack.c.h.b16 %v7726
    %v8067 = vunpack.c.l.b16 %v7727
    %v8068 = vunpack.c.h.b16 %v7727
    %v8069 = vunpack.c.l.b16 %v7728
    %v8070 = vunpack.c.h.b16 %v7728
    %v8071 = vunpack.c.l.b16 %v7729
    %v8072 = vunpack.c.h.b16 %v7729
    %v8073 = vunpack.c.l.b16 %v7730
    %v8074 = vunpack.c.h.b16 %v7730
    %v8075 = vunpack.c.l.b16 %v7731
    %v8076 = vunpack.c.h.b16 %v7731
    %v8077 = vunpack.c.l.b16 %v7732
    %v8078 = vunpack.c.h.b16 %v7732
    %v8079 = vunpack.c.l.b16 %v7733
    %v8080 = vunpack.c.h.b16 %v7733
    %v8081 = vunpack.c.l.b16 %v7734
    %v8082 = vunpack.c.h.b16 %v7734
    %v8083 = vunpack.c.l.b16 %v7735
    %v8084 = vunpack.c.h.b16 %v7735
    %v8085 = vunpack.c.l.b16 %v7736
    %v8086 = vunpack.c.h.b16 %v7736
    %v8087 = vunpack.c.l.b16 %v7737
    %v8088 = vunpack.c.h.b16 %v7737
    %v8089 = vunpack.c.l.b16 %v7738
    %v8090 = vunpack.c.h.b16 %v7738
    %v8091 = vunpack.c.l.b16 %v7739
    %v8092 = vunpack.c.h.b16 %v7739
    %v8093 = vunpack.c.l.b16 %v7740
    %v8094 = vunpack.c.h.b16 %v7740
    %v8095 = vunpack.c.l.b16 %v7741
    %v8096 = vunpack.c.h.b16 %v7741
    %v8097 = vunpack.c.l.b16 %v7742
    %v8098 = vunpack.c.h.b16 %v7742
    %v8099 = vunpack.c.l.b16 %v7743
    %v8100 = vunpack.c.h.b16 %v7743
    %v8101 = vunpack.c.l.b16 %v7744
    %v8102 = vunpack.c.h.b16 %v7744
    %v8103 = vunpack.c.l.b16 %v7745
    %v8104 = vunpack.c.h.b16 %v7745
    %v8105 = vunpack.c.l.b16 %v7746
    %v8106 = vunpack.c.h.b16 %v7746
    %v8107 = vunpack.c.l.b16 %v7747
    %v8108 = vunpack.c.h.b16 %v7747
    %v8109 = vunpack.c.l.b16 %v7748
    %v8110 = vunpack.c.h.b16 %v7748
    %v8111 = vunpack.c.l.b16 %v7749
    %v8112 = vunpack.c.h.b16 %v7749
    %v8113 = vunpack.c.l.b16 %v7750
    %v8114 = vunpack.c.h.b16 %v7750
    %v8115 = vunpack.c.l.b16 %v7751
    %v8116 = vunpack.c.h.b16 %v7751
    %v8117 = vunpack.c.l.b16 %v7752
    %v8118 = vunpack.c.h.b16 %v7752
    %v8119 = vunpack.c.l.b16 %v7753
    %v8120 = vunpack.c.h.b16 %v7753
    %v8121 = vunpack.c.l.b16 %v7754
    %v8122 = vunpack.c.h.b16 %v7754
    %v8123 = vunpack.c.l.b16 %v7755
    %v8124 = vunpack.c.h.b16 %v7755
    %v8125 = vunpack.c.l.b16 %v7756
    %v8126 = vunpack.c.h.b16 %v7756
    %v8127 = vunpack.c.l.b16 %v7757
    %v8128 = vunpack.c.h.b16 %v7757
    %v8129 = vunpack.c.l.b16 %v7758
    %v8130 = vunpack.c.h.b16 %v7758
    %v8131 = vunpack.c.l.b16 %v7759
    %v8132 = vunpack.c.h.b16 %v7759
    %v8133 = vunpack.c.l.b16 %v7760
    %v8134 = vunpack.c.h.b16 %v7760
    %v8135 = vunpack.c.l.b16 %v7761
    %v8136 = vunpack.c.h.b16 %v7761
    %v8137 = vunpack.c.l.b16 %v7762
    %v8138 = vunpack.c.h.b16 %v7762
    %v8139 = vunpack.c.l.b16 %v7763
    %v8140 = vunpack.c.h.b16 %v7763
    %v8141 = vunpack.c.l.b16 %v7764
    %v8142 = vunpack.c.h.b16 %v7764
    %v8143 = vunpack.c.l.b16 %v7765
    %v8144 = vunpack.c.h.b16 %v7765
    %v8145 = vunpack.c.l.b16 %v7766
    %v8146 = vunpack.c.h.b16 %v7766
    %v8147 = vunpack.c.l.b16 %v7767
    %v8148 = vunpack.c.h.b16 %v7767
    %v8149 = vunpack.c.l.b16 %v7768
    %v8150 = vunpack.c.h.b16 %v7768
    %v8151 = vunpack.c.l.b16 %v7769
    %v8152 = vunpack.c.h.b16 %v7769
    %v8153 = vunpack.c.l.b16 %v7770
    %v8154 = vunpack.c.h.b16 %v7770
    %v8155 = vunpack.c.l.b16 %v7771
    %v8156 = vunpack.c.h.b16 %v7771
    %v8157 = vunpack.c.l.b16 %v7772
    %v8158 = vunpack.c.h.b16 %v7772
    %v8159 = vunpack.c.l.b16 %v7773
    %v8160 = vunpack.c.h.b16 %v7773
    %v8161 = vunpack.c.l.b16 %v7774
    %v8162 = vunpack.c.h.b16 %v7774
    %v8163 = vunpack.c.l.b16 %v7775
    %v8164 = vunpack.c.h.b16 %v7775
    %v8165 = vunpack.c.l.b16 %v7776
    %v8166 = vunpack.c.h.b16 %v7776
    %v8167 = vunpack.c.l.b16 %v7777
    %v8168 = vunpack.c.h.b16 %v7777
    %v8169 = vunpack.c.l.b16 %v7778
    %v8170 = vunpack.c.h.b16 %v7778
    %v8171 = vunpack.c.l.b16 %v7779
    %v8172 = vunpack.c.h.b16 %v7779
    %v8173 = vunpack.c.l.b16 %v7780
    %v8174 = vunpack.c.h.b16 %v7780
    %v8175 = vunpack.c.l.b16 %v7781
    %v8176 = vunpack.c.h.b16 %v7781
    %v8177 = vunpack.c.l.b16 %v7782
    %v8178 = vunpack.c.h.b16 %v7782
    %v8179 = vunpack.c.l.b16 %v7783
    %v8180 = vunpack.c.h.b16 %v7783
    %v8181 = vunpack.c.l.b16 %v7784
    %v8182 = vunpack.c.h.b16 %v7784
    %v8183 = vunpack.c.l.b16 %v7785
    %v8184 = vunpack.c.h.b16 %v7785
    %v8185 = vunpack.c.l.b16 %v7786
    %v8186 = vunpack.c.h.b16 %v7786
    %v8187 = vunpack.c.l.b16 %v7787
    %v8188 = vunpack.c.h.b16 %v7787
    %v8189 = vunpack.c.l.b16 %v7788
    %v8190 = vunpack.c.h.b16 %v7788
    %v8191 = vunpack.c.l.b16 %v7789
    %v8192 = vunpack.c.h.b16 %v7789
    %v8193 = vunpack.c.l.b16 %v7790
    %v8194 = vunpack.c.h.b16 %v7790
    %v8195 = vunpack.c.l.b16 %v7791
    %v8196 = vunpack.c.h.b16 %v7791
    %v8197 = vunpack.c.l.b16 %v7792
    %v8198 = vunpack.c.h.b16 %v7792
    %v8199 = vunpack.c.l.b16 %v7793
    %v8200 = vunpack.c.h.b16 %v7793
    %v8201 = vunpack.c.l.b16 %v7794
    %v8202 = vunpack.c.h.b16 %v7794
    %v8203 = vunpack.c.l.b16 %v7795
    %v8204 = vunpack.c.h.b16 %v7795
    %v8205 = vunpack.c.l.b16 %v7796
    %v8206 = vunpack.c.h.b16 %v7796
    %v8207 = vunpack.c.l.b16 %v7797
    %v8208 = vunpack.c.h.b16 %v7797
    %v8209 = vunpack.c.l.b16 %v7798
    %v8210 = vunpack.c.h.b16 %v7798
    %v8211 = vunpack.c.l.b16 %v7799
    %v8212 = vunpack.c.h.b16 %v7799
    %v8213 = vunpack.c.l.b16 %v7800
    %v8214 = vunpack.c.h.b16 %v7800
    %v8215 = vunpack.c.l.b16 %v7801
    %v8216 = vunpack.c.h.b16 %v7801
    %v8217 = vunpack.c.l.b16 %v7802
    %v8218 = vunpack.c.h.b16 %v7802
    %v8219 = vpack.c.b16 %v7967, %v7963
    %v8220 = vpack.c.b16 %v7968, %v7964
    %v8221 = vpack.c.b16 %v7969, %v7965
    %v8222 = vpack.c.b16 %v7970, %v7966
    %v8223 = vpack.c.b16 %v7975, %v7971
    %v8224 = vpack.c.b16 %v7976, %v7972
    %v8225 = vpack.c.b16 %v7977, %v7973
    %v8226 = vpack.c.b16 %v7978, %v7974
    %v8227 = vpack.c.b16 %v7983, %v7979
    %v8228 = vpack.c.b16 %v7984, %v7980
    %v8229 = vpack.c.b16 %v7985, %v7981
    %v8230 = vpack.c.b16 %v7986, %v7982
    %v8231 = vpack.c.b16 %v7991, %v7987
    %v8232 = vpack.c.b16 %v7992, %v7988
    %v8233 = vpack.c.b16 %v7993, %v7989
    %v8234 = vpack.c.b16 %v7994, %v7990
    %v8235 = vpack.c.b16 %v7999, %v7995
    %v8236 = vpack.c.b16 %v8000, %v7996
    %v8237 = vpack.c.b16 %v8001, %v7997
    %v8238 = vpack.c.b16 %v8002, %v7998
    %v8239 = vpack.c.b16 %v8007, %v8003
    %v8240 = vpack.c.b16 %v8008, %v8004
    %v8241 = vpack.c.b16 %v8009, %v8005
    %v8242 = vpack.c.b16 %v8010, %v8006
    %v8243 = vpack.c.b16 %v8015, %v8011
    %v8244 = vpack.c.b16 %v8016, %v8012
    %v8245 = vpack.c.b16 %v8017, %v8013
    %v8246 = vpack.c.b16 %v8018, %v8014
    %v8247 = vpack.c.b16 %v8023, %v8019
    %v8248 = vpack.c.b16 %v8024, %v8020
    %v8249 = vpack.c.b16 %v8025, %v8021
    %v8250 = vpack.c.b16 %v8026, %v8022
    %v8251 = vpack.c.b16 %v8031, %v8027
    %v8252 = vpack.c.b16 %v8032, %v8028
    %v8253 = vpack.c.b16 %v8033, %v8029
    %v8254 = vpack.c.b16 %v8034, %v8030
    %v8255 = vpack.c.b16 %v8039, %v8035
    %v8256 = vpack.c.b16 %v8040, %v8036
    %v8257 = vpack.c.b16 %v8041, %v8037
    %v8258 = vpack.c.b16 %v8042, %v8038
    %v8259 = vpack.c.b16 %v8047, %v8043
    %v8260 = vpack.c.b16 %v8048, %v8044
    %v8261 = vpack.c.b16 %v8049, %v8045
    %v8262 = vpack.c.b16 %v8050, %v8046
    %v8263 = vpack.c.b16 %v8055, %v8051
    %v8264 = vpack.c.b16 %v8056, %v8052
    %v8265 = vpack.c.b16 %v8057, %v8053
    %v8266 = vpack.c.b16 %v8058, %v8054
    %v8267 = vpack.c.b16 %v8063, %v8059
    %v8268 = vpack.c.b16 %v8064, %v8060
    %v8269 = vpack.c.b16 %v8065, %v8061
    %v8270 = vpack.c.b16 %v8066, %v8062
    %v8271 = vpack.c.b16 %v8071, %v8067
    %v8272 = vpack.c.b16 %v8072, %v8068
    %v8273 = vpack.c.b16 %v8073, %v8069
    %v8274 = vpack.c.b16 %v8074, %v8070
    %v8275 = vpack.c.b16 %v8079, %v8075
    %v8276 = vpack.c.b16 %v8080, %v8076
    %v8277 = vpack.c.b16 %v8081, %v8077
    %v8278 = vpack.c.b16 %v8082, %v8078
    %v8279 = vpack.c.b16 %v8087, %v8083
    %v8280 = vpack.c.b16 %v8088, %v8084
    %v8281 = vpack.c.b16 %v8089, %v8085
    %v8282 = vpack.c.b16 %v8090, %v8086
    %v8283 = vpack.c.b16 %v8095, %v8091
    %v8284 = vpack.c.b16 %v8096, %v8092
    %v8285 = vpack.c.b16 %v8097, %v8093
    %v8286 = vpack.c.b16 %v8098, %v8094
    %v8287 = vpack.c.b16 %v8103, %v8099
    %v8288 = vpack.c.b16 %v8104, %v8100
    %v8289 = vpack.c.b16 %v8105, %v8101
    %v8290 = vpack.c.b16 %v8106, %v8102
    %v8291 = vpack.c.b16 %v8111, %v8107
    %v8292 = vpack.c.b16 %v8112, %v8108
    %v8293 = vpack.c.b16 %v8113, %v8109
    %v8294 = vpack.c.b16 %v8114, %v8110
    %v8295 = vpack.c.b16 %v8119, %v8115
    %v8296 = vpack.c.b16 %v8120, %v8116
    %v8297 = vpack.c.b16 %v8121, %v8117
    %v8298 = vpack.c.b16 %v8122, %v8118
    %v8299 = vpack.c.b16 %v8127, %v8123
    %v8300 = vpack.c.b16 %v8128, %v8124
    %v8301 = vpack.c.b16 %v8129, %v8125
    %v8302 = vpack.c.b16 %v8130, %v8126
    %v8303 = vpack.c.b16 %v8135, %v8131
    %v8304 = vpack.c.b16 %v8136, %v8132
    %v8305 = vpack.c.b16 %v8137, %v8133
    %v8306 = vpack.c.b16 %v8138, %v8134
    %v8307 = vpack.c.b16 %v8143, %v8139
    %v8308 = vpack.c.b16 %v8144, %v8140
    %v8309 = vpack.c.b16 %v8145, %v8141
    %v8310 = vpack.c.b16 %v8146, %v8142
    %v8311 = vpack.c.b16 %v8151, %v8147
    %v8312 = vpack.c.b16 %v8152, %v8148
    %v8313 = vpack.c.b16 %v8153, %v8149
    %v8314 = vpack.c.b16 %v8154, %v8150
    %v8315 = vpack.c.b16 %v8159, %v8155
    %v8316 = vpack.c.b16 %v8160, %v8156
    %v8317 = vpack.c.b16 %v8161, %v8157
    %v8318 = vpack.c.b16 %v8162, %v8158
    %v8319 = vpack.c.b16 %v8167, %v8163
    %v8320 = vpack.c.b16 %v8168, %v8164
    %v8321 = vpack.c.b16 %v8169, %v8165
    %v8322 = vpack.c.b16 %v8170, %v8166
    %v8323 = vpack.c.b16 %v8175, %v8171
    %v8324 = vpack.c.b16 %v8176, %v8172
    %v8325 = vpack.c.b16 %v8177, %v8173
    %v8326 = vpack.c.b16 %v8178, %v8174
    %v8327 = vpack.c.b16 %v8183, %v8179
    %v8328 = vpack.c.b16 %v8184, %v8180
    %v8329 = vpack.c.b16 %v8185, %v8181
    %v8330 = vpack.c.b16 %v8186, %v8182
    %v8331 = vpack.c.b16 %v8191, %v8187
    %v8332 = vpack.c.b16 %v8192, %v8188
    %v8333 = vpack.c.b16 %v8193, %v8189
    %v8334 = vpack.c.b16 %v8194, %v8190
    %v8335 = vpack.c.b16 %v8199, %v8195
    %v8336 = vpack.c.b16 %v8200, %v8196
    %v8337 = vpack.c.b16 %v8201, %v8197
    %v8338 = vpack.c.b16 %v8202, %v8198
    %v8339 = vpack.c.b16 %v8207, %v8203
    %v8340 = vpack.c.b16 %v8208, %v8204
    %v8341 = vpack.c.b16 %v8209, %v8205
    %v8342 = vpack.c.b16 %v8210, %v8206
    %v8343 = vpack.c.b16 %v8215, %v8211
    %v8344 = vpack.c.b16 %v8216, %v8212
    %v8345 = vpack.c.b16 %v8217, %v8213
    %v8346 = vpack.c.b16 %v8218, %v8214
    %8475 = vmatpush.bf16.msra.mxu0 %v8247
    %8476 = vmatpush.bf16.msra.mxu0 %v8243
    %8477 = vmatpush.bf16.msra.mxu0 %v8239
    %8478 = vmatpush.bf16.msra.mxu0 %v8235
    %8479 = vmatpush.bf16.msra.mxu0 %v8231
    %8480 = vmatpush.bf16.msra.mxu0 %v8227
    %8481 = vmatpush.bf16.msra.mxu0 %v8223
    %8482 = vmatpush.bf16.msra.mxu0 %v8219
    %8483 = vmatmul.bf16.gmra.mxu0 %v7819
    %v8484 = vpop.f32.mrf.mxu0
    %v8485 = vadd.f32 0.0, %v8484
    %v8486 = vpop.f32.mrf.mxu0
    %v8487 = vadd.f32 0.0, %v8486
    %8488 = vmatmul.bf16.gmra.mxu0 %v7823
    %v8489 = vpop.f32.mrf.mxu0
    %v8490 = vadd.f32 0.0, %v8489
    %v8491 = vpop.f32.mrf.mxu0
    %v8492 = vadd.f32 0.0, %v8491
    %8493 = vdwg.mxu0
    %8494 = vmatpush.bf16.msra.mxu0 %v8279
    %8495 = vmatpush.bf16.msra.mxu0 %v8275
    %8496 = vmatpush.bf16.msra.mxu0 %v8271
    %8497 = vmatpush.bf16.msra.mxu0 %v8267
    %8498 = vmatpush.bf16.msra.mxu0 %v8263
    %8499 = vmatpush.bf16.msra.mxu0 %v8259
    %8500 = vmatpush.bf16.msra.mxu0 %v8255
    %8501 = vmatpush.bf16.msra.mxu0 %v8251
    %8502 = vmatmul.bf16.gmra.mxu0 %v7820
    %v8503 = vpop.f32.mrf.mxu0
    %v8504 = vadd.f32 %v8485, %v8503
    %v8505 = vpop.f32.mrf.mxu0
    %v8506 = vadd.f32 %v8487, %v8505
    %8507 = vmatmul.bf16.gmra.mxu0 %v7824
    %v8508 = vpop.f32.mrf.mxu0
    %v8509 = vadd.f32 %v8490, %v8508
    %v8510 = vpop.f32.mrf.mxu0
    %v8511 = vadd.f32 %v8492, %v8510
    %8512 = vdwg.mxu0
    %8513 = vmatpush.bf16.msra.mxu0 %v8311
    %8514 = vmatpush.bf16.msra.mxu0 %v8307
    %8515 = vmatpush.bf16.msra.mxu0 %v8303
    %8516 = vmatpush.bf16.msra.mxu0 %v8299
    %8517 = vmatpush.bf16.msra.mxu0 %v8295
    %8518 = vmatpush.bf16.msra.mxu0 %v8291
    %8519 = vmatpush.bf16.msra.mxu0 %v8287
    %8520 = vmatpush.bf16.msra.mxu0 %v8283
    %8521 = vmatmul.bf16.gmra.mxu0 %v7821
    %v8522 = vpop.f32.mrf.mxu0
    %v8523 = vadd.f32 %v8504, %v8522
    %v8524 = vpop.f32.mrf.mxu0
    %v8525 = vadd.f32 %v8506, %v8524
    %8526 = vmatmul.bf16.gmra.mxu0 %v7825
    %v8527 = vpop.f32.mrf.mxu0
    %v8528 = vadd.f32 %v8509, %v8527
    %v8529 = vpop.f32.mrf.mxu0
    %v8530 = vadd.f32 %v8511, %v8529
    %8531 = vdwg.mxu0
    %8532 = vmatpush.bf16.msra.mxu0 %v8343
    %8533 = vmatpush.bf16.msra.mxu0 %v8339
    %8534 = vmatpush.bf16.msra.mxu0 %v8335
    %8535 = vmatpush.bf16.msra.mxu0 %v8331
    %8536 = vmatpush.bf16.msra.mxu0 %v8327
    %8537 = vmatpush.bf16.msra.mxu0 %v8323
    %8538 = vmatpush.bf16.msra.mxu0 %v8319
    %8539 = vmatpush.bf16.msra.mxu0 %v8315
    %8540 = vmatmul.bf16.gmra.mxu0 %v7822
    %v8541 = vpop.f32.mrf.mxu0
    %v8542 = vadd.f32 %v8523, %v8541
    %v8543 = vpop.f32.mrf.mxu0
    %v8544 = vadd.f32 %v8525, %v8543
    %8545 = vmatmul.bf16.gmra.mxu0 %v7826
    %v8546 = vpop.f32.mrf.mxu0
    %v8547 = vadd.f32 %v8528, %v8546
    %v8548 = vpop.f32.mrf.mxu0
    %v8549 = vadd.f32 %v8530, %v8548
    %8550 = vdwg.mxu0
    %8551 = vmatpush.bf16.msra.mxu0 %v8248
    %8552 = vmatpush.bf16.msra.mxu0 %v8244
    %8553 = vmatpush.bf16.msra.mxu0 %v8240
    %8554 = vmatpush.bf16.msra.mxu0 %v8236
    %8555 = vmatpush.bf16.msra.mxu0 %v8232
    %8556 = vmatpush.bf16.msra.mxu0 %v8228
    %8557 = vmatpush.bf16.msra.mxu0 %v8224
    %8558 = vmatpush.bf16.msra.mxu0 %v8220
    %8559 = vmatmul.bf16.gmra.mxu0 %v7819
    %v8560 = vpop.f32.mrf.mxu0
    %v8561 = vadd.f32 0.0, %v8560
    %v8562 = vpop.f32.mrf.mxu0
    %v8563 = vadd.f32 0.0, %v8562
    %8564 = vmatmul.bf16.gmra.mxu0 %v7823
    %v8565 = vpop.f32.mrf.mxu0
    %v8566 = vadd.f32 0.0, %v8565
    %v8567 = vpop.f32.mrf.mxu0
    %v8568 = vadd.f32 0.0, %v8567
    %8569 = vdwg.mxu0
    %8570 = vmatpush.bf16.msra.mxu0 %v8280
    %8571 = vmatpush.bf16.msra.mxu0 %v8276
    %8572 = vmatpush.bf16.msra.mxu0 %v8272
    %8573 = vmatpush.bf16.msra.mxu0 %v8268
    %8574 = vmatpush.bf16.msra.mxu0 %v8264
    %8575 = vmatpush.bf16.msra.mxu0 %v8260
    %8576 = vmatpush.bf16.msra.mxu0 %v8256
    %8577 = vmatpush.bf16.msra.mxu0 %v8252
    %8578 = vmatmul.bf16.gmra.mxu0 %v7820
    %v8579 = vpop.f32.mrf.mxu0
    %v8580 = vadd.f32 %v8561, %v8579
    %v8581 = vpop.f32.mrf.mxu0
    %v8582 = vadd.f32 %v8563, %v8581
    %8583 = vmatmul.bf16.gmra.mxu0 %v7824
    %v8584 = vpop.f32.mrf.mxu0
    %v8585 = vadd.f32 %v8566, %v8584
    %v8586 = vpop.f32.mrf.mxu0
    %v8587 = vadd.f32 %v8568, %v8586
    %8588 = vdwg.mxu0
    %8589 = vmatpush.bf16.msra.mxu0 %v8312
    %8590 = vmatpush.bf16.msra.mxu0 %v8308
    %8591 = vmatpush.bf16.msra.mxu0 %v8304
    %8592 = vmatpush.bf16.msra.mxu0 %v8300
    %8593 = vmatpush.bf16.msra.mxu0 %v8296
    %8594 = vmatpush.bf16.msra.mxu0 %v8292
    %8595 = vmatpush.bf16.msra.mxu0 %v8288
    %8596 = vmatpush.bf16.msra.mxu0 %v8284
    %8597 = vmatmul.bf16.gmra.mxu0 %v7821
    %v8598 = vpop.f32.mrf.mxu0
    %v8599 = vadd.f32 %v8580, %v8598
    %v8600 = vpop.f32.mrf.mxu0
    %v8601 = vadd.f32 %v8582, %v8600
    %8602 = vmatmul.bf16.gmra.mxu0 %v7825
    %v8603 = vpop.f32.mrf.mxu0
    %v8604 = vadd.f32 %v8585, %v8603
    %v8605 = vpop.f32.mrf.mxu0
    %v8606 = vadd.f32 %v8587, %v8605
    %8607 = vdwg.mxu0
    %8608 = vmatpush.bf16.msra.mxu0 %v8344
    %8609 = vmatpush.bf16.msra.mxu0 %v8340
    %8610 = vmatpush.bf16.msra.mxu0 %v8336
    %8611 = vmatpush.bf16.msra.mxu0 %v8332
    %8612 = vmatpush.bf16.msra.mxu0 %v8328
    %8613 = vmatpush.bf16.msra.mxu0 %v8324
    %8614 = vmatpush.bf16.msra.mxu0 %v8320
    %8615 = vmatpush.bf16.msra.mxu0 %v8316
    %8616 = vmatmul.bf16.gmra.mxu0 %v7822
    %v8617 = vpop.f32.mrf.mxu0
    %v8618 = vadd.f32 %v8599, %v8617
    %v8619 = vpop.f32.mrf.mxu0
    %v8620 = vadd.f32 %v8601, %v8619
    %8621 = vmatmul.bf16.gmra.mxu0 %v7826
    %v8622 = vpop.f32.mrf.mxu0
    %v8623 = vadd.f32 %v8604, %v8622
    %v8624 = vpop.f32.mrf.mxu0
    %v8625 = vadd.f32 %v8606, %v8624
    %8626 = vdwg.mxu0
    %8627 = vmatpush.bf16.msra.mxu0 %v8249
    %8628 = vmatpush.bf16.msra.mxu0 %v8245
    %8629 = vmatpush.bf16.msra.mxu0 %v8241
    %8630 = vmatpush.bf16.msra.mxu0 %v8237
    %8631 = vmatpush.bf16.msra.mxu0 %v8233
    %8632 = vmatpush.bf16.msra.mxu0 %v8229
    %8633 = vmatpush.bf16.msra.mxu0 %v8225
    %8634 = vmatpush.bf16.msra.mxu0 %v8221
    %8635 = vmatmul.bf16.gmra.mxu0 %v7819
    %v8636 = vpop.f32.mrf.mxu0
    %v8637 = vadd.f32 0.0, %v8636
    %v8638 = vpop.f32.mrf.mxu0
    %v8639 = vadd.f32 0.0, %v8638
    %8640 = vmatmul.bf16.gmra.mxu0 %v7823
    %v8641 = vpop.f32.mrf.mxu0
    %v8642 = vadd.f32 0.0, %v8641
    %v8643 = vpop.f32.mrf.mxu0
    %v8644 = vadd.f32 0.0, %v8643
    %8645 = vdwg.mxu0
    %8646 = vmatpush.bf16.msra.mxu0 %v8281
    %8647 = vmatpush.bf16.msra.mxu0 %v8277
    %8648 = vmatpush.bf16.msra.mxu0 %v8273
    %8649 = vmatpush.bf16.msra.mxu0 %v8269
    %8650 = vmatpush.bf16.msra.mxu0 %v8265
    %8651 = vmatpush.bf16.msra.mxu0 %v8261
    %8652 = vmatpush.bf16.msra.mxu0 %v8257
    %8653 = vmatpush.bf16.msra.mxu0 %v8253
    %8654 = vmatmul.bf16.gmra.mxu0 %v7820
    %v8655 = vpop.f32.mrf.mxu0
    %v8656 = vadd.f32 %v8637, %v8655
    %v8657 = vpop.f32.mrf.mxu0
    %v8658 = vadd.f32 %v8639, %v8657
    %8659 = vmatmul.bf16.gmra.mxu0 %v7824
    %v8660 = vpop.f32.mrf.mxu0
    %v8661 = vadd.f32 %v8642, %v8660
    %v8662 = vpop.f32.mrf.mxu0
    %v8663 = vadd.f32 %v8644, %v8662
    %8664 = vdwg.mxu0
    %8665 = vmatpush.bf16.msra.mxu0 %v8313
    %8666 = vmatpush.bf16.msra.mxu0 %v8309
    %8667 = vmatpush.bf16.msra.mxu0 %v8305
    %8668 = vmatpush.bf16.msra.mxu0 %v8301
    %8669 = vmatpush.bf16.msra.mxu0 %v8297
    %8670 = vmatpush.bf16.msra.mxu0 %v8293
    %8671 = vmatpush.bf16.msra.mxu0 %v8289
    %8672 = vmatpush.bf16.msra.mxu0 %v8285
    %8673 = vmatmul.bf16.gmra.mxu0 %v7821
    %v8674 = vpop.f32.mrf.mxu0
    %v8675 = vadd.f32 %v8656, %v8674
    %v8676 = vpop.f32.mrf.mxu0
    %v8677 = vadd.f32 %v8658, %v8676
    %8678 = vmatmul.bf16.gmra.mxu0 %v7825
    %v8679 = vpop.f32.mrf.mxu0
    %v8680 = vadd.f32 %v8661, %v8679
    %v8681 = vpop.f32.mrf.mxu0
    %v8682 = vadd.f32 %v8663, %v8681
    %8683 = vdwg.mxu0
    %8684 = vmatpush.bf16.msra.mxu0 %v8345
    %8685 = vmatpush.bf16.msra.mxu0 %v8341
    %8686 = vmatpush.bf16.msra.mxu0 %v8337
    %8687 = vmatpush.bf16.msra.mxu0 %v8333
    %8688 = vmatpush.bf16.msra.mxu0 %v8329
    %8689 = vmatpush.bf16.msra.mxu0 %v8325
    %8690 = vmatpush.bf16.msra.mxu0 %v8321
    %8691 = vmatpush.bf16.msra.mxu0 %v8317
    %8692 = vmatmul.bf16.gmra.mxu0 %v7822
    %v8693 = vpop.f32.mrf.mxu0
    %v8694 = vadd.f32 %v8675, %v8693
    %v8695 = vpop.f32.mrf.mxu0
    %v8696 = vadd.f32 %v8677, %v8695
    %8697 = vmatmul.bf16.gmra.mxu0 %v7826
    %v8698 = vpop.f32.mrf.mxu0
    %v8699 = vadd.f32 %v8680, %v8698
    %v8700 = vpop.f32.mrf.mxu0
    %v8701 = vadd.f32 %v8682, %v8700
    %8702 = vdwg.mxu0
    %8703 = vmatpush.bf16.msra.mxu0 %v8250
    %8704 = vmatpush.bf16.msra.mxu0 %v8246
    %8705 = vmatpush.bf16.msra.mxu0 %v8242
    %8706 = vmatpush.bf16.msra.mxu0 %v8238
    %8707 = vmatpush.bf16.msra.mxu0 %v8234
    %8708 = vmatpush.bf16.msra.mxu0 %v8230
    %8709 = vmatpush.bf16.msra.mxu0 %v8226
    %8710 = vmatpush.bf16.msra.mxu0 %v8222
    %8711 = vmatmul.bf16.gmra.mxu0 %v7819
    %v8712 = vpop.f32.mrf.mxu0
    %v8713 = vadd.f32 0.0, %v8712
    %v8714 = vpop.f32.mrf.mxu0
    %v8715 = vadd.f32 0.0, %v8714
    %8716 = vmatmul.bf16.gmra.mxu0 %v7823
    %v8717 = vpop.f32.mrf.mxu0
    %v8718 = vadd.f32 0.0, %v8717
    %v8719 = vpop.f32.mrf.mxu0
    %v8720 = vadd.f32 0.0, %v8719
    %8721 = vdwg.mxu0
    %8722 = vmatpush.bf16.msra.mxu0 %v8282
    %8723 = vmatpush.bf16.msra.mxu0 %v8278
    %8724 = vmatpush.bf16.msra.mxu0 %v8274
    %8725 = vmatpush.bf16.msra.mxu0 %v8270
    %8726 = vmatpush.bf16.msra.mxu0 %v8266
    %8727 = vmatpush.bf16.msra.mxu0 %v8262
    %8728 = vmatpush.bf16.msra.mxu0 %v8258
    %8729 = vmatpush.bf16.msra.mxu0 %v8254
    %8730 = vmatmul.bf16.gmra.mxu0 %v7820
    %v8731 = vpop.f32.mrf.mxu0
    %v8732 = vadd.f32 %v8713, %v8731
    %v8733 = vpop.f32.mrf.mxu0
    %v8734 = vadd.f32 %v8715, %v8733
    %8735 = vmatmul.bf16.gmra.mxu0 %v7824
    %v8736 = vpop.f32.mrf.mxu0
    %v8737 = vadd.f32 %v8718, %v8736
    %v8738 = vpop.f32.mrf.mxu0
    %v8739 = vadd.f32 %v8720, %v8738
    %8740 = vdwg.mxu0
    %8741 = vmatpush.bf16.msra.mxu0 %v8314
    %8742 = vmatpush.bf16.msra.mxu0 %v8310
    %8743 = vmatpush.bf16.msra.mxu0 %v8306
    %8744 = vmatpush.bf16.msra.mxu0 %v8302
    %8745 = vmatpush.bf16.msra.mxu0 %v8298
    %8746 = vmatpush.bf16.msra.mxu0 %v8294
    %8747 = vmatpush.bf16.msra.mxu0 %v8290
    %8748 = vmatpush.bf16.msra.mxu0 %v8286
    %8749 = vmatmul.bf16.gmra.mxu0 %v7821
    %v8750 = vpop.f32.mrf.mxu0
    %v8751 = vadd.f32 %v8732, %v8750
    %v8752 = vpop.f32.mrf.mxu0
    %v8753 = vadd.f32 %v8734, %v8752
    %8754 = vmatmul.bf16.gmra.mxu0 %v7825
    %v8755 = vpop.f32.mrf.mxu0
    %v8756 = vadd.f32 %v8737, %v8755
    %v8757 = vpop.f32.mrf.mxu0
    %v8758 = vadd.f32 %v8739, %v8757
    %8759 = vdwg.mxu0
    %8760 = vmatpush.bf16.msra.mxu0 %v8346
    %8761 = vmatpush.bf16.msra.mxu0 %v8342
    %8762 = vmatpush.bf16.msra.mxu0 %v8338
    %8763 = vmatpush.bf16.msra.mxu0 %v8334
    %8764 = vmatpush.bf16.msra.mxu0 %v8330
    %8765 = vmatpush.bf16.msra.mxu0 %v8326
    %8766 = vmatpush.bf16.msra.mxu0 %v8322
    %8767 = vmatpush.bf16.msra.mxu0 %v8318
    %8768 = vmatmul.bf16.gmra.mxu0 %v7822
    %v8769 = vpop.f32.mrf.mxu0
    %v8770 = vadd.f32 %v8751, %v8769
    %v8771 = vpop.f32.mrf.mxu0
    %v8772 = vadd.f32 %v8753, %v8771
    %8773 = vmatmul.bf16.gmra.mxu0 %v7826
    %v8774 = vpop.f32.mrf.mxu0
    %v8775 = vadd.f32 %v8756, %v8774
    %v8776 = vpop.f32.mrf.mxu0
    %v8777 = vadd.f32 %v8758, %v8776
    %8778 = vdwg.mxu0
    %v8779 = vadd.f32 %v7562, %v8542
    %v8780 = vadd.f32 %v7563, %v8618
    %v8781 = vadd.f32 %v7564, %v8694
    %v8782 = vadd.f32 %v7565, %v8770
    %v8783 = vadd.f32 %v7566, %v8544
    %v8784 = vadd.f32 %v7567, %v8620
    %v8785 = vadd.f32 %v7568, %v8696
    %v8786 = vadd.f32 %v7569, %v8772
    %v8787 = vadd.f32 %v7570, %v8547
    %v8788 = vadd.f32 %v7571, %v8623
    %v8789 = vadd.f32 %v7572, %v8699
    %v8790 = vadd.f32 %v7573, %v8775
    %v8791 = vadd.f32 %v7574, %v8549
    %v8792 = vadd.f32 %v7575, %v8625
    %v8793 = vadd.f32 %v7576, %v8701
    %v8794 = vadd.f32 %v7577, %v8777
    %v8795 = vld [vmem:[#allocation2] sm:$0xcc]
    %v8796 = vld [vmem:[#allocation2 + $0x8] sm:$0xcc]
    %v8797 = vld [vmem:[#allocation2 + $0x30] sm:$0xcc]
    %v8798 = vld [vmem:[#allocation2 + $0x38] sm:$0xcc]
    %v8807 = vrot.slane %v8795, 6
    %v8808 = vrot.slane %v8807, 4
    %v8809 = vrot.slane %v4218, 6
    %v8810 = vsel %vm2686, %v8808, %v8809
    %v8811 = vrot.slane %v8796, 6
    %v8812 = vrot.slane %v8811, 4
    %v8813 = vrot.slane %v4219, 6
    %v8814 = vsel %vm2686, %v8812, %v8813
    %v8815 = vrot.slane %v8809, 4
    %v8816 = vrot.slane %v7578, 6
    %v8817 = vsel %vm2686, %v8815, %v8816
    %v8818 = vrot.slane %v8813, 4
    %v8819 = vrot.slane %v7579, 6
    %v8820 = vsel %vm2686, %v8818, %v8819
    %v8821 = vrot.slane %v8797, 6
    %v8822 = vrot.slane %v8821, 4
    %v8823 = vrot.slane %v4224, 6
    %v8824 = vsel %vm2686, %v8822, %v8823
    %v8825 = vrot.slane %v8798, 6
    %v8826 = vrot.slane %v8825, 4
    %v8827 = vrot.slane %v4225, 6
    %v8828 = vsel %vm2686, %v8826, %v8827
    %v8829 = vrot.slane %v8823, 4
    %v8830 = vrot.slane %v7580, 6
    %v8831 = vsel %vm2686, %v8829, %v8830
    %v8832 = vrot.slane %v8827, 4
    %v8833 = vrot.slane %v7581, 6
    %v8834 = vsel %vm2686, %v8832, %v8833
    %s8835 = scalar_lea.vmem [#allocation9], 4096
    %v8836 = vld [vmem:[%s8835] sm:$0xff]
    %v8837 = vld [vmem:[%s8835 + $0x8] sm:$0xff]
    %v8838 = vld [vmem:[%s8835 + $0x10] sm:$0xff]
    %v8839 = vld [vmem:[%s8835 + $0x18] sm:$0xff]
    %v8840 = vld [vmem:[%s8835 + $0x20] sm:$0xff]
    %v8841 = vld [vmem:[%s8835 + $0x28] sm:$0xff]
    %v8842 = vld [vmem:[%s8835 + $0x30] sm:$0xff]
    %v8843 = vld [vmem:[%s8835 + $0x38] sm:$0xff]
    %v8844 = vld [vmem:[%s8835 + $0x40] sm:$0xff]
    %v8845 = vld [vmem:[%s8835 + $0x48] sm:$0xff]
    %v8846 = vld [vmem:[%s8835 + $0x50] sm:$0xff]
    %v8847 = vld [vmem:[%s8835 + $0x58] sm:$0xff]
    %v8848 = vld [vmem:[%s8835 + $0x60] sm:$0xff]
    %v8849 = vld [vmem:[%s8835 + $0x68] sm:$0xff]
    %v8850 = vld [vmem:[%s8835 + $0x70] sm:$0xff]
    %v8851 = vld [vmem:[%s8835 + $0x78] sm:$0xff]
    %v8852 = vld [vmem:[%s8835 + $0x80] sm:$0xff]
    %v8853 = vld [vmem:[%s8835 + $0x88] sm:$0xff]
    %v8854 = vld [vmem:[%s8835 + $0x90] sm:$0xff]
    %v8855 = vld [vmem:[%s8835 + $0x98] sm:$0xff]
    %v8856 = vld [vmem:[%s8835 + $0xa0] sm:$0xff]
    %v8857 = vld [vmem:[%s8835 + $0xa8] sm:$0xff]
    %v8858 = vld [vmem:[%s8835 + $0xb0] sm:$0xff]
    %v8859 = vld [vmem:[%s8835 + $0xb8] sm:$0xff]
    %v8860 = vld [vmem:[%s8835 + $0xc0] sm:$0xff]
    %v8861 = vld [vmem:[%s8835 + $0xc8] sm:$0xff]
    %v8862 = vld [vmem:[%s8835 + $0xd0] sm:$0xff]
    %v8863 = vld [vmem:[%s8835 + $0xd8] sm:$0xff]
    %v8864 = vld [vmem:[%s8835 + $0xe0] sm:$0xff]
    %v8865 = vld [vmem:[%s8835 + $0xe8] sm:$0xff]
    %v8866 = vld [vmem:[%s8835 + $0xf0] sm:$0xff]
    %v8867 = vld [vmem:[%s8835 + $0xf8] sm:$0xff]
    %v8868 = vld [vmem:[%s8835 + $0x100] sm:$0xff]
    %v8869 = vld [vmem:[%s8835 + $0x108] sm:$0xff]
    %v8870 = vld [vmem:[%s8835 + $0x110] sm:$0xff]
    %v8871 = vld [vmem:[%s8835 + $0x118] sm:$0xff]
    %v8872 = vld [vmem:[%s8835 + $0x120] sm:$0xff]
    %v8873 = vld [vmem:[%s8835 + $0x128] sm:$0xff]
    %v8874 = vld [vmem:[%s8835 + $0x130] sm:$0xff]
    %v8875 = vld [vmem:[%s8835 + $0x138] sm:$0xff]
    %v8876 = vld [vmem:[%s8835 + $0x140] sm:$0xff]
    %v8877 = vld [vmem:[%s8835 + $0x148] sm:$0xff]
    %v8878 = vld [vmem:[%s8835 + $0x150] sm:$0xff]
    %v8879 = vld [vmem:[%s8835 + $0x158] sm:$0xff]
    %v8880 = vld [vmem:[%s8835 + $0x160] sm:$0xff]
    %v8881 = vld [vmem:[%s8835 + $0x168] sm:$0xff]
    %v8882 = vld [vmem:[%s8835 + $0x170] sm:$0xff]
    %v8883 = vld [vmem:[%s8835 + $0x178] sm:$0xff]
    %v8884 = vld [vmem:[%s8835 + $0x180] sm:$0xff]
    %v8885 = vld [vmem:[%s8835 + $0x188] sm:$0xff]
    %v8886 = vld [vmem:[%s8835 + $0x190] sm:$0xff]
    %v8887 = vld [vmem:[%s8835 + $0x198] sm:$0xff]
    %v8888 = vld [vmem:[%s8835 + $0x1a0] sm:$0xff]
    %v8889 = vld [vmem:[%s8835 + $0x1a8] sm:$0xff]
    %v8890 = vld [vmem:[%s8835 + $0x1b0] sm:$0xff]
    %v8891 = vld [vmem:[%s8835 + $0x1b8] sm:$0xff]
    %v8892 = vld [vmem:[%s8835 + $0x1c0] sm:$0xff]
    %v8893 = vld [vmem:[%s8835 + $0x1c8] sm:$0xff]
    %v8894 = vld [vmem:[%s8835 + $0x1d0] sm:$0xff]
    %v8895 = vld [vmem:[%s8835 + $0x1d8] sm:$0xff]
    %v8896 = vld [vmem:[%s8835 + $0x1e0] sm:$0xff]
    %v8897 = vld [vmem:[%s8835 + $0x1e8] sm:$0xff]
    %v8898 = vld [vmem:[%s8835 + $0x1f0] sm:$0xff]
    %v8899 = vld [vmem:[%s8835 + $0x1f8] sm:$0xff]
    %v8900 = vld [vmem:[%s8835 + $0x200] sm:$0xff]
    %v8901 = vld [vmem:[%s8835 + $0x208] sm:$0xff]
    %v8902 = vld [vmem:[%s8835 + $0x210] sm:$0xff]
    %v8903 = vld [vmem:[%s8835 + $0x218] sm:$0xff]
    %v8904 = vld [vmem:[%s8835 + $0x220] sm:$0xff]
    %v8905 = vld [vmem:[%s8835 + $0x228] sm:$0xff]
    %v8906 = vld [vmem:[%s8835 + $0x230] sm:$0xff]
    %v8907 = vld [vmem:[%s8835 + $0x238] sm:$0xff]
    %v8908 = vld [vmem:[%s8835 + $0x240] sm:$0xff]
    %v8909 = vld [vmem:[%s8835 + $0x248] sm:$0xff]
    %v8910 = vld [vmem:[%s8835 + $0x250] sm:$0xff]
    %v8911 = vld [vmem:[%s8835 + $0x258] sm:$0xff]
    %v8912 = vld [vmem:[%s8835 + $0x260] sm:$0xff]
    %v8913 = vld [vmem:[%s8835 + $0x268] sm:$0xff]
    %v8914 = vld [vmem:[%s8835 + $0x270] sm:$0xff]
    %v8915 = vld [vmem:[%s8835 + $0x278] sm:$0xff]
    %v8916 = vld [vmem:[%s8835 + $0x280] sm:$0xff]
    %v8917 = vld [vmem:[%s8835 + $0x288] sm:$0xff]
    %v8918 = vld [vmem:[%s8835 + $0x290] sm:$0xff]
    %v8919 = vld [vmem:[%s8835 + $0x298] sm:$0xff]
    %v8920 = vld [vmem:[%s8835 + $0x2a0] sm:$0xff]
    %v8921 = vld [vmem:[%s8835 + $0x2a8] sm:$0xff]
    %v8922 = vld [vmem:[%s8835 + $0x2b0] sm:$0xff]
    %v8923 = vld [vmem:[%s8835 + $0x2b8] sm:$0xff]
    %v8924 = vld [vmem:[%s8835 + $0x2c0] sm:$0xff]
    %v8925 = vld [vmem:[%s8835 + $0x2c8] sm:$0xff]
    %v8926 = vld [vmem:[%s8835 + $0x2d0] sm:$0xff]
    %v8927 = vld [vmem:[%s8835 + $0x2d8] sm:$0xff]
    %v8928 = vld [vmem:[%s8835 + $0x2e0] sm:$0xff]
    %v8929 = vld [vmem:[%s8835 + $0x2e8] sm:$0xff]
    %v8930 = vld [vmem:[%s8835 + $0x2f0] sm:$0xff]
    %v8931 = vld [vmem:[%s8835 + $0x2f8] sm:$0xff]
    %v8932 = vld [vmem:[%s8835 + $0x300] sm:$0xff]
    %v8933 = vld [vmem:[%s8835 + $0x308] sm:$0xff]
    %v8934 = vld [vmem:[%s8835 + $0x310] sm:$0xff]
    %v8935 = vld [vmem:[%s8835 + $0x318] sm:$0xff]
    %v8936 = vld [vmem:[%s8835 + $0x320] sm:$0xff]
    %v8937 = vld [vmem:[%s8835 + $0x328] sm:$0xff]
    %v8938 = vld [vmem:[%s8835 + $0x330] sm:$0xff]
    %v8939 = vld [vmem:[%s8835 + $0x338] sm:$0xff]
    %v8940 = vld [vmem:[%s8835 + $0x340] sm:$0xff]
    %v8941 = vld [vmem:[%s8835 + $0x348] sm:$0xff]
    %v8942 = vld [vmem:[%s8835 + $0x350] sm:$0xff]
    %v8943 = vld [vmem:[%s8835 + $0x358] sm:$0xff]
    %v8944 = vld [vmem:[%s8835 + $0x360] sm:$0xff]
    %v8945 = vld [vmem:[%s8835 + $0x368] sm:$0xff]
    %v8946 = vld [vmem:[%s8835 + $0x370] sm:$0xff]
    %v8947 = vld [vmem:[%s8835 + $0x378] sm:$0xff]
    %v8948 = vld [vmem:[%s8835 + $0x380] sm:$0xff]
    %v8949 = vld [vmem:[%s8835 + $0x388] sm:$0xff]
    %v8950 = vld [vmem:[%s8835 + $0x390] sm:$0xff]
    %v8951 = vld [vmem:[%s8835 + $0x398] sm:$0xff]
    %v8952 = vld [vmem:[%s8835 + $0x3a0] sm:$0xff]
    %v8953 = vld [vmem:[%s8835 + $0x3a8] sm:$0xff]
    %v8954 = vld [vmem:[%s8835 + $0x3b0] sm:$0xff]
    %v8955 = vld [vmem:[%s8835 + $0x3b8] sm:$0xff]
    %v8956 = vld [vmem:[%s8835 + $0x3c0] sm:$0xff]
    %v8957 = vld [vmem:[%s8835 + $0x3c8] sm:$0xff]
    %v8958 = vld [vmem:[%s8835 + $0x3d0] sm:$0xff]
    %v8959 = vld [vmem:[%s8835 + $0x3d8] sm:$0xff]
    %v8960 = vld [vmem:[%s8835 + $0x3e0] sm:$0xff]
    %v8961 = vld [vmem:[%s8835 + $0x3e8] sm:$0xff]
    %v8962 = vld [vmem:[%s8835 + $0x3f0] sm:$0xff]
    %v8963 = vld [vmem:[%s8835 + $0x3f8] sm:$0xff]
    %v8964 = vunpack.c.l.b16 %v8810
    %v8965 = vunpack.c.h.b16 %v8810
    %v8966 = vunpack.c.l.b16 %v8814
    %v8967 = vunpack.c.h.b16 %v8814
    %v8968 = vunpack.c.l.b16 %v8817
    %v8969 = vunpack.c.h.b16 %v8817
    %v8970 = vunpack.c.l.b16 %v8820
    %v8971 = vunpack.c.h.b16 %v8820
    %v8972 = vunpack.c.l.b16 %v8824
    %v8973 = vunpack.c.h.b16 %v8824
    %v8974 = vunpack.c.l.b16 %v8828
    %v8975 = vunpack.c.h.b16 %v8828
    %v8976 = vunpack.c.l.b16 %v8831
    %v8977 = vunpack.c.h.b16 %v8831
    %v8978 = vunpack.c.l.b16 %v8834
    %v8979 = vunpack.c.h.b16 %v8834
    %v8980 = vpack.c.b16 %v8968, %v8964
    %v8981 = vpack.c.b16 %v8969, %v8965
    %v8982 = vpack.c.b16 %v8970, %v8966
    %v8983 = vpack.c.b16 %v8971, %v8967
    %v8984 = vpack.c.b16 %v8976, %v8972
    %v8985 = vpack.c.b16 %v8977, %v8973
    %v8986 = vpack.c.b16 %v8978, %v8974
    %v8987 = vpack.c.b16 %v8979, %v8975
    %v9124 = vunpack.c.l.b16 %v8836
    %v9125 = vunpack.c.h.b16 %v8836
    %v9126 = vunpack.c.l.b16 %v8837
    %v9127 = vunpack.c.h.b16 %v8837
    %v9128 = vunpack.c.l.b16 %v8838
    %v9129 = vunpack.c.h.b16 %v8838
    %v9130 = vunpack.c.l.b16 %v8839
    %v9131 = vunpack.c.h.b16 %v8839
    %v9132 = vunpack.c.l.b16 %v8840
    %v9133 = vunpack.c.h.b16 %v8840
    %v9134 = vunpack.c.l.b16 %v8841
    %v9135 = vunpack.c.h.b16 %v8841
    %v9136 = vunpack.c.l.b16 %v8842
    %v9137 = vunpack.c.h.b16 %v8842
    %v9138 = vunpack.c.l.b16 %v8843
    %v9139 = vunpack.c.h.b16 %v8843
    %v9140 = vunpack.c.l.b16 %v8844
    %v9141 = vunpack.c.h.b16 %v8844
    %v9142 = vunpack.c.l.b16 %v8845
    %v9143 = vunpack.c.h.b16 %v8845
    %v9144 = vunpack.c.l.b16 %v8846
    %v9145 = vunpack.c.h.b16 %v8846
    %v9146 = vunpack.c.l.b16 %v8847
    %v9147 = vunpack.c.h.b16 %v8847
    %v9148 = vunpack.c.l.b16 %v8848
    %v9149 = vunpack.c.h.b16 %v8848
    %v9150 = vunpack.c.l.b16 %v8849
    %v9151 = vunpack.c.h.b16 %v8849
    %v9152 = vunpack.c.l.b16 %v8850
    %v9153 = vunpack.c.h.b16 %v8850
    %v9154 = vunpack.c.l.b16 %v8851
    %v9155 = vunpack.c.h.b16 %v8851
    %v9156 = vunpack.c.l.b16 %v8852
    %v9157 = vunpack.c.h.b16 %v8852
    %v9158 = vunpack.c.l.b16 %v8853
    %v9159 = vunpack.c.h.b16 %v8853
    %v9160 = vunpack.c.l.b16 %v8854
    %v9161 = vunpack.c.h.b16 %v8854
    %v9162 = vunpack.c.l.b16 %v8855
    %v9163 = vunpack.c.h.b16 %v8855
    %v9164 = vunpack.c.l.b16 %v8856
    %v9165 = vunpack.c.h.b16 %v8856
    %v9166 = vunpack.c.l.b16 %v8857
    %v9167 = vunpack.c.h.b16 %v8857
    %v9168 = vunpack.c.l.b16 %v8858
    %v9169 = vunpack.c.h.b16 %v8858
    %v9170 = vunpack.c.l.b16 %v8859
    %v9171 = vunpack.c.h.b16 %v8859
    %v9172 = vunpack.c.l.b16 %v8860
    %v9173 = vunpack.c.h.b16 %v8860
    %v9174 = vunpack.c.l.b16 %v8861
    %v9175 = vunpack.c.h.b16 %v8861
    %v9176 = vunpack.c.l.b16 %v8862
    %v9177 = vunpack.c.h.b16 %v8862
    %v9178 = vunpack.c.l.b16 %v8863
    %v9179 = vunpack.c.h.b16 %v8863
    %v9180 = vunpack.c.l.b16 %v8864
    %v9181 = vunpack.c.h.b16 %v8864
    %v9182 = vunpack.c.l.b16 %v8865
    %v9183 = vunpack.c.h.b16 %v8865
    %v9184 = vunpack.c.l.b16 %v8866
    %v9185 = vunpack.c.h.b16 %v8866
    %v9186 = vunpack.c.l.b16 %v8867
    %v9187 = vunpack.c.h.b16 %v8867
    %v9188 = vunpack.c.l.b16 %v8868
    %v9189 = vunpack.c.h.b16 %v8868
    %v9190 = vunpack.c.l.b16 %v8869
    %v9191 = vunpack.c.h.b16 %v8869
    %v9192 = vunpack.c.l.b16 %v8870
    %v9193 = vunpack.c.h.b16 %v8870
    %v9194 = vunpack.c.l.b16 %v8871
    %v9195 = vunpack.c.h.b16 %v8871
    %v9196 = vunpack.c.l.b16 %v8872
    %v9197 = vunpack.c.h.b16 %v8872
    %v9198 = vunpack.c.l.b16 %v8873
    %v9199 = vunpack.c.h.b16 %v8873
    %v9200 = vunpack.c.l.b16 %v8874
    %v9201 = vunpack.c.h.b16 %v8874
    %v9202 = vunpack.c.l.b16 %v8875
    %v9203 = vunpack.c.h.b16 %v8875
    %v9204 = vunpack.c.l.b16 %v8876
    %v9205 = vunpack.c.h.b16 %v8876
    %v9206 = vunpack.c.l.b16 %v8877
    %v9207 = vunpack.c.h.b16 %v8877
    %v9208 = vunpack.c.l.b16 %v8878
    %v9209 = vunpack.c.h.b16 %v8878
    %v9210 = vunpack.c.l.b16 %v8879
    %v9211 = vunpack.c.h.b16 %v8879
    %v9212 = vunpack.c.l.b16 %v8880
    %v9213 = vunpack.c.h.b16 %v8880
    %v9214 = vunpack.c.l.b16 %v8881
    %v9215 = vunpack.c.h.b16 %v8881
    %v9216 = vunpack.c.l.b16 %v8882
    %v9217 = vunpack.c.h.b16 %v8882
    %v9218 = vunpack.c.l.b16 %v8883
    %v9219 = vunpack.c.h.b16 %v8883
    %v9220 = vunpack.c.l.b16 %v8884
    %v9221 = vunpack.c.h.b16 %v8884
    %v9222 = vunpack.c.l.b16 %v8885
    %v9223 = vunpack.c.h.b16 %v8885
    %v9224 = vunpack.c.l.b16 %v8886
    %v9225 = vunpack.c.h.b16 %v8886
    %v9226 = vunpack.c.l.b16 %v8887
    %v9227 = vunpack.c.h.b16 %v8887
    %v9228 = vunpack.c.l.b16 %v8888
    %v9229 = vunpack.c.h.b16 %v8888
    %v9230 = vunpack.c.l.b16 %v8889
    %v9231 = vunpack.c.h.b16 %v8889
    %v9232 = vunpack.c.l.b16 %v8890
    %v9233 = vunpack.c.h.b16 %v8890
    %v9234 = vunpack.c.l.b16 %v8891
    %v9235 = vunpack.c.h.b16 %v8891
    %v9236 = vunpack.c.l.b16 %v8892
    %v9237 = vunpack.c.h.b16 %v8892
    %v9238 = vunpack.c.l.b16 %v8893
    %v9239 = vunpack.c.h.b16 %v8893
    %v9240 = vunpack.c.l.b16 %v8894
    %v9241 = vunpack.c.h.b16 %v8894
    %v9242 = vunpack.c.l.b16 %v8895
    %v9243 = vunpack.c.h.b16 %v8895
    %v9244 = vunpack.c.l.b16 %v8896
    %v9245 = vunpack.c.h.b16 %v8896
    %v9246 = vunpack.c.l.b16 %v8897
    %v9247 = vunpack.c.h.b16 %v8897
    %v9248 = vunpack.c.l.b16 %v8898
    %v9249 = vunpack.c.h.b16 %v8898
    %v9250 = vunpack.c.l.b16 %v8899
    %v9251 = vunpack.c.h.b16 %v8899
    %v9252 = vunpack.c.l.b16 %v8900
    %v9253 = vunpack.c.h.b16 %v8900
    %v9254 = vunpack.c.l.b16 %v8901
    %v9255 = vunpack.c.h.b16 %v8901
    %v9256 = vunpack.c.l.b16 %v8902
    %v9257 = vunpack.c.h.b16 %v8902
    %v9258 = vunpack.c.l.b16 %v8903
    %v9259 = vunpack.c.h.b16 %v8903
    %v9260 = vunpack.c.l.b16 %v8904
    %v9261 = vunpack.c.h.b16 %v8904
    %v9262 = vunpack.c.l.b16 %v8905
    %v9263 = vunpack.c.h.b16 %v8905
    %v9264 = vunpack.c.l.b16 %v8906
    %v9265 = vunpack.c.h.b16 %v8906
    %v9266 = vunpack.c.l.b16 %v8907
    %v9267 = vunpack.c.h.b16 %v8907
    %v9268 = vunpack.c.l.b16 %v8908
    %v9269 = vunpack.c.h.b16 %v8908
    %v9270 = vunpack.c.l.b16 %v8909
    %v9271 = vunpack.c.h.b16 %v8909
    %v9272 = vunpack.c.l.b16 %v8910
    %v9273 = vunpack.c.h.b16 %v8910
    %v9274 = vunpack.c.l.b16 %v8911
    %v9275 = vunpack.c.h.b16 %v8911
    %v9276 = vunpack.c.l.b16 %v8912
    %v9277 = vunpack.c.h.b16 %v8912
    %v9278 = vunpack.c.l.b16 %v8913
    %v9279 = vunpack.c.h.b16 %v8913
    %v9280 = vunpack.c.l.b16 %v8914
    %v9281 = vunpack.c.h.b16 %v8914
    %v9282 = vunpack.c.l.b16 %v8915
    %v9283 = vunpack.c.h.b16 %v8915
    %v9284 = vunpack.c.l.b16 %v8916
    %v9285 = vunpack.c.h.b16 %v8916
    %v9286 = vunpack.c.l.b16 %v8917
    %v9287 = vunpack.c.h.b16 %v8917
    %v9288 = vunpack.c.l.b16 %v8918
    %v9289 = vunpack.c.h.b16 %v8918
    %v9290 = vunpack.c.l.b16 %v8919
    %v9291 = vunpack.c.h.b16 %v8919
    %v9292 = vunpack.c.l.b16 %v8920
    %v9293 = vunpack.c.h.b16 %v8920
    %v9294 = vunpack.c.l.b16 %v8921
    %v9295 = vunpack.c.h.b16 %v8921
    %v9296 = vunpack.c.l.b16 %v8922
    %v9297 = vunpack.c.h.b16 %v8922
    %v9298 = vunpack.c.l.b16 %v8923
    %v9299 = vunpack.c.h.b16 %v8923
    %v9300 = vunpack.c.l.b16 %v8924
    %v9301 = vunpack.c.h.b16 %v8924
    %v9302 = vunpack.c.l.b16 %v8925
    %v9303 = vunpack.c.h.b16 %v8925
    %v9304 = vunpack.c.l.b16 %v8926
    %v9305 = vunpack.c.h.b16 %v8926
    %v9306 = vunpack.c.l.b16 %v8927
    %v9307 = vunpack.c.h.b16 %v8927
    %v9308 = vunpack.c.l.b16 %v8928
    %v9309 = vunpack.c.h.b16 %v8928
    %v9310 = vunpack.c.l.b16 %v8929
    %v9311 = vunpack.c.h.b16 %v8929
    %v9312 = vunpack.c.l.b16 %v8930
    %v9313 = vunpack.c.h.b16 %v8930
    %v9314 = vunpack.c.l.b16 %v8931
    %v9315 = vunpack.c.h.b16 %v8931
    %v9316 = vunpack.c.l.b16 %v8932
    %v9317 = vunpack.c.h.b16 %v8932
    %v9318 = vunpack.c.l.b16 %v8933
    %v9319 = vunpack.c.h.b16 %v8933
    %v9320 = vunpack.c.l.b16 %v8934
    %v9321 = vunpack.c.h.b16 %v8934
    %v9322 = vunpack.c.l.b16 %v8935
    %v9323 = vunpack.c.h.b16 %v8935
    %v9324 = vunpack.c.l.b16 %v8936
    %v9325 = vunpack.c.h.b16 %v8936
    %v9326 = vunpack.c.l.b16 %v8937
    %v9327 = vunpack.c.h.b16 %v8937
    %v9328 = vunpack.c.l.b16 %v8938
    %v9329 = vunpack.c.h.b16 %v8938
    %v9330 = vunpack.c.l.b16 %v8939
    %v9331 = vunpack.c.h.b16 %v8939
    %v9332 = vunpack.c.l.b16 %v8940
    %v9333 = vunpack.c.h.b16 %v8940
    %v9334 = vunpack.c.l.b16 %v8941
    %v9335 = vunpack.c.h.b16 %v8941
    %v9336 = vunpack.c.l.b16 %v8942
    %v9337 = vunpack.c.h.b16 %v8942
    %v9338 = vunpack.c.l.b16 %v8943
    %v9339 = vunpack.c.h.b16 %v8943
    %v9340 = vunpack.c.l.b16 %v8944
    %v9341 = vunpack.c.h.b16 %v8944
    %v9342 = vunpack.c.l.b16 %v8945
    %v9343 = vunpack.c.h.b16 %v8945
    %v9344 = vunpack.c.l.b16 %v8946
    %v9345 = vunpack.c.h.b16 %v8946
    %v9346 = vunpack.c.l.b16 %v8947
    %v9347 = vunpack.c.h.b16 %v8947
    %v9348 = vunpack.c.l.b16 %v8948
    %v9349 = vunpack.c.h.b16 %v8948
    %v9350 = vunpack.c.l.b16 %v8949
    %v9351 = vunpack.c.h.b16 %v8949
    %v9352 = vunpack.c.l.b16 %v8950
    %v9353 = vunpack.c.h.b16 %v8950
    %v9354 = vunpack.c.l.b16 %v8951
    %v9355 = vunpack.c.h.b16 %v8951
    %v9356 = vunpack.c.l.b16 %v8952
    %v9357 = vunpack.c.h.b16 %v8952
    %v9358 = vunpack.c.l.b16 %v8953
    %v9359 = vunpack.c.h.b16 %v8953
    %v9360 = vunpack.c.l.b16 %v8954
    %v9361 = vunpack.c.h.b16 %v8954
    %v9362 = vunpack.c.l.b16 %v8955
    %v9363 = vunpack.c.h.b16 %v8955
    %v9364 = vunpack.c.l.b16 %v8956
    %v9365 = vunpack.c.h.b16 %v8956
    %v9366 = vunpack.c.l.b16 %v8957
    %v9367 = vunpack.c.h.b16 %v8957
    %v9368 = vunpack.c.l.b16 %v8958
    %v9369 = vunpack.c.h.b16 %v8958
    %v9370 = vunpack.c.l.b16 %v8959
    %v9371 = vunpack.c.h.b16 %v8959
    %v9372 = vunpack.c.l.b16 %v8960
    %v9373 = vunpack.c.h.b16 %v8960
    %v9374 = vunpack.c.l.b16 %v8961
    %v9375 = vunpack.c.h.b16 %v8961
    %v9376 = vunpack.c.l.b16 %v8962
    %v9377 = vunpack.c.h.b16 %v8962
    %v9378 = vunpack.c.l.b16 %v8963
    %v9379 = vunpack.c.h.b16 %v8963
    %v9380 = vpack.c.b16 %v9128, %v9124
    %v9381 = vpack.c.b16 %v9129, %v9125
    %v9382 = vpack.c.b16 %v9130, %v9126
    %v9383 = vpack.c.b16 %v9131, %v9127
    %v9384 = vpack.c.b16 %v9136, %v9132
    %v9385 = vpack.c.b16 %v9137, %v9133
    %v9386 = vpack.c.b16 %v9138, %v9134
    %v9387 = vpack.c.b16 %v9139, %v9135
    %v9388 = vpack.c.b16 %v9144, %v9140
    %v9389 = vpack.c.b16 %v9145, %v9141
    %v9390 = vpack.c.b16 %v9146, %v9142
    %v9391 = vpack.c.b16 %v9147, %v9143
    %v9392 = vpack.c.b16 %v9152, %v9148
    %v9393 = vpack.c.b16 %v9153, %v9149
    %v9394 = vpack.c.b16 %v9154, %v9150
    %v9395 = vpack.c.b16 %v9155, %v9151
    %v9396 = vpack.c.b16 %v9160, %v9156
    %v9397 = vpack.c.b16 %v9161, %v9157
    %v9398 = vpack.c.b16 %v9162, %v9158
    %v9399 = vpack.c.b16 %v9163, %v9159
    %v9400 = vpack.c.b16 %v9168, %v9164
    %v9401 = vpack.c.b16 %v9169, %v9165
    %v9402 = vpack.c.b16 %v9170, %v9166
    %v9403 = vpack.c.b16 %v9171, %v9167
    %v9404 = vpack.c.b16 %v9176, %v9172
    %v9405 = vpack.c.b16 %v9177, %v9173
    %v9406 = vpack.c.b16 %v9178, %v9174
    %v9407 = vpack.c.b16 %v9179, %v9175
    %v9408 = vpack.c.b16 %v9184, %v9180
    %v9409 = vpack.c.b16 %v9185, %v9181
    %v9410 = vpack.c.b16 %v9186, %v9182
    %v9411 = vpack.c.b16 %v9187, %v9183
    %v9412 = vpack.c.b16 %v9192, %v9188
    %v9413 = vpack.c.b16 %v9193, %v9189
    %v9414 = vpack.c.b16 %v9194, %v9190
    %v9415 = vpack.c.b16 %v9195, %v9191
    %v9416 = vpack.c.b16 %v9200, %v9196
    %v9417 = vpack.c.b16 %v9201, %v9197
    %v9418 = vpack.c.b16 %v9202, %v9198
    %v9419 = vpack.c.b16 %v9203, %v9199
    %v9420 = vpack.c.b16 %v9208, %v9204
    %v9421 = vpack.c.b16 %v9209, %v9205
    %v9422 = vpack.c.b16 %v9210, %v9206
    %v9423 = vpack.c.b16 %v9211, %v9207
    %v9424 = vpack.c.b16 %v9216, %v9212
    %v9425 = vpack.c.b16 %v9217, %v9213
    %v9426 = vpack.c.b16 %v9218, %v9214
    %v9427 = vpack.c.b16 %v9219, %v9215
    %v9428 = vpack.c.b16 %v9224, %v9220
    %v9429 = vpack.c.b16 %v9225, %v9221
    %v9430 = vpack.c.b16 %v9226, %v9222
    %v9431 = vpack.c.b16 %v9227, %v9223
    %v9432 = vpack.c.b16 %v9232, %v9228
    %v9433 = vpack.c.b16 %v9233, %v9229
    %v9434 = vpack.c.b16 %v9234, %v9230
    %v9435 = vpack.c.b16 %v9235, %v9231
    %v9436 = vpack.c.b16 %v9240, %v9236
    %v9437 = vpack.c.b16 %v9241, %v9237
    %v9438 = vpack.c.b16 %v9242, %v9238
    %v9439 = vpack.c.b16 %v9243, %v9239
    %v9440 = vpack.c.b16 %v9248, %v9244
    %v9441 = vpack.c.b16 %v9249, %v9245
    %v9442 = vpack.c.b16 %v9250, %v9246
    %v9443 = vpack.c.b16 %v9251, %v9247
    %v9444 = vpack.c.b16 %v9256, %v9252
    %v9445 = vpack.c.b16 %v9257, %v9253
    %v9446 = vpack.c.b16 %v9258, %v9254
    %v9447 = vpack.c.b16 %v9259, %v9255
    %v9448 = vpack.c.b16 %v9264, %v9260
    %v9449 = vpack.c.b16 %v9265, %v9261
    %v9450 = vpack.c.b16 %v9266, %v9262
    %v9451 = vpack.c.b16 %v9267, %v9263
    %v9452 = vpack.c.b16 %v9272, %v9268
    %v9453 = vpack.c.b16 %v9273, %v9269
    %v9454 = vpack.c.b16 %v9274, %v9270
    %v9455 = vpack.c.b16 %v9275, %v9271
    %v9456 = vpack.c.b16 %v9280, %v9276
    %v9457 = vpack.c.b16 %v9281, %v9277
    %v9458 = vpack.c.b16 %v9282, %v9278
    %v9459 = vpack.c.b16 %v9283, %v9279
    %v9460 = vpack.c.b16 %v9288, %v9284
    %v9461 = vpack.c.b16 %v9289, %v9285
    %v9462 = vpack.c.b16 %v9290, %v9286
    %v9463 = vpack.c.b16 %v9291, %v9287
    %v9464 = vpack.c.b16 %v9296, %v9292
    %v9465 = vpack.c.b16 %v9297, %v9293
    %v9466 = vpack.c.b16 %v9298, %v9294
    %v9467 = vpack.c.b16 %v9299, %v9295
    %v9468 = vpack.c.b16 %v9304, %v9300
    %v9469 = vpack.c.b16 %v9305, %v9301
    %v9470 = vpack.c.b16 %v9306, %v9302
    %v9471 = vpack.c.b16 %v9307, %v9303
    %v9472 = vpack.c.b16 %v9312, %v9308
    %v9473 = vpack.c.b16 %v9313, %v9309
    %v9474 = vpack.c.b16 %v9314, %v9310
    %v9475 = vpack.c.b16 %v9315, %v9311
    %v9476 = vpack.c.b16 %v9320, %v9316
    %v9477 = vpack.c.b16 %v9321, %v9317
    %v9478 = vpack.c.b16 %v9322, %v9318
    %v9479 = vpack.c.b16 %v9323, %v9319
    %v9480 = vpack.c.b16 %v9328, %v9324
    %v9481 = vpack.c.b16 %v9329, %v9325
    %v9482 = vpack.c.b16 %v9330, %v9326
    %v9483 = vpack.c.b16 %v9331, %v9327
    %v9484 = vpack.c.b16 %v9336, %v9332
    %v9485 = vpack.c.b16 %v9337, %v9333
    %v9486 = vpack.c.b16 %v9338, %v9334
    %v9487 = vpack.c.b16 %v9339, %v9335
    %v9488 = vpack.c.b16 %v9344, %v9340
    %v9489 = vpack.c.b16 %v9345, %v9341
    %v9490 = vpack.c.b16 %v9346, %v9342
    %v9491 = vpack.c.b16 %v9347, %v9343
    %v9492 = vpack.c.b16 %v9352, %v9348
    %v9493 = vpack.c.b16 %v9353, %v9349
    %v9494 = vpack.c.b16 %v9354, %v9350
    %v9495 = vpack.c.b16 %v9355, %v9351
    %v9496 = vpack.c.b16 %v9360, %v9356
    %v9497 = vpack.c.b16 %v9361, %v9357
    %v9498 = vpack.c.b16 %v9362, %v9358
    %v9499 = vpack.c.b16 %v9363, %v9359
    %v9500 = vpack.c.b16 %v9368, %v9364
    %v9501 = vpack.c.b16 %v9369, %v9365
    %v9502 = vpack.c.b16 %v9370, %v9366
    %v9503 = vpack.c.b16 %v9371, %v9367
    %v9504 = vpack.c.b16 %v9376, %v9372
    %v9505 = vpack.c.b16 %v9377, %v9373
    %v9506 = vpack.c.b16 %v9378, %v9374
    %v9507 = vpack.c.b16 %v9379, %v9375
    %9636 = vmatpush.bf16.msra.mxu0 %v9408
    %9637 = vmatpush.bf16.msra.mxu0 %v9404
    %9638 = vmatpush.bf16.msra.mxu0 %v9400
    %9639 = vmatpush.bf16.msra.mxu0 %v9396
    %9640 = vmatpush.bf16.msra.mxu0 %v9392
    %9641 = vmatpush.bf16.msra.mxu0 %v9388
    %9642 = vmatpush.bf16.msra.mxu0 %v9384
    %9643 = vmatpush.bf16.msra.mxu0 %v9380
    %9644 = vmatmul.bf16.gmra.mxu0 %v8980
    %v9645 = vpop.f32.mrf.mxu0
    %v9646 = vadd.f32 0.0, %v9645
    %v9647 = vpop.f32.mrf.mxu0
    %v9648 = vadd.f32 0.0, %v9647
    %9649 = vmatmul.bf16.gmra.mxu0 %v8984
    %v9650 = vpop.f32.mrf.mxu0
    %v9651 = vadd.f32 0.0, %v9650
    %v9652 = vpop.f32.mrf.mxu0
    %v9653 = vadd.f32 0.0, %v9652
    %9654 = vdwg.mxu0
    %9655 = vmatpush.bf16.msra.mxu0 %v9440
    %9656 = vmatpush.bf16.msra.mxu0 %v9436
    %9657 = vmatpush.bf16.msra.mxu0 %v9432
    %9658 = vmatpush.bf16.msra.mxu0 %v9428
    %9659 = vmatpush.bf16.msra.mxu0 %v9424
    %9660 = vmatpush.bf16.msra.mxu0 %v9420
    %9661 = vmatpush.bf16.msra.mxu0 %v9416
    %9662 = vmatpush.bf16.msra.mxu0 %v9412
    %9663 = vmatmul.bf16.gmra.mxu0 %v8981
    %v9664 = vpop.f32.mrf.mxu0
    %v9665 = vadd.f32 %v9646, %v9664
    %v9666 = vpop.f32.mrf.mxu0
    %v9667 = vadd.f32 %v9648, %v9666
    %9668 = vmatmul.bf16.gmra.mxu0 %v8985
    %v9669 = vpop.f32.mrf.mxu0
    %v9670 = vadd.f32 %v9651, %v9669
    %v9671 = vpop.f32.mrf.mxu0
    %v9672 = vadd.f32 %v9653, %v9671
    %9673 = vdwg.mxu0
    %9674 = vmatpush.bf16.msra.mxu0 %v9472
    %9675 = vmatpush.bf16.msra.mxu0 %v9468
    %9676 = vmatpush.bf16.msra.mxu0 %v9464
    %9677 = vmatpush.bf16.msra.mxu0 %v9460
    %9678 = vmatpush.bf16.msra.mxu0 %v9456
    %9679 = vmatpush.bf16.msra.mxu0 %v9452
    %9680 = vmatpush.bf16.msra.mxu0 %v9448
    %9681 = vmatpush.bf16.msra.mxu0 %v9444
    %9682 = vmatmul.bf16.gmra.mxu0 %v8982
    %v9683 = vpop.f32.mrf.mxu0
    %v9684 = vadd.f32 %v9665, %v9683
    %v9685 = vpop.f32.mrf.mxu0
    %v9686 = vadd.f32 %v9667, %v9685
    %9687 = vmatmul.bf16.gmra.mxu0 %v8986
    %v9688 = vpop.f32.mrf.mxu0
    %v9689 = vadd.f32 %v9670, %v9688
    %v9690 = vpop.f32.mrf.mxu0
    %v9691 = vadd.f32 %v9672, %v9690
    %9692 = vdwg.mxu0
    %9693 = vmatpush.bf16.msra.mxu0 %v9504
    %9694 = vmatpush.bf16.msra.mxu0 %v9500
    %9695 = vmatpush.bf16.msra.mxu0 %v9496
    %9696 = vmatpush.bf16.msra.mxu0 %v9492
    %9697 = vmatpush.bf16.msra.mxu0 %v9488
    %9698 = vmatpush.bf16.msra.mxu0 %v9484
    %9699 = vmatpush.bf16.msra.mxu0 %v9480
    %9700 = vmatpush.bf16.msra.mxu0 %v9476
    %9701 = vmatmul.bf16.gmra.mxu0 %v8983
    %v9702 = vpop.f32.mrf.mxu0
    %v9703 = vadd.f32 %v9684, %v9702
    %v9704 = vpop.f32.mrf.mxu0
    %v9705 = vadd.f32 %v9686, %v9704
    %9706 = vmatmul.bf16.gmra.mxu0 %v8987
    %v9707 = vpop.f32.mrf.mxu0
    %v9708 = vadd.f32 %v9689, %v9707
    %v9709 = vpop.f32.mrf.mxu0
    %v9710 = vadd.f32 %v9691, %v9709
    %9711 = vdwg.mxu0
    %9712 = vmatpush.bf16.msra.mxu0 %v9409
    %9713 = vmatpush.bf16.msra.mxu0 %v9405
    %9714 = vmatpush.bf16.msra.mxu0 %v9401
    %9715 = vmatpush.bf16.msra.mxu0 %v9397
    %9716 = vmatpush.bf16.msra.mxu0 %v9393
    %9717 = vmatpush.bf16.msra.mxu0 %v9389
    %9718 = vmatpush.bf16.msra.mxu0 %v9385
    %9719 = vmatpush.bf16.msra.mxu0 %v9381
    %9720 = vmatmul.bf16.gmra.mxu0 %v8980
    %v9721 = vpop.f32.mrf.mxu0
    %v9722 = vadd.f32 0.0, %v9721
    %v9723 = vpop.f32.mrf.mxu0
    %v9724 = vadd.f32 0.0, %v9723
    %9725 = vmatmul.bf16.gmra.mxu0 %v8984
    %v9726 = vpop.f32.mrf.mxu0
    %v9727 = vadd.f32 0.0, %v9726
    %v9728 = vpop.f32.mrf.mxu0
    %v9729 = vadd.f32 0.0, %v9728
    %9730 = vdwg.mxu0
    %9731 = vmatpush.bf16.msra.mxu0 %v9441
    %9732 = vmatpush.bf16.msra.mxu0 %v9437
    %9733 = vmatpush.bf16.msra.mxu0 %v9433
    %9734 = vmatpush.bf16.msra.mxu0 %v9429
    %9735 = vmatpush.bf16.msra.mxu0 %v9425
    %9736 = vmatpush.bf16.msra.mxu0 %v9421
    %9737 = vmatpush.bf16.msra.mxu0 %v9417
    %9738 = vmatpush.bf16.msra.mxu0 %v9413
    %9739 = vmatmul.bf16.gmra.mxu0 %v8981
    %v9740 = vpop.f32.mrf.mxu0
    %v9741 = vadd.f32 %v9722, %v9740
    %v9742 = vpop.f32.mrf.mxu0
    %v9743 = vadd.f32 %v9724, %v9742
    %9744 = vmatmul.bf16.gmra.mxu0 %v8985
    %v9745 = vpop.f32.mrf.mxu0
    %v9746 = vadd.f32 %v9727, %v9745
    %v9747 = vpop.f32.mrf.mxu0
    %v9748 = vadd.f32 %v9729, %v9747
    %9749 = vdwg.mxu0
    %9750 = vmatpush.bf16.msra.mxu0 %v9473
    %9751 = vmatpush.bf16.msra.mxu0 %v9469
    %9752 = vmatpush.bf16.msra.mxu0 %v9465
    %9753 = vmatpush.bf16.msra.mxu0 %v9461
    %9754 = vmatpush.bf16.msra.mxu0 %v9457
    %9755 = vmatpush.bf16.msra.mxu0 %v9453
    %9756 = vmatpush.bf16.msra.mxu0 %v9449
    %9757 = vmatpush.bf16.msra.mxu0 %v9445
    %9758 = vmatmul.bf16.gmra.mxu0 %v8982
    %v9759 = vpop.f32.mrf.mxu0
    %v9760 = vadd.f32 %v9741, %v9759
    %v9761 = vpop.f32.mrf.mxu0
    %v9762 = vadd.f32 %v9743, %v9761
    %9763 = vmatmul.bf16.gmra.mxu0 %v8986
    %v9764 = vpop.f32.mrf.mxu0
    %v9765 = vadd.f32 %v9746, %v9764
    %v9766 = vpop.f32.mrf.mxu0
    %v9767 = vadd.f32 %v9748, %v9766
    %9768 = vdwg.mxu0
    %9769 = vmatpush.bf16.msra.mxu0 %v9505
    %9770 = vmatpush.bf16.msra.mxu0 %v9501
    %9771 = vmatpush.bf16.msra.mxu0 %v9497
    %9772 = vmatpush.bf16.msra.mxu0 %v9493
    %9773 = vmatpush.bf16.msra.mxu0 %v9489
    %9774 = vmatpush.bf16.msra.mxu0 %v9485
    %9775 = vmatpush.bf16.msra.mxu0 %v9481
    %9776 = vmatpush.bf16.msra.mxu0 %v9477
    %9777 = vmatmul.bf16.gmra.mxu0 %v8983
    %v9778 = vpop.f32.mrf.mxu0
    %v9779 = vadd.f32 %v9760, %v9778
    %v9780 = vpop.f32.mrf.mxu0
    %v9781 = vadd.f32 %v9762, %v9780
    %9782 = vmatmul.bf16.gmra.mxu0 %v8987
    %v9783 = vpop.f32.mrf.mxu0
    %v9784 = vadd.f32 %v9765, %v9783
    %v9785 = vpop.f32.mrf.mxu0
    %v9786 = vadd.f32 %v9767, %v9785
    %9787 = vdwg.mxu0
    %9788 = vmatpush.bf16.msra.mxu0 %v9410
    %9789 = vmatpush.bf16.msra.mxu0 %v9406
    %9790 = vmatpush.bf16.msra.mxu0 %v9402
    %9791 = vmatpush.bf16.msra.mxu0 %v9398
    %9792 = vmatpush.bf16.msra.mxu0 %v9394
    %9793 = vmatpush.bf16.msra.mxu0 %v9390
    %9794 = vmatpush.bf16.msra.mxu0 %v9386
    %9795 = vmatpush.bf16.msra.mxu0 %v9382
    %9796 = vmatmul.bf16.gmra.mxu0 %v8980
    %v9797 = vpop.f32.mrf.mxu0
    %v9798 = vadd.f32 0.0, %v9797
    %v9799 = vpop.f32.mrf.mxu0
    %v9800 = vadd.f32 0.0, %v9799
    %9801 = vmatmul.bf16.gmra.mxu0 %v8984
    %v9802 = vpop.f32.mrf.mxu0
    %v9803 = vadd.f32 0.0, %v9802
    %v9804 = vpop.f32.mrf.mxu0
    %v9805 = vadd.f32 0.0, %v9804
    %9806 = vdwg.mxu0
    %9807 = vmatpush.bf16.msra.mxu0 %v9442
    %9808 = vmatpush.bf16.msra.mxu0 %v9438
    %9809 = vmatpush.bf16.msra.mxu0 %v9434
    %9810 = vmatpush.bf16.msra.mxu0 %v9430
    %9811 = vmatpush.bf16.msra.mxu0 %v9426
    %9812 = vmatpush.bf16.msra.mxu0 %v9422
    %9813 = vmatpush.bf16.msra.mxu0 %v9418
    %9814 = vmatpush.bf16.msra.mxu0 %v9414
    %9815 = vmatmul.bf16.gmra.mxu0 %v8981
    %v9816 = vpop.f32.mrf.mxu0
    %v9817 = vadd.f32 %v9798, %v9816
    %v9818 = vpop.f32.mrf.mxu0
    %v9819 = vadd.f32 %v9800, %v9818
    %9820 = vmatmul.bf16.gmra.mxu0 %v8985
    %v9821 = vpop.f32.mrf.mxu0
    %v9822 = vadd.f32 %v9803, %v9821
    %v9823 = vpop.f32.mrf.mxu0
    %v9824 = vadd.f32 %v9805, %v9823
    %9825 = vdwg.mxu0
    %9826 = vmatpush.bf16.msra.mxu0 %v9474
    %9827 = vmatpush.bf16.msra.mxu0 %v9470
    %9828 = vmatpush.bf16.msra.mxu0 %v9466
    %9829 = vmatpush.bf16.msra.mxu0 %v9462
    %9830 = vmatpush.bf16.msra.mxu0 %v9458
    %9831 = vmatpush.bf16.msra.mxu0 %v9454
    %9832 = vmatpush.bf16.msra.mxu0 %v9450
    %9833 = vmatpush.bf16.msra.mxu0 %v9446
    %9834 = vmatmul.bf16.gmra.mxu0 %v8982
    %v9835 = vpop.f32.mrf.mxu0
    %v9836 = vadd.f32 %v9817, %v9835
    %v9837 = vpop.f32.mrf.mxu0
    %v9838 = vadd.f32 %v9819, %v9837
    %9839 = vmatmul.bf16.gmra.mxu0 %v8986
    %v9840 = vpop.f32.mrf.mxu0
    %v9841 = vadd.f32 %v9822, %v9840
    %v9842 = vpop.f32.mrf.mxu0
    %v9843 = vadd.f32 %v9824, %v9842
    %9844 = vdwg.mxu0
    %9845 = vmatpush.bf16.msra.mxu0 %v9506
    %9846 = vmatpush.bf16.msra.mxu0 %v9502
    %9847 = vmatpush.bf16.msra.mxu0 %v9498
    %9848 = vmatpush.bf16.msra.mxu0 %v9494
    %9849 = vmatpush.bf16.msra.mxu0 %v9490
    %9850 = vmatpush.bf16.msra.mxu0 %v9486
    %9851 = vmatpush.bf16.msra.mxu0 %v9482
    %9852 = vmatpush.bf16.msra.mxu0 %v9478
    %9853 = vmatmul.bf16.gmra.mxu0 %v8983
    %v9854 = vpop.f32.mrf.mxu0
    %v9855 = vadd.f32 %v9836, %v9854
    %v9856 = vpop.f32.mrf.mxu0
    %v9857 = vadd.f32 %v9838, %v9856
    %9858 = vmatmul.bf16.gmra.mxu0 %v8987
    %v9859 = vpop.f32.mrf.mxu0
    %v9860 = vadd.f32 %v9841, %v9859
    %v9861 = vpop.f32.mrf.mxu0
    %v9862 = vadd.f32 %v9843, %v9861
    %9863 = vdwg.mxu0
    %9864 = vmatpush.bf16.msra.mxu0 %v9411
    %9865 = vmatpush.bf16.msra.mxu0 %v9407
    %9866 = vmatpush.bf16.msra.mxu0 %v9403
    %9867 = vmatpush.bf16.msra.mxu0 %v9399
    %9868 = vmatpush.bf16.msra.mxu0 %v9395
    %9869 = vmatpush.bf16.msra.mxu0 %v9391
    %9870 = vmatpush.bf16.msra.mxu0 %v9387
    %9871 = vmatpush.bf16.msra.mxu0 %v9383
    %9872 = vmatmul.bf16.gmra.mxu0 %v8980
    %v9873 = vpop.f32.mrf.mxu0
    %v9874 = vadd.f32 0.0, %v9873
    %v9875 = vpop.f32.mrf.mxu0
    %v9876 = vadd.f32 0.0, %v9875
    %9877 = vmatmul.bf16.gmra.mxu0 %v8984
    %v9878 = vpop.f32.mrf.mxu0
    %v9879 = vadd.f32 0.0, %v9878
    %v9880 = vpop.f32.mrf.mxu0
    %v9881 = vadd.f32 0.0, %v9880
    %9882 = vdwg.mxu0
    %9883 = vmatpush.bf16.msra.mxu0 %v9443
    %9884 = vmatpush.bf16.msra.mxu0 %v9439
    %9885 = vmatpush.bf16.msra.mxu0 %v9435
    %9886 = vmatpush.bf16.msra.mxu0 %v9431
    %9887 = vmatpush.bf16.msra.mxu0 %v9427
    %9888 = vmatpush.bf16.msra.mxu0 %v9423
    %9889 = vmatpush.bf16.msra.mxu0 %v9419
    %9890 = vmatpush.bf16.msra.mxu0 %v9415
    %9891 = vmatmul.bf16.gmra.mxu0 %v8981
    %v9892 = vpop.f32.mrf.mxu0
    %v9893 = vadd.f32 %v9874, %v9892
    %v9894 = vpop.f32.mrf.mxu0
    %v9895 = vadd.f32 %v9876, %v9894
    %9896 = vmatmul.bf16.gmra.mxu0 %v8985
    %v9897 = vpop.f32.mrf.mxu0
    %v9898 = vadd.f32 %v9879, %v9897
    %v9899 = vpop.f32.mrf.mxu0
    %v9900 = vadd.f32 %v9881, %v9899
    %9901 = vdwg.mxu0
    %9902 = vmatpush.bf16.msra.mxu0 %v9475
    %9903 = vmatpush.bf16.msra.mxu0 %v9471
    %9904 = vmatpush.bf16.msra.mxu0 %v9467
    %9905 = vmatpush.bf16.msra.mxu0 %v9463
    %9906 = vmatpush.bf16.msra.mxu0 %v9459
    %9907 = vmatpush.bf16.msra.mxu0 %v9455
    %9908 = vmatpush.bf16.msra.mxu0 %v9451
    %9909 = vmatpush.bf16.msra.mxu0 %v9447
    %9910 = vmatmul.bf16.gmra.mxu0 %v8982
    %v9911 = vpop.f32.mrf.mxu0
    %v9912 = vadd.f32 %v9893, %v9911
    %v9913 = vpop.f32.mrf.mxu0
    %v9914 = vadd.f32 %v9895, %v9913
    %9915 = vmatmul.bf16.gmra.mxu0 %v8986
    %v9916 = vpop.f32.mrf.mxu0
    %v9917 = vadd.f32 %v9898, %v9916
    %v9918 = vpop.f32.mrf.mxu0
    %v9919 = vadd.f32 %v9900, %v9918
    %9920 = vdwg.mxu0
    %9921 = vmatpush.bf16.msra.mxu0 %v9507
    %9922 = vmatpush.bf16.msra.mxu0 %v9503
    %9923 = vmatpush.bf16.msra.mxu0 %v9499
    %9924 = vmatpush.bf16.msra.mxu0 %v9495
    %9925 = vmatpush.bf16.msra.mxu0 %v9491
    %9926 = vmatpush.bf16.msra.mxu0 %v9487
    %9927 = vmatpush.bf16.msra.mxu0 %v9483
    %9928 = vmatpush.bf16.msra.mxu0 %v9479
    %9929 = vmatmul.bf16.gmra.mxu0 %v8983
    %v9930 = vpop.f32.mrf.mxu0
    %v9931 = vadd.f32 %v9912, %v9930
    %v9932 = vpop.f32.mrf.mxu0
    %v9933 = vadd.f32 %v9914, %v9932
    %9934 = vmatmul.bf16.gmra.mxu0 %v8987
    %v9935 = vpop.f32.mrf.mxu0
    %v9936 = vadd.f32 %v9917, %v9935
    %v9937 = vpop.f32.mrf.mxu0
    %v9938 = vadd.f32 %v9919, %v9937
    %9939 = vdwg.mxu0
    %v9940 = vadd.f32 %v8779, %v9703
    %v9941 = vadd.f32 %v8780, %v9779
    %v9942 = vadd.f32 %v8781, %v9855
    %v9943 = vadd.f32 %v8782, %v9931
    %v9944 = vadd.f32 %v8783, %v9705
    %v9945 = vadd.f32 %v8784, %v9781
    %v9946 = vadd.f32 %v8785, %v9857
    %v9947 = vadd.f32 %v8786, %v9933
    %v9948 = vadd.f32 %v8787, %v9708
    %v9949 = vadd.f32 %v8788, %v9784
    %v9950 = vadd.f32 %v8789, %v9860
    %v9951 = vadd.f32 %v8790, %v9936
    %v9952 = vadd.f32 %v8791, %v9710
    %v9953 = vadd.f32 %v8792, %v9786
    %v9954 = vadd.f32 %v8793, %v9862
    %v9955 = vadd.f32 %v8794, %v9938
    %v9956 = vld [vmem:[#allocation10] sm:$0xf]
    %v9958 = vperm.slane %v9956, 0
    %v9959 = vperm.slane %v9956, 1
    %v9960 = vperm.slane %v9956, 2
    %v9961 = vperm.slane %v9956, 3
    %v9966 = vadd.f32 %v9940, %v9958
    %v9967 = vadd.f32 %v9941, %v9959
    %v9968 = vadd.f32 %v9942, %v9960
    %v9969 = vadd.f32 %v9943, %v9961
    %v9970 = vadd.f32 %v9944, %v9958
    %v9971 = vadd.f32 %v9945, %v9959
    %v9972 = vadd.f32 %v9946, %v9960
    %v9973 = vadd.f32 %v9947, %v9961
    %v9974 = vadd.f32 %v9948, %v9958
    %v9975 = vadd.f32 %v9949, %v9959
    %v9976 = vadd.f32 %v9950, %v9960
    %v9977 = vadd.f32 %v9951, %v9961
    %v9978 = vadd.f32 %v9952, %v9958
    %v9979 = vadd.f32 %v9953, %v9959
    %v9980 = vadd.f32 %v9954, %v9960
    %v9981 = vadd.f32 %v9955, %v9961
    %v9982 = vmax.f32 %v9966, %v9968
    %v9983 = vmax.f32 %v9967, %v9969
    %v9984 = vmax.f32 %v9970, %v9972
    %v9985 = vmax.f32 %v9971, %v9973
    %v9986 = vmax.f32 %v9974, %v9976
    %v9987 = vmax.f32 %v9975, %v9977
    %v9988 = vmax.f32 %v9978, %v9980
    %v9989 = vmax.f32 %v9979, %v9981
    %v9998 = vrot.slane %v9983, 4
    %v9999 = vrot.slane %v9985, 4
    %v10000 = vrot.slane %v9987, 4
    %v10001 = vrot.slane %v9989, 4
    %v10002 = vsel %vm3496, %v9982, %v9998
    %v10003 = vsel %vm3496, %v9998, %v9982
    %v10004 = vrot.slane %v10003, 4
    %v10005 = vsel %vm3496, %v9984, %v9999
    %v10006 = vsel %vm3496, %v9999, %v9984
    %v10007 = vrot.slane %v10006, 4
    %v10008 = vsel %vm3496, %v9986, %v10000
    %v10009 = vsel %vm3496, %v10000, %v9986
    %v10010 = vrot.slane %v10009, 4
    %v10011 = vsel %vm3496, %v9988, %v10001
    %v10012 = vsel %vm3496, %v10001, %v9988
    %v10013 = vrot.slane %v10012, 4
    %v10023 = vunpack.c.l.s4 1966171168
    %v10024 = vunpack.c.0.s8 %v10023
    %v10025 = vperm.slane %v10002, %v10024
    %v10027 = vunpack.c.l.s4 1966171168
    %v10028 = vunpack.c.0.s8 %v10027
    %v10029 = vperm.slane %v10004, %v10028
    %v10031 = vunpack.c.l.s4 1966171168
    %v10032 = vunpack.c.0.s8 %v10031
    %v10033 = vperm.slane %v10005, %v10032
    %v10035 = vunpack.c.l.s4 1966171168
    %v10036 = vunpack.c.0.s8 %v10035
    %v10037 = vperm.slane %v10007, %v10036
    %v10039 = vunpack.c.l.s4 1966171168
    %v10040 = vunpack.c.0.s8 %v10039
    %v10041 = vperm.slane %v10008, %v10040
    %v10043 = vunpack.c.l.s4 1966171168
    %v10044 = vunpack.c.0.s8 %v10043
    %v10045 = vperm.slane %v10010, %v10044
    %v10047 = vunpack.c.l.s4 1966171168
    %v10048 = vunpack.c.0.s8 %v10047
    %v10049 = vperm.slane %v10011, %v10048
    %v10051 = vunpack.c.l.s4 1966171168
    %v10052 = vunpack.c.0.s8 %v10051
    %v10053 = vperm.slane %v10013, %v10052
    %v10062 = vrot.slane %v10025, 4
    %v10063 = vrot.slane %v10029, 4
    %v10064 = vrot.slane %v10033, 4
    %v10065 = vrot.slane %v10037, 4
    %v10066 = vrot.slane %v10041, 4
    %v10067 = vrot.slane %v10045, 4
    %v10068 = vrot.slane %v10049, 4
    %v10069 = vrot.slane %v10053, 4
    %v10078 = vmax.f32 %v10025, %v10062
    %v10079 = vmax.f32 %v10029, %v10063
    %v10080 = vmax.f32 %v10033, %v10064
    %v10081 = vmax.f32 %v10037, %v10065
    %v10082 = vmax.f32 %v10041, %v10066
    %v10083 = vmax.f32 %v10045, %v10067
    %v10084 = vmax.f32 %v10049, %v10068
    %v10085 = vmax.f32 %v10053, %v10069
    %10086 = vst [vmem:[#allocation3] sm:$0x11] 0
    %10087 = vst [vmem:[#allocation3 + $0x10] sm:$0x11] 0
    %10088 = vst [vmem:[#allocation3 + $0x8] sm:$0x22] 0
    %10089 = vst [vmem:[#allocation3 + $0x18] sm:$0x22] 0
    %10098 = vst [vmem:[#allocation1] ss:$4 sm:$0xff] %v10078
    %s10099 = scalar_lea.vmem [#allocation1], 1
    %10100 = vst [vmem:[%s10099] ss:$4 sm:$0xff] %v10079
    %s10101 = scalar_lea.vmem [#allocation1], 2
    %10102 = vst [vmem:[%s10101] ss:$4 sm:$0xff] %v10080
    %s10103 = scalar_lea.vmem [#allocation1], 3
    %10104 = vst [vmem:[%s10103] ss:$4 sm:$0xff] %v10081
    %v10105 = vld.sshfl [vmem:[#allocation1] sm:$0xff pattern:$0x73625140]
    %v10106 = vld.sshfl [vmem:[#allocation1 + $0x8] sm:$0xff pattern:$0x73625140]
    %s10107 = scalar_lea.vmem [#allocation1], 32
    %10108 = vst [vmem:[%s10107] ss:$4 sm:$0xff] %v10082
    %s10109 = scalar_lea.vmem [#allocation1], 33
    %10110 = vst [vmem:[%s10109] ss:$4 sm:$0xff] %v10083
    %s10111 = scalar_lea.vmem [#allocation1], 34
    %10112 = vst [vmem:[%s10111] ss:$4 sm:$0xff] %v10084
    %s10113 = scalar_lea.vmem [#allocation1], 35
    %10114 = vst [vmem:[%s10113] ss:$4 sm:$0xff] %v10085
    %v10115 = vld.sshfl [vmem:[#allocation1 + $0x20] sm:$0xff pattern:$0x73625140]
    %v10116 = vld.sshfl [vmem:[#allocation1 + $0x28] sm:$0xff pattern:$0x73625140]
    %v10121 = vpack.c.bf16 %v10106, %v10105
    %v10122 = vpack.c.bf16 %v10116, %v10115
    %v10125 = vrot.slane %v10121, 7
    %v10126 = vrot.slane %v10125, 4
    %v10127 = vrot.slane %v10122, 7
    %v10128 = vrot.slane %v10127, 4
    %10133 = vst [vmem:[#allocation3] sm:$0xee] %v10125
    %10134 = vst [vmem:[#allocation3 + $0x8] sm:$0x11] %v10126
    %10135 = vst [vmem:[#allocation3 + $0x10] sm:$0xee] %v10127
    %10136 = vst [vmem:[#allocation3 + $0x18] sm:$0x11] %v10128
    %v10137 = vld [vmem:[#allocation3] sm:$0xff]
    %v10138 = vld [vmem:[#allocation3 + $0x10] sm:$0xff]
    %v10139 = vld [vmem:[#allocation12] sm:$0xff]
    %v10140 = vld [vmem:[#allocation12 + $0x8] sm:$0xff]
    %v10141 = vld [vmem:[#allocation12 + $0x10] sm:$0xff]
    %v10142 = vld [vmem:[#allocation12 + $0x18] sm:$0xff]
    %v10143 = vld [vmem:[#allocation12 + $0x20] sm:$0xff]
    %v10144 = vld [vmem:[#allocation12 + $0x28] sm:$0xff]
    %v10145 = vld [vmem:[#allocation12 + $0x30] sm:$0xff]
    %v10146 = vld [vmem:[#allocation12 + $0x38] sm:$0xff]
    %v10147 = vld [vmem:[#allocation12 + $0x40] sm:$0xff]
    %v10148 = vld [vmem:[#allocation12 + $0x48] sm:$0xff]
    %v10149 = vld [vmem:[#allocation12 + $0x50] sm:$0xff]
    %v10150 = vld [vmem:[#allocation12 + $0x58] sm:$0xff]
    %v10151 = vld [vmem:[#allocation12 + $0x60] sm:$0xff]
    %v10152 = vld [vmem:[#allocation12 + $0x68] sm:$0xff]
    %v10153 = vld [vmem:[#allocation12 + $0x70] sm:$0xff]
    %v10154 = vld [vmem:[#allocation12 + $0x78] sm:$0xff]
    %v10155 = vld [vmem:[#allocation12 + $0x80] sm:$0xff]
    %v10156 = vld [vmem:[#allocation12 + $0x88] sm:$0xff]
    %v10157 = vld [vmem:[#allocation12 + $0x90] sm:$0xff]
    %v10158 = vld [vmem:[#allocation12 + $0x98] sm:$0xff]
    %v10159 = vld [vmem:[#allocation12 + $0xa0] sm:$0xff]
    %v10160 = vld [vmem:[#allocation12 + $0xa8] sm:$0xff]
    %v10161 = vld [vmem:[#allocation12 + $0xb0] sm:$0xff]
    %v10162 = vld [vmem:[#allocation12 + $0xb8] sm:$0xff]
    %v10163 = vld [vmem:[#allocation12 + $0xc0] sm:$0xff]
    %v10164 = vld [vmem:[#allocation12 + $0xc8] sm:$0xff]
    %v10165 = vld [vmem:[#allocation12 + $0xd0] sm:$0xff]
    %v10166 = vld [vmem:[#allocation12 + $0xd8] sm:$0xff]
    %v10167 = vld [vmem:[#allocation12 + $0xe0] sm:$0xff]
    %v10168 = vld [vmem:[#allocation12 + $0xe8] sm:$0xff]
    %v10169 = vld [vmem:[#allocation12 + $0xf0] sm:$0xff]
    %v10170 = vld [vmem:[#allocation12 + $0xf8] sm:$0xff]
    %v10171 = vld [vmem:[#allocation12 + $0x100] sm:$0xff]
    %v10172 = vld [vmem:[#allocation12 + $0x108] sm:$0xff]
    %v10173 = vld [vmem:[#allocation12 + $0x110] sm:$0xff]
    %v10174 = vld [vmem:[#allocation12 + $0x118] sm:$0xff]
    %v10175 = vld [vmem:[#allocation12 + $0x120] sm:$0xff]
    %v10176 = vld [vmem:[#allocation12 + $0x128] sm:$0xff]
    %v10177 = vld [vmem:[#allocation12 + $0x130] sm:$0xff]
    %v10178 = vld [vmem:[#allocation12 + $0x138] sm:$0xff]
    %v10179 = vld [vmem:[#allocation12 + $0x140] sm:$0xff]
    %v10180 = vld [vmem:[#allocation12 + $0x148] sm:$0xff]
    %v10181 = vld [vmem:[#allocation12 + $0x150] sm:$0xff]
    %v10182 = vld [vmem:[#allocation12 + $0x158] sm:$0xff]
    %v10183 = vld [vmem:[#allocation12 + $0x160] sm:$0xff]
    %v10184 = vld [vmem:[#allocation12 + $0x168] sm:$0xff]
    %v10185 = vld [vmem:[#allocation12 + $0x170] sm:$0xff]
    %v10186 = vld [vmem:[#allocation12 + $0x178] sm:$0xff]
    %v10187 = vld [vmem:[#allocation12 + $0x180] sm:$0xff]
    %v10188 = vld [vmem:[#allocation12 + $0x188] sm:$0xff]
    %v10189 = vld [vmem:[#allocation12 + $0x190] sm:$0xff]
    %v10190 = vld [vmem:[#allocation12 + $0x198] sm:$0xff]
    %v10191 = vld [vmem:[#allocation12 + $0x1a0] sm:$0xff]
    %v10192 = vld [vmem:[#allocation12 + $0x1a8] sm:$0xff]
    %v10193 = vld [vmem:[#allocation12 + $0x1b0] sm:$0xff]
    %v10194 = vld [vmem:[#allocation12 + $0x1b8] sm:$0xff]
    %v10195 = vld [vmem:[#allocation12 + $0x1c0] sm:$0xff]
    %v10196 = vld [vmem:[#allocation12 + $0x1c8] sm:$0xff]
    %v10197 = vld [vmem:[#allocation12 + $0x1d0] sm:$0xff]
    %v10198 = vld [vmem:[#allocation12 + $0x1d8] sm:$0xff]
    %v10199 = vld [vmem:[#allocation12 + $0x1e0] sm:$0xff]
    %v10200 = vld [vmem:[#allocation12 + $0x1e8] sm:$0xff]
    %v10201 = vld [vmem:[#allocation12 + $0x1f0] sm:$0xff]
    %v10202 = vld [vmem:[#allocation12 + $0x1f8] sm:$0xff]
    %v10203 = vld [vmem:[#allocation3] sm:$0xff]
    %v10204 = vld [vmem:[#allocation3 + $0x8] sm:$0x11]
    %v10205 = vld [vmem:[#allocation3 + $0x10] sm:$0xff]
    %v10206 = vld [vmem:[#allocation3 + $0x18] sm:$0x11]
    %v10208 = vshrl.u32 %v10203, 16
    %v10210 = vrot.slane %v10208, 4
    %v10211 = vshll.u32 %v10203, 16
    %v10213 = vrot.slane %v10211, 5
    %v10214 = vor.u32 %v10210, %v10213
    %v10215 = vrot.slane %v10214, 4
    %v10217 = vshll.u32 %v10204, 16
    %v10219 = vrot.slane %v10217, 5
    %v10220 = vsel %vm215, %v10215, %v10219
    %v10222 = vshrl.u32 %v10205, 16
    %v10224 = vrot.slane %v10222, 4
    %v10225 = vshll.u32 %v10205, 16
    %v10227 = vrot.slane %v10225, 5
    %v10228 = vor.u32 %v10224, %v10227
    %v10229 = vrot.slane %v10228, 4
    %v10231 = vshll.u32 %v10206, 16
    %v10233 = vrot.slane %v10231, 5
    %v10234 = vsel %vm215, %v10229, %v10233
    %s10235 = scalar_lea.vmem [#allocation12], 512
    %v10236 = vld [vmem:[%s10235] sm:$0xff]
    %v10237 = vld [vmem:[%s10235 + $0x8] sm:$0xff]
    %v10238 = vld [vmem:[%s10235 + $0x10] sm:$0xff]
    %v10239 = vld [vmem:[%s10235 + $0x18] sm:$0xff]
    %v10240 = vld [vmem:[%s10235 + $0x20] sm:$0xff]
    %v10241 = vld [vmem:[%s10235 + $0x28] sm:$0xff]
    %v10242 = vld [vmem:[%s10235 + $0x30] sm:$0xff]
    %v10243 = vld [vmem:[%s10235 + $0x38] sm:$0xff]
    %v10244 = vld [vmem:[%s10235 + $0x40] sm:$0xff]
    %v10245 = vld [vmem:[%s10235 + $0x48] sm:$0xff]
    %v10246 = vld [vmem:[%s10235 + $0x50] sm:$0xff]
    %v10247 = vld [vmem:[%s10235 + $0x58] sm:$0xff]
    %v10248 = vld [vmem:[%s10235 + $0x60] sm:$0xff]
    %v10249 = vld [vmem:[%s10235 + $0x68] sm:$0xff]
    %v10250 = vld [vmem:[%s10235 + $0x70] sm:$0xff]
    %v10251 = vld [vmem:[%s10235 + $0x78] sm:$0xff]
    %v10252 = vld [vmem:[%s10235 + $0x80] sm:$0xff]
    %v10253 = vld [vmem:[%s10235 + $0x88] sm:$0xff]
    %v10254 = vld [vmem:[%s10235 + $0x90] sm:$0xff]
    %v10255 = vld [vmem:[%s10235 + $0x98] sm:$0xff]
    %v10256 = vld [vmem:[%s10235 + $0xa0] sm:$0xff]
    %v10257 = vld [vmem:[%s10235 + $0xa8] sm:$0xff]
    %v10258 = vld [vmem:[%s10235 + $0xb0] sm:$0xff]
    %v10259 = vld [vmem:[%s10235 + $0xb8] sm:$0xff]
    %v10260 = vld [vmem:[%s10235 + $0xc0] sm:$0xff]
    %v10261 = vld [vmem:[%s10235 + $0xc8] sm:$0xff]
    %v10262 = vld [vmem:[%s10235 + $0xd0] sm:$0xff]
    %v10263 = vld [vmem:[%s10235 + $0xd8] sm:$0xff]
    %v10264 = vld [vmem:[%s10235 + $0xe0] sm:$0xff]
    %v10265 = vld [vmem:[%s10235 + $0xe8] sm:$0xff]
    %v10266 = vld [vmem:[%s10235 + $0xf0] sm:$0xff]
    %v10267 = vld [vmem:[%s10235 + $0xf8] sm:$0xff]
    %v10268 = vld [vmem:[%s10235 + $0x100] sm:$0xff]
    %v10269 = vld [vmem:[%s10235 + $0x108] sm:$0xff]
    %v10270 = vld [vmem:[%s10235 + $0x110] sm:$0xff]
    %v10271 = vld [vmem:[%s10235 + $0x118] sm:$0xff]
    %v10272 = vld [vmem:[%s10235 + $0x120] sm:$0xff]
    %v10273 = vld [vmem:[%s10235 + $0x128] sm:$0xff]
    %v10274 = vld [vmem:[%s10235 + $0x130] sm:$0xff]
    %v10275 = vld [vmem:[%s10235 + $0x138] sm:$0xff]
    %v10276 = vld [vmem:[%s10235 + $0x140] sm:$0xff]
    %v10277 = vld [vmem:[%s10235 + $0x148] sm:$0xff]
    %v10278 = vld [vmem:[%s10235 + $0x150] sm:$0xff]
    %v10279 = vld [vmem:[%s10235 + $0x158] sm:$0xff]
    %v10280 = vld [vmem:[%s10235 + $0x160] sm:$0xff]
    %v10281 = vld [vmem:[%s10235 + $0x168] sm:$0xff]
    %v10282 = vld [vmem:[%s10235 + $0x170] sm:$0xff]
    %v10283 = vld [vmem:[%s10235 + $0x178] sm:$0xff]
    %v10284 = vld [vmem:[%s10235 + $0x180] sm:$0xff]
    %v10285 = vld [vmem:[%s10235 + $0x188] sm:$0xff]
    %v10286 = vld [vmem:[%s10235 + $0x190] sm:$0xff]
    %v10287 = vld [vmem:[%s10235 + $0x198] sm:$0xff]
    %v10288 = vld [vmem:[%s10235 + $0x1a0] sm:$0xff]
    %v10289 = vld [vmem:[%s10235 + $0x1a8] sm:$0xff]
    %v10290 = vld [vmem:[%s10235 + $0x1b0] sm:$0xff]
    %v10291 = vld [vmem:[%s10235 + $0x1b8] sm:$0xff]
    %v10292 = vld [vmem:[%s10235 + $0x1c0] sm:$0xff]
    %v10293 = vld [vmem:[%s10235 + $0x1c8] sm:$0xff]
    %v10294 = vld [vmem:[%s10235 + $0x1d0] sm:$0xff]
    %v10295 = vld [vmem:[%s10235 + $0x1d8] sm:$0xff]
    %v10296 = vld [vmem:[%s10235 + $0x1e0] sm:$0xff]
    %v10297 = vld [vmem:[%s10235 + $0x1e8] sm:$0xff]
    %v10298 = vld [vmem:[%s10235 + $0x1f0] sm:$0xff]
    %v10299 = vld [vmem:[%s10235 + $0x1f8] sm:$0xff]
    %v10300 = vunpack.c.l.b16 %v10220
    %v10301 = vunpack.c.h.b16 %v10220
    %v10302 = vunpack.c.l.b16 %v10234
    %v10303 = vunpack.c.h.b16 %v10234
    %v10304 = vpack.c.b16 %v10302, %v10300
    %v10305 = vpack.c.b16 %v10303, %v10301
    %v10372 = vunpack.c.l.b16 %v10236
    %v10373 = vunpack.c.h.b16 %v10236
    %v10374 = vunpack.c.l.b16 %v10237
    %v10375 = vunpack.c.h.b16 %v10237
    %v10376 = vunpack.c.l.b16 %v10238
    %v10377 = vunpack.c.h.b16 %v10238
    %v10378 = vunpack.c.l.b16 %v10239
    %v10379 = vunpack.c.h.b16 %v10239
    %v10380 = vunpack.c.l.b16 %v10240
    %v10381 = vunpack.c.h.b16 %v10240
    %v10382 = vunpack.c.l.b16 %v10241
    %v10383 = vunpack.c.h.b16 %v10241
    %v10384 = vunpack.c.l.b16 %v10242
    %v10385 = vunpack.c.h.b16 %v10242
    %v10386 = vunpack.c.l.b16 %v10243
    %v10387 = vunpack.c.h.b16 %v10243
    %v10388 = vunpack.c.l.b16 %v10244
    %v10389 = vunpack.c.h.b16 %v10244
    %v10390 = vunpack.c.l.b16 %v10245
    %v10391 = vunpack.c.h.b16 %v10245
    %v10392 = vunpack.c.l.b16 %v10246
    %v10393 = vunpack.c.h.b16 %v10246
    %v10394 = vunpack.c.l.b16 %v10247
    %v10395 = vunpack.c.h.b16 %v10247
    %v10396 = vunpack.c.l.b16 %v10248
    %v10397 = vunpack.c.h.b16 %v10248
    %v10398 = vunpack.c.l.b16 %v10249
    %v10399 = vunpack.c.h.b16 %v10249
    %v10400 = vunpack.c.l.b16 %v10250
    %v10401 = vunpack.c.h.b16 %v10250
    %v10402 = vunpack.c.l.b16 %v10251
    %v10403 = vunpack.c.h.b16 %v10251
    %v10404 = vunpack.c.l.b16 %v10252
    %v10405 = vunpack.c.h.b16 %v10252
    %v10406 = vunpack.c.l.b16 %v10253
    %v10407 = vunpack.c.h.b16 %v10253
    %v10408 = vunpack.c.l.b16 %v10254
    %v10409 = vunpack.c.h.b16 %v10254
    %v10410 = vunpack.c.l.b16 %v10255
    %v10411 = vunpack.c.h.b16 %v10255
    %v10412 = vunpack.c.l.b16 %v10256
    %v10413 = vunpack.c.h.b16 %v10256
    %v10414 = vunpack.c.l.b16 %v10257
    %v10415 = vunpack.c.h.b16 %v10257
    %v10416 = vunpack.c.l.b16 %v10258
    %v10417 = vunpack.c.h.b16 %v10258
    %v10418 = vunpack.c.l.b16 %v10259
    %v10419 = vunpack.c.h.b16 %v10259
    %v10420 = vunpack.c.l.b16 %v10260
    %v10421 = vunpack.c.h.b16 %v10260
    %v10422 = vunpack.c.l.b16 %v10261
    %v10423 = vunpack.c.h.b16 %v10261
    %v10424 = vunpack.c.l.b16 %v10262
    %v10425 = vunpack.c.h.b16 %v10262
    %v10426 = vunpack.c.l.b16 %v10263
    %v10427 = vunpack.c.h.b16 %v10263
    %v10428 = vunpack.c.l.b16 %v10264
    %v10429 = vunpack.c.h.b16 %v10264
    %v10430 = vunpack.c.l.b16 %v10265
    %v10431 = vunpack.c.h.b16 %v10265
    %v10432 = vunpack.c.l.b16 %v10266
    %v10433 = vunpack.c.h.b16 %v10266
    %v10434 = vunpack.c.l.b16 %v10267
    %v10435 = vunpack.c.h.b16 %v10267
    %v10436 = vunpack.c.l.b16 %v10268
    %v10437 = vunpack.c.h.b16 %v10268
    %v10438 = vunpack.c.l.b16 %v10269
    %v10439 = vunpack.c.h.b16 %v10269
    %v10440 = vunpack.c.l.b16 %v10270
    %v10441 = vunpack.c.h.b16 %v10270
    %v10442 = vunpack.c.l.b16 %v10271
    %v10443 = vunpack.c.h.b16 %v10271
    %v10444 = vunpack.c.l.b16 %v10272
    %v10445 = vunpack.c.h.b16 %v10272
    %v10446 = vunpack.c.l.b16 %v10273
    %v10447 = vunpack.c.h.b16 %v10273
    %v10448 = vunpack.c.l.b16 %v10274
    %v10449 = vunpack.c.h.b16 %v10274
    %v10450 = vunpack.c.l.b16 %v10275
    %v10451 = vunpack.c.h.b16 %v10275
    %v10452 = vunpack.c.l.b16 %v10276
    %v10453 = vunpack.c.h.b16 %v10276
    %v10454 = vunpack.c.l.b16 %v10277
    %v10455 = vunpack.c.h.b16 %v10277
    %v10456 = vunpack.c.l.b16 %v10278
    %v10457 = vunpack.c.h.b16 %v10278
    %v10458 = vunpack.c.l.b16 %v10279
    %v10459 = vunpack.c.h.b16 %v10279
    %v10460 = vunpack.c.l.b16 %v10280
    %v10461 = vunpack.c.h.b16 %v10280
    %v10462 = vunpack.c.l.b16 %v10281
    %v10463 = vunpack.c.h.b16 %v10281
    %v10464 = vunpack.c.l.b16 %v10282
    %v10465 = vunpack.c.h.b16 %v10282
    %v10466 = vunpack.c.l.b16 %v10283
    %v10467 = vunpack.c.h.b16 %v10283
    %v10468 = vunpack.c.l.b16 %v10284
    %v10469 = vunpack.c.h.b16 %v10284
    %v10470 = vunpack.c.l.b16 %v10285
    %v10471 = vunpack.c.h.b16 %v10285
    %v10472 = vunpack.c.l.b16 %v10286
    %v10473 = vunpack.c.h.b16 %v10286
    %v10474 = vunpack.c.l.b16 %v10287
    %v10475 = vunpack.c.h.b16 %v10287
    %v10476 = vunpack.c.l.b16 %v10288
    %v10477 = vunpack.c.h.b16 %v10288
    %v10478 = vunpack.c.l.b16 %v10289
    %v10479 = vunpack.c.h.b16 %v10289
    %v10480 = vunpack.c.l.b16 %v10290
    %v10481 = vunpack.c.h.b16 %v10290
    %v10482 = vunpack.c.l.b16 %v10291
    %v10483 = vunpack.c.h.b16 %v10291
    %v10484 = vunpack.c.l.b16 %v10292
    %v10485 = vunpack.c.h.b16 %v10292
    %v10486 = vunpack.c.l.b16 %v10293
    %v10487 = vunpack.c.h.b16 %v10293
    %v10488 = vunpack.c.l.b16 %v10294
    %v10489 = vunpack.c.h.b16 %v10294
    %v10490 = vunpack.c.l.b16 %v10295
    %v10491 = vunpack.c.h.b16 %v10295
    %v10492 = vunpack.c.l.b16 %v10296
    %v10493 = vunpack.c.h.b16 %v10296
    %v10494 = vunpack.c.l.b16 %v10297
    %v10495 = vunpack.c.h.b16 %v10297
    %v10496 = vunpack.c.l.b16 %v10298
    %v10497 = vunpack.c.h.b16 %v10298
    %v10498 = vunpack.c.l.b16 %v10299
    %v10499 = vunpack.c.h.b16 %v10299
    %v10500 = vpack.c.b16 %v10376, %v10372
    %v10501 = vpack.c.b16 %v10377, %v10373
    %v10502 = vpack.c.b16 %v10378, %v10374
    %v10503 = vpack.c.b16 %v10379, %v10375
    %v10504 = vpack.c.b16 %v10384, %v10380
    %v10505 = vpack.c.b16 %v10385, %v10381
    %v10506 = vpack.c.b16 %v10386, %v10382
    %v10507 = vpack.c.b16 %v10387, %v10383
    %v10508 = vpack.c.b16 %v10392, %v10388
    %v10509 = vpack.c.b16 %v10393, %v10389
    %v10510 = vpack.c.b16 %v10394, %v10390
    %v10511 = vpack.c.b16 %v10395, %v10391
    %v10512 = vpack.c.b16 %v10400, %v10396
    %v10513 = vpack.c.b16 %v10401, %v10397
    %v10514 = vpack.c.b16 %v10402, %v10398
    %v10515 = vpack.c.b16 %v10403, %v10399
    %v10516 = vpack.c.b16 %v10408, %v10404
    %v10517 = vpack.c.b16 %v10409, %v10405
    %v10518 = vpack.c.b16 %v10410, %v10406
    %v10519 = vpack.c.b16 %v10411, %v10407
    %v10520 = vpack.c.b16 %v10416, %v10412
    %v10521 = vpack.c.b16 %v10417, %v10413
    %v10522 = vpack.c.b16 %v10418, %v10414
    %v10523 = vpack.c.b16 %v10419, %v10415
    %v10524 = vpack.c.b16 %v10424, %v10420
    %v10525 = vpack.c.b16 %v10425, %v10421
    %v10526 = vpack.c.b16 %v10426, %v10422
    %v10527 = vpack.c.b16 %v10427, %v10423
    %v10528 = vpack.c.b16 %v10432, %v10428
    %v10529 = vpack.c.b16 %v10433, %v10429
    %v10530 = vpack.c.b16 %v10434, %v10430
    %v10531 = vpack.c.b16 %v10435, %v10431
    %v10532 = vpack.c.b16 %v10440, %v10436
    %v10533 = vpack.c.b16 %v10441, %v10437
    %v10534 = vpack.c.b16 %v10442, %v10438
    %v10535 = vpack.c.b16 %v10443, %v10439
    %v10536 = vpack.c.b16 %v10448, %v10444
    %v10537 = vpack.c.b16 %v10449, %v10445
    %v10538 = vpack.c.b16 %v10450, %v10446
    %v10539 = vpack.c.b16 %v10451, %v10447
    %v10540 = vpack.c.b16 %v10456, %v10452
    %v10541 = vpack.c.b16 %v10457, %v10453
    %v10542 = vpack.c.b16 %v10458, %v10454
    %v10543 = vpack.c.b16 %v10459, %v10455
    %v10544 = vpack.c.b16 %v10464, %v10460
    %v10545 = vpack.c.b16 %v10465, %v10461
    %v10546 = vpack.c.b16 %v10466, %v10462
    %v10547 = vpack.c.b16 %v10467, %v10463
    %v10548 = vpack.c.b16 %v10472, %v10468
    %v10549 = vpack.c.b16 %v10473, %v10469
    %v10550 = vpack.c.b16 %v10474, %v10470
    %v10551 = vpack.c.b16 %v10475, %v10471
    %v10552 = vpack.c.b16 %v10480, %v10476
    %v10553 = vpack.c.b16 %v10481, %v10477
    %v10554 = vpack.c.b16 %v10482, %v10478
    %v10555 = vpack.c.b16 %v10483, %v10479
    %v10556 = vpack.c.b16 %v10488, %v10484
    %v10557 = vpack.c.b16 %v10489, %v10485
    %v10558 = vpack.c.b16 %v10490, %v10486
    %v10559 = vpack.c.b16 %v10491, %v10487
    %v10560 = vpack.c.b16 %v10496, %v10492
    %v10561 = vpack.c.b16 %v10497, %v10493
    %v10562 = vpack.c.b16 %v10498, %v10494
    %v10563 = vpack.c.b16 %v10499, %v10495
    %10628 = vmatpush.bf16.msra.mxu0 %v10528
    %10629 = vmatpush.bf16.msra.mxu0 %v10524
    %10630 = vmatpush.bf16.msra.mxu0 %v10520
    %10631 = vmatpush.bf16.msra.mxu0 %v10516
    %10632 = vmatpush.bf16.msra.mxu0 %v10512
    %10633 = vmatpush.bf16.msra.mxu0 %v10508
    %10634 = vmatpush.bf16.msra.mxu0 %v10504
    %10635 = vmatpush.bf16.msra.mxu0 %v10500
    %10636 = vmatmul.bf16.gmra.mxu0 %v10304
    %v10637 = vpop.f32.mrf.mxu0
    %v10638 = vadd.f32 0.0, %v10637
    %v10639 = vpop.f32.mrf.mxu0
    %v10640 = vadd.f32 0.0, %v10639
    %10641 = vdwg.mxu0
    %10642 = vmatpush.bf16.msra.mxu0 %v10560
    %10643 = vmatpush.bf16.msra.mxu0 %v10556
    %10644 = vmatpush.bf16.msra.mxu0 %v10552
    %10645 = vmatpush.bf16.msra.mxu0 %v10548
    %10646 = vmatpush.bf16.msra.mxu0 %v10544
    %10647 = vmatpush.bf16.msra.mxu0 %v10540
    %10648 = vmatpush.bf16.msra.mxu0 %v10536
    %10649 = vmatpush.bf16.msra.mxu0 %v10532
    %10650 = vmatmul.bf16.gmra.mxu0 %v10305
    %v10651 = vpop.f32.mrf.mxu0
    %v10652 = vadd.f32 %v10638, %v10651
    %v10653 = vpop.f32.mrf.mxu0
    %v10654 = vadd.f32 %v10640, %v10653
    %10655 = vdwg.mxu0
    %10656 = vmatpush.bf16.msra.mxu0 %v10529
    %10657 = vmatpush.bf16.msra.mxu0 %v10525
    %10658 = vmatpush.bf16.msra.mxu0 %v10521
    %10659 = vmatpush.bf16.msra.mxu0 %v10517
    %10660 = vmatpush.bf16.msra.mxu0 %v10513
    %10661 = vmatpush.bf16.msra.mxu0 %v10509
    %10662 = vmatpush.bf16.msra.mxu0 %v10505
    %10663 = vmatpush.bf16.msra.mxu0 %v10501
    %10664 = vmatmul.bf16.gmra.mxu0 %v10304
    %v10665 = vpop.f32.mrf.mxu0
    %v10666 = vadd.f32 0.0, %v10665
    %v10667 = vpop.f32.mrf.mxu0
    %v10668 = vadd.f32 0.0, %v10667
    %10669 = vdwg.mxu0
    %10670 = vmatpush.bf16.msra.mxu0 %v10561
    %10671 = vmatpush.bf16.msra.mxu0 %v10557
    %10672 = vmatpush.bf16.msra.mxu0 %v10553
    %10673 = vmatpush.bf16.msra.mxu0 %v10549
    %10674 = vmatpush.bf16.msra.mxu0 %v10545
    %10675 = vmatpush.bf16.msra.mxu0 %v10541
    %10676 = vmatpush.bf16.msra.mxu0 %v10537
    %10677 = vmatpush.bf16.msra.mxu0 %v10533
    %10678 = vmatmul.bf16.gmra.mxu0 %v10305
    %v10679 = vpop.f32.mrf.mxu0
    %v10680 = vadd.f32 %v10666, %v10679
    %v10681 = vpop.f32.mrf.mxu0
    %v10682 = vadd.f32 %v10668, %v10681
    %10683 = vdwg.mxu0
    %10684 = vmatpush.bf16.msra.mxu0 %v10530
    %10685 = vmatpush.bf16.msra.mxu0 %v10526
    %10686 = vmatpush.bf16.msra.mxu0 %v10522
    %10687 = vmatpush.bf16.msra.mxu0 %v10518
    %10688 = vmatpush.bf16.msra.mxu0 %v10514
    %10689 = vmatpush.bf16.msra.mxu0 %v10510
    %10690 = vmatpush.bf16.msra.mxu0 %v10506
    %10691 = vmatpush.bf16.msra.mxu0 %v10502
    %10692 = vmatmul.bf16.gmra.mxu0 %v10304
    %v10693 = vpop.f32.mrf.mxu0
    %v10694 = vadd.f32 0.0, %v10693
    %v10695 = vpop.f32.mrf.mxu0
    %v10696 = vadd.f32 0.0, %v10695
    %10697 = vdwg.mxu0
    %10698 = vmatpush.bf16.msra.mxu0 %v10562
    %10699 = vmatpush.bf16.msra.mxu0 %v10558
    %10700 = vmatpush.bf16.msra.mxu0 %v10554
    %10701 = vmatpush.bf16.msra.mxu0 %v10550
    %10702 = vmatpush.bf16.msra.mxu0 %v10546
    %10703 = vmatpush.bf16.msra.mxu0 %v10542
    %10704 = vmatpush.bf16.msra.mxu0 %v10538
    %10705 = vmatpush.bf16.msra.mxu0 %v10534
    %10706 = vmatmul.bf16.gmra.mxu0 %v10305
    %v10707 = vpop.f32.mrf.mxu0
    %v10708 = vadd.f32 %v10694, %v10707
    %v10709 = vpop.f32.mrf.mxu0
    %v10710 = vadd.f32 %v10696, %v10709
    %10711 = vdwg.mxu0
    %10712 = vmatpush.bf16.msra.mxu0 %v10531
    %10713 = vmatpush.bf16.msra.mxu0 %v10527
    %10714 = vmatpush.bf16.msra.mxu0 %v10523
    %10715 = vmatpush.bf16.msra.mxu0 %v10519
    %10716 = vmatpush.bf16.msra.mxu0 %v10515
    %10717 = vmatpush.bf16.msra.mxu0 %v10511
    %10718 = vmatpush.bf16.msra.mxu0 %v10507
    %10719 = vmatpush.bf16.msra.mxu0 %v10503
    %10720 = vmatmul.bf16.gmra.mxu0 %v10304
    %v10721 = vpop.f32.mrf.mxu0
    %v10722 = vadd.f32 0.0, %v10721
    %v10723 = vpop.f32.mrf.mxu0
    %v10724 = vadd.f32 0.0, %v10723
    %10725 = vdwg.mxu0
    %10726 = vmatpush.bf16.msra.mxu0 %v10563
    %10727 = vmatpush.bf16.msra.mxu0 %v10559
    %10728 = vmatpush.bf16.msra.mxu0 %v10555
    %10729 = vmatpush.bf16.msra.mxu0 %v10551
    %10730 = vmatpush.bf16.msra.mxu0 %v10547
    %10731 = vmatpush.bf16.msra.mxu0 %v10543
    %10732 = vmatpush.bf16.msra.mxu0 %v10539
    %10733 = vmatpush.bf16.msra.mxu0 %v10535
    %10734 = vmatmul.bf16.gmra.mxu0 %v10305
    %v10735 = vpop.f32.mrf.mxu0
    %v10736 = vadd.f32 %v10722, %v10735
    %v10737 = vpop.f32.mrf.mxu0
    %v10738 = vadd.f32 %v10724, %v10737
    %10739 = vdwg.mxu0
    %v10742 = vunpack.c.l.b16 %v10137
    %v10743 = vunpack.c.h.b16 %v10137
    %v10744 = vunpack.c.l.b16 %v10138
    %v10745 = vunpack.c.h.b16 %v10138
    %v10746 = vpack.c.b16 %v10744, %v10742
    %v10747 = vpack.c.b16 %v10745, %v10743
    %v10814 = vunpack.c.l.b16 %v10139
    %v10815 = vunpack.c.h.b16 %v10139
    %v10816 = vunpack.c.l.b16 %v10140
    %v10817 = vunpack.c.h.b16 %v10140
    %v10818 = vunpack.c.l.b16 %v10141
    %v10819 = vunpack.c.h.b16 %v10141
    %v10820 = vunpack.c.l.b16 %v10142
    %v10821 = vunpack.c.h.b16 %v10142
    %v10822 = vunpack.c.l.b16 %v10143
    %v10823 = vunpack.c.h.b16 %v10143
    %v10824 = vunpack.c.l.b16 %v10144
    %v10825 = vunpack.c.h.b16 %v10144
    %v10826 = vunpack.c.l.b16 %v10145
    %v10827 = vunpack.c.h.b16 %v10145
    %v10828 = vunpack.c.l.b16 %v10146
    %v10829 = vunpack.c.h.b16 %v10146
    %v10830 = vunpack.c.l.b16 %v10147
    %v10831 = vunpack.c.h.b16 %v10147
    %v10832 = vunpack.c.l.b16 %v10148
    %v10833 = vunpack.c.h.b16 %v10148
    %v10834 = vunpack.c.l.b16 %v10149
    %v10835 = vunpack.c.h.b16 %v10149
    %v10836 = vunpack.c.l.b16 %v10150
    %v10837 = vunpack.c.h.b16 %v10150
    %v10838 = vunpack.c.l.b16 %v10151
    %v10839 = vunpack.c.h.b16 %v10151
    %v10840 = vunpack.c.l.b16 %v10152
    %v10841 = vunpack.c.h.b16 %v10152
    %v10842 = vunpack.c.l.b16 %v10153
    %v10843 = vunpack.c.h.b16 %v10153
    %v10844 = vunpack.c.l.b16 %v10154
    %v10845 = vunpack.c.h.b16 %v10154
    %v10846 = vunpack.c.l.b16 %v10155
    %v10847 = vunpack.c.h.b16 %v10155
    %v10848 = vunpack.c.l.b16 %v10156
    %v10849 = vunpack.c.h.b16 %v10156
    %v10850 = vunpack.c.l.b16 %v10157
    %v10851 = vunpack.c.h.b16 %v10157
    %v10852 = vunpack.c.l.b16 %v10158
    %v10853 = vunpack.c.h.b16 %v10158
    %v10854 = vunpack.c.l.b16 %v10159
    %v10855 = vunpack.c.h.b16 %v10159
    %v10856 = vunpack.c.l.b16 %v10160
    %v10857 = vunpack.c.h.b16 %v10160
    %v10858 = vunpack.c.l.b16 %v10161
    %v10859 = vunpack.c.h.b16 %v10161
    %v10860 = vunpack.c.l.b16 %v10162
    %v10861 = vunpack.c.h.b16 %v10162
    %v10862 = vunpack.c.l.b16 %v10163
    %v10863 = vunpack.c.h.b16 %v10163
    %v10864 = vunpack.c.l.b16 %v10164
    %v10865 = vunpack.c.h.b16 %v10164
    %v10866 = vunpack.c.l.b16 %v10165
    %v10867 = vunpack.c.h.b16 %v10165
    %v10868 = vunpack.c.l.b16 %v10166
    %v10869 = vunpack.c.h.b16 %v10166
    %v10870 = vunpack.c.l.b16 %v10167
    %v10871 = vunpack.c.h.b16 %v10167
    %v10872 = vunpack.c.l.b16 %v10168
    %v10873 = vunpack.c.h.b16 %v10168
    %v10874 = vunpack.c.l.b16 %v10169
    %v10875 = vunpack.c.h.b16 %v10169
    %v10876 = vunpack.c.l.b16 %v10170
    %v10877 = vunpack.c.h.b16 %v10170
    %v10878 = vunpack.c.l.b16 %v10171
    %v10879 = vunpack.c.h.b16 %v10171
    %v10880 = vunpack.c.l.b16 %v10172
    %v10881 = vunpack.c.h.b16 %v10172
    %v10882 = vunpack.c.l.b16 %v10173
    %v10883 = vunpack.c.h.b16 %v10173
    %v10884 = vunpack.c.l.b16 %v10174
    %v10885 = vunpack.c.h.b16 %v10174
    %v10886 = vunpack.c.l.b16 %v10175
    %v10887 = vunpack.c.h.b16 %v10175
    %v10888 = vunpack.c.l.b16 %v10176
    %v10889 = vunpack.c.h.b16 %v10176
    %v10890 = vunpack.c.l.b16 %v10177
    %v10891 = vunpack.c.h.b16 %v10177
    %v10892 = vunpack.c.l.b16 %v10178
    %v10893 = vunpack.c.h.b16 %v10178
    %v10894 = vunpack.c.l.b16 %v10179
    %v10895 = vunpack.c.h.b16 %v10179
    %v10896 = vunpack.c.l.b16 %v10180
    %v10897 = vunpack.c.h.b16 %v10180
    %v10898 = vunpack.c.l.b16 %v10181
    %v10899 = vunpack.c.h.b16 %v10181
    %v10900 = vunpack.c.l.b16 %v10182
    %v10901 = vunpack.c.h.b16 %v10182
    %v10902 = vunpack.c.l.b16 %v10183
    %v10903 = vunpack.c.h.b16 %v10183
    %v10904 = vunpack.c.l.b16 %v10184
    %v10905 = vunpack.c.h.b16 %v10184
    %v10906 = vunpack.c.l.b16 %v10185
    %v10907 = vunpack.c.h.b16 %v10185
    %v10908 = vunpack.c.l.b16 %v10186
    %v10909 = vunpack.c.h.b16 %v10186
    %v10910 = vunpack.c.l.b16 %v10187
    %v10911 = vunpack.c.h.b16 %v10187
    %v10912 = vunpack.c.l.b16 %v10188
    %v10913 = vunpack.c.h.b16 %v10188
    %v10914 = vunpack.c.l.b16 %v10189
    %v10915 = vunpack.c.h.b16 %v10189
    %v10916 = vunpack.c.l.b16 %v10190
    %v10917 = vunpack.c.h.b16 %v10190
    %v10918 = vunpack.c.l.b16 %v10191
    %v10919 = vunpack.c.h.b16 %v10191
    %v10920 = vunpack.c.l.b16 %v10192
    %v10921 = vunpack.c.h.b16 %v10192
    %v10922 = vunpack.c.l.b16 %v10193
    %v10923 = vunpack.c.h.b16 %v10193
    %v10924 = vunpack.c.l.b16 %v10194
    %v10925 = vunpack.c.h.b16 %v10194
    %v10926 = vunpack.c.l.b16 %v10195
    %v10927 = vunpack.c.h.b16 %v10195
    %v10928 = vunpack.c.l.b16 %v10196
    %v10929 = vunpack.c.h.b16 %v10196
    %v10930 = vunpack.c.l.b16 %v10197
    %v10931 = vunpack.c.h.b16 %v10197
    %v10932 = vunpack.c.l.b16 %v10198
    %v10933 = vunpack.c.h.b16 %v10198
    %v10934 = vunpack.c.l.b16 %v10199
    %v10935 = vunpack.c.h.b16 %v10199
    %v10936 = vunpack.c.l.b16 %v10200
    %v10937 = vunpack.c.h.b16 %v10200
    %v10938 = vunpack.c.l.b16 %v10201
    %v10939 = vunpack.c.h.b16 %v10201
    %v10940 = vunpack.c.l.b16 %v10202
    %v10941 = vunpack.c.h.b16 %v10202
    %v10942 = vpack.c.b16 %v10818, %v10814
    %v10943 = vpack.c.b16 %v10819, %v10815
    %v10944 = vpack.c.b16 %v10820, %v10816
    %v10945 = vpack.c.b16 %v10821, %v10817
    %v10946 = vpack.c.b16 %v10826, %v10822
    %v10947 = vpack.c.b16 %v10827, %v10823
    %v10948 = vpack.c.b16 %v10828, %v10824
    %v10949 = vpack.c.b16 %v10829, %v10825
    %v10950 = vpack.c.b16 %v10834, %v10830
    %v10951 = vpack.c.b16 %v10835, %v10831
    %v10952 = vpack.c.b16 %v10836, %v10832
    %v10953 = vpack.c.b16 %v10837, %v10833
    %v10954 = vpack.c.b16 %v10842, %v10838
    %v10955 = vpack.c.b16 %v10843, %v10839
    %v10956 = vpack.c.b16 %v10844, %v10840
    %v10957 = vpack.c.b16 %v10845, %v10841
    %v10958 = vpack.c.b16 %v10850, %v10846
    %v10959 = vpack.c.b16 %v10851, %v10847
    %v10960 = vpack.c.b16 %v10852, %v10848
    %v10961 = vpack.c.b16 %v10853, %v10849
    %v10962 = vpack.c.b16 %v10858, %v10854
    %v10963 = vpack.c.b16 %v10859, %v10855
    %v10964 = vpack.c.b16 %v10860, %v10856
    %v10965 = vpack.c.b16 %v10861, %v10857
    %v10966 = vpack.c.b16 %v10866, %v10862
    %v10967 = vpack.c.b16 %v10867, %v10863
    %v10968 = vpack.c.b16 %v10868, %v10864
    %v10969 = vpack.c.b16 %v10869, %v10865
    %v10970 = vpack.c.b16 %v10874, %v10870
    %v10971 = vpack.c.b16 %v10875, %v10871
    %v10972 = vpack.c.b16 %v10876, %v10872
    %v10973 = vpack.c.b16 %v10877, %v10873
    %v10974 = vpack.c.b16 %v10882, %v10878
    %v10975 = vpack.c.b16 %v10883, %v10879
    %v10976 = vpack.c.b16 %v10884, %v10880
    %v10977 = vpack.c.b16 %v10885, %v10881
    %v10978 = vpack.c.b16 %v10890, %v10886
    %v10979 = vpack.c.b16 %v10891, %v10887
    %v10980 = vpack.c.b16 %v10892, %v10888
    %v10981 = vpack.c.b16 %v10893, %v10889
    %v10982 = vpack.c.b16 %v10898, %v10894
    %v10983 = vpack.c.b16 %v10899, %v10895
    %v10984 = vpack.c.b16 %v10900, %v10896
    %v10985 = vpack.c.b16 %v10901, %v10897
    %v10986 = vpack.c.b16 %v10906, %v10902
    %v10987 = vpack.c.b16 %v10907, %v10903
    %v10988 = vpack.c.b16 %v10908, %v10904
    %v10989 = vpack.c.b16 %v10909, %v10905
    %v10990 = vpack.c.b16 %v10914, %v10910
    %v10991 = vpack.c.b16 %v10915, %v10911
    %v10992 = vpack.c.b16 %v10916, %v10912
    %v10993 = vpack.c.b16 %v10917, %v10913
    %v10994 = vpack.c.b16 %v10922, %v10918
    %v10995 = vpack.c.b16 %v10923, %v10919
    %v10996 = vpack.c.b16 %v10924, %v10920
    %v10997 = vpack.c.b16 %v10925, %v10921
    %v10998 = vpack.c.b16 %v10930, %v10926
    %v10999 = vpack.c.b16 %v10931, %v10927
    %v11000 = vpack.c.b16 %v10932, %v10928
    %v11001 = vpack.c.b16 %v10933, %v10929
    %v11002 = vpack.c.b16 %v10938, %v10934
    %v11003 = vpack.c.b16 %v10939, %v10935
    %v11004 = vpack.c.b16 %v10940, %v10936
    %v11005 = vpack.c.b16 %v10941, %v10937
    %11070 = vmatpush.bf16.msra.mxu0 %v10970
    %11071 = vmatpush.bf16.msra.mxu0 %v10966
    %11072 = vmatpush.bf16.msra.mxu0 %v10962
    %11073 = vmatpush.bf16.msra.mxu0 %v10958
    %11074 = vmatpush.bf16.msra.mxu0 %v10954
    %11075 = vmatpush.bf16.msra.mxu0 %v10950
    %11076 = vmatpush.bf16.msra.mxu0 %v10946
    %11077 = vmatpush.bf16.msra.mxu0 %v10942
    %11078 = vmatmul.bf16.gmra.mxu0 %v10746
    %v11079 = vpop.f32.mrf.mxu0
    %v11080 = vadd.f32 %v10652, %v11079
    %v11081 = vpop.f32.mrf.mxu0
    %v11082 = vadd.f32 %v10654, %v11081
    %11083 = vdwg.mxu0
    %11084 = vmatpush.bf16.msra.mxu0 %v11002
    %11085 = vmatpush.bf16.msra.mxu0 %v10998
    %11086 = vmatpush.bf16.msra.mxu0 %v10994
    %11087 = vmatpush.bf16.msra.mxu0 %v10990
    %11088 = vmatpush.bf16.msra.mxu0 %v10986
    %11089 = vmatpush.bf16.msra.mxu0 %v10982
    %11090 = vmatpush.bf16.msra.mxu0 %v10978
    %11091 = vmatpush.bf16.msra.mxu0 %v10974
    %11092 = vmatmul.bf16.gmra.mxu0 %v10747
    %v11093 = vpop.f32.mrf.mxu0
    %v11094 = vadd.f32 %v11080, %v11093
    %v11095 = vpop.f32.mrf.mxu0
    %v11096 = vadd.f32 %v11082, %v11095
    %11097 = vdwg.mxu0
    %11098 = vmatpush.bf16.msra.mxu0 %v10971
    %11099 = vmatpush.bf16.msra.mxu0 %v10967
    %11100 = vmatpush.bf16.msra.mxu0 %v10963
    %11101 = vmatpush.bf16.msra.mxu0 %v10959
    %11102 = vmatpush.bf16.msra.mxu0 %v10955
    %11103 = vmatpush.bf16.msra.mxu0 %v10951
    %11104 = vmatpush.bf16.msra.mxu0 %v10947
    %11105 = vmatpush.bf16.msra.mxu0 %v10943
    %11106 = vmatmul.bf16.gmra.mxu0 %v10746
    %v11107 = vpop.f32.mrf.mxu0
    %v11108 = vadd.f32 %v10680, %v11107
    %v11109 = vpop.f32.mrf.mxu0
    %v11110 = vadd.f32 %v10682, %v11109
    %11111 = vdwg.mxu0
    %11112 = vmatpush.bf16.msra.mxu0 %v11003
    %11113 = vmatpush.bf16.msra.mxu0 %v10999
    %11114 = vmatpush.bf16.msra.mxu0 %v10995
    %11115 = vmatpush.bf16.msra.mxu0 %v10991
    %11116 = vmatpush.bf16.msra.mxu0 %v10987
    %11117 = vmatpush.bf16.msra.mxu0 %v10983
    %11118 = vmatpush.bf16.msra.mxu0 %v10979
    %11119 = vmatpush.bf16.msra.mxu0 %v10975
    %11120 = vmatmul.bf16.gmra.mxu0 %v10747
    %v11121 = vpop.f32.mrf.mxu0
    %v11122 = vadd.f32 %v11108, %v11121
    %v11123 = vpop.f32.mrf.mxu0
    %v11124 = vadd.f32 %v11110, %v11123
    %11125 = vdwg.mxu0
    %11126 = vmatpush.bf16.msra.mxu0 %v10972
    %11127 = vmatpush.bf16.msra.mxu0 %v10968
    %11128 = vmatpush.bf16.msra.mxu0 %v10964
    %11129 = vmatpush.bf16.msra.mxu0 %v10960
    %11130 = vmatpush.bf16.msra.mxu0 %v10956
    %11131 = vmatpush.bf16.msra.mxu0 %v10952
    %11132 = vmatpush.bf16.msra.mxu0 %v10948
    %11133 = vmatpush.bf16.msra.mxu0 %v10944
    %11134 = vmatmul.bf16.gmra.mxu0 %v10746
    %v11135 = vpop.f32.mrf.mxu0
    %v11136 = vadd.f32 %v10708, %v11135
    %v11137 = vpop.f32.mrf.mxu0
    %v11138 = vadd.f32 %v10710, %v11137
    %11139 = vdwg.mxu0
    %11140 = vmatpush.bf16.msra.mxu0 %v11004
    %11141 = vmatpush.bf16.msra.mxu0 %v11000
    %11142 = vmatpush.bf16.msra.mxu0 %v10996
    %11143 = vmatpush.bf16.msra.mxu0 %v10992
    %11144 = vmatpush.bf16.msra.mxu0 %v10988
    %11145 = vmatpush.bf16.msra.mxu0 %v10984
    %11146 = vmatpush.bf16.msra.mxu0 %v10980
    %11147 = vmatpush.bf16.msra.mxu0 %v10976
    %11148 = vmatmul.bf16.gmra.mxu0 %v10747
    %v11149 = vpop.f32.mrf.mxu0
    %v11150 = vadd.f32 %v11136, %v11149
    %v11151 = vpop.f32.mrf.mxu0
    %v11152 = vadd.f32 %v11138, %v11151
    %11153 = vdwg.mxu0
    %11154 = vmatpush.bf16.msra.mxu0 %v10973
    %11155 = vmatpush.bf16.msra.mxu0 %v10969
    %11156 = vmatpush.bf16.msra.mxu0 %v10965
    %11157 = vmatpush.bf16.msra.mxu0 %v10961
    %11158 = vmatpush.bf16.msra.mxu0 %v10957
    %11159 = vmatpush.bf16.msra.mxu0 %v10953
    %11160 = vmatpush.bf16.msra.mxu0 %v10949
    %11161 = vmatpush.bf16.msra.mxu0 %v10945
    %11162 = vmatmul.bf16.gmra.mxu0 %v10746
    %v11163 = vpop.f32.mrf.mxu0
    %v11164 = vadd.f32 %v10736, %v11163
    %v11165 = vpop.f32.mrf.mxu0
    %v11166 = vadd.f32 %v10738, %v11165
    %11167 = vdwg.mxu0
    %11168 = vmatpush.bf16.msra.mxu0 %v11005
    %11169 = vmatpush.bf16.msra.mxu0 %v11001
    %11170 = vmatpush.bf16.msra.mxu0 %v10997
    %11171 = vmatpush.bf16.msra.mxu0 %v10993
    %11172 = vmatpush.bf16.msra.mxu0 %v10989
    %11173 = vmatpush.bf16.msra.mxu0 %v10985
    %11174 = vmatpush.bf16.msra.mxu0 %v10981
    %11175 = vmatpush.bf16.msra.mxu0 %v10977
    %11176 = vmatmul.bf16.gmra.mxu0 %v10747
    %v11177 = vpop.f32.mrf.mxu0
    %v11178 = vadd.f32 %v11164, %v11177
    %v11179 = vpop.f32.mrf.mxu0
    %v11180 = vadd.f32 %v11166, %v11179
    %11181 = vdwg.mxu0
    %v11182 = vld [vmem:[#allocation3] sm:$0xee]
    %v11183 = vld [vmem:[#allocation3 + $0x10] sm:$0xee]
    %v11188 = vrot.slane %v11182, 5
    %v11189 = vrot.slane %v11188, 4
    %v11190 = vrot.slane %v10204, 5
    %v11191 = vsel %vm1362, %v11189, %v11190
    %v11192 = vrot.slane %v11183, 5
    %v11193 = vrot.slane %v11192, 4
    %v11194 = vrot.slane %v10206, 5
    %v11195 = vsel %vm1362, %v11193, %v11194
    %s11196 = scalar_lea.vmem [#allocation12], 1024
    %v11197 = vld [vmem:[%s11196] sm:$0xff]
    %v11198 = vld [vmem:[%s11196 + $0x8] sm:$0xff]
    %v11199 = vld [vmem:[%s11196 + $0x10] sm:$0xff]
    %v11200 = vld [vmem:[%s11196 + $0x18] sm:$0xff]
    %v11201 = vld [vmem:[%s11196 + $0x20] sm:$0xff]
    %v11202 = vld [vmem:[%s11196 + $0x28] sm:$0xff]
    %v11203 = vld [vmem:[%s11196 + $0x30] sm:$0xff]
    %v11204 = vld [vmem:[%s11196 + $0x38] sm:$0xff]
    %v11205 = vld [vmem:[%s11196 + $0x40] sm:$0xff]
    %v11206 = vld [vmem:[%s11196 + $0x48] sm:$0xff]
    %v11207 = vld [vmem:[%s11196 + $0x50] sm:$0xff]
    %v11208 = vld [vmem:[%s11196 + $0x58] sm:$0xff]
    %v11209 = vld [vmem:[%s11196 + $0x60] sm:$0xff]
    %v11210 = vld [vmem:[%s11196 + $0x68] sm:$0xff]
    %v11211 = vld [vmem:[%s11196 + $0x70] sm:$0xff]
    %v11212 = vld [vmem:[%s11196 + $0x78] sm:$0xff]
    %v11213 = vld [vmem:[%s11196 + $0x80] sm:$0xff]
    %v11214 = vld [vmem:[%s11196 + $0x88] sm:$0xff]
    %v11215 = vld [vmem:[%s11196 + $0x90] sm:$0xff]
    %v11216 = vld [vmem:[%s11196 + $0x98] sm:$0xff]
    %v11217 = vld [vmem:[%s11196 + $0xa0] sm:$0xff]
    %v11218 = vld [vmem:[%s11196 + $0xa8] sm:$0xff]
    %v11219 = vld [vmem:[%s11196 + $0xb0] sm:$0xff]
    %v11220 = vld [vmem:[%s11196 + $0xb8] sm:$0xff]
    %v11221 = vld [vmem:[%s11196 + $0xc0] sm:$0xff]
    %v11222 = vld [vmem:[%s11196 + $0xc8] sm:$0xff]
    %v11223 = vld [vmem:[%s11196 + $0xd0] sm:$0xff]
    %v11224 = vld [vmem:[%s11196 + $0xd8] sm:$0xff]
    %v11225 = vld [vmem:[%s11196 + $0xe0] sm:$0xff]
    %v11226 = vld [vmem:[%s11196 + $0xe8] sm:$0xff]
    %v11227 = vld [vmem:[%s11196 + $0xf0] sm:$0xff]
    %v11228 = vld [vmem:[%s11196 + $0xf8] sm:$0xff]
    %v11229 = vld [vmem:[%s11196 + $0x100] sm:$0xff]
    %v11230 = vld [vmem:[%s11196 + $0x108] sm:$0xff]
    %v11231 = vld [vmem:[%s11196 + $0x110] sm:$0xff]
    %v11232 = vld [vmem:[%s11196 + $0x118] sm:$0xff]
    %v11233 = vld [vmem:[%s11196 + $0x120] sm:$0xff]
    %v11234 = vld [vmem:[%s11196 + $0x128] sm:$0xff]
    %v11235 = vld [vmem:[%s11196 + $0x130] sm:$0xff]
    %v11236 = vld [vmem:[%s11196 + $0x138] sm:$0xff]
    %v11237 = vld [vmem:[%s11196 + $0x140] sm:$0xff]
    %v11238 = vld [vmem:[%s11196 + $0x148] sm:$0xff]
    %v11239 = vld [vmem:[%s11196 + $0x150] sm:$0xff]
    %v11240 = vld [vmem:[%s11196 + $0x158] sm:$0xff]
    %v11241 = vld [vmem:[%s11196 + $0x160] sm:$0xff]
    %v11242 = vld [vmem:[%s11196 + $0x168] sm:$0xff]
    %v11243 = vld [vmem:[%s11196 + $0x170] sm:$0xff]
    %v11244 = vld [vmem:[%s11196 + $0x178] sm:$0xff]
    %v11245 = vld [vmem:[%s11196 + $0x180] sm:$0xff]
    %v11246 = vld [vmem:[%s11196 + $0x188] sm:$0xff]
    %v11247 = vld [vmem:[%s11196 + $0x190] sm:$0xff]
    %v11248 = vld [vmem:[%s11196 + $0x198] sm:$0xff]
    %v11249 = vld [vmem:[%s11196 + $0x1a0] sm:$0xff]
    %v11250 = vld [vmem:[%s11196 + $0x1a8] sm:$0xff]
    %v11251 = vld [vmem:[%s11196 + $0x1b0] sm:$0xff]
    %v11252 = vld [vmem:[%s11196 + $0x1b8] sm:$0xff]
    %v11253 = vld [vmem:[%s11196 + $0x1c0] sm:$0xff]
    %v11254 = vld [vmem:[%s11196 + $0x1c8] sm:$0xff]
    %v11255 = vld [vmem:[%s11196 + $0x1d0] sm:$0xff]
    %v11256 = vld [vmem:[%s11196 + $0x1d8] sm:$0xff]
    %v11257 = vld [vmem:[%s11196 + $0x1e0] sm:$0xff]
    %v11258 = vld [vmem:[%s11196 + $0x1e8] sm:$0xff]
    %v11259 = vld [vmem:[%s11196 + $0x1f0] sm:$0xff]
    %v11260 = vld [vmem:[%s11196 + $0x1f8] sm:$0xff]
    %v11261 = vunpack.c.l.b16 %v11191
    %v11262 = vunpack.c.h.b16 %v11191
    %v11263 = vunpack.c.l.b16 %v11195
    %v11264 = vunpack.c.h.b16 %v11195
    %v11265 = vpack.c.b16 %v11263, %v11261
    %v11266 = vpack.c.b16 %v11264, %v11262
    %v11333 = vunpack.c.l.b16 %v11197
    %v11334 = vunpack.c.h.b16 %v11197
    %v11335 = vunpack.c.l.b16 %v11198
    %v11336 = vunpack.c.h.b16 %v11198
    %v11337 = vunpack.c.l.b16 %v11199
    %v11338 = vunpack.c.h.b16 %v11199
    %v11339 = vunpack.c.l.b16 %v11200
    %v11340 = vunpack.c.h.b16 %v11200
    %v11341 = vunpack.c.l.b16 %v11201
    %v11342 = vunpack.c.h.b16 %v11201
    %v11343 = vunpack.c.l.b16 %v11202
    %v11344 = vunpack.c.h.b16 %v11202
    %v11345 = vunpack.c.l.b16 %v11203
    %v11346 = vunpack.c.h.b16 %v11203
    %v11347 = vunpack.c.l.b16 %v11204
    %v11348 = vunpack.c.h.b16 %v11204
    %v11349 = vunpack.c.l.b16 %v11205
    %v11350 = vunpack.c.h.b16 %v11205
    %v11351 = vunpack.c.l.b16 %v11206
    %v11352 = vunpack.c.h.b16 %v11206
    %v11353 = vunpack.c.l.b16 %v11207
    %v11354 = vunpack.c.h.b16 %v11207
    %v11355 = vunpack.c.l.b16 %v11208
    %v11356 = vunpack.c.h.b16 %v11208
    %v11357 = vunpack.c.l.b16 %v11209
    %v11358 = vunpack.c.h.b16 %v11209
    %v11359 = vunpack.c.l.b16 %v11210
    %v11360 = vunpack.c.h.b16 %v11210
    %v11361 = vunpack.c.l.b16 %v11211
    %v11362 = vunpack.c.h.b16 %v11211
    %v11363 = vunpack.c.l.b16 %v11212
    %v11364 = vunpack.c.h.b16 %v11212
    %v11365 = vunpack.c.l.b16 %v11213
    %v11366 = vunpack.c.h.b16 %v11213
    %v11367 = vunpack.c.l.b16 %v11214
    %v11368 = vunpack.c.h.b16 %v11214
    %v11369 = vunpack.c.l.b16 %v11215
    %v11370 = vunpack.c.h.b16 %v11215
    %v11371 = vunpack.c.l.b16 %v11216
    %v11372 = vunpack.c.h.b16 %v11216
    %v11373 = vunpack.c.l.b16 %v11217
    %v11374 = vunpack.c.h.b16 %v11217
    %v11375 = vunpack.c.l.b16 %v11218
    %v11376 = vunpack.c.h.b16 %v11218
    %v11377 = vunpack.c.l.b16 %v11219
    %v11378 = vunpack.c.h.b16 %v11219
    %v11379 = vunpack.c.l.b16 %v11220
    %v11380 = vunpack.c.h.b16 %v11220
    %v11381 = vunpack.c.l.b16 %v11221
    %v11382 = vunpack.c.h.b16 %v11221
    %v11383 = vunpack.c.l.b16 %v11222
    %v11384 = vunpack.c.h.b16 %v11222
    %v11385 = vunpack.c.l.b16 %v11223
    %v11386 = vunpack.c.h.b16 %v11223
    %v11387 = vunpack.c.l.b16 %v11224
    %v11388 = vunpack.c.h.b16 %v11224
    %v11389 = vunpack.c.l.b16 %v11225
    %v11390 = vunpack.c.h.b16 %v11225
    %v11391 = vunpack.c.l.b16 %v11226
    %v11392 = vunpack.c.h.b16 %v11226
    %v11393 = vunpack.c.l.b16 %v11227
    %v11394 = vunpack.c.h.b16 %v11227
    %v11395 = vunpack.c.l.b16 %v11228
    %v11396 = vunpack.c.h.b16 %v11228
    %v11397 = vunpack.c.l.b16 %v11229
    %v11398 = vunpack.c.h.b16 %v11229
    %v11399 = vunpack.c.l.b16 %v11230
    %v11400 = vunpack.c.h.b16 %v11230
    %v11401 = vunpack.c.l.b16 %v11231
    %v11402 = vunpack.c.h.b16 %v11231
    %v11403 = vunpack.c.l.b16 %v11232
    %v11404 = vunpack.c.h.b16 %v11232
    %v11405 = vunpack.c.l.b16 %v11233
    %v11406 = vunpack.c.h.b16 %v11233
    %v11407 = vunpack.c.l.b16 %v11234
    %v11408 = vunpack.c.h.b16 %v11234
    %v11409 = vunpack.c.l.b16 %v11235
    %v11410 = vunpack.c.h.b16 %v11235
    %v11411 = vunpack.c.l.b16 %v11236
    %v11412 = vunpack.c.h.b16 %v11236
    %v11413 = vunpack.c.l.b16 %v11237
    %v11414 = vunpack.c.h.b16 %v11237
    %v11415 = vunpack.c.l.b16 %v11238
    %v11416 = vunpack.c.h.b16 %v11238
    %v11417 = vunpack.c.l.b16 %v11239
    %v11418 = vunpack.c.h.b16 %v11239
    %v11419 = vunpack.c.l.b16 %v11240
    %v11420 = vunpack.c.h.b16 %v11240
    %v11421 = vunpack.c.l.b16 %v11241
    %v11422 = vunpack.c.h.b16 %v11241
    %v11423 = vunpack.c.l.b16 %v11242
    %v11424 = vunpack.c.h.b16 %v11242
    %v11425 = vunpack.c.l.b16 %v11243
    %v11426 = vunpack.c.h.b16 %v11243
    %v11427 = vunpack.c.l.b16 %v11244
    %v11428 = vunpack.c.h.b16 %v11244
    %v11429 = vunpack.c.l.b16 %v11245
    %v11430 = vunpack.c.h.b16 %v11245
    %v11431 = vunpack.c.l.b16 %v11246
    %v11432 = vunpack.c.h.b16 %v11246
    %v11433 = vunpack.c.l.b16 %v11247
    %v11434 = vunpack.c.h.b16 %v11247
    %v11435 = vunpack.c.l.b16 %v11248
    %v11436 = vunpack.c.h.b16 %v11248
    %v11437 = vunpack.c.l.b16 %v11249
    %v11438 = vunpack.c.h.b16 %v11249
    %v11439 = vunpack.c.l.b16 %v11250
    %v11440 = vunpack.c.h.b16 %v11250
    %v11441 = vunpack.c.l.b16 %v11251
    %v11442 = vunpack.c.h.b16 %v11251
    %v11443 = vunpack.c.l.b16 %v11252
    %v11444 = vunpack.c.h.b16 %v11252
    %v11445 = vunpack.c.l.b16 %v11253
    %v11446 = vunpack.c.h.b16 %v11253
    %v11447 = vunpack.c.l.b16 %v11254
    %v11448 = vunpack.c.h.b16 %v11254
    %v11449 = vunpack.c.l.b16 %v11255
    %v11450 = vunpack.c.h.b16 %v11255
    %v11451 = vunpack.c.l.b16 %v11256
    %v11452 = vunpack.c.h.b16 %v11256
    %v11453 = vunpack.c.l.b16 %v11257
    %v11454 = vunpack.c.h.b16 %v11257
    %v11455 = vunpack.c.l.b16 %v11258
    %v11456 = vunpack.c.h.b16 %v11258
    %v11457 = vunpack.c.l.b16 %v11259
    %v11458 = vunpack.c.h.b16 %v11259
    %v11459 = vunpack.c.l.b16 %v11260
    %v11460 = vunpack.c.h.b16 %v11260
    %v11461 = vpack.c.b16 %v11337, %v11333
    %v11462 = vpack.c.b16 %v11338, %v11334
    %v11463 = vpack.c.b16 %v11339, %v11335
    %v11464 = vpack.c.b16 %v11340, %v11336
    %v11465 = vpack.c.b16 %v11345, %v11341
    %v11466 = vpack.c.b16 %v11346, %v11342
    %v11467 = vpack.c.b16 %v11347, %v11343
    %v11468 = vpack.c.b16 %v11348, %v11344
    %v11469 = vpack.c.b16 %v11353, %v11349
    %v11470 = vpack.c.b16 %v11354, %v11350
    %v11471 = vpack.c.b16 %v11355, %v11351
    %v11472 = vpack.c.b16 %v11356, %v11352
    %v11473 = vpack.c.b16 %v11361, %v11357
    %v11474 = vpack.c.b16 %v11362, %v11358
    %v11475 = vpack.c.b16 %v11363, %v11359
    %v11476 = vpack.c.b16 %v11364, %v11360
    %v11477 = vpack.c.b16 %v11369, %v11365
    %v11478 = vpack.c.b16 %v11370, %v11366
    %v11479 = vpack.c.b16 %v11371, %v11367
    %v11480 = vpack.c.b16 %v11372, %v11368
    %v11481 = vpack.c.b16 %v11377, %v11373
    %v11482 = vpack.c.b16 %v11378, %v11374
    %v11483 = vpack.c.b16 %v11379, %v11375
    %v11484 = vpack.c.b16 %v11380, %v11376
    %v11485 = vpack.c.b16 %v11385, %v11381
    %v11486 = vpack.c.b16 %v11386, %v11382
    %v11487 = vpack.c.b16 %v11387, %v11383
    %v11488 = vpack.c.b16 %v11388, %v11384
    %v11489 = vpack.c.b16 %v11393, %v11389
    %v11490 = vpack.c.b16 %v11394, %v11390
    %v11491 = vpack.c.b16 %v11395, %v11391
    %v11492 = vpack.c.b16 %v11396, %v11392
    %v11493 = vpack.c.b16 %v11401, %v11397
    %v11494 = vpack.c.b16 %v11402, %v11398
    %v11495 = vpack.c.b16 %v11403, %v11399
    %v11496 = vpack.c.b16 %v11404, %v11400
    %v11497 = vpack.c.b16 %v11409, %v11405
    %v11498 = vpack.c.b16 %v11410, %v11406
    %v11499 = vpack.c.b16 %v11411, %v11407
    %v11500 = vpack.c.b16 %v11412, %v11408
    %v11501 = vpack.c.b16 %v11417, %v11413
    %v11502 = vpack.c.b16 %v11418, %v11414
    %v11503 = vpack.c.b16 %v11419, %v11415
    %v11504 = vpack.c.b16 %v11420, %v11416
    %v11505 = vpack.c.b16 %v11425, %v11421
    %v11506 = vpack.c.b16 %v11426, %v11422
    %v11507 = vpack.c.b16 %v11427, %v11423
    %v11508 = vpack.c.b16 %v11428, %v11424
    %v11509 = vpack.c.b16 %v11433, %v11429
    %v11510 = vpack.c.b16 %v11434, %v11430
    %v11511 = vpack.c.b16 %v11435, %v11431
    %v11512 = vpack.c.b16 %v11436, %v11432
    %v11513 = vpack.c.b16 %v11441, %v11437
    %v11514 = vpack.c.b16 %v11442, %v11438
    %v11515 = vpack.c.b16 %v11443, %v11439
    %v11516 = vpack.c.b16 %v11444, %v11440
    %v11517 = vpack.c.b16 %v11449, %v11445
    %v11518 = vpack.c.b16 %v11450, %v11446
    %v11519 = vpack.c.b16 %v11451, %v11447
    %v11520 = vpack.c.b16 %v11452, %v11448
    %v11521 = vpack.c.b16 %v11457, %v11453
    %v11522 = vpack.c.b16 %v11458, %v11454
    %v11523 = vpack.c.b16 %v11459, %v11455
    %v11524 = vpack.c.b16 %v11460, %v11456
    %11589 = vmatpush.bf16.msra.mxu0 %v11489
    %11590 = vmatpush.bf16.msra.mxu0 %v11485
    %11591 = vmatpush.bf16.msra.mxu0 %v11481
    %11592 = vmatpush.bf16.msra.mxu0 %v11477
    %11593 = vmatpush.bf16.msra.mxu0 %v11473
    %11594 = vmatpush.bf16.msra.mxu0 %v11469
    %11595 = vmatpush.bf16.msra.mxu0 %v11465
    %11596 = vmatpush.bf16.msra.mxu0 %v11461
    %11597 = vmatmul.bf16.gmra.mxu0 %v11265
    %v11598 = vpop.f32.mrf.mxu0
    %v11599 = vadd.f32 0.0, %v11598
    %v11600 = vpop.f32.mrf.mxu0
    %v11601 = vadd.f32 0.0, %v11600
    %11602 = vdwg.mxu0
    %11603 = vmatpush.bf16.msra.mxu0 %v11521
    %11604 = vmatpush.bf16.msra.mxu0 %v11517
    %11605 = vmatpush.bf16.msra.mxu0 %v11513
    %11606 = vmatpush.bf16.msra.mxu0 %v11509
    %11607 = vmatpush.bf16.msra.mxu0 %v11505
    %11608 = vmatpush.bf16.msra.mxu0 %v11501
    %11609 = vmatpush.bf16.msra.mxu0 %v11497
    %11610 = vmatpush.bf16.msra.mxu0 %v11493
    %11611 = vmatmul.bf16.gmra.mxu0 %v11266
    %v11612 = vpop.f32.mrf.mxu0
    %v11613 = vadd.f32 %v11599, %v11612
    %v11614 = vpop.f32.mrf.mxu0
    %v11615 = vadd.f32 %v11601, %v11614
    %11616 = vdwg.mxu0
    %11617 = vmatpush.bf16.msra.mxu0 %v11490
    %11618 = vmatpush.bf16.msra.mxu0 %v11486
    %11619 = vmatpush.bf16.msra.mxu0 %v11482
    %11620 = vmatpush.bf16.msra.mxu0 %v11478
    %11621 = vmatpush.bf16.msra.mxu0 %v11474
    %11622 = vmatpush.bf16.msra.mxu0 %v11470
    %11623 = vmatpush.bf16.msra.mxu0 %v11466
    %11624 = vmatpush.bf16.msra.mxu0 %v11462
    %11625 = vmatmul.bf16.gmra.mxu0 %v11265
    %v11626 = vpop.f32.mrf.mxu0
    %v11627 = vadd.f32 0.0, %v11626
    %v11628 = vpop.f32.mrf.mxu0
    %v11629 = vadd.f32 0.0, %v11628
    %11630 = vdwg.mxu0
    %11631 = vmatpush.bf16.msra.mxu0 %v11522
    %11632 = vmatpush.bf16.msra.mxu0 %v11518
    %11633 = vmatpush.bf16.msra.mxu0 %v11514
    %11634 = vmatpush.bf16.msra.mxu0 %v11510
    %11635 = vmatpush.bf16.msra.mxu0 %v11506
    %11636 = vmatpush.bf16.msra.mxu0 %v11502
    %11637 = vmatpush.bf16.msra.mxu0 %v11498
    %11638 = vmatpush.bf16.msra.mxu0 %v11494
    %11639 = vmatmul.bf16.gmra.mxu0 %v11266
    %v11640 = vpop.f32.mrf.mxu0
    %v11641 = vadd.f32 %v11627, %v11640
    %v11642 = vpop.f32.mrf.mxu0
    %v11643 = vadd.f32 %v11629, %v11642
    %11644 = vdwg.mxu0
    %11645 = vmatpush.bf16.msra.mxu0 %v11491
    %11646 = vmatpush.bf16.msra.mxu0 %v11487
    %11647 = vmatpush.bf16.msra.mxu0 %v11483
    %11648 = vmatpush.bf16.msra.mxu0 %v11479
    %11649 = vmatpush.bf16.msra.mxu0 %v11475
    %11650 = vmatpush.bf16.msra.mxu0 %v11471
    %11651 = vmatpush.bf16.msra.mxu0 %v11467
    %11652 = vmatpush.bf16.msra.mxu0 %v11463
    %11653 = vmatmul.bf16.gmra.mxu0 %v11265
    %v11654 = vpop.f32.mrf.mxu0
    %v11655 = vadd.f32 0.0, %v11654
    %v11656 = vpop.f32.mrf.mxu0
    %v11657 = vadd.f32 0.0, %v11656
    %11658 = vdwg.mxu0
    %11659 = vmatpush.bf16.msra.mxu0 %v11523
    %11660 = vmatpush.bf16.msra.mxu0 %v11519
    %11661 = vmatpush.bf16.msra.mxu0 %v11515
    %11662 = vmatpush.bf16.msra.mxu0 %v11511
    %11663 = vmatpush.bf16.msra.mxu0 %v11507
    %11664 = vmatpush.bf16.msra.mxu0 %v11503
    %11665 = vmatpush.bf16.msra.mxu0 %v11499
    %11666 = vmatpush.bf16.msra.mxu0 %v11495
    %11667 = vmatmul.bf16.gmra.mxu0 %v11266
    %v11668 = vpop.f32.mrf.mxu0
    %v11669 = vadd.f32 %v11655, %v11668
    %v11670 = vpop.f32.mrf.mxu0
    %v11671 = vadd.f32 %v11657, %v11670
    %11672 = vdwg.mxu0
    %11673 = vmatpush.bf16.msra.mxu0 %v11492
    %11674 = vmatpush.bf16.msra.mxu0 %v11488
    %11675 = vmatpush.bf16.msra.mxu0 %v11484
    %11676 = vmatpush.bf16.msra.mxu0 %v11480
    %11677 = vmatpush.bf16.msra.mxu0 %v11476
    %11678 = vmatpush.bf16.msra.mxu0 %v11472
    %11679 = vmatpush.bf16.msra.mxu0 %v11468
    %11680 = vmatpush.bf16.msra.mxu0 %v11464
    %11681 = vmatmul.bf16.gmra.mxu0 %v11265
    %v11682 = vpop.f32.mrf.mxu0
    %v11683 = vadd.f32 0.0, %v11682
    %v11684 = vpop.f32.mrf.mxu0
    %v11685 = vadd.f32 0.0, %v11684
    %11686 = vdwg.mxu0
    %11687 = vmatpush.bf16.msra.mxu0 %v11524
    %11688 = vmatpush.bf16.msra.mxu0 %v11520
    %11689 = vmatpush.bf16.msra.mxu0 %v11516
    %11690 = vmatpush.bf16.msra.mxu0 %v11512
    %11691 = vmatpush.bf16.msra.mxu0 %v11508
    %11692 = vmatpush.bf16.msra.mxu0 %v11504
    %11693 = vmatpush.bf16.msra.mxu0 %v11500
    %11694 = vmatpush.bf16.msra.mxu0 %v11496
    %11695 = vmatmul.bf16.gmra.mxu0 %v11266
    %v11696 = vpop.f32.mrf.mxu0
    %v11697 = vadd.f32 %v11683, %v11696
    %v11698 = vpop.f32.mrf.mxu0
    %v11699 = vadd.f32 %v11685, %v11698
    %11700 = vdwg.mxu0
    %v11701 = vadd.f32 %v11094, %v11613
    %v11702 = vadd.f32 %v11122, %v11641
    %v11703 = vadd.f32 %v11150, %v11669
    %v11704 = vadd.f32 %v11178, %v11697
    %v11705 = vadd.f32 %v11096, %v11615
    %v11706 = vadd.f32 %v11124, %v11643
    %v11707 = vadd.f32 %v11152, %v11671
    %v11708 = vadd.f32 %v11180, %v11699
    %v11709 = vld [vmem:[#allocation3 + $0x8] sm:$0x33]
    %v11710 = vld [vmem:[#allocation3 + $0x18] sm:$0x33]
    %v11712 = vshrl.u32 %v11182, 16
    %v11714 = vrot.slane %v11712, 5
    %v11715 = vshll.u32 %v11182, 16
    %v11717 = vrot.slane %v11715, 6
    %v11718 = vor.u32 %v11714, %v11717
    %v11719 = vrot.slane %v11718, 4
    %v11721 = vshrl.u32 %v11709, 16
    %v11723 = vrot.slane %v11721, 5
    %v11724 = vshll.u32 %v11709, 16
    %v11726 = vrot.slane %v11724, 6
    %v11727 = vor.u32 %v11723, %v11726
    %v11728 = vsel %vm2002, %v11719, %v11727
    %v11730 = vshrl.u32 %v11183, 16
    %v11732 = vrot.slane %v11730, 5
    %v11733 = vshll.u32 %v11183, 16
    %v11735 = vrot.slane %v11733, 6
    %v11736 = vor.u32 %v11732, %v11735
    %v11737 = vrot.slane %v11736, 4
    %v11739 = vshrl.u32 %v11710, 16
    %v11741 = vrot.slane %v11739, 5
    %v11742 = vshll.u32 %v11710, 16
    %v11744 = vrot.slane %v11742, 6
    %v11745 = vor.u32 %v11741, %v11744
    %v11746 = vsel %vm2002, %v11737, %v11745
    %s11747 = scalar_lea.vmem [#allocation12], 1536
    %v11748 = vld [vmem:[%s11747] sm:$0xff]
    %v11749 = vld [vmem:[%s11747 + $0x8] sm:$0xff]
    %v11750 = vld [vmem:[%s11747 + $0x10] sm:$0xff]
    %v11751 = vld [vmem:[%s11747 + $0x18] sm:$0xff]
    %v11752 = vld [vmem:[%s11747 + $0x20] sm:$0xff]
    %v11753 = vld [vmem:[%s11747 + $0x28] sm:$0xff]
    %v11754 = vld [vmem:[%s11747 + $0x30] sm:$0xff]
    %v11755 = vld [vmem:[%s11747 + $0x38] sm:$0xff]
    %v11756 = vld [vmem:[%s11747 + $0x40] sm:$0xff]
    %v11757 = vld [vmem:[%s11747 + $0x48] sm:$0xff]
    %v11758 = vld [vmem:[%s11747 + $0x50] sm:$0xff]
    %v11759 = vld [vmem:[%s11747 + $0x58] sm:$0xff]
    %v11760 = vld [vmem:[%s11747 + $0x60] sm:$0xff]
    %v11761 = vld [vmem:[%s11747 + $0x68] sm:$0xff]
    %v11762 = vld [vmem:[%s11747 + $0x70] sm:$0xff]
    %v11763 = vld [vmem:[%s11747 + $0x78] sm:$0xff]
    %v11764 = vld [vmem:[%s11747 + $0x80] sm:$0xff]
    %v11765 = vld [vmem:[%s11747 + $0x88] sm:$0xff]
    %v11766 = vld [vmem:[%s11747 + $0x90] sm:$0xff]
    %v11767 = vld [vmem:[%s11747 + $0x98] sm:$0xff]
    %v11768 = vld [vmem:[%s11747 + $0xa0] sm:$0xff]
    %v11769 = vld [vmem:[%s11747 + $0xa8] sm:$0xff]
    %v11770 = vld [vmem:[%s11747 + $0xb0] sm:$0xff]
    %v11771 = vld [vmem:[%s11747 + $0xb8] sm:$0xff]
    %v11772 = vld [vmem:[%s11747 + $0xc0] sm:$0xff]
    %v11773 = vld [vmem:[%s11747 + $0xc8] sm:$0xff]
    %v11774 = vld [vmem:[%s11747 + $0xd0] sm:$0xff]
    %v11775 = vld [vmem:[%s11747 + $0xd8] sm:$0xff]
    %v11776 = vld [vmem:[%s11747 + $0xe0] sm:$0xff]
    %v11777 = vld [vmem:[%s11747 + $0xe8] sm:$0xff]
    %v11778 = vld [vmem:[%s11747 + $0xf0] sm:$0xff]
    %v11779 = vld [vmem:[%s11747 + $0xf8] sm:$0xff]
    %v11780 = vld [vmem:[%s11747 + $0x100] sm:$0xff]
    %v11781 = vld [vmem:[%s11747 + $0x108] sm:$0xff]
    %v11782 = vld [vmem:[%s11747 + $0x110] sm:$0xff]
    %v11783 = vld [vmem:[%s11747 + $0x118] sm:$0xff]
    %v11784 = vld [vmem:[%s11747 + $0x120] sm:$0xff]
    %v11785 = vld [vmem:[%s11747 + $0x128] sm:$0xff]
    %v11786 = vld [vmem:[%s11747 + $0x130] sm:$0xff]
    %v11787 = vld [vmem:[%s11747 + $0x138] sm:$0xff]
    %v11788 = vld [vmem:[%s11747 + $0x140] sm:$0xff]
    %v11789 = vld [vmem:[%s11747 + $0x148] sm:$0xff]
    %v11790 = vld [vmem:[%s11747 + $0x150] sm:$0xff]
    %v11791 = vld [vmem:[%s11747 + $0x158] sm:$0xff]
    %v11792 = vld [vmem:[%s11747 + $0x160] sm:$0xff]
    %v11793 = vld [vmem:[%s11747 + $0x168] sm:$0xff]
    %v11794 = vld [vmem:[%s11747 + $0x170] sm:$0xff]
    %v11795 = vld [vmem:[%s11747 + $0x178] sm:$0xff]
    %v11796 = vld [vmem:[%s11747 + $0x180] sm:$0xff]
    %v11797 = vld [vmem:[%s11747 + $0x188] sm:$0xff]
    %v11798 = vld [vmem:[%s11747 + $0x190] sm:$0xff]
    %v11799 = vld [vmem:[%s11747 + $0x198] sm:$0xff]
    %v11800 = vld [vmem:[%s11747 + $0x1a0] sm:$0xff]
    %v11801 = vld [vmem:[%s11747 + $0x1a8] sm:$0xff]
    %v11802 = vld [vmem:[%s11747 + $0x1b0] sm:$0xff]
    %v11803 = vld [vmem:[%s11747 + $0x1b8] sm:$0xff]
    %v11804 = vld [vmem:[%s11747 + $0x1c0] sm:$0xff]
    %v11805 = vld [vmem:[%s11747 + $0x1c8] sm:$0xff]
    %v11806 = vld [vmem:[%s11747 + $0x1d0] sm:$0xff]
    %v11807 = vld [vmem:[%s11747 + $0x1d8] sm:$0xff]
    %v11808 = vld [vmem:[%s11747 + $0x1e0] sm:$0xff]
    %v11809 = vld [vmem:[%s11747 + $0x1e8] sm:$0xff]
    %v11810 = vld [vmem:[%s11747 + $0x1f0] sm:$0xff]
    %v11811 = vld [vmem:[%s11747 + $0x1f8] sm:$0xff]
    %v11812 = vunpack.c.l.b16 %v11728
    %v11813 = vunpack.c.h.b16 %v11728
    %v11814 = vunpack.c.l.b16 %v11746
    %v11815 = vunpack.c.h.b16 %v11746
    %v11816 = vpack.c.b16 %v11814, %v11812
    %v11817 = vpack.c.b16 %v11815, %v11813
    %v11884 = vunpack.c.l.b16 %v11748
    %v11885 = vunpack.c.h.b16 %v11748
    %v11886 = vunpack.c.l.b16 %v11749
    %v11887 = vunpack.c.h.b16 %v11749
    %v11888 = vunpack.c.l.b16 %v11750
    %v11889 = vunpack.c.h.b16 %v11750
    %v11890 = vunpack.c.l.b16 %v11751
    %v11891 = vunpack.c.h.b16 %v11751
    %v11892 = vunpack.c.l.b16 %v11752
    %v11893 = vunpack.c.h.b16 %v11752
    %v11894 = vunpack.c.l.b16 %v11753
    %v11895 = vunpack.c.h.b16 %v11753
    %v11896 = vunpack.c.l.b16 %v11754
    %v11897 = vunpack.c.h.b16 %v11754
    %v11898 = vunpack.c.l.b16 %v11755
    %v11899 = vunpack.c.h.b16 %v11755
    %v11900 = vunpack.c.l.b16 %v11756
    %v11901 = vunpack.c.h.b16 %v11756
    %v11902 = vunpack.c.l.b16 %v11757
    %v11903 = vunpack.c.h.b16 %v11757
    %v11904 = vunpack.c.l.b16 %v11758
    %v11905 = vunpack.c.h.b16 %v11758
    %v11906 = vunpack.c.l.b16 %v11759
    %v11907 = vunpack.c.h.b16 %v11759
    %v11908 = vunpack.c.l.b16 %v11760
    %v11909 = vunpack.c.h.b16 %v11760
    %v11910 = vunpack.c.l.b16 %v11761
    %v11911 = vunpack.c.h.b16 %v11761
    %v11912 = vunpack.c.l.b16 %v11762
    %v11913 = vunpack.c.h.b16 %v11762
    %v11914 = vunpack.c.l.b16 %v11763
    %v11915 = vunpack.c.h.b16 %v11763
    %v11916 = vunpack.c.l.b16 %v11764
    %v11917 = vunpack.c.h.b16 %v11764
    %v11918 = vunpack.c.l.b16 %v11765
    %v11919 = vunpack.c.h.b16 %v11765
    %v11920 = vunpack.c.l.b16 %v11766
    %v11921 = vunpack.c.h.b16 %v11766
    %v11922 = vunpack.c.l.b16 %v11767
    %v11923 = vunpack.c.h.b16 %v11767
    %v11924 = vunpack.c.l.b16 %v11768
    %v11925 = vunpack.c.h.b16 %v11768
    %v11926 = vunpack.c.l.b16 %v11769
    %v11927 = vunpack.c.h.b16 %v11769
    %v11928 = vunpack.c.l.b16 %v11770
    %v11929 = vunpack.c.h.b16 %v11770
    %v11930 = vunpack.c.l.b16 %v11771
    %v11931 = vunpack.c.h.b16 %v11771
    %v11932 = vunpack.c.l.b16 %v11772
    %v11933 = vunpack.c.h.b16 %v11772
    %v11934 = vunpack.c.l.b16 %v11773
    %v11935 = vunpack.c.h.b16 %v11773
    %v11936 = vunpack.c.l.b16 %v11774
    %v11937 = vunpack.c.h.b16 %v11774
    %v11938 = vunpack.c.l.b16 %v11775
    %v11939 = vunpack.c.h.b16 %v11775
    %v11940 = vunpack.c.l.b16 %v11776
    %v11941 = vunpack.c.h.b16 %v11776
    %v11942 = vunpack.c.l.b16 %v11777
    %v11943 = vunpack.c.h.b16 %v11777
    %v11944 = vunpack.c.l.b16 %v11778
    %v11945 = vunpack.c.h.b16 %v11778
    %v11946 = vunpack.c.l.b16 %v11779
    %v11947 = vunpack.c.h.b16 %v11779
    %v11948 = vunpack.c.l.b16 %v11780
    %v11949 = vunpack.c.h.b16 %v11780
    %v11950 = vunpack.c.l.b16 %v11781
    %v11951 = vunpack.c.h.b16 %v11781
    %v11952 = vunpack.c.l.b16 %v11782
    %v11953 = vunpack.c.h.b16 %v11782
    %v11954 = vunpack.c.l.b16 %v11783
    %v11955 = vunpack.c.h.b16 %v11783
    %v11956 = vunpack.c.l.b16 %v11784
    %v11957 = vunpack.c.h.b16 %v11784
    %v11958 = vunpack.c.l.b16 %v11785
    %v11959 = vunpack.c.h.b16 %v11785
    %v11960 = vunpack.c.l.b16 %v11786
    %v11961 = vunpack.c.h.b16 %v11786
    %v11962 = vunpack.c.l.b16 %v11787
    %v11963 = vunpack.c.h.b16 %v11787
    %v11964 = vunpack.c.l.b16 %v11788
    %v11965 = vunpack.c.h.b16 %v11788
    %v11966 = vunpack.c.l.b16 %v11789
    %v11967 = vunpack.c.h.b16 %v11789
    %v11968 = vunpack.c.l.b16 %v11790
    %v11969 = vunpack.c.h.b16 %v11790
    %v11970 = vunpack.c.l.b16 %v11791
    %v11971 = vunpack.c.h.b16 %v11791
    %v11972 = vunpack.c.l.b16 %v11792
    %v11973 = vunpack.c.h.b16 %v11792
    %v11974 = vunpack.c.l.b16 %v11793
    %v11975 = vunpack.c.h.b16 %v11793
    %v11976 = vunpack.c.l.b16 %v11794
    %v11977 = vunpack.c.h.b16 %v11794
    %v11978 = vunpack.c.l.b16 %v11795
    %v11979 = vunpack.c.h.b16 %v11795
    %v11980 = vunpack.c.l.b16 %v11796
    %v11981 = vunpack.c.h.b16 %v11796
    %v11982 = vunpack.c.l.b16 %v11797
    %v11983 = vunpack.c.h.b16 %v11797
    %v11984 = vunpack.c.l.b16 %v11798
    %v11985 = vunpack.c.h.b16 %v11798
    %v11986 = vunpack.c.l.b16 %v11799
    %v11987 = vunpack.c.h.b16 %v11799
    %v11988 = vunpack.c.l.b16 %v11800
    %v11989 = vunpack.c.h.b16 %v11800
    %v11990 = vunpack.c.l.b16 %v11801
    %v11991 = vunpack.c.h.b16 %v11801
    %v11992 = vunpack.c.l.b16 %v11802
    %v11993 = vunpack.c.h.b16 %v11802
    %v11994 = vunpack.c.l.b16 %v11803
    %v11995 = vunpack.c.h.b16 %v11803
    %v11996 = vunpack.c.l.b16 %v11804
    %v11997 = vunpack.c.h.b16 %v11804
    %v11998 = vunpack.c.l.b16 %v11805
    %v11999 = vunpack.c.h.b16 %v11805
    %v12000 = vunpack.c.l.b16 %v11806
    %v12001 = vunpack.c.h.b16 %v11806
    %v12002 = vunpack.c.l.b16 %v11807
    %v12003 = vunpack.c.h.b16 %v11807
    %v12004 = vunpack.c.l.b16 %v11808
    %v12005 = vunpack.c.h.b16 %v11808
    %v12006 = vunpack.c.l.b16 %v11809
    %v12007 = vunpack.c.h.b16 %v11809
    %v12008 = vunpack.c.l.b16 %v11810
    %v12009 = vunpack.c.h.b16 %v11810
    %v12010 = vunpack.c.l.b16 %v11811
    %v12011 = vunpack.c.h.b16 %v11811
    %v12012 = vpack.c.b16 %v11888, %v11884
    %v12013 = vpack.c.b16 %v11889, %v11885
    %v12014 = vpack.c.b16 %v11890, %v11886
    %v12015 = vpack.c.b16 %v11891, %v11887
    %v12016 = vpack.c.b16 %v11896, %v11892
    %v12017 = vpack.c.b16 %v11897, %v11893
    %v12018 = vpack.c.b16 %v11898, %v11894
    %v12019 = vpack.c.b16 %v11899, %v11895
    %v12020 = vpack.c.b16 %v11904, %v11900
    %v12021 = vpack.c.b16 %v11905, %v11901
    %v12022 = vpack.c.b16 %v11906, %v11902
    %v12023 = vpack.c.b16 %v11907, %v11903
    %v12024 = vpack.c.b16 %v11912, %v11908
    %v12025 = vpack.c.b16 %v11913, %v11909
    %v12026 = vpack.c.b16 %v11914, %v11910
    %v12027 = vpack.c.b16 %v11915, %v11911
    %v12028 = vpack.c.b16 %v11920, %v11916
    %v12029 = vpack.c.b16 %v11921, %v11917
    %v12030 = vpack.c.b16 %v11922, %v11918
    %v12031 = vpack.c.b16 %v11923, %v11919
    %v12032 = vpack.c.b16 %v11928, %v11924
    %v12033 = vpack.c.b16 %v11929, %v11925
    %v12034 = vpack.c.b16 %v11930, %v11926
    %v12035 = vpack.c.b16 %v11931, %v11927
    %v12036 = vpack.c.b16 %v11936, %v11932
    %v12037 = vpack.c.b16 %v11937, %v11933
    %v12038 = vpack.c.b16 %v11938, %v11934
    %v12039 = vpack.c.b16 %v11939, %v11935
    %v12040 = vpack.c.b16 %v11944, %v11940
    %v12041 = vpack.c.b16 %v11945, %v11941
    %v12042 = vpack.c.b16 %v11946, %v11942
    %v12043 = vpack.c.b16 %v11947, %v11943
    %v12044 = vpack.c.b16 %v11952, %v11948
    %v12045 = vpack.c.b16 %v11953, %v11949
    %v12046 = vpack.c.b16 %v11954, %v11950
    %v12047 = vpack.c.b16 %v11955, %v11951
    %v12048 = vpack.c.b16 %v11960, %v11956
    %v12049 = vpack.c.b16 %v11961, %v11957
    %v12050 = vpack.c.b16 %v11962, %v11958
    %v12051 = vpack.c.b16 %v11963, %v11959
    %v12052 = vpack.c.b16 %v11968, %v11964
    %v12053 = vpack.c.b16 %v11969, %v11965
    %v12054 = vpack.c.b16 %v11970, %v11966
    %v12055 = vpack.c.b16 %v11971, %v11967
    %v12056 = vpack.c.b16 %v11976, %v11972
    %v12057 = vpack.c.b16 %v11977, %v11973
    %v12058 = vpack.c.b16 %v11978, %v11974
    %v12059 = vpack.c.b16 %v11979, %v11975
    %v12060 = vpack.c.b16 %v11984, %v11980
    %v12061 = vpack.c.b16 %v11985, %v11981
    %v12062 = vpack.c.b16 %v11986, %v11982
    %v12063 = vpack.c.b16 %v11987, %v11983
    %v12064 = vpack.c.b16 %v11992, %v11988
    %v12065 = vpack.c.b16 %v11993, %v11989
    %v12066 = vpack.c.b16 %v11994, %v11990
    %v12067 = vpack.c.b16 %v11995, %v11991
    %v12068 = vpack.c.b16 %v12000, %v11996
    %v12069 = vpack.c.b16 %v12001, %v11997
    %v12070 = vpack.c.b16 %v12002, %v11998
    %v12071 = vpack.c.b16 %v12003, %v11999
    %v12072 = vpack.c.b16 %v12008, %v12004
    %v12073 = vpack.c.b16 %v12009, %v12005
    %v12074 = vpack.c.b16 %v12010, %v12006
    %v12075 = vpack.c.b16 %v12011, %v12007
    %12140 = vmatpush.bf16.msra.mxu0 %v12040
    %12141 = vmatpush.bf16.msra.mxu0 %v12036
    %12142 = vmatpush.bf16.msra.mxu0 %v12032
    %12143 = vmatpush.bf16.msra.mxu0 %v12028
    %12144 = vmatpush.bf16.msra.mxu0 %v12024
    %12145 = vmatpush.bf16.msra.mxu0 %v12020
    %12146 = vmatpush.bf16.msra.mxu0 %v12016
    %12147 = vmatpush.bf16.msra.mxu0 %v12012
    %12148 = vmatmul.bf16.gmra.mxu0 %v11816
    %v12149 = vpop.f32.mrf.mxu0
    %v12150 = vadd.f32 0.0, %v12149
    %v12151 = vpop.f32.mrf.mxu0
    %v12152 = vadd.f32 0.0, %v12151
    %12153 = vdwg.mxu0
    %12154 = vmatpush.bf16.msra.mxu0 %v12072
    %12155 = vmatpush.bf16.msra.mxu0 %v12068
    %12156 = vmatpush.bf16.msra.mxu0 %v12064
    %12157 = vmatpush.bf16.msra.mxu0 %v12060
    %12158 = vmatpush.bf16.msra.mxu0 %v12056
    %12159 = vmatpush.bf16.msra.mxu0 %v12052
    %12160 = vmatpush.bf16.msra.mxu0 %v12048
    %12161 = vmatpush.bf16.msra.mxu0 %v12044
    %12162 = vmatmul.bf16.gmra.mxu0 %v11817
    %v12163 = vpop.f32.mrf.mxu0
    %v12164 = vadd.f32 %v12150, %v12163
    %v12165 = vpop.f32.mrf.mxu0
    %v12166 = vadd.f32 %v12152, %v12165
    %12167 = vdwg.mxu0
    %12168 = vmatpush.bf16.msra.mxu0 %v12041
    %12169 = vmatpush.bf16.msra.mxu0 %v12037
    %12170 = vmatpush.bf16.msra.mxu0 %v12033
    %12171 = vmatpush.bf16.msra.mxu0 %v12029
    %12172 = vmatpush.bf16.msra.mxu0 %v12025
    %12173 = vmatpush.bf16.msra.mxu0 %v12021
    %12174 = vmatpush.bf16.msra.mxu0 %v12017
    %12175 = vmatpush.bf16.msra.mxu0 %v12013
    %12176 = vmatmul.bf16.gmra.mxu0 %v11816
    %v12177 = vpop.f32.mrf.mxu0
    %v12178 = vadd.f32 0.0, %v12177
    %v12179 = vpop.f32.mrf.mxu0
    %v12180 = vadd.f32 0.0, %v12179
    %12181 = vdwg.mxu0
    %12182 = vmatpush.bf16.msra.mxu0 %v12073
    %12183 = vmatpush.bf16.msra.mxu0 %v12069
    %12184 = vmatpush.bf16.msra.mxu0 %v12065
    %12185 = vmatpush.bf16.msra.mxu0 %v12061
    %12186 = vmatpush.bf16.msra.mxu0 %v12057
    %12187 = vmatpush.bf16.msra.mxu0 %v12053
    %12188 = vmatpush.bf16.msra.mxu0 %v12049
    %12189 = vmatpush.bf16.msra.mxu0 %v12045
    %12190 = vmatmul.bf16.gmra.mxu0 %v11817
    %v12191 = vpop.f32.mrf.mxu0
    %v12192 = vadd.f32 %v12178, %v12191
    %v12193 = vpop.f32.mrf.mxu0
    %v12194 = vadd.f32 %v12180, %v12193
    %12195 = vdwg.mxu0
    %12196 = vmatpush.bf16.msra.mxu0 %v12042
    %12197 = vmatpush.bf16.msra.mxu0 %v12038
    %12198 = vmatpush.bf16.msra.mxu0 %v12034
    %12199 = vmatpush.bf16.msra.mxu0 %v12030
    %12200 = vmatpush.bf16.msra.mxu0 %v12026
    %12201 = vmatpush.bf16.msra.mxu0 %v12022
    %12202 = vmatpush.bf16.msra.mxu0 %v12018
    %12203 = vmatpush.bf16.msra.mxu0 %v12014
    %12204 = vmatmul.bf16.gmra.mxu0 %v11816
    %v12205 = vpop.f32.mrf.mxu0
    %v12206 = vadd.f32 0.0, %v12205
    %v12207 = vpop.f32.mrf.mxu0
    %v12208 = vadd.f32 0.0, %v12207
    %12209 = vdwg.mxu0
    %12210 = vmatpush.bf16.msra.mxu0 %v12074
    %12211 = vmatpush.bf16.msra.mxu0 %v12070
    %12212 = vmatpush.bf16.msra.mxu0 %v12066
    %12213 = vmatpush.bf16.msra.mxu0 %v12062
    %12214 = vmatpush.bf16.msra.mxu0 %v12058
    %12215 = vmatpush.bf16.msra.mxu0 %v12054
    %12216 = vmatpush.bf16.msra.mxu0 %v12050
    %12217 = vmatpush.bf16.msra.mxu0 %v12046
    %12218 = vmatmul.bf16.gmra.mxu0 %v11817
    %v12219 = vpop.f32.mrf.mxu0
    %v12220 = vadd.f32 %v12206, %v12219
    %v12221 = vpop.f32.mrf.mxu0
    %v12222 = vadd.f32 %v12208, %v12221
    %12223 = vdwg.mxu0
    %12224 = vmatpush.bf16.msra.mxu0 %v12043
    %12225 = vmatpush.bf16.msra.mxu0 %v12039
    %12226 = vmatpush.bf16.msra.mxu0 %v12035
    %12227 = vmatpush.bf16.msra.mxu0 %v12031
    %12228 = vmatpush.bf16.msra.mxu0 %v12027
    %12229 = vmatpush.bf16.msra.mxu0 %v12023
    %12230 = vmatpush.bf16.msra.mxu0 %v12019
    %12231 = vmatpush.bf16.msra.mxu0 %v12015
    %12232 = vmatmul.bf16.gmra.mxu0 %v11816
    %v12233 = vpop.f32.mrf.mxu0
    %v12234 = vadd.f32 0.0, %v12233
    %v12235 = vpop.f32.mrf.mxu0
    %v12236 = vadd.f32 0.0, %v12235
    %12237 = vdwg.mxu0
    %12238 = vmatpush.bf16.msra.mxu0 %v12075
    %12239 = vmatpush.bf16.msra.mxu0 %v12071
    %12240 = vmatpush.bf16.msra.mxu0 %v12067
    %12241 = vmatpush.bf16.msra.mxu0 %v12063
    %12242 = vmatpush.bf16.msra.mxu0 %v12059
    %12243 = vmatpush.bf16.msra.mxu0 %v12055
    %12244 = vmatpush.bf16.msra.mxu0 %v12051
    %12245 = vmatpush.bf16.msra.mxu0 %v12047
    %12246 = vmatmul.bf16.gmra.mxu0 %v11817
    %v12247 = vpop.f32.mrf.mxu0
    %v12248 = vadd.f32 %v12234, %v12247
    %v12249 = vpop.f32.mrf.mxu0
    %v12250 = vadd.f32 %v12236, %v12249
    %12251 = vdwg.mxu0
    %v12252 = vadd.f32 %v11701, %v12164
    %v12253 = vadd.f32 %v11702, %v12192
    %v12254 = vadd.f32 %v11703, %v12220
    %v12255 = vadd.f32 %v11704, %v12248
    %v12256 = vadd.f32 %v11705, %v12166
    %v12257 = vadd.f32 %v11706, %v12194
    %v12258 = vadd.f32 %v11707, %v12222
    %v12259 = vadd.f32 %v11708, %v12250
    %v12260 = vld [vmem:[#allocation3] sm:$0xcc]
    %v12261 = vld [vmem:[#allocation3 + $0x10] sm:$0xcc]
    %v12266 = vrot.slane %v12260, 6
    %v12267 = vrot.slane %v12266, 4
    %v12268 = vrot.slane %v11709, 6
    %v12269 = vsel %vm2686, %v12267, %v12268
    %v12270 = vrot.slane %v12261, 6
    %v12271 = vrot.slane %v12270, 4
    %v12272 = vrot.slane %v11710, 6
    %v12273 = vsel %vm2686, %v12271, %v12272
    %s12274 = scalar_lea.vmem [#allocation12], 2048
    %v12275 = vld [vmem:[%s12274] sm:$0xff]
    %v12276 = vld [vmem:[%s12274 + $0x8] sm:$0xff]
    %v12277 = vld [vmem:[%s12274 + $0x10] sm:$0xff]
    %v12278 = vld [vmem:[%s12274 + $0x18] sm:$0xff]
    %v12279 = vld [vmem:[%s12274 + $0x20] sm:$0xff]
    %v12280 = vld [vmem:[%s12274 + $0x28] sm:$0xff]
    %v12281 = vld [vmem:[%s12274 + $0x30] sm:$0xff]
    %v12282 = vld [vmem:[%s12274 + $0x38] sm:$0xff]
    %v12283 = vld [vmem:[%s12274 + $0x40] sm:$0xff]
    %v12284 = vld [vmem:[%s12274 + $0x48] sm:$0xff]
    %v12285 = vld [vmem:[%s12274 + $0x50] sm:$0xff]
    %v12286 = vld [vmem:[%s12274 + $0x58] sm:$0xff]
    %v12287 = vld [vmem:[%s12274 + $0x60] sm:$0xff]
    %v12288 = vld [vmem:[%s12274 + $0x68] sm:$0xff]
    %v12289 = vld [vmem:[%s12274 + $0x70] sm:$0xff]
    %v12290 = vld [vmem:[%s12274 + $0x78] sm:$0xff]
    %v12291 = vld [vmem:[%s12274 + $0x80] sm:$0xff]
    %v12292 = vld [vmem:[%s12274 + $0x88] sm:$0xff]
    %v12293 = vld [vmem:[%s12274 + $0x90] sm:$0xff]
    %v12294 = vld [vmem:[%s12274 + $0x98] sm:$0xff]
    %v12295 = vld [vmem:[%s12274 + $0xa0] sm:$0xff]
    %v12296 = vld [vmem:[%s12274 + $0xa8] sm:$0xff]
    %v12297 = vld [vmem:[%s12274 + $0xb0] sm:$0xff]
    %v12298 = vld [vmem:[%s12274 + $0xb8] sm:$0xff]
    %v12299 = vld [vmem:[%s12274 + $0xc0] sm:$0xff]
    %v12300 = vld [vmem:[%s12274 + $0xc8] sm:$0xff]
    %v12301 = vld [vmem:[%s12274 + $0xd0] sm:$0xff]
    %v12302 = vld [vmem:[%s12274 + $0xd8] sm:$0xff]
    %v12303 = vld [vmem:[%s12274 + $0xe0] sm:$0xff]
    %v12304 = vld [vmem:[%s12274 + $0xe8] sm:$0xff]
    %v12305 = vld [vmem:[%s12274 + $0xf0] sm:$0xff]
    %v12306 = vld [vmem:[%s12274 + $0xf8] sm:$0xff]
    %v12307 = vld [vmem:[%s12274 + $0x100] sm:$0xff]
    %v12308 = vld [vmem:[%s12274 + $0x108] sm:$0xff]
    %v12309 = vld [vmem:[%s12274 + $0x110] sm:$0xff]
    %v12310 = vld [vmem:[%s12274 + $0x118] sm:$0xff]
    %v12311 = vld [vmem:[%s12274 + $0x120] sm:$0xff]
    %v12312 = vld [vmem:[%s12274 + $0x128] sm:$0xff]
    %v12313 = vld [vmem:[%s12274 + $0x130] sm:$0xff]
    %v12314 = vld [vmem:[%s12274 + $0x138] sm:$0xff]
    %v12315 = vld [vmem:[%s12274 + $0x140] sm:$0xff]
    %v12316 = vld [vmem:[%s12274 + $0x148] sm:$0xff]
    %v12317 = vld [vmem:[%s12274 + $0x150] sm:$0xff]
    %v12318 = vld [vmem:[%s12274 + $0x158] sm:$0xff]
    %v12319 = vld [vmem:[%s12274 + $0x160] sm:$0xff]
    %v12320 = vld [vmem:[%s12274 + $0x168] sm:$0xff]
    %v12321 = vld [vmem:[%s12274 + $0x170] sm:$0xff]
    %v12322 = vld [vmem:[%s12274 + $0x178] sm:$0xff]
    %v12323 = vld [vmem:[%s12274 + $0x180] sm:$0xff]
    %v12324 = vld [vmem:[%s12274 + $0x188] sm:$0xff]
    %v12325 = vld [vmem:[%s12274 + $0x190] sm:$0xff]
    %v12326 = vld [vmem:[%s12274 + $0x198] sm:$0xff]
    %v12327 = vld [vmem:[%s12274 + $0x1a0] sm:$0xff]
    %v12328 = vld [vmem:[%s12274 + $0x1a8] sm:$0xff]
    %v12329 = vld [vmem:[%s12274 + $0x1b0] sm:$0xff]
    %v12330 = vld [vmem:[%s12274 + $0x1b8] sm:$0xff]
    %v12331 = vld [vmem:[%s12274 + $0x1c0] sm:$0xff]
    %v12332 = vld [vmem:[%s12274 + $0x1c8] sm:$0xff]
    %v12333 = vld [vmem:[%s12274 + $0x1d0] sm:$0xff]
    %v12334 = vld [vmem:[%s12274 + $0x1d8] sm:$0xff]
    %v12335 = vld [vmem:[%s12274 + $0x1e0] sm:$0xff]
    %v12336 = vld [vmem:[%s12274 + $0x1e8] sm:$0xff]
    %v12337 = vld [vmem:[%s12274 + $0x1f0] sm:$0xff]
    %v12338 = vld [vmem:[%s12274 + $0x1f8] sm:$0xff]
    %v12339 = vunpack.c.l.b16 %v12269
    %v12340 = vunpack.c.h.b16 %v12269
    %v12341 = vunpack.c.l.b16 %v12273
    %v12342 = vunpack.c.h.b16 %v12273
    %v12343 = vpack.c.b16 %v12341, %v12339
    %v12344 = vpack.c.b16 %v12342, %v12340
    %v12411 = vunpack.c.l.b16 %v12275
    %v12412 = vunpack.c.h.b16 %v12275
    %v12413 = vunpack.c.l.b16 %v12276
    %v12414 = vunpack.c.h.b16 %v12276
    %v12415 = vunpack.c.l.b16 %v12277
    %v12416 = vunpack.c.h.b16 %v12277
    %v12417 = vunpack.c.l.b16 %v12278
    %v12418 = vunpack.c.h.b16 %v12278
    %v12419 = vunpack.c.l.b16 %v12279
    %v12420 = vunpack.c.h.b16 %v12279
    %v12421 = vunpack.c.l.b16 %v12280
    %v12422 = vunpack.c.h.b16 %v12280
    %v12423 = vunpack.c.l.b16 %v12281
    %v12424 = vunpack.c.h.b16 %v12281
    %v12425 = vunpack.c.l.b16 %v12282
    %v12426 = vunpack.c.h.b16 %v12282
    %v12427 = vunpack.c.l.b16 %v12283
    %v12428 = vunpack.c.h.b16 %v12283
    %v12429 = vunpack.c.l.b16 %v12284
    %v12430 = vunpack.c.h.b16 %v12284
    %v12431 = vunpack.c.l.b16 %v12285
    %v12432 = vunpack.c.h.b16 %v12285
    %v12433 = vunpack.c.l.b16 %v12286
    %v12434 = vunpack.c.h.b16 %v12286
    %v12435 = vunpack.c.l.b16 %v12287
    %v12436 = vunpack.c.h.b16 %v12287
    %v12437 = vunpack.c.l.b16 %v12288
    %v12438 = vunpack.c.h.b16 %v12288
    %v12439 = vunpack.c.l.b16 %v12289
    %v12440 = vunpack.c.h.b16 %v12289
    %v12441 = vunpack.c.l.b16 %v12290
    %v12442 = vunpack.c.h.b16 %v12290
    %v12443 = vunpack.c.l.b16 %v12291
    %v12444 = vunpack.c.h.b16 %v12291
    %v12445 = vunpack.c.l.b16 %v12292
    %v12446 = vunpack.c.h.b16 %v12292
    %v12447 = vunpack.c.l.b16 %v12293
    %v12448 = vunpack.c.h.b16 %v12293
    %v12449 = vunpack.c.l.b16 %v12294
    %v12450 = vunpack.c.h.b16 %v12294
    %v12451 = vunpack.c.l.b16 %v12295
    %v12452 = vunpack.c.h.b16 %v12295
    %v12453 = vunpack.c.l.b16 %v12296
    %v12454 = vunpack.c.h.b16 %v12296
    %v12455 = vunpack.c.l.b16 %v12297
    %v12456 = vunpack.c.h.b16 %v12297
    %v12457 = vunpack.c.l.b16 %v12298
    %v12458 = vunpack.c.h.b16 %v12298
    %v12459 = vunpack.c.l.b16 %v12299
    %v12460 = vunpack.c.h.b16 %v12299
    %v12461 = vunpack.c.l.b16 %v12300
    %v12462 = vunpack.c.h.b16 %v12300
    %v12463 = vunpack.c.l.b16 %v12301
    %v12464 = vunpack.c.h.b16 %v12301
    %v12465 = vunpack.c.l.b16 %v12302
    %v12466 = vunpack.c.h.b16 %v12302
    %v12467 = vunpack.c.l.b16 %v12303
    %v12468 = vunpack.c.h.b16 %v12303
    %v12469 = vunpack.c.l.b16 %v12304
    %v12470 = vunpack.c.h.b16 %v12304
    %v12471 = vunpack.c.l.b16 %v12305
    %v12472 = vunpack.c.h.b16 %v12305
    %v12473 = vunpack.c.l.b16 %v12306
    %v12474 = vunpack.c.h.b16 %v12306
    %v12475 = vunpack.c.l.b16 %v12307
    %v12476 = vunpack.c.h.b16 %v12307
    %v12477 = vunpack.c.l.b16 %v12308
    %v12478 = vunpack.c.h.b16 %v12308
    %v12479 = vunpack.c.l.b16 %v12309
    %v12480 = vunpack.c.h.b16 %v12309
    %v12481 = vunpack.c.l.b16 %v12310
    %v12482 = vunpack.c.h.b16 %v12310
    %v12483 = vunpack.c.l.b16 %v12311
    %v12484 = vunpack.c.h.b16 %v12311
    %v12485 = vunpack.c.l.b16 %v12312
    %v12486 = vunpack.c.h.b16 %v12312
    %v12487 = vunpack.c.l.b16 %v12313
    %v12488 = vunpack.c.h.b16 %v12313
    %v12489 = vunpack.c.l.b16 %v12314
    %v12490 = vunpack.c.h.b16 %v12314
    %v12491 = vunpack.c.l.b16 %v12315
    %v12492 = vunpack.c.h.b16 %v12315
    %v12493 = vunpack.c.l.b16 %v12316
    %v12494 = vunpack.c.h.b16 %v12316
    %v12495 = vunpack.c.l.b16 %v12317
    %v12496 = vunpack.c.h.b16 %v12317
    %v12497 = vunpack.c.l.b16 %v12318
    %v12498 = vunpack.c.h.b16 %v12318
    %v12499 = vunpack.c.l.b16 %v12319
    %v12500 = vunpack.c.h.b16 %v12319
    %v12501 = vunpack.c.l.b16 %v12320
    %v12502 = vunpack.c.h.b16 %v12320
    %v12503 = vunpack.c.l.b16 %v12321
    %v12504 = vunpack.c.h.b16 %v12321
    %v12505 = vunpack.c.l.b16 %v12322
    %v12506 = vunpack.c.h.b16 %v12322
    %v12507 = vunpack.c.l.b16 %v12323
    %v12508 = vunpack.c.h.b16 %v12323
    %v12509 = vunpack.c.l.b16 %v12324
    %v12510 = vunpack.c.h.b16 %v12324
    %v12511 = vunpack.c.l.b16 %v12325
    %v12512 = vunpack.c.h.b16 %v12325
    %v12513 = vunpack.c.l.b16 %v12326
    %v12514 = vunpack.c.h.b16 %v12326
    %v12515 = vunpack.c.l.b16 %v12327
    %v12516 = vunpack.c.h.b16 %v12327
    %v12517 = vunpack.c.l.b16 %v12328
    %v12518 = vunpack.c.h.b16 %v12328
    %v12519 = vunpack.c.l.b16 %v12329
    %v12520 = vunpack.c.h.b16 %v12329
    %v12521 = vunpack.c.l.b16 %v12330
    %v12522 = vunpack.c.h.b16 %v12330
    %v12523 = vunpack.c.l.b16 %v12331
    %v12524 = vunpack.c.h.b16 %v12331
    %v12525 = vunpack.c.l.b16 %v12332
    %v12526 = vunpack.c.h.b16 %v12332
    %v12527 = vunpack.c.l.b16 %v12333
    %v12528 = vunpack.c.h.b16 %v12333
    %v12529 = vunpack.c.l.b16 %v12334
    %v12530 = vunpack.c.h.b16 %v12334
    %v12531 = vunpack.c.l.b16 %v12335
    %v12532 = vunpack.c.h.b16 %v12335
    %v12533 = vunpack.c.l.b16 %v12336
    %v12534 = vunpack.c.h.b16 %v12336
    %v12535 = vunpack.c.l.b16 %v12337
    %v12536 = vunpack.c.h.b16 %v12337
    %v12537 = vunpack.c.l.b16 %v12338
    %v12538 = vunpack.c.h.b16 %v12338
    %v12539 = vpack.c.b16 %v12415, %v12411
    %v12540 = vpack.c.b16 %v12416, %v12412
    %v12541 = vpack.c.b16 %v12417, %v12413
    %v12542 = vpack.c.b16 %v12418, %v12414
    %v12543 = vpack.c.b16 %v12423, %v12419
    %v12544 = vpack.c.b16 %v12424, %v12420
    %v12545 = vpack.c.b16 %v12425, %v12421
    %v12546 = vpack.c.b16 %v12426, %v12422
    %v12547 = vpack.c.b16 %v12431, %v12427
    %v12548 = vpack.c.b16 %v12432, %v12428
    %v12549 = vpack.c.b16 %v12433, %v12429
    %v12550 = vpack.c.b16 %v12434, %v12430
    %v12551 = vpack.c.b16 %v12439, %v12435
    %v12552 = vpack.c.b16 %v12440, %v12436
    %v12553 = vpack.c.b16 %v12441, %v12437
    %v12554 = vpack.c.b16 %v12442, %v12438
    %v12555 = vpack.c.b16 %v12447, %v12443
    %v12556 = vpack.c.b16 %v12448, %v12444
    %v12557 = vpack.c.b16 %v12449, %v12445
    %v12558 = vpack.c.b16 %v12450, %v12446
    %v12559 = vpack.c.b16 %v12455, %v12451
    %v12560 = vpack.c.b16 %v12456, %v12452
    %v12561 = vpack.c.b16 %v12457, %v12453
    %v12562 = vpack.c.b16 %v12458, %v12454
    %v12563 = vpack.c.b16 %v12463, %v12459
    %v12564 = vpack.c.b16 %v12464, %v12460
    %v12565 = vpack.c.b16 %v12465, %v12461
    %v12566 = vpack.c.b16 %v12466, %v12462
    %v12567 = vpack.c.b16 %v12471, %v12467
    %v12568 = vpack.c.b16 %v12472, %v12468
    %v12569 = vpack.c.b16 %v12473, %v12469
    %v12570 = vpack.c.b16 %v12474, %v12470
    %v12571 = vpack.c.b16 %v12479, %v12475
    %v12572 = vpack.c.b16 %v12480, %v12476
    %v12573 = vpack.c.b16 %v12481, %v12477
    %v12574 = vpack.c.b16 %v12482, %v12478
    %v12575 = vpack.c.b16 %v12487, %v12483
    %v12576 = vpack.c.b16 %v12488, %v12484
    %v12577 = vpack.c.b16 %v12489, %v12485
    %v12578 = vpack.c.b16 %v12490, %v12486
    %v12579 = vpack.c.b16 %v12495, %v12491
    %v12580 = vpack.c.b16 %v12496, %v12492
    %v12581 = vpack.c.b16 %v12497, %v12493
    %v12582 = vpack.c.b16 %v12498, %v12494
    %v12583 = vpack.c.b16 %v12503, %v12499
    %v12584 = vpack.c.b16 %v12504, %v12500
    %v12585 = vpack.c.b16 %v12505, %v12501
    %v12586 = vpack.c.b16 %v12506, %v12502
    %v12587 = vpack.c.b16 %v12511, %v12507
    %v12588 = vpack.c.b16 %v12512, %v12508
    %v12589 = vpack.c.b16 %v12513, %v12509
    %v12590 = vpack.c.b16 %v12514, %v12510
    %v12591 = vpack.c.b16 %v12519, %v12515
    %v12592 = vpack.c.b16 %v12520, %v12516
    %v12593 = vpack.c.b16 %v12521, %v12517
    %v12594 = vpack.c.b16 %v12522, %v12518
    %v12595 = vpack.c.b16 %v12527, %v12523
    %v12596 = vpack.c.b16 %v12528, %v12524
    %v12597 = vpack.c.b16 %v12529, %v12525
    %v12598 = vpack.c.b16 %v12530, %v12526
    %v12599 = vpack.c.b16 %v12535, %v12531
    %v12600 = vpack.c.b16 %v12536, %v12532
    %v12601 = vpack.c.b16 %v12537, %v12533
    %v12602 = vpack.c.b16 %v12538, %v12534
    %12667 = vmatpush.bf16.msra.mxu0 %v12567
    %12668 = vmatpush.bf16.msra.mxu0 %v12563
    %12669 = vmatpush.bf16.msra.mxu0 %v12559
    %12670 = vmatpush.bf16.msra.mxu0 %v12555
    %12671 = vmatpush.bf16.msra.mxu0 %v12551
    %12672 = vmatpush.bf16.msra.mxu0 %v12547
    %12673 = vmatpush.bf16.msra.mxu0 %v12543
    %12674 = vmatpush.bf16.msra.mxu0 %v12539
    %12675 = vmatmul.bf16.gmra.mxu0 %v12343
    %v12676 = vpop.f32.mrf.mxu0
    %v12677 = vadd.f32 0.0, %v12676
    %v12678 = vpop.f32.mrf.mxu0
    %v12679 = vadd.f32 0.0, %v12678
    %12680 = vdwg.mxu0
    %12681 = vmatpush.bf16.msra.mxu0 %v12599
    %12682 = vmatpush.bf16.msra.mxu0 %v12595
    %12683 = vmatpush.bf16.msra.mxu0 %v12591
    %12684 = vmatpush.bf16.msra.mxu0 %v12587
    %12685 = vmatpush.bf16.msra.mxu0 %v12583
    %12686 = vmatpush.bf16.msra.mxu0 %v12579
    %12687 = vmatpush.bf16.msra.mxu0 %v12575
    %12688 = vmatpush.bf16.msra.mxu0 %v12571
    %12689 = vmatmul.bf16.gmra.mxu0 %v12344
    %v12690 = vpop.f32.mrf.mxu0
    %v12691 = vadd.f32 %v12677, %v12690
    %v12692 = vpop.f32.mrf.mxu0
    %v12693 = vadd.f32 %v12679, %v12692
    %12694 = vdwg.mxu0
    %12695 = vmatpush.bf16.msra.mxu0 %v12568
    %12696 = vmatpush.bf16.msra.mxu0 %v12564
    %12697 = vmatpush.bf16.msra.mxu0 %v12560
    %12698 = vmatpush.bf16.msra.mxu0 %v12556
    %12699 = vmatpush.bf16.msra.mxu0 %v12552
    %12700 = vmatpush.bf16.msra.mxu0 %v12548
    %12701 = vmatpush.bf16.msra.mxu0 %v12544
    %12702 = vmatpush.bf16.msra.mxu0 %v12540
    %12703 = vmatmul.bf16.gmra.mxu0 %v12343
    %v12704 = vpop.f32.mrf.mxu0
    %v12705 = vadd.f32 0.0, %v12704
    %v12706 = vpop.f32.mrf.mxu0
    %v12707 = vadd.f32 0.0, %v12706
    %12708 = vdwg.mxu0
    %12709 = vmatpush.bf16.msra.mxu0 %v12600
    %12710 = vmatpush.bf16.msra.mxu0 %v12596
    %12711 = vmatpush.bf16.msra.mxu0 %v12592
    %12712 = vmatpush.bf16.msra.mxu0 %v12588
    %12713 = vmatpush.bf16.msra.mxu0 %v12584
    %12714 = vmatpush.bf16.msra.mxu0 %v12580
    %12715 = vmatpush.bf16.msra.mxu0 %v12576
    %12716 = vmatpush.bf16.msra.mxu0 %v12572
    %12717 = vmatmul.bf16.gmra.mxu0 %v12344
    %v12718 = vpop.f32.mrf.mxu0
    %v12719 = vadd.f32 %v12705, %v12718
    %v12720 = vpop.f32.mrf.mxu0
    %v12721 = vadd.f32 %v12707, %v12720
    %12722 = vdwg.mxu0
    %12723 = vmatpush.bf16.msra.mxu0 %v12569
    %12724 = vmatpush.bf16.msra.mxu0 %v12565
    %12725 = vmatpush.bf16.msra.mxu0 %v12561
    %12726 = vmatpush.bf16.msra.mxu0 %v12557
    %12727 = vmatpush.bf16.msra.mxu0 %v12553
    %12728 = vmatpush.bf16.msra.mxu0 %v12549
    %12729 = vmatpush.bf16.msra.mxu0 %v12545
    %12730 = vmatpush.bf16.msra.mxu0 %v12541
    %12731 = vmatmul.bf16.gmra.mxu0 %v12343
    %v12732 = vpop.f32.mrf.mxu0
    %v12733 = vadd.f32 0.0, %v12732
    %v12734 = vpop.f32.mrf.mxu0
    %v12735 = vadd.f32 0.0, %v12734
    %12736 = vdwg.mxu0
    %12737 = vmatpush.bf16.msra.mxu0 %v12601
    %12738 = vmatpush.bf16.msra.mxu0 %v12597
    %12739 = vmatpush.bf16.msra.mxu0 %v12593
    %12740 = vmatpush.bf16.msra.mxu0 %v12589
    %12741 = vmatpush.bf16.msra.mxu0 %v12585
    %12742 = vmatpush.bf16.msra.mxu0 %v12581
    %12743 = vmatpush.bf16.msra.mxu0 %v12577
    %12744 = vmatpush.bf16.msra.mxu0 %v12573
    %12745 = vmatmul.bf16.gmra.mxu0 %v12344
    %v12746 = vpop.f32.mrf.mxu0
    %v12747 = vadd.f32 %v12733, %v12746
    %v12748 = vpop.f32.mrf.mxu0
    %v12749 = vadd.f32 %v12735, %v12748
    %12750 = vdwg.mxu0
    %12751 = vmatpush.bf16.msra.mxu0 %v12570
    %12752 = vmatpush.bf16.msra.mxu0 %v12566
    %12753 = vmatpush.bf16.msra.mxu0 %v12562
    %12754 = vmatpush.bf16.msra.mxu0 %v12558
    %12755 = vmatpush.bf16.msra.mxu0 %v12554
    %12756 = vmatpush.bf16.msra.mxu0 %v12550
    %12757 = vmatpush.bf16.msra.mxu0 %v12546
    %12758 = vmatpush.bf16.msra.mxu0 %v12542
    %12759 = vmatmul.bf16.gmra.mxu0 %v12343
    %v12760 = vpop.f32.mrf.mxu0
    %v12761 = vadd.f32 0.0, %v12760
    %v12762 = vpop.f32.mrf.mxu0
    %v12763 = vadd.f32 0.0, %v12762
    %12764 = vdwg.mxu0
    %12765 = vmatpush.bf16.msra.mxu0 %v12602
    %12766 = vmatpush.bf16.msra.mxu0 %v12598
    %12767 = vmatpush.bf16.msra.mxu0 %v12594
    %12768 = vmatpush.bf16.msra.mxu0 %v12590
    %12769 = vmatpush.bf16.msra.mxu0 %v12586
    %12770 = vmatpush.bf16.msra.mxu0 %v12582
    %12771 = vmatpush.bf16.msra.mxu0 %v12578
    %12772 = vmatpush.bf16.msra.mxu0 %v12574
    %12773 = vmatmul.bf16.gmra.mxu0 %v12344
    %v12774 = vpop.f32.mrf.mxu0
    %v12775 = vadd.f32 %v12761, %v12774
    %v12776 = vpop.f32.mrf.mxu0
    %v12777 = vadd.f32 %v12763, %v12776
    %12778 = vdwg.mxu0
    %v12779 = vadd.f32 %v12252, %v12691
    %v12780 = vadd.f32 %v12253, %v12719
    %v12781 = vadd.f32 %v12254, %v12747
    %v12782 = vadd.f32 %v12255, %v12775
    %v12783 = vadd.f32 %v12256, %v12693
    %v12784 = vadd.f32 %v12257, %v12721
    %v12785 = vadd.f32 %v12258, %v12749
    %v12786 = vadd.f32 %v12259, %v12777
    %v12787 = vld [vmem:[#allocation13] sm:$0xf]
    %v12789 = vperm.slane %v12787, 0
    %v12790 = vperm.slane %v12787, 1
    %v12791 = vperm.slane %v12787, 2
    %v12792 = vperm.slane %v12787, 3
    %v12797 = vadd.f32 %v12779, %v12789
    %v12798 = vadd.f32 %v12780, %v12790
    %v12799 = vadd.f32 %v12781, %v12791
    %v12800 = vadd.f32 %v12782, %v12792
    %v12801 = vadd.f32 %v12783, %v12789
    %v12802 = vadd.f32 %v12784, %v12790
    %v12803 = vadd.f32 %v12785, %v12791
    %v12804 = vadd.f32 %v12786, %v12792
    %v12805 = vmax.f32 %v12797, %v12799
    %v12806 = vmax.f32 %v12798, %v12800
    %v12807 = vmax.f32 %v12801, %v12803
    %v12808 = vmax.f32 %v12802, %v12804
    %v12813 = vrot.slane %v12806, 4
    %v12814 = vrot.slane %v12808, 4
    %v12815 = vsel %vm3496, %v12805, %v12813
    %v12816 = vsel %vm3496, %v12813, %v12805
    %v12817 = vrot.slane %v12816, 4
    %v12818 = vsel %vm3496, %v12807, %v12814
    %v12819 = vsel %vm3496, %v12814, %v12807
    %v12820 = vrot.slane %v12819, 4
    %v12826 = vunpack.c.l.s4 1966171168
    %v12827 = vunpack.c.0.s8 %v12826
    %v12828 = vperm.slane %v12815, %v12827
    %v12830 = vunpack.c.l.s4 1966171168
    %v12831 = vunpack.c.0.s8 %v12830
    %v12832 = vperm.slane %v12817, %v12831
    %v12834 = vunpack.c.l.s4 1966171168
    %v12835 = vunpack.c.0.s8 %v12834
    %v12836 = vperm.slane %v12818, %v12835
    %v12838 = vunpack.c.l.s4 1966171168
    %v12839 = vunpack.c.0.s8 %v12838
    %v12840 = vperm.slane %v12820, %v12839
    %v12845 = vrot.slane %v12828, 4
    %v12846 = vrot.slane %v12832, 4
    %v12847 = vrot.slane %v12836, 4
    %v12848 = vrot.slane %v12840, 4
    %v12853 = vmax.f32 %v12828, %v12845
    %v12854 = vmax.f32 %v12832, %v12846
    %v12855 = vmax.f32 %v12836, %v12847
    %v12856 = vmax.f32 %v12840, %v12848
    %12861 = vst [vmem:[#allocation1] ss:$2 sm:$0xff] %v12853
    %s12862 = scalar_lea.vmem [#allocation1], 1
    %12863 = vst [vmem:[%s12862] ss:$2 sm:$0xff] %v12854
    %s12864 = scalar_lea.vmem [#allocation1], 16
    %12865 = vst [vmem:[%s12864] ss:$2 sm:$0xff] %v12855
    %s12866 = scalar_lea.vmem [#allocation1], 17
    %12867 = vst [vmem:[%s12866] ss:$2 sm:$0xff] %v12856
    %v12868 = vld.sshfl [vmem:[#allocation1] sm:$0xff pattern:$0x75643120]
    %v12869 = vld.sshfl [vmem:[#allocation1 + $0x10] sm:$0xff pattern:$0x75643120]
    %v12873 = vunpack.c.l.s4 1935823168
    %v12874 = vunpack.c.0.s8 %v12873
    %v12875 = vperm.slane %v12868, %v12874
    %v12877 = vunpack.c.l.s4 1935823168
    %v12878 = vunpack.c.0.s8 %v12877
    %v12879 = vperm.slane %v12869, %v12878
    %12882 = vst [vmem:[#allocation1] ss:$9 sm:$0xff] %v12875
    %s12883 = scalar_lea.vmem [#allocation1], 1
    %12884 = vst [vmem:[%s12883] ss:$9 sm:$0xff] %v12879
    %v12885 = vld [vmem:[#allocation1] sm:$0xff]
    %v12886 = vld [vmem:[#allocation1 + $0x9] sm:$0xff]
    %v12887 = vld [vmem:[#allocation1 + $0x12] sm:$0xff]
    %v12888 = vld [vmem:[#allocation1 + $0x1b] sm:$0xff]
    %v12889 = vld [vmem:[#allocation1 + $0x24] sm:$0xff]
    %v12890 = vld [vmem:[#allocation1 + $0x2d] sm:$0xff]
    %v12891 = vld [vmem:[#allocation1 + $0x36] sm:$0xff]
    %v12892 = vld [vmem:[#allocation1 + $0x3f] sm:$0xff]
    %v12901 = vpack.c.bf16 %v12885, %v12885
    %v12902 = vpack.c.bf16 %v12886, %v12886
    %v12903 = vpack.c.bf16 %v12887, %v12887
    %v12904 = vpack.c.bf16 %v12888, %v12888
    %v12905 = vpack.c.bf16 %v12889, %v12889
    %v12906 = vpack.c.bf16 %v12890, %v12890
    %v12907 = vpack.c.bf16 %v12891, %v12891
    %v12908 = vpack.c.bf16 %v12892, %v12892
    %v12909 = vld [vmem:[%s7] sm:$0xf]
    %v12910 = vld [vmem:[%s7 + $0x4] sm:$0xf]
    %v12911 = vld [vmem:[%s7 + $0x8] sm:$0xf]
    %v12912 = vld [vmem:[%s7 + $0xc] sm:$0xf]
    %v12913 = vld [vmem:[%s7 + $0x10] sm:$0xf]
    %v12914 = vld [vmem:[%s7 + $0x14] sm:$0xf]
    %v12915 = vld [vmem:[%s7 + $0x18] sm:$0xf]
    %v12916 = vld [vmem:[%s7 + $0x1c] sm:$0xf]
    %v12917 = vld [vmem:[%s7 + $0x20] sm:$0xf]
    %v12918 = vld [vmem:[%s7 + $0x24] sm:$0xf]
    %v12919 = vld [vmem:[%s7 + $0x28] sm:$0xf]
    %v12920 = vld [vmem:[%s7 + $0x2c] sm:$0xf]
    %v12921 = vld [vmem:[%s7 + $0x30] sm:$0xf]
    %v12922 = vld [vmem:[%s7 + $0x34] sm:$0xf]
    %v12923 = vld [vmem:[%s7 + $0x38] sm:$0xf]
    %v12924 = vld [vmem:[%s7 + $0x3c] sm:$0xf]
    %v12925 = vld [vmem:[%s7 + $0x40] sm:$0xf]
    %v12926 = vld [vmem:[%s7 + $0x44] sm:$0xf]
    %v12927 = vld [vmem:[%s7 + $0x48] sm:$0xf]
    %v12928 = vld [vmem:[%s7 + $0x4c] sm:$0xf]
    %v12929 = vld [vmem:[%s7 + $0x50] sm:$0xf]
    %v12930 = vld [vmem:[%s7 + $0x54] sm:$0xf]
    %v12931 = vld [vmem:[%s7 + $0x58] sm:$0xf]
    %v12932 = vld [vmem:[%s7 + $0x5c] sm:$0xf]
    %v12933 = vld [vmem:[%s7 + $0x60] sm:$0xf]
    %v12934 = vld [vmem:[%s7 + $0x64] sm:$0xf]
    %v12935 = vld [vmem:[%s7 + $0x68] sm:$0xf]
    %v12936 = vld [vmem:[%s7 + $0x6c] sm:$0xf]
    %v12937 = vld [vmem:[%s7 + $0x70] sm:$0xf]
    %v12938 = vld [vmem:[%s7 + $0x74] sm:$0xf]
    %v12939 = vld [vmem:[%s7 + $0x78] sm:$0xf]
    %v12940 = vld [vmem:[%s7 + $0x7c] sm:$0xf]
    %v12941 = vld [vmem:[%s7 + $0x80] sm:$0xf]
    %v12942 = vld [vmem:[%s7 + $0x84] sm:$0xf]
    %v12943 = vld [vmem:[%s7 + $0x88] sm:$0xf]
    %v12944 = vld [vmem:[%s7 + $0x8c] sm:$0xf]
    %v12945 = vld [vmem:[%s7 + $0x90] sm:$0xf]
    %v12946 = vld [vmem:[%s7 + $0x94] sm:$0xf]
    %v12947 = vld [vmem:[%s7 + $0x98] sm:$0xf]
    %v12948 = vld [vmem:[%s7 + $0x9c] sm:$0xf]
    %v12949 = vld [vmem:[%s7 + $0xa0] sm:$0xf]
    %v12950 = vld [vmem:[%s7 + $0xa4] sm:$0xf]
    %v12951 = vld [vmem:[%s7 + $0xa8] sm:$0xf]
    %v12952 = vld [vmem:[%s7 + $0xac] sm:$0xf]
    %v12953 = vld [vmem:[%s7 + $0xb0] sm:$0xf]
    %v12954 = vld [vmem:[%s7 + $0xb4] sm:$0xf]
    %v12955 = vld [vmem:[%s7 + $0xb8] sm:$0xf]
    %v12956 = vld [vmem:[%s7 + $0xbc] sm:$0xf]
    %v12957 = vld [vmem:[%s7 + $0xc0] sm:$0xf]
    %v12958 = vld [vmem:[%s7 + $0xc4] sm:$0xf]
    %v12959 = vld [vmem:[%s7 + $0xc8] sm:$0xf]
    %v12960 = vld [vmem:[%s7 + $0xcc] sm:$0xf]
    %v12961 = vld [vmem:[%s7 + $0xd0] sm:$0xf]
    %v12962 = vld [vmem:[%s7 + $0xd4] sm:$0xf]
    %v12963 = vld [vmem:[%s7 + $0xd8] sm:$0xf]
    %v12964 = vld [vmem:[%s7 + $0xdc] sm:$0xf]
    %v12965 = vld [vmem:[%s7 + $0xe0] sm:$0xf]
    %v12966 = vld [vmem:[%s7 + $0xe4] sm:$0xf]
    %v12967 = vld [vmem:[%s7 + $0xe8] sm:$0xf]
    %v12968 = vld [vmem:[%s7 + $0xec] sm:$0xf]
    %v12969 = vld [vmem:[%s7 + $0xf0] sm:$0xf]
    %v12970 = vld [vmem:[%s7 + $0xf4] sm:$0xf]
    %v12971 = vld [vmem:[%s7 + $0xf8] sm:$0xf]
    %v12972 = vld [vmem:[%s7 + $0xfc] sm:$0xf]
    %v12973 = vld [vmem:[%s7 + $0x100] sm:$0xf]
    %v12974 = vld [vmem:[%s7 + $0x104] sm:$0xf]
    %v12975 = vld [vmem:[%s7 + $0x108] sm:$0xf]
    %v12976 = vld [vmem:[%s7 + $0x10c] sm:$0xf]
    %v12977 = vld [vmem:[%s7 + $0x110] sm:$0xf]
    %v12978 = vld [vmem:[%s7 + $0x114] sm:$0xf]
    %v12979 = vld [vmem:[%s7 + $0x118] sm:$0xf]
    %v12980 = vld [vmem:[%s7 + $0x11c] sm:$0xf]
    %v12981 = vld [vmem:[%s7 + $0x120] sm:$0xf]
    %v12982 = vld [vmem:[%s7 + $0x124] sm:$0xf]
    %v12983 = vld [vmem:[%s7 + $0x128] sm:$0xf]
    %v12984 = vld [vmem:[%s7 + $0x12c] sm:$0xf]
    %v12985 = vld [vmem:[%s7 + $0x130] sm:$0xf]
    %v12986 = vld [vmem:[%s7 + $0x134] sm:$0xf]
    %v12987 = vld [vmem:[%s7 + $0x138] sm:$0xf]
    %v12988 = vld [vmem:[%s7 + $0x13c] sm:$0xf]
    %v12989 = vld [vmem:[%s7 + $0x140] sm:$0xf]
    %v12990 = vld [vmem:[%s7 + $0x144] sm:$0xf]
    %v12991 = vld [vmem:[%s7 + $0x148] sm:$0xf]
    %v12992 = vld [vmem:[%s7 + $0x14c] sm:$0xf]
    %v12993 = vld [vmem:[%s7 + $0x150] sm:$0xf]
    %v12994 = vld [vmem:[%s7 + $0x154] sm:$0xf]
    %v12995 = vld [vmem:[%s7 + $0x158] sm:$0xf]
    %v12996 = vld [vmem:[%s7 + $0x15c] sm:$0xf]
    %v12997 = vld [vmem:[%s7 + $0x160] sm:$0xf]
    %v12998 = vld [vmem:[%s7 + $0x164] sm:$0xf]
    %v12999 = vld [vmem:[%s7 + $0x168] sm:$0xf]
    %v13000 = vld [vmem:[%s7 + $0x16c] sm:$0xf]
    %v13001 = vld [vmem:[%s7 + $0x170] sm:$0xf]
    %v13002 = vld [vmem:[%s7 + $0x174] sm:$0xf]
    %v13003 = vld [vmem:[%s7 + $0x178] sm:$0xf]
    %v13004 = vld [vmem:[%s7 + $0x17c] sm:$0xf]
    %v13005 = vld [vmem:[%s7 + $0x180] sm:$0xf]
    %v13006 = vld [vmem:[%s7 + $0x184] sm:$0xf]
    %v13007 = vld [vmem:[%s7 + $0x188] sm:$0xf]
    %v13008 = vld [vmem:[%s7 + $0x18c] sm:$0xf]
    %v13009 = vld [vmem:[%s7 + $0x190] sm:$0xf]
    %v13010 = vld [vmem:[%s7 + $0x194] sm:$0xf]
    %v13011 = vld [vmem:[%s7 + $0x198] sm:$0xf]
    %v13012 = vld [vmem:[%s7 + $0x19c] sm:$0xf]
    %v13013 = vld [vmem:[%s7 + $0x1a0] sm:$0xf]
    %v13014 = vld [vmem:[%s7 + $0x1a4] sm:$0xf]
    %v13015 = vld [vmem:[%s7 + $0x1a8] sm:$0xf]
    %v13016 = vld [vmem:[%s7 + $0x1ac] sm:$0xf]
    %v13017 = vld [vmem:[%s7 + $0x1b0] sm:$0xf]
    %v13018 = vld [vmem:[%s7 + $0x1b4] sm:$0xf]
    %v13019 = vld [vmem:[%s7 + $0x1b8] sm:$0xf]
    %v13020 = vld [vmem:[%s7 + $0x1bc] sm:$0xf]
    %v13021 = vld [vmem:[%s7 + $0x1c0] sm:$0xf]
    %v13022 = vld [vmem:[%s7 + $0x1c4] sm:$0xf]
    %v13023 = vld [vmem:[%s7 + $0x1c8] sm:$0xf]
    %v13024 = vld [vmem:[%s7 + $0x1cc] sm:$0xf]
    %v13025 = vld [vmem:[%s7 + $0x1d0] sm:$0xf]
    %v13026 = vld [vmem:[%s7 + $0x1d4] sm:$0xf]
    %v13027 = vld [vmem:[%s7 + $0x1d8] sm:$0xf]
    %v13028 = vld [vmem:[%s7 + $0x1dc] sm:$0xf]
    %v13029 = vld [vmem:[%s7 + $0x1e0] sm:$0xf]
    %v13030 = vld [vmem:[%s7 + $0x1e4] sm:$0xf]
    %v13031 = vld [vmem:[%s7 + $0x1e8] sm:$0xf]
    %v13032 = vld [vmem:[%s7 + $0x1ec] sm:$0xf]
    %v13033 = vld [vmem:[%s7 + $0x1f0] sm:$0xf]
    %v13034 = vld [vmem:[%s7 + $0x1f4] sm:$0xf]
    %v13035 = vld [vmem:[%s7 + $0x1f8] sm:$0xf]
    %v13036 = vld [vmem:[%s7 + $0x1fc] sm:$0xf]
    %v13037 = vld [vmem:[#allocation15] sm:$0x1]
    %v13039 = vperm.slane %v13037, 0
    %v13169 = vunpack.c.l.b16 %v12909
    %v13170 = vunpack.c.l.b16 %v12910
    %v13171 = vunpack.c.l.b16 %v12911
    %v13172 = vunpack.c.l.b16 %v12912
    %v13173 = vunpack.c.l.b16 %v12913
    %v13174 = vunpack.c.l.b16 %v12914
    %v13175 = vunpack.c.l.b16 %v12915
    %v13176 = vunpack.c.l.b16 %v12916
    %v13177 = vunpack.c.l.b16 %v12917
    %v13178 = vunpack.c.l.b16 %v12918
    %v13179 = vunpack.c.l.b16 %v12919
    %v13180 = vunpack.c.l.b16 %v12920
    %v13181 = vunpack.c.l.b16 %v12921
    %v13182 = vunpack.c.l.b16 %v12922
    %v13183 = vunpack.c.l.b16 %v12923
    %v13184 = vunpack.c.l.b16 %v12924
    %v13185 = vunpack.c.l.b16 %v12925
    %v13186 = vunpack.c.l.b16 %v12926
    %v13187 = vunpack.c.l.b16 %v12927
    %v13188 = vunpack.c.l.b16 %v12928
    %v13189 = vunpack.c.l.b16 %v12929
    %v13190 = vunpack.c.l.b16 %v12930
    %v13191 = vunpack.c.l.b16 %v12931
    %v13192 = vunpack.c.l.b16 %v12932
    %v13193 = vunpack.c.l.b16 %v12933
    %v13194 = vunpack.c.l.b16 %v12934
    %v13195 = vunpack.c.l.b16 %v12935
    %v13196 = vunpack.c.l.b16 %v12936
    %v13197 = vunpack.c.l.b16 %v12937
    %v13198 = vunpack.c.l.b16 %v12938
    %v13199 = vunpack.c.l.b16 %v12939
    %v13200 = vunpack.c.l.b16 %v12940
    %v13201 = vunpack.c.l.b16 %v12941
    %v13202 = vunpack.c.l.b16 %v12942
    %v13203 = vunpack.c.l.b16 %v12943
    %v13204 = vunpack.c.l.b16 %v12944
    %v13205 = vunpack.c.l.b16 %v12945
    %v13206 = vunpack.c.l.b16 %v12946
    %v13207 = vunpack.c.l.b16 %v12947
    %v13208 = vunpack.c.l.b16 %v12948
    %v13209 = vunpack.c.l.b16 %v12949
    %v13210 = vunpack.c.l.b16 %v12950
    %v13211 = vunpack.c.l.b16 %v12951
    %v13212 = vunpack.c.l.b16 %v12952
    %v13213 = vunpack.c.l.b16 %v12953
    %v13214 = vunpack.c.l.b16 %v12954
    %v13215 = vunpack.c.l.b16 %v12955
    %v13216 = vunpack.c.l.b16 %v12956
    %v13217 = vunpack.c.l.b16 %v12957
    %v13218 = vunpack.c.l.b16 %v12958
    %v13219 = vunpack.c.l.b16 %v12959
    %v13220 = vunpack.c.l.b16 %v12960
    %v13221 = vunpack.c.l.b16 %v12961
    %v13222 = vunpack.c.l.b16 %v12962
    %v13223 = vunpack.c.l.b16 %v12963
    %v13224 = vunpack.c.l.b16 %v12964
    %v13225 = vunpack.c.l.b16 %v12965
    %v13226 = vunpack.c.l.b16 %v12966
    %v13227 = vunpack.c.l.b16 %v12967
    %v13228 = vunpack.c.l.b16 %v12968
    %v13229 = vunpack.c.l.b16 %v12969
    %v13230 = vunpack.c.l.b16 %v12970
    %v13231 = vunpack.c.l.b16 %v12971
    %v13232 = vunpack.c.l.b16 %v12972
    %v13233 = vunpack.c.l.b16 %v12973
    %v13234 = vunpack.c.l.b16 %v12974
    %v13235 = vunpack.c.l.b16 %v12975
    %v13236 = vunpack.c.l.b16 %v12976
    %v13237 = vunpack.c.l.b16 %v12977
    %v13238 = vunpack.c.l.b16 %v12978
    %v13239 = vunpack.c.l.b16 %v12979
    %v13240 = vunpack.c.l.b16 %v12980
    %v13241 = vunpack.c.l.b16 %v12981
    %v13242 = vunpack.c.l.b16 %v12982
    %v13243 = vunpack.c.l.b16 %v12983
    %v13244 = vunpack.c.l.b16 %v12984
    %v13245 = vunpack.c.l.b16 %v12985
    %v13246 = vunpack.c.l.b16 %v12986
    %v13247 = vunpack.c.l.b16 %v12987
    %v13248 = vunpack.c.l.b16 %v12988
    %v13249 = vunpack.c.l.b16 %v12989
    %v13250 = vunpack.c.l.b16 %v12990
    %v13251 = vunpack.c.l.b16 %v12991
    %v13252 = vunpack.c.l.b16 %v12992
    %v13253 = vunpack.c.l.b16 %v12993
    %v13254 = vunpack.c.l.b16 %v12994
    %v13255 = vunpack.c.l.b16 %v12995
    %v13256 = vunpack.c.l.b16 %v12996
    %v13257 = vunpack.c.l.b16 %v12997
    %v13258 = vunpack.c.l.b16 %v12998
    %v13259 = vunpack.c.l.b16 %v12999
    %v13260 = vunpack.c.l.b16 %v13000
    %v13261 = vunpack.c.l.b16 %v13001
    %v13262 = vunpack.c.l.b16 %v13002
    %v13263 = vunpack.c.l.b16 %v13003
    %v13264 = vunpack.c.l.b16 %v13004
    %v13265 = vunpack.c.l.b16 %v13005
    %v13266 = vunpack.c.l.b16 %v13006
    %v13267 = vunpack.c.l.b16 %v13007
    %v13268 = vunpack.c.l.b16 %v13008
    %v13269 = vunpack.c.l.b16 %v13009
    %v13270 = vunpack.c.l.b16 %v13010
    %v13271 = vunpack.c.l.b16 %v13011
    %v13272 = vunpack.c.l.b16 %v13012
    %v13273 = vunpack.c.l.b16 %v13013
    %v13274 = vunpack.c.l.b16 %v13014
    %v13275 = vunpack.c.l.b16 %v13015
    %v13276 = vunpack.c.l.b16 %v13016
    %v13277 = vunpack.c.l.b16 %v13017
    %v13278 = vunpack.c.l.b16 %v13018
    %v13279 = vunpack.c.l.b16 %v13019
    %v13280 = vunpack.c.l.b16 %v13020
    %v13281 = vunpack.c.l.b16 %v13021
    %v13282 = vunpack.c.l.b16 %v13022
    %v13283 = vunpack.c.l.b16 %v13023
    %v13284 = vunpack.c.l.b16 %v13024
    %v13285 = vunpack.c.l.b16 %v13025
    %v13286 = vunpack.c.l.b16 %v13026
    %v13287 = vunpack.c.l.b16 %v13027
    %v13288 = vunpack.c.l.b16 %v13028
    %v13289 = vunpack.c.l.b16 %v13029
    %v13290 = vunpack.c.l.b16 %v13030
    %v13291 = vunpack.c.l.b16 %v13031
    %v13292 = vunpack.c.l.b16 %v13032
    %v13293 = vunpack.c.l.b16 %v13033
    %v13294 = vunpack.c.l.b16 %v13034
    %v13295 = vunpack.c.l.b16 %v13035
    %v13296 = vunpack.c.l.b16 %v13036
    %v13297 = vpack.c.b16 %v13170, %v13169
    %v13298 = vpack.c.b16 %v13172, %v13171
    %v13299 = vpack.c.b16 %v13174, %v13173
    %v13300 = vpack.c.b16 %v13176, %v13175
    %v13301 = vpack.c.b16 %v13178, %v13177
    %v13302 = vpack.c.b16 %v13180, %v13179
    %v13303 = vpack.c.b16 %v13182, %v13181
    %v13304 = vpack.c.b16 %v13184, %v13183
    %v13305 = vpack.c.b16 %v13186, %v13185
    %v13306 = vpack.c.b16 %v13188, %v13187
    %v13307 = vpack.c.b16 %v13190, %v13189
    %v13308 = vpack.c.b16 %v13192, %v13191
    %v13309 = vpack.c.b16 %v13194, %v13193
    %v13310 = vpack.c.b16 %v13196, %v13195
    %v13311 = vpack.c.b16 %v13198, %v13197
    %v13312 = vpack.c.b16 %v13200, %v13199
    %v13313 = vpack.c.b16 %v13202, %v13201
    %v13314 = vpack.c.b16 %v13204, %v13203
    %v13315 = vpack.c.b16 %v13206, %v13205
    %v13316 = vpack.c.b16 %v13208, %v13207
    %v13317 = vpack.c.b16 %v13210, %v13209
    %v13318 = vpack.c.b16 %v13212, %v13211
    %v13319 = vpack.c.b16 %v13214, %v13213
    %v13320 = vpack.c.b16 %v13216, %v13215
    %v13321 = vpack.c.b16 %v13218, %v13217
    %v13322 = vpack.c.b16 %v13220, %v13219
    %v13323 = vpack.c.b16 %v13222, %v13221
    %v13324 = vpack.c.b16 %v13224, %v13223
    %v13325 = vpack.c.b16 %v13226, %v13225
    %v13326 = vpack.c.b16 %v13228, %v13227
    %v13327 = vpack.c.b16 %v13230, %v13229
    %v13328 = vpack.c.b16 %v13232, %v13231
    %v13329 = vpack.c.b16 %v13234, %v13233
    %v13330 = vpack.c.b16 %v13236, %v13235
    %v13331 = vpack.c.b16 %v13238, %v13237
    %v13332 = vpack.c.b16 %v13240, %v13239
    %v13333 = vpack.c.b16 %v13242, %v13241
    %v13334 = vpack.c.b16 %v13244, %v13243
    %v13335 = vpack.c.b16 %v13246, %v13245
    %v13336 = vpack.c.b16 %v13248, %v13247
    %v13337 = vpack.c.b16 %v13250, %v13249
    %v13338 = vpack.c.b16 %v13252, %v13251
    %v13339 = vpack.c.b16 %v13254, %v13253
    %v13340 = vpack.c.b16 %v13256, %v13255
    %v13341 = vpack.c.b16 %v13258, %v13257
    %v13342 = vpack.c.b16 %v13260, %v13259
    %v13343 = vpack.c.b16 %v13262, %v13261
    %v13344 = vpack.c.b16 %v13264, %v13263
    %v13345 = vpack.c.b16 %v13266, %v13265
    %v13346 = vpack.c.b16 %v13268, %v13267
    %v13347 = vpack.c.b16 %v13270, %v13269
    %v13348 = vpack.c.b16 %v13272, %v13271
    %v13349 = vpack.c.b16 %v13274, %v13273
    %v13350 = vpack.c.b16 %v13276, %v13275
    %v13351 = vpack.c.b16 %v13278, %v13277
    %v13352 = vpack.c.b16 %v13280, %v13279
    %v13353 = vpack.c.b16 %v13282, %v13281
    %v13354 = vpack.c.b16 %v13284, %v13283
    %v13355 = vpack.c.b16 %v13286, %v13285
    %v13356 = vpack.c.b16 %v13288, %v13287
    %v13357 = vpack.c.b16 %v13290, %v13289
    %v13358 = vpack.c.b16 %v13292, %v13291
    %v13359 = vpack.c.b16 %v13294, %v13293
    %v13360 = vpack.c.b16 %v13296, %v13295
    %13425 = vmatpush.bf16.msra.mxu0 %v13304
    %13426 = vmatpush.bf16.msra.mxu0 %v13303
    %13427 = vmatpush.bf16.msra.mxu0 %v13302
    %13428 = vmatpush.bf16.msra.mxu0 %v13301
    %13429 = vmatpush.bf16.msra.mxu0 %v13300
    %13430 = vmatpush.bf16.msra.mxu0 %v13299
    %13431 = vmatpush.bf16.msra.mxu0 %v13298
    %13432 = vmatpush.bf16.msra.mxu0 %v13297
    %13433 = vmatmul.bf16.gmra.mxu0 %v12901
    %v13434 = vpop.f32.mrf.mxu0
    %v13435 = vadd.f32 %v13039, %v13434
    %v13436 = vpop.f32.mrf.mxu0
    %13437 = vdwg.mxu0
    %13438 = vmatpush.bf16.msra.mxu0 %v13312
    %13439 = vmatpush.bf16.msra.mxu0 %v13311
    %13440 = vmatpush.bf16.msra.mxu0 %v13310
    %13441 = vmatpush.bf16.msra.mxu0 %v13309
    %13442 = vmatpush.bf16.msra.mxu0 %v13308
    %13443 = vmatpush.bf16.msra.mxu0 %v13307
    %13444 = vmatpush.bf16.msra.mxu0 %v13306
    %13445 = vmatpush.bf16.msra.mxu0 %v13305
    %13446 = vmatmul.bf16.gmra.mxu0 %v12902
    %v13447 = vpop.f32.mrf.mxu0
    %v13448 = vadd.f32 %v13435, %v13447
    %v13449 = vpop.f32.mrf.mxu0
    %13450 = vdwg.mxu0
    %13451 = vmatpush.bf16.msra.mxu0 %v13320
    %13452 = vmatpush.bf16.msra.mxu0 %v13319
    %13453 = vmatpush.bf16.msra.mxu0 %v13318
    %13454 = vmatpush.bf16.msra.mxu0 %v13317
    %13455 = vmatpush.bf16.msra.mxu0 %v13316
    %13456 = vmatpush.bf16.msra.mxu0 %v13315
    %13457 = vmatpush.bf16.msra.mxu0 %v13314
    %13458 = vmatpush.bf16.msra.mxu0 %v13313
    %13459 = vmatmul.bf16.gmra.mxu0 %v12903
    %v13460 = vpop.f32.mrf.mxu0
    %v13461 = vadd.f32 %v13448, %v13460
    %v13462 = vpop.f32.mrf.mxu0
    %13463 = vdwg.mxu0
    %13464 = vmatpush.bf16.msra.mxu0 %v13328
    %13465 = vmatpush.bf16.msra.mxu0 %v13327
    %13466 = vmatpush.bf16.msra.mxu0 %v13326
    %13467 = vmatpush.bf16.msra.mxu0 %v13325
    %13468 = vmatpush.bf16.msra.mxu0 %v13324
    %13469 = vmatpush.bf16.msra.mxu0 %v13323
    %13470 = vmatpush.bf16.msra.mxu0 %v13322
    %13471 = vmatpush.bf16.msra.mxu0 %v13321
    %13472 = vmatmul.bf16.gmra.mxu0 %v12904
    %v13473 = vpop.f32.mrf.mxu0
    %v13474 = vadd.f32 %v13461, %v13473
    %v13475 = vpop.f32.mrf.mxu0
    %13476 = vdwg.mxu0
    %13477 = vmatpush.bf16.msra.mxu0 %v13336
    %13478 = vmatpush.bf16.msra.mxu0 %v13335
    %13479 = vmatpush.bf16.msra.mxu0 %v13334
    %13480 = vmatpush.bf16.msra.mxu0 %v13333
    %13481 = vmatpush.bf16.msra.mxu0 %v13332
    %13482 = vmatpush.bf16.msra.mxu0 %v13331
    %13483 = vmatpush.bf16.msra.mxu0 %v13330
    %13484 = vmatpush.bf16.msra.mxu0 %v13329
    %13485 = vmatmul.bf16.gmra.mxu0 %v12905
    %v13486 = vpop.f32.mrf.mxu0
    %v13487 = vadd.f32 %v13474, %v13486
    %v13488 = vpop.f32.mrf.mxu0
    %13489 = vdwg.mxu0
    %13490 = vmatpush.bf16.msra.mxu0 %v13344
    %13491 = vmatpush.bf16.msra.mxu0 %v13343
    %13492 = vmatpush.bf16.msra.mxu0 %v13342
    %13493 = vmatpush.bf16.msra.mxu0 %v13341
    %13494 = vmatpush.bf16.msra.mxu0 %v13340
    %13495 = vmatpush.bf16.msra.mxu0 %v13339
    %13496 = vmatpush.bf16.msra.mxu0 %v13338
    %13497 = vmatpush.bf16.msra.mxu0 %v13337
    %13498 = vmatmul.bf16.gmra.mxu0 %v12906
    %v13499 = vpop.f32.mrf.mxu0
    %v13500 = vadd.f32 %v13487, %v13499
    %v13501 = vpop.f32.mrf.mxu0
    %13502 = vdwg.mxu0
    %13503 = vmatpush.bf16.msra.mxu0 %v13352
    %13504 = vmatpush.bf16.msra.mxu0 %v13351
    %13505 = vmatpush.bf16.msra.mxu0 %v13350
    %13506 = vmatpush.bf16.msra.mxu0 %v13349
    %13507 = vmatpush.bf16.msra.mxu0 %v13348
    %13508 = vmatpush.bf16.msra.mxu0 %v13347
    %13509 = vmatpush.bf16.msra.mxu0 %v13346
    %13510 = vmatpush.bf16.msra.mxu0 %v13345
    %13511 = vmatmul.bf16.gmra.mxu0 %v12907
    %v13512 = vpop.f32.mrf.mxu0
    %v13513 = vadd.f32 %v13500, %v13512
    %v13514 = vpop.f32.mrf.mxu0
    %13515 = vdwg.mxu0
    %13516 = vmatpush.bf16.msra.mxu0 %v13360
    %13517 = vmatpush.bf16.msra.mxu0 %v13359
    %13518 = vmatpush.bf16.msra.mxu0 %v13358
    %13519 = vmatpush.bf16.msra.mxu0 %v13357
    %13520 = vmatpush.bf16.msra.mxu0 %v13356
    %13521 = vmatpush.bf16.msra.mxu0 %v13355
    %13522 = vmatpush.bf16.msra.mxu0 %v13354
    %13523 = vmatpush.bf16.msra.mxu0 %v13353
    %13524 = vmatmul.bf16.gmra.mxu0 %v12908
    %v13525 = vpop.f32.mrf.mxu0
    %v13526 = vadd.f32 %v13513, %v13525
    %v13527 = vpop.f32.mrf.mxu0
    %13528 = vdwg.mxu0
    %v13529 = vpack.c.bf16 %v13526, %v13526
    %v13530 = vld [vmem:[%s9] sm:$0xf]
    %v13531 = vld [vmem:[%s9 + $0x4] sm:$0xf]
    %v13532 = vld [vmem:[%s9 + $0x8] sm:$0xf]
    %v13533 = vld [vmem:[%s9 + $0xc] sm:$0xf]
    %v13534 = vld [vmem:[%s9 + $0x10] sm:$0xf]
    %v13535 = vld [vmem:[%s9 + $0x14] sm:$0xf]
    %v13536 = vld [vmem:[%s9 + $0x18] sm:$0xf]
    %v13537 = vld [vmem:[%s9 + $0x1c] sm:$0xf]
    %v13538 = vld [vmem:[#allocation16] sm:$0x1]
    %v13540 = vperm.slane %v13538, 0
    %v13550 = vunpack.c.l.b16 %v13530
    %v13551 = vunpack.c.l.b16 %v13531
    %v13552 = vunpack.c.l.b16 %v13532
    %v13553 = vunpack.c.l.b16 %v13533
    %v13554 = vunpack.c.l.b16 %v13534
    %v13555 = vunpack.c.l.b16 %v13535
    %v13556 = vunpack.c.l.b16 %v13536
    %v13557 = vunpack.c.l.b16 %v13537
    %v13558 = vpack.c.b16 %v13551, %v13550
    %v13559 = vpack.c.b16 %v13553, %v13552
    %v13560 = vpack.c.b16 %v13555, %v13554
    %v13561 = vpack.c.b16 %v13557, %v13556
    %vm13566 = vcmask 523264
    %v13568 = vsel %vm13566, %v13529, 0
    %13570 = vmatpush.bf16.msra.mxu0 0
    %13571 = vmatpush.bf16.msra.mxu0 0
    %13572 = vmatpush.bf16.msra.mxu0 0
    %13573 = vmatpush.bf16.msra.mxu0 0
    %13574 = vmatpush.bf16.msra.mxu0 %v13561
    %13575 = vmatpush.bf16.msra.mxu0 %v13560
    %13576 = vmatpush.bf16.msra.mxu0 %v13559
    %13577 = vmatpush.bf16.msra.mxu0 %v13558
    %13578 = vmatmul.bf16.gmra.mxu0 %v13568
    %v13579 = vpop.f32.mrf.mxu0
    %v13580 = vadd.f32 %v13540, %v13579
    %v13581 = vpop.f32.mrf.mxu0
    %13582 = vdwg.mxu0
    %vm13583 = vcmask 74752
    %13584 = vst.msk [vmem:[#allocation18] sm:$0x3] %vm13583, %v13580
    // Predicated region
    $region78: #{tudui_forward.1} parent=1 // pred_check
      _
    $region79: #{tudui_forward.1} parent=1 // pred_check_branch
      %13586 = sbr.rel (0) target = $region81
    $region80: #{tudui_forward.1} parent=1 // pred_region
      %13588 = vsyncadd [#allocation6], 0
      %s13590 = sshll.u32 [#allocation18], 4
      %s13591 = int_to_ptr.vmem [resolvable:$true] %s13590
      %s13592 = sshll.u32 %s11, 4
      %s13593 = int_to_ptr.hbm [resolvable:$true] %s13592
      %13595 = dma.vmem_to_hbm [thread:$0]  %s13591, 32, %s13593, [#allocation6]
    $region81: #{tudui_forward.1} parent=1 // pred_fallthru
      _
    // Predicated region
    $region82: #{tudui_forward.1} parent=1 // pred_check
      _
    $region83: #{tudui_forward.1} parent=1 // pred_check_branch
      %13597 = sbr.rel (0) target = $region85
    $region84: #{tudui_forward.1} parent=1 // pred_region
      %13599 = dma.done [#allocation6], 32
    $region85: #{tudui_forward.1} parent=1 // pred_fallthru
      _
    %13600 = vsyncpa [#allocation5], 1
    %13601 = vsyncpa [#allocation8], 1
    %13602 = vsyncpa [#allocation11], 1
    %13603 = vsyncpa [#allocation14], 1
    %13604 = vsyncpa [#allocation17], 1
    %13605 = vsyncpa [#allocation6], 1

</llo_original>
